<compile_context>
chip_gen: v7x
topology: tpu7x:2x2x1
jax: 0.10.0
libtpu: 0.0.40
codegen_flags: <defaults>
</compile_context>

<pallas_src>
import functools

import jax
import jax.numpy as jnp
import numpy as np
from jax import lax
from jax.experimental import pallas as pl
from jax.experimental.pallas import tpu as pltpu

LRELU_SLOPE = 0.1


def _round_up(x, m):
    return (x + m - 1) // m * m


def _pick_tile(size, max_tile, mult):
    """Largest tile <= max_tile that is a multiple of `mult` and divides `size`.
    `size` must itself be a multiple of `mult`."""
    t = min(size, max_tile)
    t = (t // mult) * mult
    while size % t:
        t -= mult
    return t


# ----------------------------------------------------------------------------
# Pallas kernels:  out = maybe_leaky_relu(A @ W + b)
# ----------------------------------------------------------------------------
def _mm_kernel_acc(a_ref, w_ref, b_ref, o_ref, acc_ref, *, apply_lrelu, slope):
    """K-accumulating variant (grid = (m, n, k), k innermost)."""
    k = pl.program_id(2)

    @pl.when(k == 0)
    def _():
        acc_ref[...] = jnp.zeros_like(acc_ref)

    acc_ref[...] += jnp.dot(a_ref[...], w_ref[...],
                            preferred_element_type=jnp.float32)

    @pl.when(k == pl.num_programs(2) - 1)
    def _():
        y = acc_ref[...] + b_ref[...]          # f32 epilogue
        if apply_lrelu:
            y = jnp.where(y >= 0.0, y, slope * y)
        o_ref[...] = y.astype(o_ref.dtype)


def _mm_kernel_single(a_ref, w_ref, b_ref, o_ref, *, apply_lrelu, slope):
    """Single-pass variant (whole K fits in one tile): no scratch accumulator."""
    y = jnp.dot(a_ref[...], w_ref[...],
                preferred_element_type=jnp.float32) + b_ref[...]
    if apply_lrelu:
        y = jnp.where(y >= 0.0, y, slope * y)
    o_ref[...] = y.astype(o_ref.dtype)


def fused_matmul_bias_lrelu(a_p, w_p, b_p, M, N, *, apply_lrelu,
                            slope=LRELU_SLOPE, tm_max=512, tn_max=512,
                            tk_max=1024):
    """out[:M, :N] = maybe_leaky_relu(a_p @ w_p + b_p) in f32.

    a_p: (Mp, Kp) bf16 (zero padded), w_p: (Kp, Np) bf16, b_p: (1, Np) f32.
    Mp is tile-friendly (multiple of 16 or of tm_max); Kp/Np multiples of 128.
    """
    Mp, Kp = a_p.shape
    Kp2, Np = w_p.shape
    assert Kp == Kp2 and b_p.shape == (1, Np)

    tm = Mp if Mp <= tm_max else tm_max          # Mp was built to divide tm
    tn = _pick_tile(Np, tn_max, 128)
    tk = _pick_tile(Kp, tk_max, 128)
    nm, nn, nk = Mp // tm, Np // tn, Kp // tk

    if nk == 1:
        kernel = functools.partial(_mm_kernel_single,
                                   apply_lrelu=apply_lrelu, slope=slope)
        grid = (nm, nn)
        in_specs = [
            pl.BlockSpec((tm, tk), lambda m, n: (m, 0)),   # A tile (bf16)
            pl.BlockSpec((tk, tn), lambda m, n: (0, n)),   # W tile (bf16)
            pl.BlockSpec((1, tn), lambda m, n: (0, n)),    # bias (f32)
        ]
        out_specs = pl.BlockSpec((tm, tn), lambda m, n: (m, n))
        scratch = []
        dims = ("parallel", "parallel")
    else:
        kernel = functools.partial(_mm_kernel_acc,
                                   apply_lrelu=apply_lrelu, slope=slope)
        grid = (nm, nn, nk)
        in_specs = [
            pl.BlockSpec((tm, tk), lambda m, n, k: (m, k)),
            pl.BlockSpec((tk, tn), lambda m, n, k: (k, n)),
            pl.BlockSpec((1, tn), lambda m, n, k: (0, n)),
        ]
        out_specs = pl.BlockSpec((tm, tn), lambda m, n, k: (m, n))
        scratch = [pltpu.VMEM((tm, tn), jnp.float32)]
        dims = ("parallel", "parallel", "arbitrary")

    out = pl.pallas_call(
        kernel,
        out_shape=jax.ShapeDtypeStruct((Mp, Np), jnp.float32),
        grid_spec=pltpu.PrefetchScalarGridSpec(
            num_scalar_prefetch=0,
            grid=grid,
            in_specs=in_specs,
            out_specs=out_specs,
            scratch_shapes=scratch,
        ),
        compiler_params=pltpu.CompilerParams(
            dimension_semantics=dims,
            vmem_limit_bytes=48 << 20,   # fits v7x's 64 MiB physical VMEM
        ),
    )(a_p, w_p, b_p)
    return out[:M, :N]


# ----------------------------------------------------------------------------
# Conv2d with kernel (K,1), stride (S,1), padding (P,0)  ->  im2col + kernel.
# ----------------------------------------------------------------------------
def conv2d_kx1(x_nhwc, w_p, b_p, meta, tm_max=512):
    """x_nhwc: (B, H, W, Cin) f32. `meta` carries static layer ints."""
    B, H, W, Cin = x_nhwc.shape
    K, stride, pad = meta["K"], meta["stride"], meta["pad"]
    Kd, Kp, Cout = K * Cin, meta["Kp"], meta["Cout"]
    H_out = (H + 2 * pad - K) // stride + 1
    M = B * H_out * W

    # bf16 before the gather: halves the im2col glue traffic (exact for MXU use).
    xp = jnp.pad(x_nhwc.astype(jnp.bfloat16),
                 ((0, 0), (pad, pad), (0, 0), (0, 0)))
    # im2col: K shifted strided H-slices; channel-last so each tap is a
    # contiguous Cin slab whose column order matches the packed weight.
    cols = [xp[:, k:k + stride * (H_out - 1) + 1:stride, :, :] for k in range(K)]
    patch = jnp.concatenate(cols, axis=-1).reshape(M, Kd)

    Mp = _round_up(M, 16) if M <= tm_max else _round_up(M, tm_max)
    if Mp != M or Kp != Kd:
        patch = jnp.pad(patch, ((0, Mp - M), (0, Kp - Kd)))

    y = fused_matmul_bias_lrelu(patch, w_p, b_p, M, Cout,
                                apply_lrelu=meta["lrelu"], tm_max=tm_max)
    return y.reshape(B, H_out, W, Cout)


# ----------------------------------------------------------------------------
# Parameter packing (static per model: pad + transpose + bf16 cast hoisted out).
# Returns (metas, weights): static Python metadata vs. jit-traced arrays.
# ----------------------------------------------------------------------------
def pack_params(params):
    specs = [(w, b, s, p, True) for (w, b, s, p) in params["convs"]]
    w, b, s, p = params["conv_post"]
    specs.append((w, b, s, p, False))

    metas, weights = [], []
    for (w, b, s, p, lrelu) in specs:
        Cout, Cin, K, _ = w.shape
        Kd = K * Cin
        Kp = _round_up(Kd, 128)
        Np = _round_up(Cout, 128)
        # (Cout,Cin,K,1) -> (K,Cin,Cout) -> (Kd,Cout): matches im2col col order.
        w_mat = jnp.transpose(w[..., 0], (2, 1, 0)).reshape(Kd, Cout)
        w_p = jnp.pad(w_mat, ((0, Kp - Kd), (0, Np - Cout))).astype(jnp.bfloat16)
        b_p = jnp.pad(b.astype(jnp.float32), (0, Np - Cout)).reshape(1, Np)
        metas.append(dict(K=K, stride=s, pad=p, Kp=Kp, Cout=Cout, lrelu=lrelu))
        weights.append((w_p, b_p))
    return tuple(metas), weights


# ----------------------------------------------------------------------------
# DiscriminatorP forward (whole thing jitted; metas/period closed over as static).
# ----------------------------------------------------------------------------
def make_forward(metas, period):
    def fwd(x, weights):
        B, C, T = x.shape
        if T % period != 0:
            n_pad = period - T % period
            x = jnp.pad(x, ((0, 0), (0, 0), (0, n_pad)), mode="reflect")
            T = T + n_pad
        h = jnp.transpose(x.reshape(B, C, T // period, period),
                          (0, 2, 3, 1))                       # NHWC

        fmap = []
        for meta, (w_p, b_p) in zip(metas, weights):
            h = conv2d_kx1(h, w_p, b_p, meta)
            fmap.append(jnp.transpose(h, (0, 3, 1, 2)))       # NCHW (PyTorch)
        out = fmap[-1].reshape(B, -1)                         # torch.flatten(x,1,-1)
        return out, fmap

    return jax.jit(fwd)


# ----------------------------------------------------------------------------
# Deterministic parameter init (weight_norm at init is identity: w = v).
# ----------------------------------------------------------------------------
def init_params(key, kernel_size=5, stride=3):
    pad = (kernel_size - 1) // 2                       # get_padding(k, 1)
    chans = [(1, 32), (32, 128), (128, 512), (512, 1024), (1024, 1024)]
    strides = [stride, stride, stride, stride, 1]
    keys = jax.random.split(key, 2 * len(chans) + 2)

    convs = []
    for i, (cin, cout) in enumerate(chans):
        w = 0.02 * jax.random.normal(keys[2 * i], (cout, cin, kernel_size, 1),
                                     jnp.float32)
        b = 0.01 * jax.random.normal(keys[2 * i + 1], (cout,), jnp.float32)
        convs.append((w, b, strides[i], pad))

    w = 0.02 * jax.random.normal(keys[-2], (1, 1024, 3, 1), jnp.float32)
    b = 0.01 * jax.random.normal(keys[-1], (1,), jnp.float32)
    return {"convs": convs, "conv_post": (w, b, 1, 1)}


# ----------------------------------------------------------------------------
# Reference (lax.conv) using the same bf16-in / f32-accumulate numerics.
# ----------------------------------------------------------------------------
def ref_forward(x, params, period):
    B, C, T = x.shape
    if T % period != 0:
        n_pad = period - T % period
        x = jnp.pad(x, ((0, 0), (0, 0), (0, n_pad)), mode="reflect")
        T = T + n_pad
    h = x.reshape(B, C, T // period, period)

    def conv(h, w, b, s, p, lrelu):
        y = lax.conv_general_dilated(
            h.astype(jnp.bfloat16), w.astype(jnp.bfloat16),
            (s, 1), ((p, p), (0, 0)),
            dimension_numbers=("NCHW", "OIHW", "NCHW"),
            preferred_element_type=jnp.float32)
        y = y + b[None, :, None, None].astype(jnp.float32)
        if lrelu:
            y = jnp.where(y >= 0.0, y, LRELU_SLOPE * y)
        return y

    fmap = []
    for (w, b, s, p) in params["convs"]:
        h = conv(h, w, b, s, p, True)
        fmap.append(h)
    (w, b, s, p) = params["conv_post"]
    h = conv(h, w, b, s, p, False)
    fmap.append(h)
    return h.reshape(B, -1), fmap


if __name__ == "__main__":
    key = jax.random.PRNGKey(0)
    pkey, xkey = jax.random.split(key)

    period = 3
    params = init_params(pkey)
    metas, weights = pack_params(params)
    fwd = make_forward(metas, period)

    x = jax.random.normal(xkey, (2, 1, 256), jnp.float32)   # (B, C=1, T)

    out, fmap = fwd(x, weights)
    out = jax.block_until_ready(out)
    fmap = [jax.block_until_ready(f) for f in fmap]

    out_ref, fmap_ref = ref_forward(x, params, period)
    np.testing.assert_allclose(np.asarray(out), np.asarray(out_ref),
                               rtol=2e-2, atol=1e-4)
    for got, want in zip(fmap, fmap_ref):
        assert got.shape == want.shape
        np.testing.assert_allclose(np.asarray(got), np.asarray(want),
                                   rtol=2e-2, atol=1e-4)

    print("KERNEL_OK")
</pallas_src>

<mosaic_0001>
module attributes {stable_mosaic.version = 11 : i64} {
  func.func @_mm_kernel_single(%arg0: i32, %arg1: i32, %arg2: memref<176x128xbf16, #tpu.memory_space<vmem>>, %arg3: memref<128x128xbf16, #tpu.memory_space<vmem>>, %arg4: memref<1x128xf32, #tpu.memory_space<vmem>>, %arg5: memref<176x128xf32, #tpu.memory_space<vmem>>) attributes {dimension_semantics = [#tpu.dimension_semantics<parallel>, #tpu.dimension_semantics<parallel>], iteration_bounds = array<i64: 1, 1>, scalar_prefetch = 0 : i64, scratch_operands = 0 : i64, tpu.core_type = #tpu.core_type<tc>, window_params = [{transform_indices = @transform_0, window_bounds = array<i64: 176, 128>}, {transform_indices = @transform_1, window_bounds = array<i64: 128, 128>}, {transform_indices = @transform_2, window_bounds = array<i64: 1, 128>}, {transform_indices = @transform_3, window_bounds = array<i64: 176, 128>}]} {
    %c0 = arith.constant 0 : index
    %c0_0 = arith.constant 0 : index
    %0 = vector.load %arg2[%c0, %c0_0] : memref<176x128xbf16, #tpu.memory_space<vmem>>, vector<176x128xbf16>
    %c0_1 = arith.constant 0 : index
    %c0_2 = arith.constant 0 : index
    %1 = vector.load %arg3[%c0_1, %c0_2] : memref<128x128xbf16, #tpu.memory_space<vmem>>, vector<128x128xbf16>
    %cst = arith.constant dense<0.000000e+00> : vector<176x128xf32>
    %2 = tpu.matmul %0, %1, %cst {dimension_numbers = #tpu.dot_dimension_numbers<[1], [0], [0], [1], [0, 0, 1, 1], [], []>} : vector<176x128xbf16>, vector<128x128xbf16>, vector<176x128xf32> -> vector<176x128xf32>
    %c0_3 = arith.constant 0 : index
    %c0_4 = arith.constant 0 : index
    %3 = vector.load %arg4[%c0_3, %c0_4] : memref<1x128xf32, #tpu.memory_space<vmem>>, vector<1x128xf32>
    %4 = vector.broadcast %3 : vector<1x128xf32> to vector<176x128xf32>
    %5 = arith.addf %2, %4 : vector<176x128xf32>
    %cst_5 = arith.constant 0.000000e+00 : f32
    %6 = vector.broadcast %cst_5 : f32 to vector<176x128xf32>
    %7 = arith.cmpf oge, %5, %6 : vector<176x128xf32>
    %cst_6 = arith.constant 1.000000e-01 : f32
    %8 = vector.broadcast %cst_6 : f32 to vector<176x128xf32>
    %9 = arith.mulf %8, %5 : vector<176x128xf32>
    %10 = arith.select %7, %5, %9 : vector<176x128xi1>, vector<176x128xf32>
    %c0_7 = arith.constant 0 : index
    %c0_8 = arith.constant 0 : index
    %11 = vector.load %arg5[%c0_7, %c0_8] : memref<176x128xf32, #tpu.memory_space<vmem>>, vector<176x128xf32>
    tpu.vector_store %arg5[%c0_7, %c0_8], %10 {strides = array<i32>} : memref<176x128xf32, #tpu.memory_space<vmem>>, vector<176x128xf32>,
    return
  }
  func.func @transform_0(%arg0: i32, %arg1: i32) -> (i32, i32) {
    %c0_i32 = arith.constant 0 : i32
    %c0_i32_0 = arith.constant 0 : i32
    return %arg0, %c0_i32 : i32, i32
  }
  func.func @transform_1(%arg0: i32, %arg1: i32) -> (i32, i32) {
    %c0_i32 = arith.constant 0 : i32
    %c0_i32_0 = arith.constant 0 : i32
    return %c0_i32, %arg1 : i32, i32
  }
  func.func @transform_2(%arg0: i32, %arg1: i32) -> (i32, i32) {
    %c0_i32 = arith.constant 0 : i32
    %c0_i32_0 = arith.constant 0 : i32
    return %c0_i32, %arg1 : i32, i32
  }
  func.func @transform_3(%arg0: i32, %arg1: i32) -> (i32, i32) {
    %c0_i32 = arith.constant 0 : i32
    return %arg0, %arg1 : i32, i32
  }
}

module attributes {stable_mosaic.version = 11 : i64} {
  func.func @_mm_kernel_single(%arg0: i32, %arg1: i32, %arg2: memref<64x256xbf16, #tpu.memory_space<vmem>>, %arg3: memref<256x128xbf16, #tpu.memory_space<vmem>>, %arg4: memref<1x128xf32, #tpu.memory_space<vmem>>, %arg5: memref<64x128xf32, #tpu.memory_space<vmem>>) attributes {dimension_semantics = [#tpu.dimension_semantics<parallel>, #tpu.dimension_semantics<parallel>], iteration_bounds = array<i64: 1, 1>, scalar_prefetch = 0 : i64, scratch_operands = 0 : i64, tpu.core_type = #tpu.core_type<tc>, window_params = [{transform_indices = @transform_0, window_bounds = array<i64: 64, 256>}, {transform_indices = @transform_1, window_bounds = array<i64: 256, 128>}, {transform_indices = @transform_2, window_bounds = array<i64: 1, 128>}, {transform_indices = @transform_3, window_bounds = array<i64: 64, 128>}]} {
    %c0 = arith.constant 0 : index
    %c0_0 = arith.constant 0 : index
    %0 = vector.load %arg2[%c0, %c0_0] : memref<64x256xbf16, #tpu.memory_space<vmem>>, vector<64x256xbf16>
    %c0_1 = arith.constant 0 : index
    %c0_2 = arith.constant 0 : index
    %1 = vector.load %arg3[%c0_1, %c0_2] : memref<256x128xbf16, #tpu.memory_space<vmem>>, vector<256x128xbf16>
    %cst = arith.constant dense<0.000000e+00> : vector<64x128xf32>
    %2 = tpu.matmul %0, %1, %cst {dimension_numbers = #tpu.dot_dimension_numbers<[1], [0], [0], [1], [0, 0, 1, 1], [], []>} : vector<64x256xbf16>, vector<256x128xbf16>, vector<64x128xf32> -> vector<64x128xf32>
    %c0_3 = arith.constant 0 : index
    %c0_4 = arith.constant 0 : index
    %3 = vector.load %arg4[%c0_3, %c0_4] : memref<1x128xf32, #tpu.memory_space<vmem>>, vector<1x128xf32>
    %4 = vector.broadcast %3 : vector<1x128xf32> to vector<64x128xf32>
    %5 = arith.addf %2, %4 : vector<64x128xf32>
    %cst_5 = arith.constant 0.000000e+00 : f32
    %6 = vector.broadcast %cst_5 : f32 to vector<64x128xf32>
    %7 = arith.cmpf oge, %5, %6 : vector<64x128xf32>
    %cst_6 = arith.constant 1.000000e-01 : f32
    %8 = vector.broadcast %cst_6 : f32 to vector<64x128xf32>
    %9 = arith.mulf %8, %5 : vector<64x128xf32>
    %10 = arith.select %7, %5, %9 : vector<64x128xi1>, vector<64x128xf32>
    %c0_7 = arith.constant 0 : index
    %c0_8 = arith.constant 0 : index
    %11 = vector.load %arg5[%c0_7, %c0_8] : memref<64x128xf32, #tpu.memory_space<vmem>>, vector<64x128xf32>
    tpu.vector_store %arg5[%c0_7, %c0_8], %10 {strides = array<i32>} : memref<64x128xf32, #tpu.memory_space<vmem>>, vector<64x128xf32>,
    return
  }
  func.func @transform_0(%arg0: i32, %arg1: i32) -> (i32, i32) {
    %c0_i32 = arith.constant 0 : i32
    %c0_i32_0 = arith.constant 0 : i32
    return %arg0, %c0_i32 : i32, i32
  }
  func.func @transform_1(%arg0: i32, %arg1: i32) -> (i32, i32) {
    %c0_i32 = arith.constant 0 : i32
    %c0_i32_0 = arith.constant 0 : i32
    return %c0_i32, %arg1 : i32, i32
  }
  func.func @transform_2(%arg0: i32, %arg1: i32) -> (i32, i32) {
    %c0_i32 = arith.constant 0 : i32
    %c0_i32_0 = arith.constant 0 : i32
    return %c0_i32, %arg1 : i32, i32
  }
  func.func @transform_3(%arg0: i32, %arg1: i32) -> (i32, i32) {
    %c0_i32 = arith.constant 0 : i32
    return %arg0, %arg1 : i32, i32
  }
}

module attributes {stable_mosaic.version = 11 : i64} {
  func.func @_mm_kernel_single(%arg0: i32, %arg1: i32, %arg2: memref<32x640xbf16, #tpu.memory_space<vmem>>, %arg3: memref<640x512xbf16, #tpu.memory_space<vmem>>, %arg4: memref<1x512xf32, #tpu.memory_space<vmem>>, %arg5: memref<32x512xf32, #tpu.memory_space<vmem>>) attributes {dimension_semantics = [#tpu.dimension_semantics<parallel>, #tpu.dimension_semantics<parallel>], iteration_bounds = array<i64: 1, 1>, scalar_prefetch = 0 : i64, scratch_operands = 0 : i64, tpu.core_type = #tpu.core_type<tc>, window_params = [{transform_indices = @transform_0, window_bounds = array<i64: 32, 640>}, {transform_indices = @transform_1, window_bounds = array<i64: 640, 512>}, {transform_indices = @transform_2, window_bounds = array<i64: 1, 512>}, {transform_indices = @transform_3, window_bounds = array<i64: 32, 512>}]} {
    %c0 = arith.constant 0 : index
    %c0_0 = arith.constant 0 : index
    %0 = vector.load %arg2[%c0, %c0_0] : memref<32x640xbf16, #tpu.memory_space<vmem>>, vector<32x640xbf16>
    %c0_1 = arith.constant 0 : index
    %c0_2 = arith.constant 0 : index
    %1 = vector.load %arg3[%c0_1, %c0_2] : memref<640x512xbf16, #tpu.memory_space<vmem>>, vector<640x512xbf16>
    %cst = arith.constant dense<0.000000e+00> : vector<32x512xf32>
    %2 = tpu.matmul %0, %1, %cst {dimension_numbers = #tpu.dot_dimension_numbers<[1], [0], [0], [1], [0, 0, 1, 1], [], []>} : vector<32x640xbf16>, vector<640x512xbf16>, vector<32x512xf32> -> vector<32x512xf32>
    %c0_3 = arith.constant 0 : index
    %c0_4 = arith.constant 0 : index
    %3 = vector.load %arg4[%c0_3, %c0_4] : memref<1x512xf32, #tpu.memory_space<vmem>>, vector<1x512xf32>
    %4 = vector.broadcast %3 : vector<1x512xf32> to vector<32x512xf32>
    %5 = arith.addf %2, %4 : vector<32x512xf32>
    %cst_5 = arith.constant 0.000000e+00 : f32
    %6 = vector.broadcast %cst_5 : f32 to vector<32x512xf32>
    %7 = arith.cmpf oge, %5, %6 : vector<32x512xf32>
    %cst_6 = arith.constant 1.000000e-01 : f32
    %8 = vector.broadcast %cst_6 : f32 to vector<32x512xf32>
    %9 = arith.mulf %8, %5 : vector<32x512xf32>
    %10 = arith.select %7, %5, %9 : vector<32x512xi1>, vector<32x512xf32>
    %c0_7 = arith.constant 0 : index
    %c0_8 = arith.constant 0 : index
    %11 = vector.load %arg5[%c0_7, %c0_8] : memref<32x512xf32, #tpu.memory_space<vmem>>, vector<32x512xf32>
    tpu.vector_store %arg5[%c0_7, %c0_8], %10 {strides = array<i32>} : memref<32x512xf32, #tpu.memory_space<vmem>>, vector<32x512xf32>,
    return
  }
  func.func @transform_0(%arg0: i32, %arg1: i32) -> (i32, i32) {
    %c0_i32 = arith.constant 0 : i32
    %c0_i32_0 = arith.constant 0 : i32
    return %arg0, %c0_i32 : i32, i32
  }
  func.func @transform_1(%arg0: i32, %arg1: i32) -> (i32, i32) {
    %c0_i32 = arith.constant 0 : i32
    %c0_i32_0 = arith.constant 0 : i32
    return %c0_i32, %arg1 : i32, i32
  }
  func.func @transform_2(%arg0: i32, %arg1: i32) -> (i32, i32) {
    %c0_i32 = arith.constant 0 : i32
    %c0_i32_0 = arith.constant 0 : i32
    return %c0_i32, %arg1 : i32, i32
  }
  func.func @transform_3(%arg0: i32, %arg1: i32) -> (i32, i32) {
    %c0_i32 = arith.constant 0 : i32
    return %arg0, %arg1 : i32, i32
  }
}

module attributes {stable_mosaic.version = 11 : i64} {
  func.func @_mm_kernel_acc(%arg0: i32, %arg1: i32, %arg2: i32, %arg3: memref<16x640xbf16, #tpu.memory_space<vmem>>, %arg4: memref<640x512xbf16, #tpu.memory_space<vmem>>, %arg5: memref<1x512xf32, #tpu.memory_space<vmem>>, %arg6: memref<16x512xf32, #tpu.memory_space<vmem>>, %arg7: memref<16x512xf32, #tpu.memory_space<vmem>>) attributes {dimension_semantics = [#tpu.dimension_semantics<parallel>, #tpu.dimension_semantics<parallel>, #tpu.dimension_semantics<arbitrary>], iteration_bounds = array<i64: 1, 2, 4>, scalar_prefetch = 0 : i64, scratch_operands = 1 : i64, tpu.core_type = #tpu.core_type<tc>, window_params = [{transform_indices = @transform_0, window_bounds = array<i64: 16, 640>}, {transform_indices = @transform_1, window_bounds = array<i64: 640, 512>}, {transform_indices = @transform_2, window_bounds = array<i64: 1, 512>}, {transform_indices = @transform_3, window_bounds = array<i64: 16, 512>}]} {
    %c0_i32 = arith.constant 0 : i32
    %0 = arith.cmpi eq, %arg2, %c0_i32 : i32
    %1 = arith.extui %0 : i1 to i32
    %c0_i32_0 = arith.constant 0 : i32
    %2 = arith.cmpi ne, %1, %c0_i32_0 : i32
    scf.if %2 {
      %cst_9 = arith.constant 0.000000e+00 : f32
      %12 = vector.broadcast %cst_9 : f32 to vector<16x512xf32>
      %c0_10 = arith.constant 0 : index
      %c0_11 = arith.constant 0 : index
      %13 = vector.load %arg7[%c0_10, %c0_11] : memref<16x512xf32, #tpu.memory_space<vmem>>, vector<16x512xf32>
      tpu.vector_store %arg7[%c0_10, %c0_11], %12 {strides = array<i32>} : memref<16x512xf32, #tpu.memory_space<vmem>>, vector<16x512xf32>,
    } else {
    }
    %c0 = arith.constant 0 : index
    %c0_1 = arith.constant 0 : index
    %3 = vector.load %arg7[%c0, %c0_1] : memref<16x512xf32, #tpu.memory_space<vmem>>, vector<16x512xf32>
    %c0_2 = arith.constant 0 : index
    %c0_3 = arith.constant 0 : index
    %4 = vector.load %arg3[%c0_2, %c0_3] : memref<16x640xbf16, #tpu.memory_space<vmem>>, vector<16x640xbf16>
    %c0_4 = arith.constant 0 : index
    %c0_5 = arith.constant 0 : index
    %5 = vector.load %arg4[%c0_4, %c0_5] : memref<640x512xbf16, #tpu.memory_space<vmem>>, vector<640x512xbf16>
    %cst = arith.constant dense<0.000000e+00> : vector<16x512xf32>
    %6 = tpu.matmul %4, %5, %cst {dimension_numbers = #tpu.dot_dimension_numbers<[1], [0], [0], [1], [0, 0, 1, 1], [], []>} : vector<16x640xbf16>, vector<640x512xbf16>, vector<16x512xf32> -> vector<16x512xf32>
    %7 = arith.addf %3, %6 : vector<16x512xf32>
    %c0_6 = arith.constant 0 : index
    %c0_7 = arith.constant 0 : index
    %8 = vector.load %arg7[%c0_6, %c0_7] : memref<16x512xf32, #tpu.memory_space<vmem>>, vector<16x512xf32>
    tpu.vector_store %arg7[%c0_6, %c0_7], %7 {strides = array<i32>} : memref<16x512xf32, #tpu.memory_space<vmem>>, vector<16x512xf32>,
    %c3_i32 = arith.constant 3 : i32
    %9 = arith.cmpi eq, %arg2, %c3_i32 : i32
    %10 = arith.extui %9 : i1 to i32
    %c0_i32_8 = arith.constant 0 : i32
    %11 = arith.cmpi ne, %10, %c0_i32_8 : i32
    scf.if %11 {
      %c0_9 = arith.constant 0 : index
      %c0_10 = arith.constant 0 : index
      %12 = vector.load %arg7[%c0_9, %c0_10] : memref<16x512xf32, #tpu.memory_space<vmem>>, vector<16x512xf32>
      %c0_11 = arith.constant 0 : index
      %c0_12 = arith.constant 0 : index
      %13 = vector.load %arg5[%c0_11, %c0_12] : memref<1x512xf32, #tpu.memory_space<vmem>>, vector<1x512xf32>
      %14 = vector.broadcast %13 : vector<1x512xf32> to vector<16x512xf32>
      %15 = arith.addf %12, %14 : vector<16x512xf32>
      %cst_13 = arith.constant 0.000000e+00 : f32
      %16 = vector.broadcast %cst_13 : f32 to vector<16x512xf32>
      %17 = arith.cmpf oge, %15, %16 : vector<16x512xf32>
      %cst_14 = arith.constant 1.000000e-01 : f32
      %18 = vector.broadcast %cst_14 : f32 to vector<16x512xf32>
      %19 = arith.mulf %18, %15 : vector<16x512xf32>
      %20 = arith.select %17, %15, %19 : vector<16x512xi1>, vector<16x512xf32>
      %c0_15 = arith.constant 0 : index
      %c0_16 = arith.constant 0 : index
      %21 = vector.load %arg6[%c0_15, %c0_16] : memref<16x512xf32, #tpu.memory_space<vmem>>, vector<16x512xf32>
      tpu.vector_store %arg6[%c0_15, %c0_16], %20 {strides = array<i32>} : memref<16x512xf32, #tpu.memory_space<vmem>>, vector<16x512xf32>,
    } else {
    }
    return
  }
  func.func @transform_0(%arg0: i32, %arg1: i32, %arg2: i32) -> (i32, i32) {
    %c0_i32 = arith.constant 0 : i32
    return %arg0, %arg2 : i32, i32
  }
  func.func @transform_1(%arg0: i32, %arg1: i32, %arg2: i32) -> (i32, i32) {
    %c0_i32 = arith.constant 0 : i32
    return %arg2, %arg1 : i32, i32
  }
  func.func @transform_2(%arg0: i32, %arg1: i32, %arg2: i32) -> (i32, i32) {
    %c0_i32 = arith.constant 0 : i32
    %c0_i32_0 = arith.constant 0 : i32
    return %c0_i32, %arg1 : i32, i32
  }
  func.func @transform_3(%arg0: i32, %arg1: i32, %arg2: i32) -> (i32, i32) {
    %c0_i32 = arith.constant 0 : i32
    return %arg0, %arg1 : i32, i32
  }
}

module attributes {stable_mosaic.version = 11 : i64} {
  func.func @_mm_kernel_acc(%arg0: i32, %arg1: i32, %arg2: i32, %arg3: memref<16x1024xbf16, #tpu.memory_space<vmem>>, %arg4: memref<1024x512xbf16, #tpu.memory_space<vmem>>, %arg5: memref<1x512xf32, #tpu.memory_space<vmem>>, %arg6: memref<16x512xf32, #tpu.memory_space<vmem>>, %arg7: memref<16x512xf32, #tpu.memory_space<vmem>>) attributes {dimension_semantics = [#tpu.dimension_semantics<parallel>, #tpu.dimension_semantics<parallel>, #tpu.dimension_semantics<arbitrary>], iteration_bounds = array<i64: 1, 2, 5>, scalar_prefetch = 0 : i64, scratch_operands = 1 : i64, tpu.core_type = #tpu.core_type<tc>, window_params = [{transform_indices = @transform_0, window_bounds = array<i64: 16, 1024>}, {transform_indices = @transform_1, window_bounds = array<i64: 1024, 512>}, {transform_indices = @transform_2, window_bounds = array<i64: 1, 512>}, {transform_indices = @transform_3, window_bounds = array<i64: 16, 512>}]} {
    %c0_i32 = arith.constant 0 : i32
    %0 = arith.cmpi eq, %arg2, %c0_i32 : i32
    %1 = arith.extui %0 : i1 to i32
    %c0_i32_0 = arith.constant 0 : i32
    %2 = arith.cmpi ne, %1, %c0_i32_0 : i32
    scf.if %2 {
      %cst_9 = arith.constant 0.000000e+00 : f32
      %12 = vector.broadcast %cst_9 : f32 to vector<16x512xf32>
      %c0_10 = arith.constant 0 : index
      %c0_11 = arith.constant 0 : index
      %13 = vector.load %arg7[%c0_10, %c0_11] : memref<16x512xf32, #tpu.memory_space<vmem>>, vector<16x512xf32>
      tpu.vector_store %arg7[%c0_10, %c0_11], %12 {strides = array<i32>} : memref<16x512xf32, #tpu.memory_space<vmem>>, vector<16x512xf32>,
    } else {
    }
    %c0 = arith.constant 0 : index
    %c0_1 = arith.constant 0 : index
    %3 = vector.load %arg7[%c0, %c0_1] : memref<16x512xf32, #tpu.memory_space<vmem>>, vector<16x512xf32>
    %c0_2 = arith.constant 0 : index
    %c0_3 = arith.constant 0 : index
    %4 = vector.load %arg3[%c0_2, %c0_3] : memref<16x1024xbf16, #tpu.memory_space<vmem>>, vector<16x1024xbf16>
    %c0_4 = arith.constant 0 : index
    %c0_5 = arith.constant 0 : index
    %5 = vector.load %arg4[%c0_4, %c0_5] : memref<1024x512xbf16, #tpu.memory_space<vmem>>, vector<1024x512xbf16>
    %cst = arith.constant dense<0.000000e+00> : vector<16x512xf32>
    %6 = tpu.matmul %4, %5, %cst {dimension_numbers = #tpu.dot_dimension_numbers<[1], [0], [0], [1], [0, 0, 1, 1], [], []>} : vector<16x1024xbf16>, vector<1024x512xbf16>, vector<16x512xf32> -> vector<16x512xf32>
    %7 = arith.addf %3, %6 : vector<16x512xf32>
    %c0_6 = arith.constant 0 : index
    %c0_7 = arith.constant 0 : index
    %8 = vector.load %arg7[%c0_6, %c0_7] : memref<16x512xf32, #tpu.memory_space<vmem>>, vector<16x512xf32>
    tpu.vector_store %arg7[%c0_6, %c0_7], %7 {strides = array<i32>} : memref<16x512xf32, #tpu.memory_space<vmem>>, vector<16x512xf32>,
    %c4_i32 = arith.constant 4 : i32
    %9 = arith.cmpi eq, %arg2, %c4_i32 : i32
    %10 = arith.extui %9 : i1 to i32
    %c0_i32_8 = arith.constant 0 : i32
    %11 = arith.cmpi ne, %10, %c0_i32_8 : i32
    scf.if %11 {
      %c0_9 = arith.constant 0 : index
      %c0_10 = arith.constant 0 : index
      %12 = vector.load %arg7[%c0_9, %c0_10] : memref<16x512xf32, #tpu.memory_space<vmem>>, vector<16x512xf32>
      %c0_11 = arith.constant 0 : index
      %c0_12 = arith.constant 0 : index
      %13 = vector.load %arg5[%c0_11, %c0_12] : memref<1x512xf32, #tpu.memory_space<vmem>>, vector<1x512xf32>
      %14 = vector.broadcast %13 : vector<1x512xf32> to vector<16x512xf32>
      %15 = arith.addf %12, %14 : vector<16x512xf32>
      %cst_13 = arith.constant 0.000000e+00 : f32
      %16 = vector.broadcast %cst_13 : f32 to vector<16x512xf32>
      %17 = arith.cmpf oge, %15, %16 : vector<16x512xf32>
      %cst_14 = arith.constant 1.000000e-01 : f32
      %18 = vector.broadcast %cst_14 : f32 to vector<16x512xf32>
      %19 = arith.mulf %18, %15 : vector<16x512xf32>
      %20 = arith.select %17, %15, %19 : vector<16x512xi1>, vector<16x512xf32>
      %c0_15 = arith.constant 0 : index
      %c0_16 = arith.constant 0 : index
      %21 = vector.load %arg6[%c0_15, %c0_16] : memref<16x512xf32, #tpu.memory_space<vmem>>, vector<16x512xf32>
      tpu.vector_store %arg6[%c0_15, %c0_16], %20 {strides = array<i32>} : memref<16x512xf32, #tpu.memory_space<vmem>>, vector<16x512xf32>,
    } else {
    }
    return
  }
  func.func @transform_0(%arg0: i32, %arg1: i32, %arg2: i32) -> (i32, i32) {
    %c0_i32 = arith.constant 0 : i32
    return %arg0, %arg2 : i32, i32
  }
  func.func @transform_1(%arg0: i32, %arg1: i32, %arg2: i32) -> (i32, i32) {
    %c0_i32 = arith.constant 0 : i32
    return %arg2, %arg1 : i32, i32
  }
  func.func @transform_2(%arg0: i32, %arg1: i32, %arg2: i32) -> (i32, i32) {
    %c0_i32 = arith.constant 0 : i32
    %c0_i32_0 = arith.constant 0 : i32
    return %c0_i32, %arg1 : i32, i32
  }
  func.func @transform_3(%arg0: i32, %arg1: i32, %arg2: i32) -> (i32, i32) {
    %c0_i32 = arith.constant 0 : i32
    return %arg0, %arg1 : i32, i32
  }
}

module attributes {stable_mosaic.version = 11 : i64} {
  func.func @_mm_kernel_acc(%arg0: i32, %arg1: i32, %arg2: i32, %arg3: memref<16x1024xbf16, #tpu.memory_space<vmem>>, %arg4: memref<1024x128xbf16, #tpu.memory_space<vmem>>, %arg5: memref<1x128xf32, #tpu.memory_space<vmem>>, %arg6: memref<16x128xf32, #tpu.memory_space<vmem>>, %arg7: memref<16x128xf32, #tpu.memory_space<vmem>>) attributes {dimension_semantics = [#tpu.dimension_semantics<parallel>, #tpu.dimension_semantics<parallel>, #tpu.dimension_semantics<arbitrary>], iteration_bounds = array<i64: 1, 1, 3>, scalar_prefetch = 0 : i64, scratch_operands = 1 : i64, tpu.core_type = #tpu.core_type<tc>, window_params = [{transform_indices = @transform_0, window_bounds = array<i64: 16, 1024>}, {transform_indices = @transform_1, window_bounds = array<i64: 1024, 128>}, {transform_indices = @transform_2, window_bounds = array<i64: 1, 128>}, {transform_indices = @transform_3, window_bounds = array<i64: 16, 128>}]} {
    %c0_i32 = arith.constant 0 : i32
    %0 = arith.cmpi eq, %arg2, %c0_i32 : i32
    %1 = arith.extui %0 : i1 to i32
    %c0_i32_0 = arith.constant 0 : i32
    %2 = arith.cmpi ne, %1, %c0_i32_0 : i32
    scf.if %2 {
      %cst_9 = arith.constant 0.000000e+00 : f32
      %12 = vector.broadcast %cst_9 : f32 to vector<16x128xf32>
      %c0_10 = arith.constant 0 : index
      %c0_11 = arith.constant 0 : index
      %13 = vector.load %arg7[%c0_10, %c0_11] : memref<16x128xf32, #tpu.memory_space<vmem>>, vector<16x128xf32>
      tpu.vector_store %arg7[%c0_10, %c0_11], %12 {strides = array<i32>} : memref<16x128xf32, #tpu.memory_space<vmem>>, vector<16x128xf32>,
    } else {
    }
    %c0 = arith.constant 0 : index
    %c0_1 = arith.constant 0 : index
    %3 = vector.load %arg7[%c0, %c0_1] : memref<16x128xf32, #tpu.memory_space<vmem>>, vector<16x128xf32>
    %c0_2 = arith.constant 0 : index
    %c0_3 = arith.constant 0 : index
    %4 = vector.load %arg3[%c0_2, %c0_3] : memref<16x1024xbf16, #tpu.memory_space<vmem>>, vector<16x1024xbf16>
    %c0_4 = arith.constant 0 : index
    %c0_5 = arith.constant 0 : index
    %5 = vector.load %arg4[%c0_4, %c0_5] : memref<1024x128xbf16, #tpu.memory_space<vmem>>, vector<1024x128xbf16>
    %cst = arith.constant dense<0.000000e+00> : vector<16x128xf32>
    %6 = tpu.matmul %4, %5, %cst {dimension_numbers = #tpu.dot_dimension_numbers<[1], [0], [0], [1], [0, 0, 1, 1], [], []>} : vector<16x1024xbf16>, vector<1024x128xbf16>, vector<16x128xf32> -> vector<16x128xf32>
    %7 = arith.addf %3, %6 : vector<16x128xf32>
    %c0_6 = arith.constant 0 : index
    %c0_7 = arith.constant 0 : index
    %8 = vector.load %arg7[%c0_6, %c0_7] : memref<16x128xf32, #tpu.memory_space<vmem>>, vector<16x128xf32>
    tpu.vector_store %arg7[%c0_6, %c0_7], %7 {strides = array<i32>} : memref<16x128xf32, #tpu.memory_space<vmem>>, vector<16x128xf32>,
    %c2_i32 = arith.constant 2 : i32
    %9 = arith.cmpi eq, %arg2, %c2_i32 : i32
    %10 = arith.extui %9 : i1 to i32
    %c0_i32_8 = arith.constant 0 : i32
    %11 = arith.cmpi ne, %10, %c0_i32_8 : i32
    scf.if %11 {
      %c0_9 = arith.constant 0 : index
      %c0_10 = arith.constant 0 : index
      %12 = vector.load %arg7[%c0_9, %c0_10] : memref<16x128xf32, #tpu.memory_space<vmem>>, vector<16x128xf32>
      %c0_11 = arith.constant 0 : index
      %c0_12 = arith.constant 0 : index
      %13 = vector.load %arg5[%c0_11, %c0_12] : memref<1x128xf32, #tpu.memory_space<vmem>>, vector<1x128xf32>
      %14 = vector.broadcast %13 : vector<1x128xf32> to vector<16x128xf32>
      %15 = arith.addf %12, %14 : vector<16x128xf32>
      %c0_13 = arith.constant 0 : index
      %c0_14 = arith.constant 0 : index
      %16 = vector.load %arg6[%c0_13, %c0_14] : memref<16x128xf32, #tpu.memory_space<vmem>>, vector<16x128xf32>
      tpu.vector_store %arg6[%c0_13, %c0_14], %15 {strides = array<i32>} : memref<16x128xf32, #tpu.memory_space<vmem>>, vector<16x128xf32>,
    } else {
    }
    return
  }
  func.func @transform_0(%arg0: i32, %arg1: i32, %arg2: i32) -> (i32, i32) {
    %c0_i32 = arith.constant 0 : i32
    return %arg0, %arg2 : i32, i32
  }
  func.func @transform_1(%arg0: i32, %arg1: i32, %arg2: i32) -> (i32, i32) {
    %c0_i32 = arith.constant 0 : i32
    return %arg2, %arg1 : i32, i32
  }
  func.func @transform_2(%arg0: i32, %arg1: i32, %arg2: i32) -> (i32, i32) {
    %c0_i32 = arith.constant 0 : i32
    %c0_i32_0 = arith.constant 0 : i32
    return %c0_i32, %arg1 : i32, i32
  }
  func.func @transform_3(%arg0: i32, %arg1: i32, %arg2: i32) -> (i32, i32) {
    %c0_i32 = arith.constant 0 : i32
    return %arg0, %arg1 : i32, i32
  }
}

</mosaic_0001>

<llo_original>
// kernel: fwd.6
$region0: #{fwd.6}
  #allocation0 [shape = 'u32[]', space=smem, size = 0x4, offset = 0x4, fixed_abs, tag = 'smem constant byte address 0x4 - core index']
  #allocation1 [shape = 'u32[144,128]{1,0:T(1,128)}', space=vmem, size = 0x12000, scoped, tag = 'internal scratch']
  %s0 = inlined_call_operand.vmem [shape: bf16[176,128], index: 0, kind: input, shape index: {}]
  %s1 = inlined_call_operand.hbm [shape: bf16[128,128], index: 1, kind: input, shape index: {}]
  %s2 = inlined_call_operand.hbm [shape: f32[1,128], index: 2, kind: input, shape index: {}]
  %s3 = inlined_call_operand.vmem [shape: f32[176,128], index: 3, kind: output, shape index: {}]
  %s4 = sld [smem:[#allocation0]]
  $region30: #{fwd.6} parent=0
    _
  %s6 = ssub.s32 1, %s4
  %s7 = scalar_select 0, %s6, %s4
  $region1: #{fwd.6} parent=0
    #allocation2 [shape = 'u8[32768]{0}', space=vmem, size = 0x8000, scoped, tag = 'input window, operand 1, single buffered']
    #allocation3 [shape = 's32[1]{0}', space=sflag, size = 0x4, scoped, tag = 'scoped memory for fwd.6']
    #allocation4 [shape = 'u8[512]{0}', space=vmem, size = 0x400, scoped, tag = 'input window, operand 2, single buffered']
    #allocation5 [shape = 's32[1]{0}', space=sflag, size = 0x4, scoped, tag = 'scoped memory for fwd.6']
    %8 = vsyncpa [#allocation3], 0
    %9 = vsyncpa [#allocation5], 0
    // Predicated region
    $region2: #{fwd.6} parent=1 // pred_check
      _
    $region3: #{fwd.6} parent=1 // pred_check_branch
      %11 = sbr.rel (0) target = $region5
    $region4: #{fwd.6} parent=1 // pred_region
      _
    $region5: #{fwd.6} parent=1 // pred_fallthru
      _
    // Predicated region
    $region6: #{fwd.6} parent=1 // pred_check
      _
    $region7: #{fwd.6} parent=1 // pred_check_branch
      %13 = sbr.rel (0) target = $region9
    $region8: #{fwd.6} parent=1 // pred_region
      %s15 = ssub.s32 1024, 1024
      %16 = vsyncadd [#allocation3], %s15
      %s17 = sshll.u32 [#allocation2], 4
      %s18 = int_to_ptr.vmem [resolvable:$true] %s17
      %23 = dma.hbm_to_vmem [thread:$0]  %s1, 1024, %s18, [#allocation3], 64, 64, 4
    $region9: #{fwd.6} parent=1 // pred_fallthru
      _
    // Predicated region
    $region10: #{fwd.6} parent=1 // pred_check
      _
    $region11: #{fwd.6} parent=1 // pred_check_branch
      %25 = sbr.rel (0) target = $region13
    $region12: #{fwd.6} parent=1 // pred_region
      %s27 = ssub.s32 16, 16
      %28 = vsyncadd [#allocation5], %s27
      %s30 = sshll.u32 [#allocation4], 4
      %s31 = int_to_ptr.vmem [resolvable:$true] %s30
      %33 = dma.hbm_to_vmem [thread:$0]  %s2, 16, %s31, [#allocation5]
    $region13: #{fwd.6} parent=1 // pred_fallthru
      _
    // Predicated region
    $region14: #{fwd.6} parent=1 // pred_check
      _
    $region15: #{fwd.6} parent=1 // pred_check_branch
      %35 = sbr.rel (0) target = $region17
    $region16: #{fwd.6} parent=1 // pred_region
      %36 = dma.done [#allocation3], 1024
    $region17: #{fwd.6} parent=1 // pred_fallthru
      _
    // Predicated region
    $region18: #{fwd.6} parent=1 // pred_check
      _
    $region19: #{fwd.6} parent=1 // pred_check_branch
      %38 = sbr.rel (0) target = $region21
    $region20: #{fwd.6} parent=1 // pred_region
      %39 = dma.done [#allocation5], 16
    $region21: #{fwd.6} parent=1 // pred_fallthru
      _
    %v41 = vld [vmem:[%s0] sm:$0xf]
    %v42 = vld [vmem:[%s0 + $0x4] sm:$0xf]
    %v43 = vld [vmem:[%s0 + $0x8] sm:$0xf]
    %v44 = vld [vmem:[%s0 + $0xc] sm:$0xf]
    %v45 = vld [vmem:[%s0 + $0x10] sm:$0xf]
    %v46 = vld [vmem:[%s0 + $0x14] sm:$0xf]
    %v47 = vld [vmem:[%s0 + $0x18] sm:$0xf]
    %v48 = vld [vmem:[%s0 + $0x1c] sm:$0xf]
    %v49 = vld [vmem:[%s0 + $0x20] sm:$0xf]
    %v50 = vld [vmem:[%s0 + $0x24] sm:$0xf]
    %v51 = vld [vmem:[%s0 + $0x28] sm:$0xf]
    %v52 = vld [vmem:[%s0 + $0x2c] sm:$0xf]
    %v53 = vld [vmem:[%s0 + $0x30] sm:$0xf]
    %v54 = vld [vmem:[%s0 + $0x34] sm:$0xf]
    %v55 = vld [vmem:[%s0 + $0x38] sm:$0xf]
    %v56 = vld [vmem:[%s0 + $0x3c] sm:$0xf]
    %v57 = vld [vmem:[%s0 + $0x40] sm:$0xf]
    %v58 = vld [vmem:[%s0 + $0x44] sm:$0xf]
    %v59 = vld [vmem:[%s0 + $0x48] sm:$0xf]
    %v60 = vld [vmem:[%s0 + $0x4c] sm:$0xf]
    %v61 = vld [vmem:[%s0 + $0x50] sm:$0xf]
    %v62 = vld [vmem:[%s0 + $0x54] sm:$0xf]
    %v63 = vld [vmem:[#allocation2] sm:$0xf]
    %v64 = vld [vmem:[#allocation2 + $0x4] sm:$0xf]
    %v65 = vld [vmem:[#allocation2 + $0x8] sm:$0xf]
    %v66 = vld [vmem:[#allocation2 + $0xc] sm:$0xf]
    %v67 = vld [vmem:[#allocation2 + $0x10] sm:$0xf]
    %v68 = vld [vmem:[#allocation2 + $0x14] sm:$0xf]
    %v69 = vld [vmem:[#allocation2 + $0x18] sm:$0xf]
    %v70 = vld [vmem:[#allocation2 + $0x1c] sm:$0xf]
    %v71 = vld [vmem:[#allocation2 + $0x20] sm:$0xf]
    %v72 = vld [vmem:[#allocation2 + $0x24] sm:$0xf]
    %v73 = vld [vmem:[#allocation2 + $0x28] sm:$0xf]
    %v74 = vld [vmem:[#allocation2 + $0x2c] sm:$0xf]
    %v75 = vld [vmem:[#allocation2 + $0x30] sm:$0xf]
    %v76 = vld [vmem:[#allocation2 + $0x34] sm:$0xf]
    %v77 = vld [vmem:[#allocation2 + $0x38] sm:$0xf]
    %v78 = vld [vmem:[#allocation2 + $0x3c] sm:$0xf]
    %v79 = vld [vmem:[#allocation4] sm:$0x1]
    %v81 = vlaneseq
    %v82 = vshrl.u32 %v81, 7
    %v83 = vsub.s32 0, %v82
    %v84 = vrot.slane %v79, %v83
    %v108 = vunpack.c.l.b16 %v41
    %v109 = vunpack.c.l.b16 %v42
    %v110 = vunpack.c.l.b16 %v43
    %v111 = vunpack.c.l.b16 %v44
    %v112 = vunpack.c.l.b16 %v45
    %v113 = vunpack.c.l.b16 %v46
    %v114 = vunpack.c.l.b16 %v47
    %v115 = vunpack.c.l.b16 %v48
    %v116 = vunpack.c.l.b16 %v49
    %v117 = vunpack.c.l.b16 %v50
    %v118 = vunpack.c.l.b16 %v51
    %v119 = vunpack.c.l.b16 %v52
    %v120 = vunpack.c.l.b16 %v53
    %v121 = vunpack.c.l.b16 %v54
    %v122 = vunpack.c.l.b16 %v55
    %v123 = vunpack.c.l.b16 %v56
    %v124 = vunpack.c.l.b16 %v57
    %v125 = vunpack.c.l.b16 %v58
    %v126 = vunpack.c.l.b16 %v59
    %v127 = vunpack.c.l.b16 %v60
    %v128 = vunpack.c.l.b16 %v61
    %v129 = vunpack.c.l.b16 %v62
    %v130 = vpack.c.b16 %v109, %v108
    %v131 = vpack.c.b16 %v111, %v110
    %v132 = vpack.c.b16 %v113, %v112
    %v133 = vpack.c.b16 %v115, %v114
    %v134 = vpack.c.b16 %v117, %v116
    %v135 = vpack.c.b16 %v119, %v118
    %v136 = vpack.c.b16 %v121, %v120
    %v137 = vpack.c.b16 %v123, %v122
    %v138 = vpack.c.b16 %v125, %v124
    %v139 = vpack.c.b16 %v127, %v126
    %v140 = vpack.c.b16 %v129, %v128
    %v168 = vunpack.c.l.b16 %v63
    %v169 = vunpack.c.l.b16 %v64
    %v170 = vunpack.c.l.b16 %v65
    %v171 = vunpack.c.l.b16 %v66
    %v172 = vunpack.c.l.b16 %v67
    %v173 = vunpack.c.l.b16 %v68
    %v174 = vunpack.c.l.b16 %v69
    %v175 = vunpack.c.l.b16 %v70
    %v176 = vunpack.c.l.b16 %v71
    %v177 = vunpack.c.l.b16 %v72
    %v178 = vunpack.c.l.b16 %v73
    %v179 = vunpack.c.l.b16 %v74
    %v180 = vunpack.c.l.b16 %v75
    %v181 = vunpack.c.l.b16 %v76
    %v182 = vunpack.c.l.b16 %v77
    %v183 = vunpack.c.l.b16 %v78
    %v184 = vpack.c.b16 %v169, %v168
    %v185 = vpack.c.b16 %v171, %v170
    %v186 = vpack.c.b16 %v173, %v172
    %v187 = vpack.c.b16 %v175, %v174
    %v188 = vpack.c.b16 %v177, %v176
    %v189 = vpack.c.b16 %v179, %v178
    %v190 = vpack.c.b16 %v181, %v180
    %v191 = vpack.c.b16 %v183, %v182
    %200 = vmatprep.subr.bf16.mxu0 0
    %201 = vmatpush1.bf16.msra.mxu0 %v184
    %202 = vmatprep.subr.bf16.mxu0 0
    %203 = vmatpush1.bf16.msra.mxu0 %v185
    %204 = vmatprep.subr.bf16.mxu0 0
    %205 = vmatpush1.bf16.msra.mxu0 %v186
    %206 = vmatprep.subr.bf16.mxu0 0
    %207 = vmatpush1.bf16.msra.mxu0 %v187
    %208 = vmatprep.subr.bf16.mxu0 0
    %209 = vmatpush1.bf16.msra.mxu0 %v188
    %210 = vmatprep.subr.bf16.mxu0 0
    %211 = vmatpush1.bf16.msra.mxu0 %v189
    %212 = vmatprep.subr.bf16.mxu0 0
    %213 = vmatpush1.bf16.msra.mxu0 %v190
    %214 = vmatprep.subr.bf16.mxu0 0
    %215 = vmatpush1.bf16.msra.mxu0 %v191
    %216 = vmatprep.subr.bf16.mxu0 0
    %217 = vmatpush1.bf16.msra.mxu0 0
    %218 = vmatprep.subr.bf16.mxu0 0
    %219 = vmatpush1.bf16.msra.mxu0 0
    %220 = vmatprep.subr.bf16.mxu0 0
    %221 = vmatpush1.bf16.msra.mxu0 0
    %222 = vmatprep.subr.bf16.mxu0 0
    %223 = vmatpush1.bf16.msra.mxu0 0
    %224 = vmatprep.subr.bf16.mxu0 0
    %225 = vmatpush1.bf16.msra.mxu0 0
    %226 = vmatprep.subr.bf16.mxu0 0
    %227 = vmatpush1.bf16.msra.mxu0 0
    %228 = vmatprep.subr.bf16.mxu0 0
    %229 = vmatpush1.bf16.msra.mxu0 0
    %230 = vmatprep.subr.bf16.mxu0 0
    %231 = vmatpush1.bf16.msra.mxu0 0
    %232 = vmatprep.mubr.bf16.mxu0 0
    %233 = vmatmul.mubr.bf16.gmra.mrb[0].mxu0 %v130
    %v234 = vpop.f32.mrb[0].mxu0
    %v235 = vadd.f32 %v84, %v234
    %v236 = vpop.f32.mrb[0].mxu0
    %v237 = vpop.f32.mrb[0].mxu0
    %v238 = vadd.f32 %v84, %v237
    %v239 = vpop.f32.mrb[0].mxu0
    %240 = vmatprep.mubr.bf16.mxu0 0
    %241 = vmatmul.mubr.bf16.gmra.mrb[0].mxu0 %v131
    %v242 = vpop.f32.mrb[0].mxu0
    %v243 = vadd.f32 %v84, %v242
    %v244 = vpop.f32.mrb[0].mxu0
    %v245 = vpop.f32.mrb[0].mxu0
    %v246 = vadd.f32 %v84, %v245
    %v247 = vpop.f32.mrb[0].mxu0
    %248 = vmatprep.mubr.bf16.mxu0 0
    %249 = vmatmul.mubr.bf16.gmra.mrb[0].mxu0 %v132
    %v250 = vpop.f32.mrb[0].mxu0
    %v251 = vadd.f32 %v84, %v250
    %v252 = vpop.f32.mrb[0].mxu0
    %v253 = vpop.f32.mrb[0].mxu0
    %v254 = vadd.f32 %v84, %v253
    %v255 = vpop.f32.mrb[0].mxu0
    %256 = vmatprep.mubr.bf16.mxu0 0
    %257 = vmatmul.mubr.bf16.gmra.mrb[0].mxu0 %v133
    %v258 = vpop.f32.mrb[0].mxu0
    %v259 = vadd.f32 %v84, %v258
    %v260 = vpop.f32.mrb[0].mxu0
    %v261 = vpop.f32.mrb[0].mxu0
    %v262 = vadd.f32 %v84, %v261
    %v263 = vpop.f32.mrb[0].mxu0
    %264 = vmatprep.mubr.bf16.mxu0 0
    %265 = vmatmul.mubr.bf16.gmra.mrb[0].mxu0 %v134
    %v266 = vpop.f32.mrb[0].mxu0
    %v267 = vadd.f32 %v84, %v266
    %v268 = vpop.f32.mrb[0].mxu0
    %v269 = vpop.f32.mrb[0].mxu0
    %v270 = vadd.f32 %v84, %v269
    %v271 = vpop.f32.mrb[0].mxu0
    %272 = vmatprep.mubr.bf16.mxu0 0
    %273 = vmatmul.mubr.bf16.gmra.mrb[0].mxu0 %v135
    %v274 = vpop.f32.mrb[0].mxu0
    %v275 = vadd.f32 %v84, %v274
    %v276 = vpop.f32.mrb[0].mxu0
    %v277 = vpop.f32.mrb[0].mxu0
    %v278 = vadd.f32 %v84, %v277
    %v279 = vpop.f32.mrb[0].mxu0
    %280 = vmatprep.mubr.bf16.mxu0 0
    %281 = vmatmul.mubr.bf16.gmra.mrb[0].mxu0 %v136
    %v282 = vpop.f32.mrb[0].mxu0
    %v283 = vadd.f32 %v84, %v282
    %v284 = vpop.f32.mrb[0].mxu0
    %v285 = vpop.f32.mrb[0].mxu0
    %v286 = vadd.f32 %v84, %v285
    %v287 = vpop.f32.mrb[0].mxu0
    %288 = vmatprep.mubr.bf16.mxu0 0
    %289 = vmatmul.mubr.bf16.gmra.mrb[0].mxu0 %v137
    %v290 = vpop.f32.mrb[0].mxu0
    %v291 = vadd.f32 %v84, %v290
    %v292 = vpop.f32.mrb[0].mxu0
    %v293 = vpop.f32.mrb[0].mxu0
    %v294 = vadd.f32 %v84, %v293
    %v295 = vpop.f32.mrb[0].mxu0
    %296 = vmatprep.mubr.bf16.mxu0 0
    %297 = vmatmul.mubr.bf16.gmra.mrb[0].mxu0 %v138
    %v298 = vpop.f32.mrb[0].mxu0
    %v299 = vadd.f32 %v84, %v298
    %v300 = vpop.f32.mrb[0].mxu0
    %v301 = vpop.f32.mrb[0].mxu0
    %v302 = vadd.f32 %v84, %v301
    %v303 = vpop.f32.mrb[0].mxu0
    %304 = vmatprep.mubr.bf16.mxu0 0
    %305 = vmatmul.mubr.bf16.gmra.mrb[0].mxu0 %v139
    %v306 = vpop.f32.mrb[0].mxu0
    %v307 = vadd.f32 %v84, %v306
    %v308 = vpop.f32.mrb[0].mxu0
    %v309 = vpop.f32.mrb[0].mxu0
    %v310 = vadd.f32 %v84, %v309
    %v311 = vpop.f32.mrb[0].mxu0
    %312 = vmatprep.mubr.bf16.mxu0 0
    %313 = vmatmul.mubr.bf16.gmra.mrb[0].mxu0 %v140
    %v314 = vpop.f32.mrb[0].mxu0
    %v315 = vadd.f32 %v84, %v314
    %v316 = vpop.f32.mrb[0].mxu0
    %v317 = vpop.f32.mrb[0].mxu0
    %v318 = vadd.f32 %v84, %v317
    %v319 = vpop.f32.mrb[0].mxu0
    %320 = vdwg.mxu0
    %vm321 = vcmp.ge.f32.partialorder %v235, 0.0
    %vm322 = vcmp.ge.f32.partialorder %v238, 0.0
    %vm323 = vcmp.ge.f32.partialorder %v243, 0.0
    %vm324 = vcmp.ge.f32.partialorder %v246, 0.0
    %vm325 = vcmp.ge.f32.partialorder %v251, 0.0
    %vm326 = vcmp.ge.f32.partialorder %v254, 0.0
    %vm327 = vcmp.ge.f32.partialorder %v259, 0.0
    %vm328 = vcmp.ge.f32.partialorder %v262, 0.0
    %vm329 = vcmp.ge.f32.partialorder %v267, 0.0
    %vm330 = vcmp.ge.f32.partialorder %v270, 0.0
    %vm331 = vcmp.ge.f32.partialorder %v275, 0.0
    %vm332 = vcmp.ge.f32.partialorder %v278, 0.0
    %vm333 = vcmp.ge.f32.partialorder %v283, 0.0
    %vm334 = vcmp.ge.f32.partialorder %v286, 0.0
    %vm335 = vcmp.ge.f32.partialorder %v291, 0.0
    %vm336 = vcmp.ge.f32.partialorder %v294, 0.0
    %vm337 = vcmp.ge.f32.partialorder %v299, 0.0
    %vm338 = vcmp.ge.f32.partialorder %v302, 0.0
    %vm339 = vcmp.ge.f32.partialorder %v307, 0.0
    %vm340 = vcmp.ge.f32.partialorder %v310, 0.0
    %vm341 = vcmp.ge.f32.partialorder %v315, 0.0
    %vm342 = vcmp.ge.f32.partialorder %v318, 0.0
    %v343 = vmul.f32 %v235, 0.1
    %v344 = vmul.f32 %v238, 0.1
    %v345 = vmul.f32 %v243, 0.1
    %v346 = vmul.f32 %v246, 0.1
    %v347 = vmul.f32 %v251, 0.1
    %v348 = vmul.f32 %v254, 0.1
    %v349 = vmul.f32 %v259, 0.1
    %v350 = vmul.f32 %v262, 0.1
    %v351 = vmul.f32 %v267, 0.1
    %v352 = vmul.f32 %v270, 0.1
    %v353 = vmul.f32 %v275, 0.1
    %v354 = vmul.f32 %v278, 0.1
    %v355 = vmul.f32 %v283, 0.1
    %v356 = vmul.f32 %v286, 0.1
    %v357 = vmul.f32 %v291, 0.1
    %v358 = vmul.f32 %v294, 0.1
    %v359 = vmul.f32 %v299, 0.1
    %v360 = vmul.f32 %v302, 0.1
    %v361 = vmul.f32 %v307, 0.1
    %v362 = vmul.f32 %v310, 0.1
    %v363 = vmul.f32 %v315, 0.1
    %v364 = vmul.f32 %v318, 0.1
    %v365 = vsel %vm321, %v235, %v343
    %v366 = vsel %vm322, %v238, %v344
    %v367 = vsel %vm323, %v243, %v345
    %v368 = vsel %vm324, %v246, %v346
    %v369 = vsel %vm325, %v251, %v347
    %v370 = vsel %vm326, %v254, %v348
    %v371 = vsel %vm327, %v259, %v349
    %v372 = vsel %vm328, %v262, %v350
    %v373 = vsel %vm329, %v267, %v351
    %v374 = vsel %vm330, %v270, %v352
    %v375 = vsel %vm331, %v275, %v353
    %v376 = vsel %vm332, %v278, %v354
    %v377 = vsel %vm333, %v283, %v355
    %v378 = vsel %vm334, %v286, %v356
    %v379 = vsel %vm335, %v291, %v357
    %v380 = vsel %vm336, %v294, %v358
    %v381 = vsel %vm337, %v299, %v359
    %v382 = vsel %vm338, %v302, %v360
    %v383 = vsel %vm339, %v307, %v361
    %v384 = vsel %vm340, %v310, %v362
    %v385 = vsel %vm341, %v315, %v363
    %v386 = vsel %vm342, %v318, %v364
    %387 = vst [vmem:[%s3] sm:$0xff] %v365
    %388 = vst [vmem:[%s3 + $0x8] sm:$0xff] %v366
    %389 = vst [vmem:[%s3 + $0x10] sm:$0xff] %v367
    %390 = vst [vmem:[%s3 + $0x18] sm:$0xff] %v368
    %391 = vst [vmem:[%s3 + $0x20] sm:$0xff] %v369
    %392 = vst [vmem:[%s3 + $0x28] sm:$0xff] %v370
    %393 = vst [vmem:[%s3 + $0x30] sm:$0xff] %v371
    %394 = vst [vmem:[%s3 + $0x38] sm:$0xff] %v372
    %395 = vst [vmem:[%s3 + $0x40] sm:$0xff] %v373
    %396 = vst [vmem:[%s3 + $0x48] sm:$0xff] %v374
    %397 = vst [vmem:[%s3 + $0x50] sm:$0xff] %v375
    %398 = vst [vmem:[%s3 + $0x58] sm:$0xff] %v376
    %399 = vst [vmem:[%s3 + $0x60] sm:$0xff] %v377
    %400 = vst [vmem:[%s3 + $0x68] sm:$0xff] %v378
    %401 = vst [vmem:[%s3 + $0x70] sm:$0xff] %v379
    %402 = vst [vmem:[%s3 + $0x78] sm:$0xff] %v380
    %403 = vst [vmem:[%s3 + $0x80] sm:$0xff] %v381
    %404 = vst [vmem:[%s3 + $0x88] sm:$0xff] %v382
    %405 = vst [vmem:[%s3 + $0x90] sm:$0xff] %v383
    %406 = vst [vmem:[%s3 + $0x98] sm:$0xff] %v384
    %407 = vst [vmem:[%s3 + $0xa0] sm:$0xff] %v385
    %408 = vst [vmem:[%s3 + $0xa8] sm:$0xff] %v386
    // Predicated region
    $region22: #{fwd.6} parent=1 // pred_check
      _
    $region23: #{fwd.6} parent=1 // pred_check_branch
      %410 = sbr.rel (0) target = $region25
    $region24: #{fwd.6} parent=1 // pred_region
      _
    $region25: #{fwd.6} parent=1 // pred_fallthru
      _
    // Predicated region
    $region26: #{fwd.6} parent=1 // pred_check
      _
    $region27: #{fwd.6} parent=1 // pred_check_branch
      %412 = sbr.rel (0) target = $region29
    $region28: #{fwd.6} parent=1 // pred_region
      _
    $region29: #{fwd.6} parent=1 // pred_fallthru
      _
    %413 = vsyncpa [#allocation3], 1
    %414 = vsyncpa [#allocation5], 1

// kernel: fwd.7
$region0: #{fwd.7}
  #allocation0 [shape = 'u32[]', space=smem, size = 0x4, offset = 0x4, fixed_abs, tag = 'smem constant byte address 0x4 - core index']
  #allocation1 [shape = 'u32[144,128]{1,0:T(1,128)}', space=vmem, size = 0x12000, scoped, tag = 'internal scratch']
  %s0 = inlined_call_operand.vmem [shape: bf16[64,256], index: 0, kind: input, shape index: {}]
  %s1 = inlined_call_operand.hbm [shape: bf16[256,128], index: 1, kind: input, shape index: {}]
  %s2 = inlined_call_operand.hbm [shape: f32[1,128], index: 2, kind: input, shape index: {}]
  %s3 = inlined_call_operand.vmem [shape: f32[64,128], index: 3, kind: output, shape index: {}]
  %s4 = sld [smem:[#allocation0]]
  $region30: #{fwd.7} parent=0
    _
  %s6 = ssub.s32 1, %s4
  %s7 = scalar_select 0, %s6, %s4
  $region1: #{fwd.7} parent=0
    #allocation2 [shape = 'u8[65536]{0}', space=vmem, size = 0x10000, scoped, tag = 'input window, operand 1, single buffered']
    #allocation3 [shape = 's32[1]{0}', space=sflag, size = 0x4, scoped, tag = 'scoped memory for fwd.7']
    #allocation4 [shape = 'u8[512]{0}', space=vmem, size = 0x400, scoped, tag = 'input window, operand 2, single buffered']
    #allocation5 [shape = 's32[1]{0}', space=sflag, size = 0x4, scoped, tag = 'scoped memory for fwd.7']
    %8 = vsyncpa [#allocation3], 0
    %9 = vsyncpa [#allocation5], 0
    // Predicated region
    $region2: #{fwd.7} parent=1 // pred_check
      _
    $region3: #{fwd.7} parent=1 // pred_check_branch
      %11 = sbr.rel (0) target = $region5
    $region4: #{fwd.7} parent=1 // pred_region
      _
    $region5: #{fwd.7} parent=1 // pred_fallthru
      _
    // Predicated region
    $region6: #{fwd.7} parent=1 // pred_check
      _
    $region7: #{fwd.7} parent=1 // pred_check_branch
      %13 = sbr.rel (0) target = $region9
    $region8: #{fwd.7} parent=1 // pred_region
      %s15 = ssub.s32 2048, 2048
      %16 = vsyncadd [#allocation3], %s15
      %s17 = sshll.u32 [#allocation2], 4
      %s18 = int_to_ptr.vmem [resolvable:$true] %s17
      %23 = dma.hbm_to_vmem [thread:$0]  %s1, 2048, %s18, [#allocation3], 64, 64, 4
    $region9: #{fwd.7} parent=1 // pred_fallthru
      _
    // Predicated region
    $region10: #{fwd.7} parent=1 // pred_check
      _
    $region11: #{fwd.7} parent=1 // pred_check_branch
      %25 = sbr.rel (0) target = $region13
    $region12: #{fwd.7} parent=1 // pred_region
      %s27 = ssub.s32 16, 16
      %28 = vsyncadd [#allocation5], %s27
      %s30 = sshll.u32 [#allocation4], 4
      %s31 = int_to_ptr.vmem [resolvable:$true] %s30
      %33 = dma.hbm_to_vmem [thread:$0]  %s2, 16, %s31, [#allocation5]
    $region13: #{fwd.7} parent=1 // pred_fallthru
      _
    // Predicated region
    $region14: #{fwd.7} parent=1 // pred_check
      _
    $region15: #{fwd.7} parent=1 // pred_check_branch
      %35 = sbr.rel (0) target = $region17
    $region16: #{fwd.7} parent=1 // pred_region
      %36 = dma.done [#allocation3], 2048
    $region17: #{fwd.7} parent=1 // pred_fallthru
      _
    // Predicated region
    $region18: #{fwd.7} parent=1 // pred_check
      _
    $region19: #{fwd.7} parent=1 // pred_check_branch
      %38 = sbr.rel (0) target = $region21
    $region20: #{fwd.7} parent=1 // pred_region
      %39 = dma.done [#allocation5], 16
    $region21: #{fwd.7} parent=1 // pred_fallthru
      _
    %v41 = vld [vmem:[%s0] sm:$0xff]
    %v42 = vld [vmem:[%s0 + $0x8] sm:$0xff]
    %v43 = vld [vmem:[%s0 + $0x10] sm:$0xff]
    %v44 = vld [vmem:[%s0 + $0x18] sm:$0xff]
    %v45 = vld [vmem:[%s0 + $0x20] sm:$0xff]
    %v46 = vld [vmem:[%s0 + $0x28] sm:$0xff]
    %v47 = vld [vmem:[%s0 + $0x30] sm:$0xff]
    %v48 = vld [vmem:[%s0 + $0x38] sm:$0xff]
    %v49 = vld [vmem:[#allocation2] sm:$0xf]
    %v50 = vld [vmem:[#allocation2 + $0x4] sm:$0xf]
    %v51 = vld [vmem:[#allocation2 + $0x8] sm:$0xf]
    %v52 = vld [vmem:[#allocation2 + $0xc] sm:$0xf]
    %v53 = vld [vmem:[#allocation2 + $0x10] sm:$0xf]
    %v54 = vld [vmem:[#allocation2 + $0x14] sm:$0xf]
    %v55 = vld [vmem:[#allocation2 + $0x18] sm:$0xf]
    %v56 = vld [vmem:[#allocation2 + $0x1c] sm:$0xf]
    %v57 = vld [vmem:[#allocation2 + $0x20] sm:$0xf]
    %v58 = vld [vmem:[#allocation2 + $0x24] sm:$0xf]
    %v59 = vld [vmem:[#allocation2 + $0x28] sm:$0xf]
    %v60 = vld [vmem:[#allocation2 + $0x2c] sm:$0xf]
    %v61 = vld [vmem:[#allocation2 + $0x30] sm:$0xf]
    %v62 = vld [vmem:[#allocation2 + $0x34] sm:$0xf]
    %v63 = vld [vmem:[#allocation2 + $0x38] sm:$0xf]
    %v64 = vld [vmem:[#allocation2 + $0x3c] sm:$0xf]
    %v65 = vld [vmem:[#allocation2 + $0x40] sm:$0xf]
    %v66 = vld [vmem:[#allocation2 + $0x44] sm:$0xf]
    %v67 = vld [vmem:[#allocation2 + $0x48] sm:$0xf]
    %v68 = vld [vmem:[#allocation2 + $0x4c] sm:$0xf]
    %v69 = vld [vmem:[#allocation2 + $0x50] sm:$0xf]
    %v70 = vld [vmem:[#allocation2 + $0x54] sm:$0xf]
    %v71 = vld [vmem:[#allocation2 + $0x58] sm:$0xf]
    %v72 = vld [vmem:[#allocation2 + $0x5c] sm:$0xf]
    %v73 = vld [vmem:[#allocation2 + $0x60] sm:$0xf]
    %v74 = vld [vmem:[#allocation2 + $0x64] sm:$0xf]
    %v75 = vld [vmem:[#allocation2 + $0x68] sm:$0xf]
    %v76 = vld [vmem:[#allocation2 + $0x6c] sm:$0xf]
    %v77 = vld [vmem:[#allocation2 + $0x70] sm:$0xf]
    %v78 = vld [vmem:[#allocation2 + $0x74] sm:$0xf]
    %v79 = vld [vmem:[#allocation2 + $0x78] sm:$0xf]
    %v80 = vld [vmem:[#allocation2 + $0x7c] sm:$0xf]
    %v81 = vld [vmem:[#allocation4] sm:$0x1]
    %v83 = vlaneseq
    %v84 = vshrl.u32 %v83, 7
    %v85 = vsub.s32 0, %v84
    %v86 = vrot.slane %v81, %v85
    %v96 = vunpack.c.l.b16 %v41
    %v97 = vunpack.c.h.b16 %v41
    %v98 = vunpack.c.l.b16 %v42
    %v99 = vunpack.c.h.b16 %v42
    %v100 = vunpack.c.l.b16 %v43
    %v101 = vunpack.c.h.b16 %v43
    %v102 = vunpack.c.l.b16 %v44
    %v103 = vunpack.c.h.b16 %v44
    %v104 = vunpack.c.l.b16 %v45
    %v105 = vunpack.c.h.b16 %v45
    %v106 = vunpack.c.l.b16 %v46
    %v107 = vunpack.c.h.b16 %v46
    %v108 = vunpack.c.l.b16 %v47
    %v109 = vunpack.c.h.b16 %v47
    %v110 = vunpack.c.l.b16 %v48
    %v111 = vunpack.c.h.b16 %v48
    %v112 = vpack.c.b16 %v98, %v96
    %v113 = vpack.c.b16 %v99, %v97
    %v114 = vpack.c.b16 %v102, %v100
    %v115 = vpack.c.b16 %v103, %v101
    %v116 = vpack.c.b16 %v106, %v104
    %v117 = vpack.c.b16 %v107, %v105
    %v118 = vpack.c.b16 %v110, %v108
    %v119 = vpack.c.b16 %v111, %v109
    %v160 = vunpack.c.l.b16 %v49
    %v161 = vunpack.c.l.b16 %v50
    %v162 = vunpack.c.l.b16 %v51
    %v163 = vunpack.c.l.b16 %v52
    %v164 = vunpack.c.l.b16 %v53
    %v165 = vunpack.c.l.b16 %v54
    %v166 = vunpack.c.l.b16 %v55
    %v167 = vunpack.c.l.b16 %v56
    %v168 = vunpack.c.l.b16 %v57
    %v169 = vunpack.c.l.b16 %v58
    %v170 = vunpack.c.l.b16 %v59
    %v171 = vunpack.c.l.b16 %v60
    %v172 = vunpack.c.l.b16 %v61
    %v173 = vunpack.c.l.b16 %v62
    %v174 = vunpack.c.l.b16 %v63
    %v175 = vunpack.c.l.b16 %v64
    %v176 = vunpack.c.l.b16 %v65
    %v177 = vunpack.c.l.b16 %v66
    %v178 = vunpack.c.l.b16 %v67
    %v179 = vunpack.c.l.b16 %v68
    %v180 = vunpack.c.l.b16 %v69
    %v181 = vunpack.c.l.b16 %v70
    %v182 = vunpack.c.l.b16 %v71
    %v183 = vunpack.c.l.b16 %v72
    %v184 = vunpack.c.l.b16 %v73
    %v185 = vunpack.c.l.b16 %v74
    %v186 = vunpack.c.l.b16 %v75
    %v187 = vunpack.c.l.b16 %v76
    %v188 = vunpack.c.l.b16 %v77
    %v189 = vunpack.c.l.b16 %v78
    %v190 = vunpack.c.l.b16 %v79
    %v191 = vunpack.c.l.b16 %v80
    %v192 = vpack.c.b16 %v161, %v160
    %v193 = vpack.c.b16 %v163, %v162
    %v194 = vpack.c.b16 %v165, %v164
    %v195 = vpack.c.b16 %v167, %v166
    %v196 = vpack.c.b16 %v169, %v168
    %v197 = vpack.c.b16 %v171, %v170
    %v198 = vpack.c.b16 %v173, %v172
    %v199 = vpack.c.b16 %v175, %v174
    %v200 = vpack.c.b16 %v177, %v176
    %v201 = vpack.c.b16 %v179, %v178
    %v202 = vpack.c.b16 %v181, %v180
    %v203 = vpack.c.b16 %v183, %v182
    %v204 = vpack.c.b16 %v185, %v184
    %v205 = vpack.c.b16 %v187, %v186
    %v206 = vpack.c.b16 %v189, %v188
    %v207 = vpack.c.b16 %v191, %v190
    %224 = vmatprep.subr.bf16.mxu0 0
    %225 = vmatpush1.bf16.msra.mxu0 %v192
    %226 = vmatprep.subr.bf16.mxu0 0
    %227 = vmatpush1.bf16.msra.mxu0 %v193
    %228 = vmatprep.subr.bf16.mxu0 0
    %229 = vmatpush1.bf16.msra.mxu0 %v194
    %230 = vmatprep.subr.bf16.mxu0 0
    %231 = vmatpush1.bf16.msra.mxu0 %v195
    %232 = vmatprep.subr.bf16.mxu0 0
    %233 = vmatpush1.bf16.msra.mxu0 %v196
    %234 = vmatprep.subr.bf16.mxu0 0
    %235 = vmatpush1.bf16.msra.mxu0 %v197
    %236 = vmatprep.subr.bf16.mxu0 0
    %237 = vmatpush1.bf16.msra.mxu0 %v198
    %238 = vmatprep.subr.bf16.mxu0 0
    %239 = vmatpush1.bf16.msra.mxu0 %v199
    %240 = vmatprep.subr.bf16.mxu0 0
    %241 = vmatpush1.bf16.msra.mxu0 %v200
    %242 = vmatprep.subr.bf16.mxu0 0
    %243 = vmatpush1.bf16.msra.mxu0 %v201
    %244 = vmatprep.subr.bf16.mxu0 0
    %245 = vmatpush1.bf16.msra.mxu0 %v202
    %246 = vmatprep.subr.bf16.mxu0 0
    %247 = vmatpush1.bf16.msra.mxu0 %v203
    %248 = vmatprep.subr.bf16.mxu0 0
    %249 = vmatpush1.bf16.msra.mxu0 %v204
    %250 = vmatprep.subr.bf16.mxu0 0
    %251 = vmatpush1.bf16.msra.mxu0 %v205
    %252 = vmatprep.subr.bf16.mxu0 0
    %253 = vmatpush1.bf16.msra.mxu0 %v206
    %254 = vmatprep.subr.bf16.mxu0 0
    %255 = vmatpush1.bf16.msra.mxu0 %v207
    %256 = vmatprep.mubr.bf16.mxu0 %v113
    %257 = vmatmul.mubr.bf16.gmra.mrb[0].mxu0 %v112
    %v258 = vpop.f32.mrb[0].mxu0
    %v259 = vadd.f32 %v86, %v258
    %v260 = vpop.f32.mrb[0].mxu0
    %v261 = vpop.f32.mrb[0].mxu0
    %v262 = vadd.f32 %v86, %v261
    %v263 = vpop.f32.mrb[0].mxu0
    %264 = vmatprep.mubr.bf16.mxu0 %v115
    %265 = vmatmul.mubr.bf16.gmra.mrb[0].mxu0 %v114
    %v266 = vpop.f32.mrb[0].mxu0
    %v267 = vadd.f32 %v86, %v266
    %v268 = vpop.f32.mrb[0].mxu0
    %v269 = vpop.f32.mrb[0].mxu0
    %v270 = vadd.f32 %v86, %v269
    %v271 = vpop.f32.mrb[0].mxu0
    %272 = vmatprep.mubr.bf16.mxu0 %v117
    %273 = vmatmul.mubr.bf16.gmra.mrb[0].mxu0 %v116
    %v274 = vpop.f32.mrb[0].mxu0
    %v275 = vadd.f32 %v86, %v274
    %v276 = vpop.f32.mrb[0].mxu0
    %v277 = vpop.f32.mrb[0].mxu0
    %v278 = vadd.f32 %v86, %v277
    %v279 = vpop.f32.mrb[0].mxu0
    %280 = vmatprep.mubr.bf16.mxu0 %v119
    %281 = vmatmul.mubr.bf16.gmra.mrb[0].mxu0 %v118
    %v282 = vpop.f32.mrb[0].mxu0
    %v283 = vadd.f32 %v86, %v282
    %v284 = vpop.f32.mrb[0].mxu0
    %v285 = vpop.f32.mrb[0].mxu0
    %v286 = vadd.f32 %v86, %v285
    %v287 = vpop.f32.mrb[0].mxu0
    %288 = vdwg.mxu0
    %vm289 = vcmp.ge.f32.partialorder %v259, 0.0
    %vm290 = vcmp.ge.f32.partialorder %v262, 0.0
    %vm291 = vcmp.ge.f32.partialorder %v267, 0.0
    %vm292 = vcmp.ge.f32.partialorder %v270, 0.0
    %vm293 = vcmp.ge.f32.partialorder %v275, 0.0
    %vm294 = vcmp.ge.f32.partialorder %v278, 0.0
    %vm295 = vcmp.ge.f32.partialorder %v283, 0.0
    %vm296 = vcmp.ge.f32.partialorder %v286, 0.0
    %v297 = vmul.f32 %v259, 0.1
    %v298 = vmul.f32 %v262, 0.1
    %v299 = vmul.f32 %v267, 0.1
    %v300 = vmul.f32 %v270, 0.1
    %v301 = vmul.f32 %v275, 0.1
    %v302 = vmul.f32 %v278, 0.1
    %v303 = vmul.f32 %v283, 0.1
    %v304 = vmul.f32 %v286, 0.1
    %v305 = vsel %vm289, %v259, %v297
    %v306 = vsel %vm290, %v262, %v298
    %v307 = vsel %vm291, %v267, %v299
    %v308 = vsel %vm292, %v270, %v300
    %v309 = vsel %vm293, %v275, %v301
    %v310 = vsel %vm294, %v278, %v302
    %v311 = vsel %vm295, %v283, %v303
    %v312 = vsel %vm296, %v286, %v304
    %313 = vst [vmem:[%s3] sm:$0xff] %v305
    %314 = vst [vmem:[%s3 + $0x8] sm:$0xff] %v306
    %315 = vst [vmem:[%s3 + $0x10] sm:$0xff] %v307
    %316 = vst [vmem:[%s3 + $0x18] sm:$0xff] %v308
    %317 = vst [vmem:[%s3 + $0x20] sm:$0xff] %v309
    %318 = vst [vmem:[%s3 + $0x28] sm:$0xff] %v310
    %319 = vst [vmem:[%s3 + $0x30] sm:$0xff] %v311
    %320 = vst [vmem:[%s3 + $0x38] sm:$0xff] %v312
    // Predicated region
    $region22: #{fwd.7} parent=1 // pred_check
      _
    $region23: #{fwd.7} parent=1 // pred_check_branch
      %322 = sbr.rel (0) target = $region25
    $region24: #{fwd.7} parent=1 // pred_region
      _
    $region25: #{fwd.7} parent=1 // pred_fallthru
      _
    // Predicated region
    $region26: #{fwd.7} parent=1 // pred_check
      _
    $region27: #{fwd.7} parent=1 // pred_check_branch
      %324 = sbr.rel (0) target = $region29
    $region28: #{fwd.7} parent=1 // pred_region
      _
    $region29: #{fwd.7} parent=1 // pred_fallthru
      _
    %325 = vsyncpa [#allocation3], 1
    %326 = vsyncpa [#allocation5], 1

// kernel: fwd.8
$region0: #{fwd.8}
  #allocation0 [shape = 'u32[]', space=smem, size = 0x4, offset = 0x4, fixed_abs, tag = 'smem constant byte address 0x4 - core index']
  #allocation1 [shape = 'u32[144,128]{1,0:T(1,128)}', space=vmem, size = 0x12000, scoped, tag = 'internal scratch']
  %s0 = inlined_call_operand.vmem [shape: bf16[32,640], index: 0, kind: input, shape index: {}]
  %s1 = inlined_call_operand.hbm [shape: bf16[640,512], index: 1, kind: input, shape index: {}]
  %s2 = inlined_call_operand.hbm [shape: f32[1,512], index: 2, kind: input, shape index: {}]
  %s3 = inlined_call_operand.vmem [shape: f32[32,512], index: 3, kind: output, shape index: {}]
  %s4 = sld [smem:[#allocation0]]
  $region30: #{fwd.8} parent=0
    _
  %s6 = ssub.s32 1, %s4
  %s7 = scalar_select 0, %s6, %s4
  $region1: #{fwd.8} parent=0
    #allocation2 [shape = 'u8[655360]{0}', space=vmem, size = 0xa0000, scoped, tag = 'input window, operand 1, single buffered']
    #allocation3 [shape = 's32[1]{0}', space=sflag, size = 0x4, scoped, tag = 'scoped memory for fwd.8']
    #allocation4 [shape = 'u8[2048]{0}', space=vmem, size = 0x800, scoped, tag = 'input window, operand 2, single buffered']
    #allocation5 [shape = 's32[1]{0}', space=sflag, size = 0x4, scoped, tag = 'scoped memory for fwd.8']
    %8 = vsyncpa [#allocation3], 0
    %9 = vsyncpa [#allocation5], 0
    // Predicated region
    $region2: #{fwd.8} parent=1 // pred_check
      _
    $region3: #{fwd.8} parent=1 // pred_check_branch
      %11 = sbr.rel (0) target = $region5
    $region4: #{fwd.8} parent=1 // pred_region
      _
    $region5: #{fwd.8} parent=1 // pred_fallthru
      _
    // Predicated region
    $region6: #{fwd.8} parent=1 // pred_check
      _
    $region7: #{fwd.8} parent=1 // pred_check_branch
      %13 = sbr.rel (0) target = $region9
    $region8: #{fwd.8} parent=1 // pred_region
      %s15 = ssub.s32 20480, 20480
      %16 = vsyncadd [#allocation3], %s15
      %s17 = sshll.u32 [#allocation2], 4
      %s18 = int_to_ptr.vmem [resolvable:$true] %s17
      %23 = dma.hbm_to_vmem [thread:$0]  %s1, 20480, %s18, [#allocation3], 256, 256, 16
    $region9: #{fwd.8} parent=1 // pred_fallthru
      _
    // Predicated region
    $region10: #{fwd.8} parent=1 // pred_check
      _
    $region11: #{fwd.8} parent=1 // pred_check_branch
      %25 = sbr.rel (0) target = $region13
    $region12: #{fwd.8} parent=1 // pred_region
      %s27 = ssub.s32 64, 64
      %28 = vsyncadd [#allocation5], %s27
      %s30 = sshll.u32 [#allocation4], 4
      %s31 = int_to_ptr.vmem [resolvable:$true] %s30
      %33 = dma.hbm_to_vmem [thread:$0]  %s2, 64, %s31, [#allocation5]
    $region13: #{fwd.8} parent=1 // pred_fallthru
      _
    // Predicated region
    $region14: #{fwd.8} parent=1 // pred_check
      _
    $region15: #{fwd.8} parent=1 // pred_check_branch
      %35 = sbr.rel (0) target = $region17
    $region16: #{fwd.8} parent=1 // pred_region
      %36 = dma.done [#allocation3], 20480
    $region17: #{fwd.8} parent=1 // pred_fallthru
      _
    // Predicated region
    $region18: #{fwd.8} parent=1 // pred_check
      _
    $region19: #{fwd.8} parent=1 // pred_check_branch
      %38 = sbr.rel (0) target = $region21
    $region20: #{fwd.8} parent=1 // pred_region
      %39 = dma.done [#allocation5], 64
    $region21: #{fwd.8} parent=1 // pred_fallthru
      _
    %v41 = vld [vmem:[%s0] sm:$0xff]
    %v42 = vld [vmem:[%s0 + $0x8] sm:$0xff]
    %v43 = vld [vmem:[%s0 + $0x10] sm:$0xf]
    %v44 = vld [vmem:[%s0 + $0x14] sm:$0xff]
    %v45 = vld [vmem:[%s0 + $0x1c] sm:$0xff]
    %v46 = vld [vmem:[%s0 + $0x24] sm:$0xf]
    %v47 = vld [vmem:[%s0 + $0x28] sm:$0xff]
    %v48 = vld [vmem:[%s0 + $0x30] sm:$0xff]
    %v49 = vld [vmem:[%s0 + $0x38] sm:$0xf]
    %v50 = vld [vmem:[%s0 + $0x3c] sm:$0xff]
    %v51 = vld [vmem:[%s0 + $0x44] sm:$0xff]
    %v52 = vld [vmem:[%s0 + $0x4c] sm:$0xf]
    %v53 = vld [vmem:[#allocation2] sm:$0xff]
    %v54 = vld [vmem:[#allocation2 + $0x8] sm:$0xff]
    %v55 = vld [vmem:[#allocation2 + $0x10] sm:$0xff]
    %v56 = vld [vmem:[#allocation2 + $0x18] sm:$0xff]
    %v57 = vld [vmem:[#allocation2 + $0x20] sm:$0xff]
    %v58 = vld [vmem:[#allocation2 + $0x28] sm:$0xff]
    %v59 = vld [vmem:[#allocation2 + $0x30] sm:$0xff]
    %v60 = vld [vmem:[#allocation2 + $0x38] sm:$0xff]
    %v61 = vld [vmem:[#allocation2 + $0x40] sm:$0xff]
    %v62 = vld [vmem:[#allocation2 + $0x48] sm:$0xff]
    %v63 = vld [vmem:[#allocation2 + $0x50] sm:$0xff]
    %v64 = vld [vmem:[#allocation2 + $0x58] sm:$0xff]
    %v65 = vld [vmem:[#allocation2 + $0x60] sm:$0xff]
    %v66 = vld [vmem:[#allocation2 + $0x68] sm:$0xff]
    %v67 = vld [vmem:[#allocation2 + $0x70] sm:$0xff]
    %v68 = vld [vmem:[#allocation2 + $0x78] sm:$0xff]
    %v69 = vld [vmem:[#allocation2 + $0x80] sm:$0xff]
    %v70 = vld [vmem:[#allocation2 + $0x88] sm:$0xff]
    %v71 = vld [vmem:[#allocation2 + $0x90] sm:$0xff]
    %v72 = vld [vmem:[#allocation2 + $0x98] sm:$0xff]
    %v73 = vld [vmem:[#allocation2 + $0xa0] sm:$0xff]
    %v74 = vld [vmem:[#allocation2 + $0xa8] sm:$0xff]
    %v75 = vld [vmem:[#allocation2 + $0xb0] sm:$0xff]
    %v76 = vld [vmem:[#allocation2 + $0xb8] sm:$0xff]
    %v77 = vld [vmem:[#allocation2 + $0xc0] sm:$0xff]
    %v78 = vld [vmem:[#allocation2 + $0xc8] sm:$0xff]
    %v79 = vld [vmem:[#allocation2 + $0xd0] sm:$0xff]
    %v80 = vld [vmem:[#allocation2 + $0xd8] sm:$0xff]
    %v81 = vld [vmem:[#allocation2 + $0xe0] sm:$0xff]
    %v82 = vld [vmem:[#allocation2 + $0xe8] sm:$0xff]
    %v83 = vld [vmem:[#allocation2 + $0xf0] sm:$0xff]
    %v84 = vld [vmem:[#allocation2 + $0xf8] sm:$0xff]
    %v85 = vld [vmem:[#allocation2 + $0x100] sm:$0xff]
    %v86 = vld [vmem:[#allocation2 + $0x108] sm:$0xff]
    %v87 = vld [vmem:[#allocation2 + $0x110] sm:$0xff]
    %v88 = vld [vmem:[#allocation2 + $0x118] sm:$0xff]
    %v89 = vld [vmem:[#allocation2 + $0x120] sm:$0xff]
    %v90 = vld [vmem:[#allocation2 + $0x128] sm:$0xff]
    %v91 = vld [vmem:[#allocation2 + $0x130] sm:$0xff]
    %v92 = vld [vmem:[#allocation2 + $0x138] sm:$0xff]
    %v93 = vld [vmem:[#allocation2 + $0x140] sm:$0xff]
    %v94 = vld [vmem:[#allocation2 + $0x148] sm:$0xff]
    %v95 = vld [vmem:[#allocation2 + $0x150] sm:$0xff]
    %v96 = vld [vmem:[#allocation2 + $0x158] sm:$0xff]
    %v97 = vld [vmem:[#allocation2 + $0x160] sm:$0xff]
    %v98 = vld [vmem:[#allocation2 + $0x168] sm:$0xff]
    %v99 = vld [vmem:[#allocation2 + $0x170] sm:$0xff]
    %v100 = vld [vmem:[#allocation2 + $0x178] sm:$0xff]
    %v101 = vld [vmem:[#allocation2 + $0x180] sm:$0xff]
    %v102 = vld [vmem:[#allocation2 + $0x188] sm:$0xff]
    %v103 = vld [vmem:[#allocation2 + $0x190] sm:$0xff]
    %v104 = vld [vmem:[#allocation2 + $0x198] sm:$0xff]
    %v105 = vld [vmem:[#allocation2 + $0x1a0] sm:$0xff]
    %v106 = vld [vmem:[#allocation2 + $0x1a8] sm:$0xff]
    %v107 = vld [vmem:[#allocation2 + $0x1b0] sm:$0xff]
    %v108 = vld [vmem:[#allocation2 + $0x1b8] sm:$0xff]
    %v109 = vld [vmem:[#allocation2 + $0x1c0] sm:$0xff]
    %v110 = vld [vmem:[#allocation2 + $0x1c8] sm:$0xff]
    %v111 = vld [vmem:[#allocation2 + $0x1d0] sm:$0xff]
    %v112 = vld [vmem:[#allocation2 + $0x1d8] sm:$0xff]
    %v113 = vld [vmem:[#allocation2 + $0x1e0] sm:$0xff]
    %v114 = vld [vmem:[#allocation2 + $0x1e8] sm:$0xff]
    %v115 = vld [vmem:[#allocation2 + $0x1f0] sm:$0xff]
    %v116 = vld [vmem:[#allocation2 + $0x1f8] sm:$0xff]
    %v117 = vld [vmem:[#allocation2 + $0x200] sm:$0xff]
    %v118 = vld [vmem:[#allocation2 + $0x208] sm:$0xff]
    %v119 = vld [vmem:[#allocation2 + $0x210] sm:$0xff]
    %v120 = vld [vmem:[#allocation2 + $0x218] sm:$0xff]
    %v121 = vld [vmem:[#allocation2 + $0x220] sm:$0xff]
    %v122 = vld [vmem:[#allocation2 + $0x228] sm:$0xff]
    %v123 = vld [vmem:[#allocation2 + $0x230] sm:$0xff]
    %v124 = vld [vmem:[#allocation2 + $0x238] sm:$0xff]
    %v125 = vld [vmem:[#allocation2 + $0x240] sm:$0xff]
    %v126 = vld [vmem:[#allocation2 + $0x248] sm:$0xff]
    %v127 = vld [vmem:[#allocation2 + $0x250] sm:$0xff]
    %v128 = vld [vmem:[#allocation2 + $0x258] sm:$0xff]
    %v129 = vld [vmem:[#allocation2 + $0x260] sm:$0xff]
    %v130 = vld [vmem:[#allocation2 + $0x268] sm:$0xff]
    %v131 = vld [vmem:[#allocation2 + $0x270] sm:$0xff]
    %v132 = vld [vmem:[#allocation2 + $0x278] sm:$0xff]
    %v133 = vld [vmem:[#allocation2 + $0x280] sm:$0xff]
    %v134 = vld [vmem:[#allocation2 + $0x288] sm:$0xff]
    %v135 = vld [vmem:[#allocation2 + $0x290] sm:$0xff]
    %v136 = vld [vmem:[#allocation2 + $0x298] sm:$0xff]
    %v137 = vld [vmem:[#allocation2 + $0x2a0] sm:$0xff]
    %v138 = vld [vmem:[#allocation2 + $0x2a8] sm:$0xff]
    %v139 = vld [vmem:[#allocation2 + $0x2b0] sm:$0xff]
    %v140 = vld [vmem:[#allocation2 + $0x2b8] sm:$0xff]
    %v141 = vld [vmem:[#allocation2 + $0x2c0] sm:$0xff]
    %v142 = vld [vmem:[#allocation2 + $0x2c8] sm:$0xff]
    %v143 = vld [vmem:[#allocation2 + $0x2d0] sm:$0xff]
    %v144 = vld [vmem:[#allocation2 + $0x2d8] sm:$0xff]
    %v145 = vld [vmem:[#allocation2 + $0x2e0] sm:$0xff]
    %v146 = vld [vmem:[#allocation2 + $0x2e8] sm:$0xff]
    %v147 = vld [vmem:[#allocation2 + $0x2f0] sm:$0xff]
    %v148 = vld [vmem:[#allocation2 + $0x2f8] sm:$0xff]
    %v149 = vld [vmem:[#allocation2 + $0x300] sm:$0xff]
    %v150 = vld [vmem:[#allocation2 + $0x308] sm:$0xff]
    %v151 = vld [vmem:[#allocation2 + $0x310] sm:$0xff]
    %v152 = vld [vmem:[#allocation2 + $0x318] sm:$0xff]
    %v153 = vld [vmem:[#allocation2 + $0x320] sm:$0xff]
    %v154 = vld [vmem:[#allocation2 + $0x328] sm:$0xff]
    %v155 = vld [vmem:[#allocation2 + $0x330] sm:$0xff]
    %v156 = vld [vmem:[#allocation2 + $0x338] sm:$0xff]
    %v157 = vld [vmem:[#allocation2 + $0x340] sm:$0xff]
    %v158 = vld [vmem:[#allocation2 + $0x348] sm:$0xff]
    %v159 = vld [vmem:[#allocation2 + $0x350] sm:$0xff]
    %v160 = vld [vmem:[#allocation2 + $0x358] sm:$0xff]
    %v161 = vld [vmem:[#allocation2 + $0x360] sm:$0xff]
    %v162 = vld [vmem:[#allocation2 + $0x368] sm:$0xff]
    %v163 = vld [vmem:[#allocation2 + $0x370] sm:$0xff]
    %v164 = vld [vmem:[#allocation2 + $0x378] sm:$0xff]
    %v165 = vld [vmem:[#allocation2 + $0x380] sm:$0xff]
    %v166 = vld [vmem:[#allocation2 + $0x388] sm:$0xff]
    %v167 = vld [vmem:[#allocation2 + $0x390] sm:$0xff]
    %v168 = vld [vmem:[#allocation2 + $0x398] sm:$0xff]
    %v169 = vld [vmem:[#allocation2 + $0x3a0] sm:$0xff]
    %v170 = vld [vmem:[#allocation2 + $0x3a8] sm:$0xff]
    %v171 = vld [vmem:[#allocation2 + $0x3b0] sm:$0xff]
    %v172 = vld [vmem:[#allocation2 + $0x3b8] sm:$0xff]
    %v173 = vld [vmem:[#allocation2 + $0x3c0] sm:$0xff]
    %v174 = vld [vmem:[#allocation2 + $0x3c8] sm:$0xff]
    %v175 = vld [vmem:[#allocation2 + $0x3d0] sm:$0xff]
    %v176 = vld [vmem:[#allocation2 + $0x3d8] sm:$0xff]
    %v177 = vld [vmem:[#allocation2 + $0x3e0] sm:$0xff]
    %v178 = vld [vmem:[#allocation2 + $0x3e8] sm:$0xff]
    %v179 = vld [vmem:[#allocation2 + $0x3f0] sm:$0xff]
    %v180 = vld [vmem:[#allocation2 + $0x3f8] sm:$0xff]
    %v181 = vld [vmem:[#allocation2 + $0x400] sm:$0xff]
    %v182 = vld [vmem:[#allocation2 + $0x408] sm:$0xff]
    %v183 = vld [vmem:[#allocation2 + $0x410] sm:$0xff]
    %v184 = vld [vmem:[#allocation2 + $0x418] sm:$0xff]
    %v185 = vld [vmem:[#allocation2 + $0x420] sm:$0xff]
    %v186 = vld [vmem:[#allocation2 + $0x428] sm:$0xff]
    %v187 = vld [vmem:[#allocation2 + $0x430] sm:$0xff]
    %v188 = vld [vmem:[#allocation2 + $0x438] sm:$0xff]
    %v189 = vld [vmem:[#allocation2 + $0x440] sm:$0xff]
    %v190 = vld [vmem:[#allocation2 + $0x448] sm:$0xff]
    %v191 = vld [vmem:[#allocation2 + $0x450] sm:$0xff]
    %v192 = vld [vmem:[#allocation2 + $0x458] sm:$0xff]
    %v193 = vld [vmem:[#allocation2 + $0x460] sm:$0xff]
    %v194 = vld [vmem:[#allocation2 + $0x468] sm:$0xff]
    %v195 = vld [vmem:[#allocation2 + $0x470] sm:$0xff]
    %v196 = vld [vmem:[#allocation2 + $0x478] sm:$0xff]
    %v197 = vld [vmem:[#allocation2 + $0x480] sm:$0xff]
    %v198 = vld [vmem:[#allocation2 + $0x488] sm:$0xff]
    %v199 = vld [vmem:[#allocation2 + $0x490] sm:$0xff]
    %v200 = vld [vmem:[#allocation2 + $0x498] sm:$0xff]
    %v201 = vld [vmem:[#allocation2 + $0x4a0] sm:$0xff]
    %v202 = vld [vmem:[#allocation2 + $0x4a8] sm:$0xff]
    %v203 = vld [vmem:[#allocation2 + $0x4b0] sm:$0xff]
    %v204 = vld [vmem:[#allocation2 + $0x4b8] sm:$0xff]
    %v205 = vld [vmem:[#allocation2 + $0x4c0] sm:$0xff]
    %v206 = vld [vmem:[#allocation2 + $0x4c8] sm:$0xff]
    %v207 = vld [vmem:[#allocation2 + $0x4d0] sm:$0xff]
    %v208 = vld [vmem:[#allocation2 + $0x4d8] sm:$0xff]
    %v209 = vld [vmem:[#allocation2 + $0x4e0] sm:$0xff]
    %v210 = vld [vmem:[#allocation2 + $0x4e8] sm:$0xff]
    %v211 = vld [vmem:[#allocation2 + $0x4f0] sm:$0xff]
    %v212 = vld [vmem:[#allocation2 + $0x4f8] sm:$0xff]
    %v213 = vld [vmem:[#allocation4] sm:$0xf]
    %v215 = vlaneseq
    %v216 = vshrl.u32 %v215, 7
    %v217 = vsub.s32 0, %v216
    %v218 = vrot.slane %v213, %v217
    %v219 = vlaneseq
    %v220 = vshrl.u32 %v219, 7
    %v221 = vsub.s32 1, %v220
    %v222 = vrot.slane %v213, %v221
    %v223 = vlaneseq
    %v224 = vshrl.u32 %v223, 7
    %v225 = vsub.s32 2, %v224
    %v226 = vrot.slane %v213, %v225
    %v227 = vlaneseq
    %v228 = vshrl.u32 %v227, 7
    %v229 = vsub.s32 3, %v228
    %v230 = vrot.slane %v213, %v229
    %v247 = vunpack.c.l.b16 %v41
    %v248 = vunpack.c.h.b16 %v41
    %v249 = vunpack.c.l.b16 %v42
    %v250 = vunpack.c.h.b16 %v42
    %v251 = vunpack.c.l.b16 %v43
    %v252 = vunpack.c.l.b16 %v44
    %v253 = vunpack.c.h.b16 %v44
    %v254 = vunpack.c.l.b16 %v45
    %v255 = vunpack.c.h.b16 %v45
    %v256 = vunpack.c.l.b16 %v46
    %v257 = vunpack.c.l.b16 %v47
    %v258 = vunpack.c.h.b16 %v47
    %v259 = vunpack.c.l.b16 %v48
    %v260 = vunpack.c.h.b16 %v48
    %v261 = vunpack.c.l.b16 %v49
    %v262 = vunpack.c.l.b16 %v50
    %v263 = vunpack.c.h.b16 %v50
    %v264 = vunpack.c.l.b16 %v51
    %v265 = vunpack.c.h.b16 %v51
    %v266 = vunpack.c.l.b16 %v52
    %v267 = vpack.c.b16 %v252, %v247
    %v268 = vpack.c.b16 %v253, %v248
    %v269 = vpack.c.b16 %v254, %v249
    %v270 = vpack.c.b16 %v255, %v250
    %v271 = vpack.c.b16 %v256, %v251
    %v272 = vpack.c.b16 %v262, %v257
    %v273 = vpack.c.b16 %v263, %v258
    %v274 = vpack.c.b16 %v264, %v259
    %v275 = vpack.c.b16 %v265, %v260
    %v276 = vpack.c.b16 %v266, %v261
    %v447 = vunpack.c.l.b16 %v53
    %v448 = vunpack.c.h.b16 %v53
    %v449 = vunpack.c.l.b16 %v54
    %v450 = vunpack.c.h.b16 %v54
    %v451 = vunpack.c.l.b16 %v55
    %v452 = vunpack.c.h.b16 %v55
    %v453 = vunpack.c.l.b16 %v56
    %v454 = vunpack.c.h.b16 %v56
    %v455 = vunpack.c.l.b16 %v57
    %v456 = vunpack.c.h.b16 %v57
    %v457 = vunpack.c.l.b16 %v58
    %v458 = vunpack.c.h.b16 %v58
    %v459 = vunpack.c.l.b16 %v59
    %v460 = vunpack.c.h.b16 %v59
    %v461 = vunpack.c.l.b16 %v60
    %v462 = vunpack.c.h.b16 %v60
    %v463 = vunpack.c.l.b16 %v61
    %v464 = vunpack.c.h.b16 %v61
    %v465 = vunpack.c.l.b16 %v62
    %v466 = vunpack.c.h.b16 %v62
    %v467 = vunpack.c.l.b16 %v63
    %v468 = vunpack.c.h.b16 %v63
    %v469 = vunpack.c.l.b16 %v64
    %v470 = vunpack.c.h.b16 %v64
    %v471 = vunpack.c.l.b16 %v65
    %v472 = vunpack.c.h.b16 %v65
    %v473 = vunpack.c.l.b16 %v66
    %v474 = vunpack.c.h.b16 %v66
    %v475 = vunpack.c.l.b16 %v67
    %v476 = vunpack.c.h.b16 %v67
    %v477 = vunpack.c.l.b16 %v68
    %v478 = vunpack.c.h.b16 %v68
    %v479 = vunpack.c.l.b16 %v69
    %v480 = vunpack.c.h.b16 %v69
    %v481 = vunpack.c.l.b16 %v70
    %v482 = vunpack.c.h.b16 %v70
    %v483 = vunpack.c.l.b16 %v71
    %v484 = vunpack.c.h.b16 %v71
    %v485 = vunpack.c.l.b16 %v72
    %v486 = vunpack.c.h.b16 %v72
    %v487 = vunpack.c.l.b16 %v73
    %v488 = vunpack.c.h.b16 %v73
    %v489 = vunpack.c.l.b16 %v74
    %v490 = vunpack.c.h.b16 %v74
    %v491 = vunpack.c.l.b16 %v75
    %v492 = vunpack.c.h.b16 %v75
    %v493 = vunpack.c.l.b16 %v76
    %v494 = vunpack.c.h.b16 %v76
    %v495 = vunpack.c.l.b16 %v77
    %v496 = vunpack.c.h.b16 %v77
    %v497 = vunpack.c.l.b16 %v78
    %v498 = vunpack.c.h.b16 %v78
    %v499 = vunpack.c.l.b16 %v79
    %v500 = vunpack.c.h.b16 %v79
    %v501 = vunpack.c.l.b16 %v80
    %v502 = vunpack.c.h.b16 %v80
    %v503 = vunpack.c.l.b16 %v81
    %v504 = vunpack.c.h.b16 %v81
    %v505 = vunpack.c.l.b16 %v82
    %v506 = vunpack.c.h.b16 %v82
    %v507 = vunpack.c.l.b16 %v83
    %v508 = vunpack.c.h.b16 %v83
    %v509 = vunpack.c.l.b16 %v84
    %v510 = vunpack.c.h.b16 %v84
    %v511 = vunpack.c.l.b16 %v85
    %v512 = vunpack.c.h.b16 %v85
    %v513 = vunpack.c.l.b16 %v86
    %v514 = vunpack.c.h.b16 %v86
    %v515 = vunpack.c.l.b16 %v87
    %v516 = vunpack.c.h.b16 %v87
    %v517 = vunpack.c.l.b16 %v88
    %v518 = vunpack.c.h.b16 %v88
    %v519 = vunpack.c.l.b16 %v89
    %v520 = vunpack.c.h.b16 %v89
    %v521 = vunpack.c.l.b16 %v90
    %v522 = vunpack.c.h.b16 %v90
    %v523 = vunpack.c.l.b16 %v91
    %v524 = vunpack.c.h.b16 %v91
    %v525 = vunpack.c.l.b16 %v92
    %v526 = vunpack.c.h.b16 %v92
    %v527 = vunpack.c.l.b16 %v93
    %v528 = vunpack.c.h.b16 %v93
    %v529 = vunpack.c.l.b16 %v94
    %v530 = vunpack.c.h.b16 %v94
    %v531 = vunpack.c.l.b16 %v95
    %v532 = vunpack.c.h.b16 %v95
    %v533 = vunpack.c.l.b16 %v96
    %v534 = vunpack.c.h.b16 %v96
    %v535 = vunpack.c.l.b16 %v97
    %v536 = vunpack.c.h.b16 %v97
    %v537 = vunpack.c.l.b16 %v98
    %v538 = vunpack.c.h.b16 %v98
    %v539 = vunpack.c.l.b16 %v99
    %v540 = vunpack.c.h.b16 %v99
    %v541 = vunpack.c.l.b16 %v100
    %v542 = vunpack.c.h.b16 %v100
    %v543 = vunpack.c.l.b16 %v101
    %v544 = vunpack.c.h.b16 %v101
    %v545 = vunpack.c.l.b16 %v102
    %v546 = vunpack.c.h.b16 %v102
    %v547 = vunpack.c.l.b16 %v103
    %v548 = vunpack.c.h.b16 %v103
    %v549 = vunpack.c.l.b16 %v104
    %v550 = vunpack.c.h.b16 %v104
    %v551 = vunpack.c.l.b16 %v105
    %v552 = vunpack.c.h.b16 %v105
    %v553 = vunpack.c.l.b16 %v106
    %v554 = vunpack.c.h.b16 %v106
    %v555 = vunpack.c.l.b16 %v107
    %v556 = vunpack.c.h.b16 %v107
    %v557 = vunpack.c.l.b16 %v108
    %v558 = vunpack.c.h.b16 %v108
    %v559 = vunpack.c.l.b16 %v109
    %v560 = vunpack.c.h.b16 %v109
    %v561 = vunpack.c.l.b16 %v110
    %v562 = vunpack.c.h.b16 %v110
    %v563 = vunpack.c.l.b16 %v111
    %v564 = vunpack.c.h.b16 %v111
    %v565 = vunpack.c.l.b16 %v112
    %v566 = vunpack.c.h.b16 %v112
    %v567 = vunpack.c.l.b16 %v113
    %v568 = vunpack.c.h.b16 %v113
    %v569 = vunpack.c.l.b16 %v114
    %v570 = vunpack.c.h.b16 %v114
    %v571 = vunpack.c.l.b16 %v115
    %v572 = vunpack.c.h.b16 %v115
    %v573 = vunpack.c.l.b16 %v116
    %v574 = vunpack.c.h.b16 %v116
    %v575 = vunpack.c.l.b16 %v117
    %v576 = vunpack.c.h.b16 %v117
    %v577 = vunpack.c.l.b16 %v118
    %v578 = vunpack.c.h.b16 %v118
    %v579 = vunpack.c.l.b16 %v119
    %v580 = vunpack.c.h.b16 %v119
    %v581 = vunpack.c.l.b16 %v120
    %v582 = vunpack.c.h.b16 %v120
    %v583 = vunpack.c.l.b16 %v121
    %v584 = vunpack.c.h.b16 %v121
    %v585 = vunpack.c.l.b16 %v122
    %v586 = vunpack.c.h.b16 %v122
    %v587 = vunpack.c.l.b16 %v123
    %v588 = vunpack.c.h.b16 %v123
    %v589 = vunpack.c.l.b16 %v124
    %v590 = vunpack.c.h.b16 %v124
    %v591 = vunpack.c.l.b16 %v125
    %v592 = vunpack.c.h.b16 %v125
    %v593 = vunpack.c.l.b16 %v126
    %v594 = vunpack.c.h.b16 %v126
    %v595 = vunpack.c.l.b16 %v127
    %v596 = vunpack.c.h.b16 %v127
    %v597 = vunpack.c.l.b16 %v128
    %v598 = vunpack.c.h.b16 %v128
    %v599 = vunpack.c.l.b16 %v129
    %v600 = vunpack.c.h.b16 %v129
    %v601 = vunpack.c.l.b16 %v130
    %v602 = vunpack.c.h.b16 %v130
    %v603 = vunpack.c.l.b16 %v131
    %v604 = vunpack.c.h.b16 %v131
    %v605 = vunpack.c.l.b16 %v132
    %v606 = vunpack.c.h.b16 %v132
    %v607 = vunpack.c.l.b16 %v133
    %v608 = vunpack.c.h.b16 %v133
    %v609 = vunpack.c.l.b16 %v134
    %v610 = vunpack.c.h.b16 %v134
    %v611 = vunpack.c.l.b16 %v135
    %v612 = vunpack.c.h.b16 %v135
    %v613 = vunpack.c.l.b16 %v136
    %v614 = vunpack.c.h.b16 %v136
    %v615 = vunpack.c.l.b16 %v137
    %v616 = vunpack.c.h.b16 %v137
    %v617 = vunpack.c.l.b16 %v138
    %v618 = vunpack.c.h.b16 %v138
    %v619 = vunpack.c.l.b16 %v139
    %v620 = vunpack.c.h.b16 %v139
    %v621 = vunpack.c.l.b16 %v140
    %v622 = vunpack.c.h.b16 %v140
    %v623 = vunpack.c.l.b16 %v141
    %v624 = vunpack.c.h.b16 %v141
    %v625 = vunpack.c.l.b16 %v142
    %v626 = vunpack.c.h.b16 %v142
    %v627 = vunpack.c.l.b16 %v143
    %v628 = vunpack.c.h.b16 %v143
    %v629 = vunpack.c.l.b16 %v144
    %v630 = vunpack.c.h.b16 %v144
    %v631 = vunpack.c.l.b16 %v145
    %v632 = vunpack.c.h.b16 %v145
    %v633 = vunpack.c.l.b16 %v146
    %v634 = vunpack.c.h.b16 %v146
    %v635 = vunpack.c.l.b16 %v147
    %v636 = vunpack.c.h.b16 %v147
    %v637 = vunpack.c.l.b16 %v148
    %v638 = vunpack.c.h.b16 %v148
    %v639 = vunpack.c.l.b16 %v149
    %v640 = vunpack.c.h.b16 %v149
    %v641 = vunpack.c.l.b16 %v150
    %v642 = vunpack.c.h.b16 %v150
    %v643 = vunpack.c.l.b16 %v151
    %v644 = vunpack.c.h.b16 %v151
    %v645 = vunpack.c.l.b16 %v152
    %v646 = vunpack.c.h.b16 %v152
    %v647 = vunpack.c.l.b16 %v153
    %v648 = vunpack.c.h.b16 %v153
    %v649 = vunpack.c.l.b16 %v154
    %v650 = vunpack.c.h.b16 %v154
    %v651 = vunpack.c.l.b16 %v155
    %v652 = vunpack.c.h.b16 %v155
    %v653 = vunpack.c.l.b16 %v156
    %v654 = vunpack.c.h.b16 %v156
    %v655 = vunpack.c.l.b16 %v157
    %v656 = vunpack.c.h.b16 %v157
    %v657 = vunpack.c.l.b16 %v158
    %v658 = vunpack.c.h.b16 %v158
    %v659 = vunpack.c.l.b16 %v159
    %v660 = vunpack.c.h.b16 %v159
    %v661 = vunpack.c.l.b16 %v160
    %v662 = vunpack.c.h.b16 %v160
    %v663 = vunpack.c.l.b16 %v161
    %v664 = vunpack.c.h.b16 %v161
    %v665 = vunpack.c.l.b16 %v162
    %v666 = vunpack.c.h.b16 %v162
    %v667 = vunpack.c.l.b16 %v163
    %v668 = vunpack.c.h.b16 %v163
    %v669 = vunpack.c.l.b16 %v164
    %v670 = vunpack.c.h.b16 %v164
    %v671 = vunpack.c.l.b16 %v165
    %v672 = vunpack.c.h.b16 %v165
    %v673 = vunpack.c.l.b16 %v166
    %v674 = vunpack.c.h.b16 %v166
    %v675 = vunpack.c.l.b16 %v167
    %v676 = vunpack.c.h.b16 %v167
    %v677 = vunpack.c.l.b16 %v168
    %v678 = vunpack.c.h.b16 %v168
    %v679 = vunpack.c.l.b16 %v169
    %v680 = vunpack.c.h.b16 %v169
    %v681 = vunpack.c.l.b16 %v170
    %v682 = vunpack.c.h.b16 %v170
    %v683 = vunpack.c.l.b16 %v171
    %v684 = vunpack.c.h.b16 %v171
    %v685 = vunpack.c.l.b16 %v172
    %v686 = vunpack.c.h.b16 %v172
    %v687 = vunpack.c.l.b16 %v173
    %v688 = vunpack.c.h.b16 %v173
    %v689 = vunpack.c.l.b16 %v174
    %v690 = vunpack.c.h.b16 %v174
    %v691 = vunpack.c.l.b16 %v175
    %v692 = vunpack.c.h.b16 %v175
    %v693 = vunpack.c.l.b16 %v176
    %v694 = vunpack.c.h.b16 %v176
    %v695 = vunpack.c.l.b16 %v177
    %v696 = vunpack.c.h.b16 %v177
    %v697 = vunpack.c.l.b16 %v178
    %v698 = vunpack.c.h.b16 %v178
    %v699 = vunpack.c.l.b16 %v179
    %v700 = vunpack.c.h.b16 %v179
    %v701 = vunpack.c.l.b16 %v180
    %v702 = vunpack.c.h.b16 %v180
    %v703 = vunpack.c.l.b16 %v181
    %v704 = vunpack.c.h.b16 %v181
    %v705 = vunpack.c.l.b16 %v182
    %v706 = vunpack.c.h.b16 %v182
    %v707 = vunpack.c.l.b16 %v183
    %v708 = vunpack.c.h.b16 %v183
    %v709 = vunpack.c.l.b16 %v184
    %v710 = vunpack.c.h.b16 %v184
    %v711 = vunpack.c.l.b16 %v185
    %v712 = vunpack.c.h.b16 %v185
    %v713 = vunpack.c.l.b16 %v186
    %v714 = vunpack.c.h.b16 %v186
    %v715 = vunpack.c.l.b16 %v187
    %v716 = vunpack.c.h.b16 %v187
    %v717 = vunpack.c.l.b16 %v188
    %v718 = vunpack.c.h.b16 %v188
    %v719 = vunpack.c.l.b16 %v189
    %v720 = vunpack.c.h.b16 %v189
    %v721 = vunpack.c.l.b16 %v190
    %v722 = vunpack.c.h.b16 %v190
    %v723 = vunpack.c.l.b16 %v191
    %v724 = vunpack.c.h.b16 %v191
    %v725 = vunpack.c.l.b16 %v192
    %v726 = vunpack.c.h.b16 %v192
    %v727 = vunpack.c.l.b16 %v193
    %v728 = vunpack.c.h.b16 %v193
    %v729 = vunpack.c.l.b16 %v194
    %v730 = vunpack.c.h.b16 %v194
    %v731 = vunpack.c.l.b16 %v195
    %v732 = vunpack.c.h.b16 %v195
    %v733 = vunpack.c.l.b16 %v196
    %v734 = vunpack.c.h.b16 %v196
    %v735 = vunpack.c.l.b16 %v197
    %v736 = vunpack.c.h.b16 %v197
    %v737 = vunpack.c.l.b16 %v198
    %v738 = vunpack.c.h.b16 %v198
    %v739 = vunpack.c.l.b16 %v199
    %v740 = vunpack.c.h.b16 %v199
    %v741 = vunpack.c.l.b16 %v200
    %v742 = vunpack.c.h.b16 %v200
    %v743 = vunpack.c.l.b16 %v201
    %v744 = vunpack.c.h.b16 %v201
    %v745 = vunpack.c.l.b16 %v202
    %v746 = vunpack.c.h.b16 %v202
    %v747 = vunpack.c.l.b16 %v203
    %v748 = vunpack.c.h.b16 %v203
    %v749 = vunpack.c.l.b16 %v204
    %v750 = vunpack.c.h.b16 %v204
    %v751 = vunpack.c.l.b16 %v205
    %v752 = vunpack.c.h.b16 %v205
    %v753 = vunpack.c.l.b16 %v206
    %v754 = vunpack.c.h.b16 %v206
    %v755 = vunpack.c.l.b16 %v207
    %v756 = vunpack.c.h.b16 %v207
    %v757 = vunpack.c.l.b16 %v208
    %v758 = vunpack.c.h.b16 %v208
    %v759 = vunpack.c.l.b16 %v209
    %v760 = vunpack.c.h.b16 %v209
    %v761 = vunpack.c.l.b16 %v210
    %v762 = vunpack.c.h.b16 %v210
    %v763 = vunpack.c.l.b16 %v211
    %v764 = vunpack.c.h.b16 %v211
    %v765 = vunpack.c.l.b16 %v212
    %v766 = vunpack.c.h.b16 %v212
    %v767 = vpack.c.b16 %v451, %v447
    %v768 = vpack.c.b16 %v452, %v448
    %v769 = vpack.c.b16 %v453, %v449
    %v770 = vpack.c.b16 %v454, %v450
    %v771 = vpack.c.b16 %v459, %v455
    %v772 = vpack.c.b16 %v460, %v456
    %v773 = vpack.c.b16 %v461, %v457
    %v774 = vpack.c.b16 %v462, %v458
    %v775 = vpack.c.b16 %v467, %v463
    %v776 = vpack.c.b16 %v468, %v464
    %v777 = vpack.c.b16 %v469, %v465
    %v778 = vpack.c.b16 %v470, %v466
    %v779 = vpack.c.b16 %v475, %v471
    %v780 = vpack.c.b16 %v476, %v472
    %v781 = vpack.c.b16 %v477, %v473
    %v782 = vpack.c.b16 %v478, %v474
    %v783 = vpack.c.b16 %v483, %v479
    %v784 = vpack.c.b16 %v484, %v480
    %v785 = vpack.c.b16 %v485, %v481
    %v786 = vpack.c.b16 %v486, %v482
    %v787 = vpack.c.b16 %v491, %v487
    %v788 = vpack.c.b16 %v492, %v488
    %v789 = vpack.c.b16 %v493, %v489
    %v790 = vpack.c.b16 %v494, %v490
    %v791 = vpack.c.b16 %v499, %v495
    %v792 = vpack.c.b16 %v500, %v496
    %v793 = vpack.c.b16 %v501, %v497
    %v794 = vpack.c.b16 %v502, %v498
    %v795 = vpack.c.b16 %v507, %v503
    %v796 = vpack.c.b16 %v508, %v504
    %v797 = vpack.c.b16 %v509, %v505
    %v798 = vpack.c.b16 %v510, %v506
    %v799 = vpack.c.b16 %v515, %v511
    %v800 = vpack.c.b16 %v516, %v512
    %v801 = vpack.c.b16 %v517, %v513
    %v802 = vpack.c.b16 %v518, %v514
    %v803 = vpack.c.b16 %v523, %v519
    %v804 = vpack.c.b16 %v524, %v520
    %v805 = vpack.c.b16 %v525, %v521
    %v806 = vpack.c.b16 %v526, %v522
    %v807 = vpack.c.b16 %v531, %v527
    %v808 = vpack.c.b16 %v532, %v528
    %v809 = vpack.c.b16 %v533, %v529
    %v810 = vpack.c.b16 %v534, %v530
    %v811 = vpack.c.b16 %v539, %v535
    %v812 = vpack.c.b16 %v540, %v536
    %v813 = vpack.c.b16 %v541, %v537
    %v814 = vpack.c.b16 %v542, %v538
    %v815 = vpack.c.b16 %v547, %v543
    %v816 = vpack.c.b16 %v548, %v544
    %v817 = vpack.c.b16 %v549, %v545
    %v818 = vpack.c.b16 %v550, %v546
    %v819 = vpack.c.b16 %v555, %v551
    %v820 = vpack.c.b16 %v556, %v552
    %v821 = vpack.c.b16 %v557, %v553
    %v822 = vpack.c.b16 %v558, %v554
    %v823 = vpack.c.b16 %v563, %v559
    %v824 = vpack.c.b16 %v564, %v560
    %v825 = vpack.c.b16 %v565, %v561
    %v826 = vpack.c.b16 %v566, %v562
    %v827 = vpack.c.b16 %v571, %v567
    %v828 = vpack.c.b16 %v572, %v568
    %v829 = vpack.c.b16 %v573, %v569
    %v830 = vpack.c.b16 %v574, %v570
    %v831 = vpack.c.b16 %v579, %v575
    %v832 = vpack.c.b16 %v580, %v576
    %v833 = vpack.c.b16 %v581, %v577
    %v834 = vpack.c.b16 %v582, %v578
    %v835 = vpack.c.b16 %v587, %v583
    %v836 = vpack.c.b16 %v588, %v584
    %v837 = vpack.c.b16 %v589, %v585
    %v838 = vpack.c.b16 %v590, %v586
    %v839 = vpack.c.b16 %v595, %v591
    %v840 = vpack.c.b16 %v596, %v592
    %v841 = vpack.c.b16 %v597, %v593
    %v842 = vpack.c.b16 %v598, %v594
    %v843 = vpack.c.b16 %v603, %v599
    %v844 = vpack.c.b16 %v604, %v600
    %v845 = vpack.c.b16 %v605, %v601
    %v846 = vpack.c.b16 %v606, %v602
    %v847 = vpack.c.b16 %v611, %v607
    %v848 = vpack.c.b16 %v612, %v608
    %v849 = vpack.c.b16 %v613, %v609
    %v850 = vpack.c.b16 %v614, %v610
    %v851 = vpack.c.b16 %v619, %v615
    %v852 = vpack.c.b16 %v620, %v616
    %v853 = vpack.c.b16 %v621, %v617
    %v854 = vpack.c.b16 %v622, %v618
    %v855 = vpack.c.b16 %v627, %v623
    %v856 = vpack.c.b16 %v628, %v624
    %v857 = vpack.c.b16 %v629, %v625
    %v858 = vpack.c.b16 %v630, %v626
    %v859 = vpack.c.b16 %v635, %v631
    %v860 = vpack.c.b16 %v636, %v632
    %v861 = vpack.c.b16 %v637, %v633
    %v862 = vpack.c.b16 %v638, %v634
    %v863 = vpack.c.b16 %v643, %v639
    %v864 = vpack.c.b16 %v644, %v640
    %v865 = vpack.c.b16 %v645, %v641
    %v866 = vpack.c.b16 %v646, %v642
    %v867 = vpack.c.b16 %v651, %v647
    %v868 = vpack.c.b16 %v652, %v648
    %v869 = vpack.c.b16 %v653, %v649
    %v870 = vpack.c.b16 %v654, %v650
    %v871 = vpack.c.b16 %v659, %v655
    %v872 = vpack.c.b16 %v660, %v656
    %v873 = vpack.c.b16 %v661, %v657
    %v874 = vpack.c.b16 %v662, %v658
    %v875 = vpack.c.b16 %v667, %v663
    %v876 = vpack.c.b16 %v668, %v664
    %v877 = vpack.c.b16 %v669, %v665
    %v878 = vpack.c.b16 %v670, %v666
    %v879 = vpack.c.b16 %v675, %v671
    %v880 = vpack.c.b16 %v676, %v672
    %v881 = vpack.c.b16 %v677, %v673
    %v882 = vpack.c.b16 %v678, %v674
    %v883 = vpack.c.b16 %v683, %v679
    %v884 = vpack.c.b16 %v684, %v680
    %v885 = vpack.c.b16 %v685, %v681
    %v886 = vpack.c.b16 %v686, %v682
    %v887 = vpack.c.b16 %v691, %v687
    %v888 = vpack.c.b16 %v692, %v688
    %v889 = vpack.c.b16 %v693, %v689
    %v890 = vpack.c.b16 %v694, %v690
    %v891 = vpack.c.b16 %v699, %v695
    %v892 = vpack.c.b16 %v700, %v696
    %v893 = vpack.c.b16 %v701, %v697
    %v894 = vpack.c.b16 %v702, %v698
    %v895 = vpack.c.b16 %v707, %v703
    %v896 = vpack.c.b16 %v708, %v704
    %v897 = vpack.c.b16 %v709, %v705
    %v898 = vpack.c.b16 %v710, %v706
    %v899 = vpack.c.b16 %v715, %v711
    %v900 = vpack.c.b16 %v716, %v712
    %v901 = vpack.c.b16 %v717, %v713
    %v902 = vpack.c.b16 %v718, %v714
    %v903 = vpack.c.b16 %v723, %v719
    %v904 = vpack.c.b16 %v724, %v720
    %v905 = vpack.c.b16 %v725, %v721
    %v906 = vpack.c.b16 %v726, %v722
    %v907 = vpack.c.b16 %v731, %v727
    %v908 = vpack.c.b16 %v732, %v728
    %v909 = vpack.c.b16 %v733, %v729
    %v910 = vpack.c.b16 %v734, %v730
    %v911 = vpack.c.b16 %v739, %v735
    %v912 = vpack.c.b16 %v740, %v736
    %v913 = vpack.c.b16 %v741, %v737
    %v914 = vpack.c.b16 %v742, %v738
    %v915 = vpack.c.b16 %v747, %v743
    %v916 = vpack.c.b16 %v748, %v744
    %v917 = vpack.c.b16 %v749, %v745
    %v918 = vpack.c.b16 %v750, %v746
    %v919 = vpack.c.b16 %v755, %v751
    %v920 = vpack.c.b16 %v756, %v752
    %v921 = vpack.c.b16 %v757, %v753
    %v922 = vpack.c.b16 %v758, %v754
    %v923 = vpack.c.b16 %v763, %v759
    %v924 = vpack.c.b16 %v764, %v760
    %v925 = vpack.c.b16 %v765, %v761
    %v926 = vpack.c.b16 %v766, %v762
    %1087 = vmatprep.subr.bf16.mxu0 %v768
    %1088 = vmatpush1.bf16.msra.mxu0 %v767
    %1089 = vmatprep.subr.bf16.mxu0 %v772
    %1090 = vmatpush1.bf16.msra.mxu0 %v771
    %1091 = vmatprep.subr.bf16.mxu0 %v776
    %1092 = vmatpush1.bf16.msra.mxu0 %v775
    %1093 = vmatprep.subr.bf16.mxu0 %v780
    %1094 = vmatpush1.bf16.msra.mxu0 %v779
    %1095 = vmatprep.subr.bf16.mxu0 %v784
    %1096 = vmatpush1.bf16.msra.mxu0 %v783
    %1097 = vmatprep.subr.bf16.mxu0 %v788
    %1098 = vmatpush1.bf16.msra.mxu0 %v787
    %1099 = vmatprep.subr.bf16.mxu0 %v792
    %1100 = vmatpush1.bf16.msra.mxu0 %v791
    %1101 = vmatprep.subr.bf16.mxu0 %v796
    %1102 = vmatpush1.bf16.msra.mxu0 %v795
    %1103 = vmatprep.subr.bf16.mxu0 %v800
    %1104 = vmatpush1.bf16.msra.mxu0 %v799
    %1105 = vmatprep.subr.bf16.mxu0 %v804
    %1106 = vmatpush1.bf16.msra.mxu0 %v803
    %1107 = vmatprep.subr.bf16.mxu0 %v808
    %1108 = vmatpush1.bf16.msra.mxu0 %v807
    %1109 = vmatprep.subr.bf16.mxu0 %v812
    %1110 = vmatpush1.bf16.msra.mxu0 %v811
    %1111 = vmatprep.subr.bf16.mxu0 %v816
    %1112 = vmatpush1.bf16.msra.mxu0 %v815
    %1113 = vmatprep.subr.bf16.mxu0 %v820
    %1114 = vmatpush1.bf16.msra.mxu0 %v819
    %1115 = vmatprep.subr.bf16.mxu0 %v824
    %1116 = vmatpush1.bf16.msra.mxu0 %v823
    %1117 = vmatprep.subr.bf16.mxu0 %v828
    %1118 = vmatpush1.bf16.msra.mxu0 %v827
    %1119 = vmatprep.mubr.bf16.mxu0 %v268
    %1120 = vmatmul.mubr.bf16.gmra.mrb[0].mxu0 %v267
    %v1121 = vpop.f32.mrb[0].mxu0
    %v1122 = vadd.f32 %v218, %v1121
    %v1123 = vpop.f32.mrb[0].mxu0
    %v1124 = vadd.f32 %v222, %v1123
    %v1125 = vpop.f32.mrb[0].mxu0
    %v1126 = vadd.f32 %v218, %v1125
    %v1127 = vpop.f32.mrb[0].mxu0
    %v1128 = vadd.f32 %v222, %v1127
    %1129 = vmatprep.mubr.bf16.mxu0 %v273
    %1130 = vmatmul.mubr.bf16.gmra.mrb[0].mxu0 %v272
    %v1131 = vpop.f32.mrb[0].mxu0
    %v1132 = vadd.f32 %v218, %v1131
    %v1133 = vpop.f32.mrb[0].mxu0
    %v1134 = vadd.f32 %v222, %v1133
    %v1135 = vpop.f32.mrb[0].mxu0
    %v1136 = vadd.f32 %v218, %v1135
    %v1137 = vpop.f32.mrb[0].mxu0
    %v1138 = vadd.f32 %v222, %v1137
    %1139 = vdwg.mxu0
    %1140 = vmatprep.subr.bf16.mxu0 %v832
    %1141 = vmatpush1.bf16.msra.mxu0 %v831
    %1142 = vmatprep.subr.bf16.mxu0 %v836
    %1143 = vmatpush1.bf16.msra.mxu0 %v835
    %1144 = vmatprep.subr.bf16.mxu0 %v840
    %1145 = vmatpush1.bf16.msra.mxu0 %v839
    %1146 = vmatprep.subr.bf16.mxu0 %v844
    %1147 = vmatpush1.bf16.msra.mxu0 %v843
    %1148 = vmatprep.subr.bf16.mxu0 %v848
    %1149 = vmatpush1.bf16.msra.mxu0 %v847
    %1150 = vmatprep.subr.bf16.mxu0 %v852
    %1151 = vmatpush1.bf16.msra.mxu0 %v851
    %1152 = vmatprep.subr.bf16.mxu0 %v856
    %1153 = vmatpush1.bf16.msra.mxu0 %v855
    %1154 = vmatprep.subr.bf16.mxu0 %v860
    %1155 = vmatpush1.bf16.msra.mxu0 %v859
    %1156 = vmatprep.subr.bf16.mxu0 %v864
    %1157 = vmatpush1.bf16.msra.mxu0 %v863
    %1158 = vmatprep.subr.bf16.mxu0 %v868
    %1159 = vmatpush1.bf16.msra.mxu0 %v867
    %1160 = vmatprep.subr.bf16.mxu0 %v872
    %1161 = vmatpush1.bf16.msra.mxu0 %v871
    %1162 = vmatprep.subr.bf16.mxu0 %v876
    %1163 = vmatpush1.bf16.msra.mxu0 %v875
    %1164 = vmatprep.subr.bf16.mxu0 %v880
    %1165 = vmatpush1.bf16.msra.mxu0 %v879
    %1166 = vmatprep.subr.bf16.mxu0 %v884
    %1167 = vmatpush1.bf16.msra.mxu0 %v883
    %1168 = vmatprep.subr.bf16.mxu0 %v888
    %1169 = vmatpush1.bf16.msra.mxu0 %v887
    %1170 = vmatprep.subr.bf16.mxu0 %v892
    %1171 = vmatpush1.bf16.msra.mxu0 %v891
    %1172 = vmatprep.mubr.bf16.mxu0 %v270
    %1173 = vmatmul.mubr.bf16.gmra.mrb[0].mxu0 %v269
    %v1174 = vpop.f32.mrb[0].mxu0
    %v1175 = vadd.f32 %v1122, %v1174
    %v1176 = vpop.f32.mrb[0].mxu0
    %v1177 = vadd.f32 %v1124, %v1176
    %v1178 = vpop.f32.mrb[0].mxu0
    %v1179 = vadd.f32 %v1126, %v1178
    %v1180 = vpop.f32.mrb[0].mxu0
    %v1181 = vadd.f32 %v1128, %v1180
    %1182 = vmatprep.mubr.bf16.mxu0 %v275
    %1183 = vmatmul.mubr.bf16.gmra.mrb[0].mxu0 %v274
    %v1184 = vpop.f32.mrb[0].mxu0
    %v1185 = vadd.f32 %v1132, %v1184
    %v1186 = vpop.f32.mrb[0].mxu0
    %v1187 = vadd.f32 %v1134, %v1186
    %v1188 = vpop.f32.mrb[0].mxu0
    %v1189 = vadd.f32 %v1136, %v1188
    %v1190 = vpop.f32.mrb[0].mxu0
    %v1191 = vadd.f32 %v1138, %v1190
    %1192 = vdwg.mxu0
    %1193 = vmatprep.subr.bf16.mxu0 %v896
    %1194 = vmatpush1.bf16.msra.mxu0 %v895
    %1195 = vmatprep.subr.bf16.mxu0 %v900
    %1196 = vmatpush1.bf16.msra.mxu0 %v899
    %1197 = vmatprep.subr.bf16.mxu0 %v904
    %1198 = vmatpush1.bf16.msra.mxu0 %v903
    %1199 = vmatprep.subr.bf16.mxu0 %v908
    %1200 = vmatpush1.bf16.msra.mxu0 %v907
    %1201 = vmatprep.subr.bf16.mxu0 %v912
    %1202 = vmatpush1.bf16.msra.mxu0 %v911
    %1203 = vmatprep.subr.bf16.mxu0 %v916
    %1204 = vmatpush1.bf16.msra.mxu0 %v915
    %1205 = vmatprep.subr.bf16.mxu0 %v920
    %1206 = vmatpush1.bf16.msra.mxu0 %v919
    %1207 = vmatprep.subr.bf16.mxu0 %v924
    %1208 = vmatpush1.bf16.msra.mxu0 %v923
    %1209 = vmatprep.subr.bf16.mxu0 0
    %1210 = vmatpush1.bf16.msra.mxu0 0
    %1211 = vmatprep.subr.bf16.mxu0 0
    %1212 = vmatpush1.bf16.msra.mxu0 0
    %1213 = vmatprep.subr.bf16.mxu0 0
    %1214 = vmatpush1.bf16.msra.mxu0 0
    %1215 = vmatprep.subr.bf16.mxu0 0
    %1216 = vmatpush1.bf16.msra.mxu0 0
    %1217 = vmatprep.subr.bf16.mxu0 0
    %1218 = vmatpush1.bf16.msra.mxu0 0
    %1219 = vmatprep.subr.bf16.mxu0 0
    %1220 = vmatpush1.bf16.msra.mxu0 0
    %1221 = vmatprep.subr.bf16.mxu0 0
    %1222 = vmatpush1.bf16.msra.mxu0 0
    %1223 = vmatprep.subr.bf16.mxu0 0
    %1224 = vmatpush1.bf16.msra.mxu0 0
    %1225 = vmatprep.mubr.bf16.mxu0 0
    %1226 = vmatmul.mubr.bf16.gmra.mrb[0].mxu0 %v271
    %v1227 = vpop.f32.mrb[0].mxu0
    %v1228 = vadd.f32 %v1175, %v1227
    %v1229 = vpop.f32.mrb[0].mxu0
    %v1230 = vadd.f32 %v1177, %v1229
    %v1231 = vpop.f32.mrb[0].mxu0
    %v1232 = vadd.f32 %v1179, %v1231
    %v1233 = vpop.f32.mrb[0].mxu0
    %v1234 = vadd.f32 %v1181, %v1233
    %1235 = vmatprep.mubr.bf16.mxu0 0
    %1236 = vmatmul.mubr.bf16.gmra.mrb[0].mxu0 %v276
    %v1237 = vpop.f32.mrb[0].mxu0
    %v1238 = vadd.f32 %v1185, %v1237
    %v1239 = vpop.f32.mrb[0].mxu0
    %v1240 = vadd.f32 %v1187, %v1239
    %v1241 = vpop.f32.mrb[0].mxu0
    %v1242 = vadd.f32 %v1189, %v1241
    %v1243 = vpop.f32.mrb[0].mxu0
    %v1244 = vadd.f32 %v1191, %v1243
    %1245 = vdwg.mxu0
    %1246 = vmatprep.subr.bf16.mxu0 %v770
    %1247 = vmatpush1.bf16.msra.mxu0 %v769
    %1248 = vmatprep.subr.bf16.mxu0 %v774
    %1249 = vmatpush1.bf16.msra.mxu0 %v773
    %1250 = vmatprep.subr.bf16.mxu0 %v778
    %1251 = vmatpush1.bf16.msra.mxu0 %v777
    %1252 = vmatprep.subr.bf16.mxu0 %v782
    %1253 = vmatpush1.bf16.msra.mxu0 %v781
    %1254 = vmatprep.subr.bf16.mxu0 %v786
    %1255 = vmatpush1.bf16.msra.mxu0 %v785
    %1256 = vmatprep.subr.bf16.mxu0 %v790
    %1257 = vmatpush1.bf16.msra.mxu0 %v789
    %1258 = vmatprep.subr.bf16.mxu0 %v794
    %1259 = vmatpush1.bf16.msra.mxu0 %v793
    %1260 = vmatprep.subr.bf16.mxu0 %v798
    %1261 = vmatpush1.bf16.msra.mxu0 %v797
    %1262 = vmatprep.subr.bf16.mxu0 %v802
    %1263 = vmatpush1.bf16.msra.mxu0 %v801
    %1264 = vmatprep.subr.bf16.mxu0 %v806
    %1265 = vmatpush1.bf16.msra.mxu0 %v805
    %1266 = vmatprep.subr.bf16.mxu0 %v810
    %1267 = vmatpush1.bf16.msra.mxu0 %v809
    %1268 = vmatprep.subr.bf16.mxu0 %v814
    %1269 = vmatpush1.bf16.msra.mxu0 %v813
    %1270 = vmatprep.subr.bf16.mxu0 %v818
    %1271 = vmatpush1.bf16.msra.mxu0 %v817
    %1272 = vmatprep.subr.bf16.mxu0 %v822
    %1273 = vmatpush1.bf16.msra.mxu0 %v821
    %1274 = vmatprep.subr.bf16.mxu0 %v826
    %1275 = vmatpush1.bf16.msra.mxu0 %v825
    %1276 = vmatprep.subr.bf16.mxu0 %v830
    %1277 = vmatpush1.bf16.msra.mxu0 %v829
    %1278 = vmatprep.mubr.bf16.mxu0 %v268
    %1279 = vmatmul.mubr.bf16.gmra.mrb[0].mxu0 %v267
    %v1280 = vpop.f32.mrb[0].mxu0
    %v1281 = vadd.f32 %v226, %v1280
    %v1282 = vpop.f32.mrb[0].mxu0
    %v1283 = vadd.f32 %v230, %v1282
    %v1284 = vpop.f32.mrb[0].mxu0
    %v1285 = vadd.f32 %v226, %v1284
    %v1286 = vpop.f32.mrb[0].mxu0
    %v1287 = vadd.f32 %v230, %v1286
    %1288 = vmatprep.mubr.bf16.mxu0 %v273
    %1289 = vmatmul.mubr.bf16.gmra.mrb[0].mxu0 %v272
    %v1290 = vpop.f32.mrb[0].mxu0
    %v1291 = vadd.f32 %v226, %v1290
    %v1292 = vpop.f32.mrb[0].mxu0
    %v1293 = vadd.f32 %v230, %v1292
    %v1294 = vpop.f32.mrb[0].mxu0
    %v1295 = vadd.f32 %v226, %v1294
    %v1296 = vpop.f32.mrb[0].mxu0
    %v1297 = vadd.f32 %v230, %v1296
    %1298 = vdwg.mxu0
    %1299 = vmatprep.subr.bf16.mxu0 %v834
    %1300 = vmatpush1.bf16.msra.mxu0 %v833
    %1301 = vmatprep.subr.bf16.mxu0 %v838
    %1302 = vmatpush1.bf16.msra.mxu0 %v837
    %1303 = vmatprep.subr.bf16.mxu0 %v842
    %1304 = vmatpush1.bf16.msra.mxu0 %v841
    %1305 = vmatprep.subr.bf16.mxu0 %v846
    %1306 = vmatpush1.bf16.msra.mxu0 %v845
    %1307 = vmatprep.subr.bf16.mxu0 %v850
    %1308 = vmatpush1.bf16.msra.mxu0 %v849
    %1309 = vmatprep.subr.bf16.mxu0 %v854
    %1310 = vmatpush1.bf16.msra.mxu0 %v853
    %1311 = vmatprep.subr.bf16.mxu0 %v858
    %1312 = vmatpush1.bf16.msra.mxu0 %v857
    %1313 = vmatprep.subr.bf16.mxu0 %v862
    %1314 = vmatpush1.bf16.msra.mxu0 %v861
    %1315 = vmatprep.subr.bf16.mxu0 %v866
    %1316 = vmatpush1.bf16.msra.mxu0 %v865
    %1317 = vmatprep.subr.bf16.mxu0 %v870
    %1318 = vmatpush1.bf16.msra.mxu0 %v869
    %1319 = vmatprep.subr.bf16.mxu0 %v874
    %1320 = vmatpush1.bf16.msra.mxu0 %v873
    %1321 = vmatprep.subr.bf16.mxu0 %v878
    %1322 = vmatpush1.bf16.msra.mxu0 %v877
    %1323 = vmatprep.subr.bf16.mxu0 %v882
    %1324 = vmatpush1.bf16.msra.mxu0 %v881
    %1325 = vmatprep.subr.bf16.mxu0 %v886
    %1326 = vmatpush1.bf16.msra.mxu0 %v885
    %1327 = vmatprep.subr.bf16.mxu0 %v890
    %1328 = vmatpush1.bf16.msra.mxu0 %v889
    %1329 = vmatprep.subr.bf16.mxu0 %v894
    %1330 = vmatpush1.bf16.msra.mxu0 %v893
    %1331 = vmatprep.mubr.bf16.mxu0 %v270
    %1332 = vmatmul.mubr.bf16.gmra.mrb[0].mxu0 %v269
    %v1333 = vpop.f32.mrb[0].mxu0
    %v1334 = vadd.f32 %v1281, %v1333
    %v1335 = vpop.f32.mrb[0].mxu0
    %v1336 = vadd.f32 %v1283, %v1335
    %v1337 = vpop.f32.mrb[0].mxu0
    %v1338 = vadd.f32 %v1285, %v1337
    %v1339 = vpop.f32.mrb[0].mxu0
    %v1340 = vadd.f32 %v1287, %v1339
    %1341 = vmatprep.mubr.bf16.mxu0 %v275
    %1342 = vmatmul.mubr.bf16.gmra.mrb[0].mxu0 %v274
    %v1343 = vpop.f32.mrb[0].mxu0
    %v1344 = vadd.f32 %v1291, %v1343
    %v1345 = vpop.f32.mrb[0].mxu0
    %v1346 = vadd.f32 %v1293, %v1345
    %v1347 = vpop.f32.mrb[0].mxu0
    %v1348 = vadd.f32 %v1295, %v1347
    %v1349 = vpop.f32.mrb[0].mxu0
    %v1350 = vadd.f32 %v1297, %v1349
    %1351 = vdwg.mxu0
    %1352 = vmatprep.subr.bf16.mxu0 %v898
    %1353 = vmatpush1.bf16.msra.mxu0 %v897
    %1354 = vmatprep.subr.bf16.mxu0 %v902
    %1355 = vmatpush1.bf16.msra.mxu0 %v901
    %1356 = vmatprep.subr.bf16.mxu0 %v906
    %1357 = vmatpush1.bf16.msra.mxu0 %v905
    %1358 = vmatprep.subr.bf16.mxu0 %v910
    %1359 = vmatpush1.bf16.msra.mxu0 %v909
    %1360 = vmatprep.subr.bf16.mxu0 %v914
    %1361 = vmatpush1.bf16.msra.mxu0 %v913
    %1362 = vmatprep.subr.bf16.mxu0 %v918
    %1363 = vmatpush1.bf16.msra.mxu0 %v917
    %1364 = vmatprep.subr.bf16.mxu0 %v922
    %1365 = vmatpush1.bf16.msra.mxu0 %v921
    %1366 = vmatprep.subr.bf16.mxu0 %v926
    %1367 = vmatpush1.bf16.msra.mxu0 %v925
    %1368 = vmatprep.subr.bf16.mxu0 0
    %1369 = vmatpush1.bf16.msra.mxu0 0
    %1370 = vmatprep.subr.bf16.mxu0 0
    %1371 = vmatpush1.bf16.msra.mxu0 0
    %1372 = vmatprep.subr.bf16.mxu0 0
    %1373 = vmatpush1.bf16.msra.mxu0 0
    %1374 = vmatprep.subr.bf16.mxu0 0
    %1375 = vmatpush1.bf16.msra.mxu0 0
    %1376 = vmatprep.subr.bf16.mxu0 0
    %1377 = vmatpush1.bf16.msra.mxu0 0
    %1378 = vmatprep.subr.bf16.mxu0 0
    %1379 = vmatpush1.bf16.msra.mxu0 0
    %1380 = vmatprep.subr.bf16.mxu0 0
    %1381 = vmatpush1.bf16.msra.mxu0 0
    %1382 = vmatprep.subr.bf16.mxu0 0
    %1383 = vmatpush1.bf16.msra.mxu0 0
    %1384 = vmatprep.mubr.bf16.mxu0 0
    %1385 = vmatmul.mubr.bf16.gmra.mrb[0].mxu0 %v271
    %v1386 = vpop.f32.mrb[0].mxu0
    %v1387 = vadd.f32 %v1334, %v1386
    %v1388 = vpop.f32.mrb[0].mxu0
    %v1389 = vadd.f32 %v1336, %v1388
    %v1390 = vpop.f32.mrb[0].mxu0
    %v1391 = vadd.f32 %v1338, %v1390
    %v1392 = vpop.f32.mrb[0].mxu0
    %v1393 = vadd.f32 %v1340, %v1392
    %1394 = vmatprep.mubr.bf16.mxu0 0
    %1395 = vmatmul.mubr.bf16.gmra.mrb[0].mxu0 %v276
    %v1396 = vpop.f32.mrb[0].mxu0
    %v1397 = vadd.f32 %v1344, %v1396
    %v1398 = vpop.f32.mrb[0].mxu0
    %v1399 = vadd.f32 %v1346, %v1398
    %v1400 = vpop.f32.mrb[0].mxu0
    %v1401 = vadd.f32 %v1348, %v1400
    %v1402 = vpop.f32.mrb[0].mxu0
    %v1403 = vadd.f32 %v1350, %v1402
    %1404 = vdwg.mxu0
    %vm1405 = vcmp.ge.f32.partialorder %v1228, 0.0
    %vm1406 = vcmp.ge.f32.partialorder %v1230, 0.0
    %vm1407 = vcmp.ge.f32.partialorder %v1387, 0.0
    %vm1408 = vcmp.ge.f32.partialorder %v1389, 0.0
    %vm1409 = vcmp.ge.f32.partialorder %v1232, 0.0
    %vm1410 = vcmp.ge.f32.partialorder %v1234, 0.0
    %vm1411 = vcmp.ge.f32.partialorder %v1391, 0.0
    %vm1412 = vcmp.ge.f32.partialorder %v1393, 0.0
    %vm1413 = vcmp.ge.f32.partialorder %v1238, 0.0
    %vm1414 = vcmp.ge.f32.partialorder %v1240, 0.0
    %vm1415 = vcmp.ge.f32.partialorder %v1397, 0.0
    %vm1416 = vcmp.ge.f32.partialorder %v1399, 0.0
    %vm1417 = vcmp.ge.f32.partialorder %v1242, 0.0
    %vm1418 = vcmp.ge.f32.partialorder %v1244, 0.0
    %vm1419 = vcmp.ge.f32.partialorder %v1401, 0.0
    %vm1420 = vcmp.ge.f32.partialorder %v1403, 0.0
    %v1421 = vmul.f32 %v1228, 0.1
    %v1422 = vmul.f32 %v1230, 0.1
    %v1423 = vmul.f32 %v1387, 0.1
    %v1424 = vmul.f32 %v1389, 0.1
    %v1425 = vmul.f32 %v1232, 0.1
    %v1426 = vmul.f32 %v1234, 0.1
    %v1427 = vmul.f32 %v1391, 0.1
    %v1428 = vmul.f32 %v1393, 0.1
    %v1429 = vmul.f32 %v1238, 0.1
    %v1430 = vmul.f32 %v1240, 0.1
    %v1431 = vmul.f32 %v1397, 0.1
    %v1432 = vmul.f32 %v1399, 0.1
    %v1433 = vmul.f32 %v1242, 0.1
    %v1434 = vmul.f32 %v1244, 0.1
    %v1435 = vmul.f32 %v1401, 0.1
    %v1436 = vmul.f32 %v1403, 0.1
    %v1437 = vsel %vm1405, %v1228, %v1421
    %v1438 = vsel %vm1406, %v1230, %v1422
    %v1439 = vsel %vm1407, %v1387, %v1423
    %v1440 = vsel %vm1408, %v1389, %v1424
    %v1441 = vsel %vm1409, %v1232, %v1425
    %v1442 = vsel %vm1410, %v1234, %v1426
    %v1443 = vsel %vm1411, %v1391, %v1427
    %v1444 = vsel %vm1412, %v1393, %v1428
    %v1445 = vsel %vm1413, %v1238, %v1429
    %v1446 = vsel %vm1414, %v1240, %v1430
    %v1447 = vsel %vm1415, %v1397, %v1431
    %v1448 = vsel %vm1416, %v1399, %v1432
    %v1449 = vsel %vm1417, %v1242, %v1433
    %v1450 = vsel %vm1418, %v1244, %v1434
    %v1451 = vsel %vm1419, %v1401, %v1435
    %v1452 = vsel %vm1420, %v1403, %v1436
    %1453 = vst [vmem:[%s3] sm:$0xff] %v1437
    %1454 = vst [vmem:[%s3 + $0x8] sm:$0xff] %v1438
    %1455 = vst [vmem:[%s3 + $0x10] sm:$0xff] %v1439
    %1456 = vst [vmem:[%s3 + $0x18] sm:$0xff] %v1440
    %1457 = vst [vmem:[%s3 + $0x20] sm:$0xff] %v1441
    %1458 = vst [vmem:[%s3 + $0x28] sm:$0xff] %v1442
    %1459 = vst [vmem:[%s3 + $0x30] sm:$0xff] %v1443
    %1460 = vst [vmem:[%s3 + $0x38] sm:$0xff] %v1444
    %1461 = vst [vmem:[%s3 + $0x40] sm:$0xff] %v1445
    %1462 = vst [vmem:[%s3 + $0x48] sm:$0xff] %v1446
    %1463 = vst [vmem:[%s3 + $0x50] sm:$0xff] %v1447
    %1464 = vst [vmem:[%s3 + $0x58] sm:$0xff] %v1448
    %1465 = vst [vmem:[%s3 + $0x60] sm:$0xff] %v1449
    %1466 = vst [vmem:[%s3 + $0x68] sm:$0xff] %v1450
    %1467 = vst [vmem:[%s3 + $0x70] sm:$0xff] %v1451
    %1468 = vst [vmem:[%s3 + $0x78] sm:$0xff] %v1452
    // Predicated region
    $region22: #{fwd.8} parent=1 // pred_check
      _
    $region23: #{fwd.8} parent=1 // pred_check_branch
      %1470 = sbr.rel (0) target = $region25
    $region24: #{fwd.8} parent=1 // pred_region
      _
    $region25: #{fwd.8} parent=1 // pred_fallthru
      _
    // Predicated region
    $region26: #{fwd.8} parent=1 // pred_check
      _
    $region27: #{fwd.8} parent=1 // pred_check_branch
      %1472 = sbr.rel (0) target = $region29
    $region28: #{fwd.8} parent=1 // pred_region
      _
    $region29: #{fwd.8} parent=1 // pred_fallthru
      _
    %1473 = vsyncpa [#allocation3], 1
    %1474 = vsyncpa [#allocation5], 1

// kernel: fwd.9
$region0: #{fwd.9}
  #allocation0 [shape = 'u32[]', space=smem, size = 0x4, offset = 0x4, fixed_abs, tag = 'smem constant byte address 0x4 - core index']
  #allocation1 [shape = 'u32[144,128]{1,0:T(1,128)}', space=vmem, size = 0x12000, scoped, tag = 'internal scratch']
  #allocation2 [shape = 'f32[16,512]{1,0:T(8,128)}', space=vmem, size = 0x8000, scoped, tag = 'scratch operand']
  %s0 = inlined_call_operand.vmem [shape: bf16[16,2560], index: 0, kind: input, shape index: {}]
  %s1 = inlined_call_operand.hbm [shape: bf16[2560,1024], index: 1, kind: input, shape index: {}]
  %s2 = inlined_call_operand.hbm [shape: f32[1,1024], index: 2, kind: input, shape index: {}]
  %s3 = inlined_call_operand.vmem [shape: f32[16,1024], index: 3, kind: output, shape index: {}]
  %s4 = sld [smem:[#allocation0]]
  $region106: #{fwd.9} parent=0
    _
  %s6 = ssub.s32 1, %s4
  %s7 = scalar_select 0, %s6, %s4
  $region1: #{fwd.9} parent=0
    #allocation3 [shape = 'u8[40960]{0}', space=vmem, size = 0xa000, scoped, tag = 'input window, operand 0']
    #allocation4 [shape = 'u8[1310720]{0}', space=vmem, size = 0x140000, scoped, tag = 'input window, operand 1']
    #allocation5 [shape = 's32[2]{0}', space=sflag, size = 0x8, scoped, tag = 'scoped memory for fwd.9']
    #allocation6 [shape = 'u8[4096]{0}', space=vmem, size = 0x1000, scoped, tag = 'input window, operand 2']
    #allocation7 [shape = 's32[2]{0}', space=sflag, size = 0x8, scoped, tag = 'scoped memory for fwd.9']
    #allocation8 [shape = 'u8[65536]{0}', space=vmem, size = 0x10000, scoped, tag = 'output window, operand 0']
    %8 = vsyncpa [#allocation5], 0
    %s9 = scalar_lea.sflag [#allocation5], 1
    %10 = vsyncpa %s9, 0
    %11 = vsyncpa [#allocation7], 0
    %s12 = scalar_lea.sflag [#allocation7], 1
    %13 = vsyncpa %s12, 0
    loop: start=0, step=1, limit=10
    $region2: #{fwd.9} parent=1 // loop_pre_header
      _
    $region3: #{fwd.9} parent=1 // loop_header
      %s15 = sphi 0, %s19
      %p16 = scmp.ge.s32.totalorder %s15, 10
      %s22 = sphi 0, %s41
      %s23 = sphi 0, %s37
      %s24 = sphi 0, %s33
      %s25 = sphi 0, %s22
      %s26 = sphi 0, %s23
      %s27 = sphi 0, %s24
      %s28 = sphi 0, %s25
      %s29 = sphi 0, %s26
      %s30 = sphi 0, %s27
      %s46 = sphi 0, %s48
      %s49 = sphi 0, %s46
      %s50 = sphi 0, %s49
      %s66 = sphi 0, %s50
      %s74 = sphi 0, %s76
      %s77 = sphi 0, %s74
      %s78 = sphi 0, %s77
      %s94 = sphi 0, %s78
      %s100 = sphi 0, %s102
      %s103 = sphi 0, %s100
      %s104 = sphi 0, %s103
      %s120 = sphi 0, %s104
      %s128 = sphi 0, %s130
      %s131 = sphi 0, %s128
      %s132 = sphi 0, %s131
      %s148 = sphi 0, %s132
    $region4: #{fwd.9} parent=1 // loop_header_branch
      %18 = sbr.rel (%p16) target = $region8
    $region5: #{fwd.9} parent=1 // loop_body
      %s20 = ssub.s32 %s15, 1
      %s21 = ssub.s32 %s15, 2
      %s31 = sadd.s32 1, %s24
      %p32 = scmp.ge.s32.totalorder %s31, 4
      %s33 = scalar_select %p32, 0, %s31
      %s34 = sadd.s32 1, %s23
      %s35 = scalar_select %p32, %s34, %s23
      %p36 = scmp.ge.s32.totalorder %s35, 2
      %s37 = scalar_select %p36, 0, %s35
      %s38 = sadd.s32 1, %s22
      %s39 = scalar_select %p36, %s38, %s22
      %p40 = scmp.ge.s32.totalorder %s39, 1
      %s41 = scalar_select %p40, 0, %s39
      %s42 = ssub.s32 %s22, %s41
      %s43 = ssub.s32 %s24, %s33
      %s44 = sor.u32 %s42, %s43
      %p45 = scmp.eq.s32.totalorder %s44, 0
      %s47 = sadd.s32 %s46, 1
      %s48 = scalar_select %p45, %s46, %s47
      %p51 = pneg %p45
      %p52 = scmp.eq.s32.totalorder %s15, 7
      %p53 = por %p51, %p52
      %p54 = scmp.ne.s32.totalorder %s46, %s49
      %p55 = scmp.eq.s32.totalorder %s15, 0
      %p56 = por %p54, %p55
      %p57 = scmp.ne.s32.totalorder %s46, %s49
      %p58 = scmp.eq.s32.totalorder %s20, 7
      %p59 = por %p57, %p58
      %p60 = scmp.ne.s32.totalorder %s49, %s50
      %p61 = scmp.eq.s32.totalorder %s20, 0
      %p62 = por %p60, %p61
      %p63 = scmp.ne.s32.totalorder %s49, %s50
      %p64 = scmp.eq.s32.totalorder %s21, 7
      %p65 = por %p63, %p64
      %p67 = scmp.ne.s32.totalorder %s50, %s66
      %p68 = scmp.eq.s32.totalorder %s21, 0
      %p69 = por %p67, %p68
      %s70 = ssub.s32 %s24, %s33
      %s71 = ssub.s32 %s23, %s37
      %s72 = sor.u32 %s70, %s71
      %p73 = scmp.eq.s32.totalorder %s72, 0
      %s75 = sadd.s32 %s74, 1
      %s76 = scalar_select %p73, %s74, %s75
      %p79 = pneg %p73
      %p80 = scmp.eq.s32.totalorder %s15, 7
      %p81 = por %p79, %p80
      %p82 = scmp.ne.s32.totalorder %s74, %s77
      %p83 = scmp.eq.s32.totalorder %s15, 0
      %p84 = por %p82, %p83
      %p85 = scmp.ne.s32.totalorder %s74, %s77
      %p86 = scmp.eq.s32.totalorder %s20, 7
      %p87 = por %p85, %p86
      %p88 = scmp.ne.s32.totalorder %s77, %s78
      %p89 = scmp.eq.s32.totalorder %s20, 0
      %p90 = por %p88, %p89
      %p91 = scmp.ne.s32.totalorder %s77, %s78
      %p92 = scmp.eq.s32.totalorder %s21, 7
      %p93 = por %p91, %p92
      %p95 = scmp.ne.s32.totalorder %s78, %s94
      %p96 = scmp.eq.s32.totalorder %s21, 0
      %p97 = por %p95, %p96
      %s98 = ssub.s32 %s23, %s37
      %p99 = scmp.eq.s32.totalorder %s98, 0
      %s101 = sadd.s32 %s100, 1
      %s102 = scalar_select %p99, %s100, %s101
      %p105 = pneg %p99
      %p106 = scmp.eq.s32.totalorder %s15, 7
      %p107 = por %p105, %p106
      %p108 = scmp.ne.s32.totalorder %s100, %s103
      %p109 = scmp.eq.s32.totalorder %s15, 0
      %p110 = por %p108, %p109
      %p111 = scmp.ne.s32.totalorder %s100, %s103
      %p112 = scmp.eq.s32.totalorder %s20, 7
      %p113 = por %p111, %p112
      %p114 = scmp.ne.s32.totalorder %s103, %s104
      %p115 = scmp.eq.s32.totalorder %s20, 0
      %p116 = por %p114, %p115
      %p117 = scmp.ne.s32.totalorder %s103, %s104
      %p118 = scmp.eq.s32.totalorder %s21, 7
      %p119 = por %p117, %p118
      %p121 = scmp.ne.s32.totalorder %s104, %s120
      %p122 = scmp.eq.s32.totalorder %s21, 0
      %p123 = por %p121, %p122
      %s124 = ssub.s32 %s22, %s41
      %s125 = ssub.s32 %s23, %s37
      %s126 = sor.u32 %s124, %s125
      %p127 = scmp.eq.s32.totalorder %s126, 0
      %s129 = sadd.s32 %s128, 1
      %s130 = scalar_select %p127, %s128, %s129
      %p133 = pneg %p127
      %p134 = scmp.eq.s32.totalorder %s15, 7
      %p135 = por %p133, %p134
      %p136 = scmp.ne.s32.totalorder %s128, %s131
      %p137 = scmp.eq.s32.totalorder %s15, 0
      %p138 = por %p136, %p137
      %p139 = scmp.ne.s32.totalorder %s128, %s131
      %p140 = scmp.eq.s32.totalorder %s20, 7
      %p141 = por %p139, %p140
      %p142 = scmp.ne.s32.totalorder %s131, %s132
      %p143 = scmp.eq.s32.totalorder %s20, 0
      %p144 = por %p142, %p143
      %p145 = scmp.ne.s32.totalorder %s131, %s132
      %p146 = scmp.eq.s32.totalorder %s21, 7
      %p147 = por %p145, %p146
      %p149 = scmp.ne.s32.totalorder %s132, %s148
      %p150 = scmp.eq.s32.totalorder %s21, 0
      %p151 = por %p149, %p150
      %p152 = scmp.le.s32.totalorder 1, %s15
      %p153 = scmp.lt.s32.totalorder %s15, 9
      %p154 = pnand %p152, %p153
      %p155 = pneg %p154
      // Predicated region
      $region9: #{fwd.9} parent=5 // pred_check
        _
      $region10: #{fwd.9} parent=5 // pred_check_branch
        %157 = sbr.rel (%p154) target = $region12
      $region11: #{fwd.9} parent=5 // pred_region
        %s158 = ssub.s32 %s15, 1
      $region12: #{fwd.9} parent=5 // pred_fallthru
        _
      %p159 = scmp.lt.s32.totalorder %s15, 8
      // Predicated region
      $region13: #{fwd.9} parent=5 // pred_check
        %p160 = pneg %p159
      $region14: #{fwd.9} parent=5 // pred_check_branch
        %162 = sbr.rel (%p160) target = $region16
      $region15: #{fwd.9} parent=5 // pred_region
        // Predicated region
        $region17: #{fwd.9} parent=15 // pred_check
          %p163 = pneg %p56
        $region18: #{fwd.9} parent=15 // pred_check_branch
          %165 = sbr.rel (%p163) target = $region20
        $region19: #{fwd.9} parent=15 // pred_region
          %s166 = sand.u32 %s46, 1
          %s167 = sand.u32 %s46, 1
          %s168 = smul.addr %s167, 40
          %s169 = scalar_lea.vmem [#allocation3], %s168
          %s170 = smul.u32 2, %s22
          %s171 = smul.u32 5, %s24
          %s172 = smul.addr %s170, 20
          %s173 = sadd.s32 %s171, %s172
          %s174 = smul.addr %s173, 4
          %s175 = scalar_lea.vmem %s0, %s174
          // Predicated region
          $region21: #{fwd.9} parent=19 // pred_check
            _
          $region22: #{fwd.9} parent=19 // pred_check_branch
            %177 = sbr.rel (0) target = $region24
          $region23: #{fwd.9} parent=19 // pred_region
            // Predicated region
            $region25: #{fwd.9} parent=23 // pred_check
              _
            $region26: #{fwd.9} parent=23 // pred_check_branch
              %179 = sbr.rel (0) target = $region28
            $region27: #{fwd.9} parent=23 // pred_region
              %s180 = scalar_lea.vmem %s175, 16
              %s181 = scalar_lea.vmem %s169, 16 [#allocation3]
              loop: start=0, step=1, limit=1
              $region29: #{fwd.9} parent=27 // loop_pre_header
                _
              $region30: #{fwd.9} parent=27 // loop_header
                %s183 = sphi 0, %s187
                %p184 = scmp.ge.s32.totalorder %s183, 1
                %s188 = sphi %s175, %s175
                %s189 = sphi %s169, %s169
              $region31: #{fwd.9} parent=27 // loop_header_branch
                %186 = sbr.rel (%p184) target = $region35
              $region32: #{fwd.9} parent=27 // loop_body
                %v190 = vld [vmem:[%s188] sm:$0xff]
                %191 = vst [vmem:[%s189] sm:$0xff] %v190
                %v192 = vld [vmem:[%s188 + $0x8] sm:$0xff]
                %193 = vst [vmem:[%s189 + $0x8] sm:$0xff] %v192
                %v194 = vld [vmem:[%s188 + $0x50] sm:$0xff]
                %195 = vst [vmem:[%s189 + $0x14] sm:$0xff] %v194
                %v196 = vld [vmem:[%s188 + $0x58] sm:$0xff]
                %197 = vst [vmem:[%s189 + $0x1c] sm:$0xff] %v196
              $region33: #{fwd.9} parent=27 // loop_footer
                %s187 = sadd.s32 1, %s183
              $region34: #{fwd.9} parent=27 // loop_footer_branch
                %182 = sbr.rel target = $region30
              $region35: #{fwd.9} parent=27 // loop_exit
                _
              loop: start=0, step=1, limit=1
              $region36: #{fwd.9} parent=27 // loop_pre_header
                _
              $region37: #{fwd.9} parent=27 // loop_header
                %s200 = sphi 0, %s204
                %p201 = scmp.ge.s32.totalorder %s200, 1
                %s205 = sphi %s180, %s180
                %s206 = sphi %s181, %s181
              $region38: #{fwd.9} parent=27 // loop_header_branch
                %203 = sbr.rel (%p201) target = $region42
              $region39: #{fwd.9} parent=27 // loop_body
                %v207 = vld [vmem:[%s205] sm:$0xf]
                %208 = vst [vmem:[%s206] sm:$0xf] %v207
                %v209 = vld [vmem:[%s205 + $0x50] sm:$0xf]
                %210 = vst [vmem:[%s206 + $0x14] sm:$0xf] %v209
              $region40: #{fwd.9} parent=27 // loop_footer
                %s204 = sadd.s32 1, %s200
              $region41: #{fwd.9} parent=27 // loop_footer_branch
                %199 = sbr.rel target = $region37
              $region42: #{fwd.9} parent=27 // loop_exit
                _
            $region28: #{fwd.9} parent=23 // pred_fallthru
              _
          $region24: #{fwd.9} parent=19 // pred_fallthru
            _
          %211 = vnop
        $region20: #{fwd.9} parent=15 // pred_fallthru
          _
        // Predicated region
        $region43: #{fwd.9} parent=15 // pred_check
          %p212 = pneg %p84
        $region44: #{fwd.9} parent=15 // pred_check_branch
          %214 = sbr.rel (%p212) target = $region46
        $region45: #{fwd.9} parent=15 // pred_region
          %s215 = sand.u32 %s74, 1
          %s216 = scalar_lea.sflag [#allocation5], %s215
          %s217 = sand.u32 %s74, 1
          %s218 = smul.addr %s217, 1280
          %s219 = scalar_lea.vmem [#allocation4], %s218
          %s220 = smul.u32 80, %s24
          %s221 = smul.u32 4, %s23
          %s223 = ssub.s32 20480, 20480
          %224 = vsyncadd %s216, %s223
          %s225 = smul.addr %s220, 8
          %s226 = sadd.s32 %s221, %s225
          %s227 = smul.addr %s226, 64
          %s228 = scalar_lea.hbm %s1, %s227
          %s229 = sshll.u32 %s219, 4
          %s230 = int_to_ptr.vmem [resolvable:$true] %s229
          %235 = dma.hbm_to_vmem [thread:$0]  %s228, 20480, %s230, %s216, 512, 256, 16
        $region46: #{fwd.9} parent=15 // pred_fallthru
          _
        // Predicated region
        $region47: #{fwd.9} parent=15 // pred_check
          %p236 = pneg %p110
        $region48: #{fwd.9} parent=15 // pred_check_branch
          %238 = sbr.rel (%p236) target = $region50
        $region49: #{fwd.9} parent=15 // pred_region
          %s239 = sand.u32 %s100, 1
          %s240 = scalar_lea.sflag [#allocation7], %s239
          %s241 = sand.u32 %s100, 1
          %s242 = smul.addr %s241, 4
          %s243 = scalar_lea.vmem [#allocation6], %s242
          %s244 = smul.u32 4, %s23
          %s246 = ssub.s32 64, 64
          %247 = vsyncadd %s240, %s246
          %s248 = smul.addr %s244, 16
          %s249 = scalar_lea.hbm %s2, %s248
          %s251 = sshll.u32 %s243, 4
          %s252 = int_to_ptr.vmem [resolvable:$true] %s251
          %254 = dma.hbm_to_vmem [thread:$0]  %s249, 64, %s252, %s240
        $region50: #{fwd.9} parent=15 // pred_fallthru
          _
      $region16: #{fwd.9} parent=5 // pred_fallthru
        _
      %p255 = scmp.le.s32.totalorder 1, %s15
      %p256 = scmp.lt.s32.totalorder %s15, 9
      %p257 = pnand %p255, %p256
      %p258 = pneg %p257
      // Predicated region
      $region51: #{fwd.9} parent=5 // pred_check
        _
      $region52: #{fwd.9} parent=5 // pred_check_branch
        %260 = sbr.rel (%p257) target = $region54
      $region53: #{fwd.9} parent=5 // pred_region
        %s261 = ssub.s32 %s15, 1
        %s262 = sand.u32 %s49, 1
        %s263 = sand.u32 %s49, 1
        %s264 = smul.addr %s263, 40
        %s265 = scalar_lea.vmem [#allocation3], %s264
        // Predicated region
        $region55: #{fwd.9} parent=53 // pred_check
          %p266 = pneg %p62
        $region56: #{fwd.9} parent=53 // pred_check_branch
          %268 = sbr.rel (%p266) target = $region58
        $region57: #{fwd.9} parent=53 // pred_region
          _
        $region58: #{fwd.9} parent=53 // pred_fallthru
          _
        %s269 = sand.u32 %s77, 1
        %s270 = scalar_lea.sflag [#allocation5], %s269
        %s271 = sand.u32 %s77, 1
        %s272 = smul.addr %s271, 1280
        %s273 = scalar_lea.vmem [#allocation4], %s272
        // Predicated region
        $region59: #{fwd.9} parent=53 // pred_check
          %p274 = pneg %p90
        $region60: #{fwd.9} parent=53 // pred_check_branch
          %276 = sbr.rel (%p274) target = $region62
        $region61: #{fwd.9} parent=53 // pred_region
          %277 = dma.done %s270, 20480
        $region62: #{fwd.9} parent=53 // pred_fallthru
          _
        %s278 = sand.u32 %s103, 1
        %s279 = scalar_lea.sflag [#allocation7], %s278
        %s280 = sand.u32 %s103, 1
        %s281 = smul.addr %s280, 4
        %s282 = scalar_lea.vmem [#allocation6], %s281
        // Predicated region
        $region63: #{fwd.9} parent=53 // pred_check
          %p283 = pneg %p116
        $region64: #{fwd.9} parent=53 // pred_check_branch
          %285 = sbr.rel (%p283) target = $region66
        $region65: #{fwd.9} parent=53 // pred_region
          %286 = dma.done %s279, 64
        $region66: #{fwd.9} parent=53 // pred_fallthru
          _
        %s287 = sand.u32 %s49, 1
        %s288 = sand.u32 %s49, 1
        %s289 = smul.addr %s288, 40
        %s290 = scalar_lea.vmem [#allocation3], %s289
        %p291 = pneg %p62
        %p292 = pneg %p59
        %s293 = sand.u32 %s77, 1
        %s294 = scalar_lea.sflag [#allocation5], %s293
        %s295 = sand.u32 %s77, 1
        %s296 = smul.addr %s295, 1280
        %s297 = scalar_lea.vmem [#allocation4], %s296
        %p298 = pneg %p90
        %p299 = pneg %p87
        %s300 = sand.u32 %s103, 1
        %s301 = scalar_lea.sflag [#allocation7], %s300
        %s302 = sand.u32 %s103, 1
        %s303 = smul.addr %s302, 4
        %s304 = scalar_lea.vmem [#allocation6], %s303
        %p305 = pneg %p116
        %p306 = pneg %p113
        %p307 = pneg %p144
        %p308 = pneg %p141
        %s309 = sand.u32 %s131, 1
        %s310 = sand.u32 %s131, 1
        %s311 = smul.addr %s310, 64
        %s312 = scalar_lea.vmem [#allocation8], %s311
        %s313 = smul.u32 2, %s25
        %s314 = smul.u32 5, %s27
        %s315 = smul.u32 80, %s27
        %s316 = smul.u32 4, %s26
        %s317 = smul.u32 4, %s26
        %s318 = smul.u32 2, %s25
        %s319 = smul.u32 4, %s26
        %p321 = scmp.eq.s32.totalorder %s27, 0
        // Predicated region
        $region67: #{fwd.9} parent=53 // pred_check
          %p322 = pneg %p321
        $region68: #{fwd.9} parent=53 // pred_check_branch
          %324 = sbr.rel (%p322) target = $region70
        $region69: #{fwd.9} parent=53 // pred_region
          %325 = vst [vmem:[#allocation2] sm:$0xff] 0.0
          %326 = vst [vmem:[#allocation2 + $0x8] sm:$0xff] 0.0
          %327 = vst [vmem:[#allocation2 + $0x10] sm:$0xff] 0.0
          %328 = vst [vmem:[#allocation2 + $0x18] sm:$0xff] 0.0
          %329 = vst [vmem:[#allocation2 + $0x20] sm:$0xff] 0.0
          %330 = vst [vmem:[#allocation2 + $0x28] sm:$0xff] 0.0
          %331 = vst [vmem:[#allocation2 + $0x30] sm:$0xff] 0.0
          %332 = vst [vmem:[#allocation2 + $0x38] sm:$0xff] 0.0
        $region70: #{fwd.9} parent=53 // pred_fallthru
          _
        %v333 = vld [vmem:[#allocation2] sm:$0xff]
        %v334 = vld [vmem:[#allocation2 + $0x8] sm:$0xff]
        %v335 = vld [vmem:[#allocation2 + $0x10] sm:$0xff]
        %v336 = vld [vmem:[#allocation2 + $0x18] sm:$0xff]
        %v337 = vld [vmem:[#allocation2 + $0x20] sm:$0xff]
        %v338 = vld [vmem:[#allocation2 + $0x28] sm:$0xff]
        %v339 = vld [vmem:[#allocation2 + $0x30] sm:$0xff]
        %v340 = vld [vmem:[#allocation2 + $0x38] sm:$0xff]
        %v341 = vld [vmem:[%s265] sm:$0xff]
        %v342 = vld [vmem:[%s265 + $0x8] sm:$0xff]
        %v343 = vld [vmem:[%s265 + $0x10] sm:$0xf]
        %v344 = vld [vmem:[%s265 + $0x14] sm:$0xff]
        %v345 = vld [vmem:[%s265 + $0x1c] sm:$0xff]
        %v346 = vld [vmem:[%s265 + $0x24] sm:$0xf]
        %v347 = vld [vmem:[%s273] sm:$0xff]
        %v348 = vld [vmem:[%s273 + $0x8] sm:$0xff]
        %v349 = vld [vmem:[%s273 + $0x10] sm:$0xff]
        %v350 = vld [vmem:[%s273 + $0x18] sm:$0xff]
        %v351 = vld [vmem:[%s273 + $0x20] sm:$0xff]
        %v352 = vld [vmem:[%s273 + $0x28] sm:$0xff]
        %v353 = vld [vmem:[%s273 + $0x30] sm:$0xff]
        %v354 = vld [vmem:[%s273 + $0x38] sm:$0xff]
        %v355 = vld [vmem:[%s273 + $0x40] sm:$0xff]
        %v356 = vld [vmem:[%s273 + $0x48] sm:$0xff]
        %v357 = vld [vmem:[%s273 + $0x50] sm:$0xff]
        %v358 = vld [vmem:[%s273 + $0x58] sm:$0xff]
        %v359 = vld [vmem:[%s273 + $0x60] sm:$0xff]
        %v360 = vld [vmem:[%s273 + $0x68] sm:$0xff]
        %v361 = vld [vmem:[%s273 + $0x70] sm:$0xff]
        %v362 = vld [vmem:[%s273 + $0x78] sm:$0xff]
        %v363 = vld [vmem:[%s273 + $0x80] sm:$0xff]
        %v364 = vld [vmem:[%s273 + $0x88] sm:$0xff]
        %v365 = vld [vmem:[%s273 + $0x90] sm:$0xff]
        %v366 = vld [vmem:[%s273 + $0x98] sm:$0xff]
        %v367 = vld [vmem:[%s273 + $0xa0] sm:$0xff]
        %v368 = vld [vmem:[%s273 + $0xa8] sm:$0xff]
        %v369 = vld [vmem:[%s273 + $0xb0] sm:$0xff]
        %v370 = vld [vmem:[%s273 + $0xb8] sm:$0xff]
        %v371 = vld [vmem:[%s273 + $0xc0] sm:$0xff]
        %v372 = vld [vmem:[%s273 + $0xc8] sm:$0xff]
        %v373 = vld [vmem:[%s273 + $0xd0] sm:$0xff]
        %v374 = vld [vmem:[%s273 + $0xd8] sm:$0xff]
        %v375 = vld [vmem:[%s273 + $0xe0] sm:$0xff]
        %v376 = vld [vmem:[%s273 + $0xe8] sm:$0xff]
        %v377 = vld [vmem:[%s273 + $0xf0] sm:$0xff]
        %v378 = vld [vmem:[%s273 + $0xf8] sm:$0xff]
        %v379 = vld [vmem:[%s273 + $0x100] sm:$0xff]
        %v380 = vld [vmem:[%s273 + $0x108] sm:$0xff]
        %v381 = vld [vmem:[%s273 + $0x110] sm:$0xff]
        %v382 = vld [vmem:[%s273 + $0x118] sm:$0xff]
        %v383 = vld [vmem:[%s273 + $0x120] sm:$0xff]
        %v384 = vld [vmem:[%s273 + $0x128] sm:$0xff]
        %v385 = vld [vmem:[%s273 + $0x130] sm:$0xff]
        %v386 = vld [vmem:[%s273 + $0x138] sm:$0xff]
        %v387 = vld [vmem:[%s273 + $0x140] sm:$0xff]
        %v388 = vld [vmem:[%s273 + $0x148] sm:$0xff]
        %v389 = vld [vmem:[%s273 + $0x150] sm:$0xff]
        %v390 = vld [vmem:[%s273 + $0x158] sm:$0xff]
        %v391 = vld [vmem:[%s273 + $0x160] sm:$0xff]
        %v392 = vld [vmem:[%s273 + $0x168] sm:$0xff]
        %v393 = vld [vmem:[%s273 + $0x170] sm:$0xff]
        %v394 = vld [vmem:[%s273 + $0x178] sm:$0xff]
        %v395 = vld [vmem:[%s273 + $0x180] sm:$0xff]
        %v396 = vld [vmem:[%s273 + $0x188] sm:$0xff]
        %v397 = vld [vmem:[%s273 + $0x190] sm:$0xff]
        %v398 = vld [vmem:[%s273 + $0x198] sm:$0xff]
        %v399 = vld [vmem:[%s273 + $0x1a0] sm:$0xff]
        %v400 = vld [vmem:[%s273 + $0x1a8] sm:$0xff]
        %v401 = vld [vmem:[%s273 + $0x1b0] sm:$0xff]
        %v402 = vld [vmem:[%s273 + $0x1b8] sm:$0xff]
        %v403 = vld [vmem:[%s273 + $0x1c0] sm:$0xff]
        %v404 = vld [vmem:[%s273 + $0x1c8] sm:$0xff]
        %v405 = vld [vmem:[%s273 + $0x1d0] sm:$0xff]
        %v406 = vld [vmem:[%s273 + $0x1d8] sm:$0xff]
        %v407 = vld [vmem:[%s273 + $0x1e0] sm:$0xff]
        %v408 = vld [vmem:[%s273 + $0x1e8] sm:$0xff]
        %v409 = vld [vmem:[%s273 + $0x1f0] sm:$0xff]
        %v410 = vld [vmem:[%s273 + $0x1f8] sm:$0xff]
        %v411 = vld [vmem:[%s273 + $0x200] sm:$0xff]
        %v412 = vld [vmem:[%s273 + $0x208] sm:$0xff]
        %v413 = vld [vmem:[%s273 + $0x210] sm:$0xff]
        %v414 = vld [vmem:[%s273 + $0x218] sm:$0xff]
        %v415 = vld [vmem:[%s273 + $0x220] sm:$0xff]
        %v416 = vld [vmem:[%s273 + $0x228] sm:$0xff]
        %v417 = vld [vmem:[%s273 + $0x230] sm:$0xff]
        %v418 = vld [vmem:[%s273 + $0x238] sm:$0xff]
        %v419 = vld [vmem:[%s273 + $0x240] sm:$0xff]
        %v420 = vld [vmem:[%s273 + $0x248] sm:$0xff]
        %v421 = vld [vmem:[%s273 + $0x250] sm:$0xff]
        %v422 = vld [vmem:[%s273 + $0x258] sm:$0xff]
        %v423 = vld [vmem:[%s273 + $0x260] sm:$0xff]
        %v424 = vld [vmem:[%s273 + $0x268] sm:$0xff]
        %v425 = vld [vmem:[%s273 + $0x270] sm:$0xff]
        %v426 = vld [vmem:[%s273 + $0x278] sm:$0xff]
        %v427 = vld [vmem:[%s273 + $0x280] sm:$0xff]
        %v428 = vld [vmem:[%s273 + $0x288] sm:$0xff]
        %v429 = vld [vmem:[%s273 + $0x290] sm:$0xff]
        %v430 = vld [vmem:[%s273 + $0x298] sm:$0xff]
        %v431 = vld [vmem:[%s273 + $0x2a0] sm:$0xff]
        %v432 = vld [vmem:[%s273 + $0x2a8] sm:$0xff]
        %v433 = vld [vmem:[%s273 + $0x2b0] sm:$0xff]
        %v434 = vld [vmem:[%s273 + $0x2b8] sm:$0xff]
        %v435 = vld [vmem:[%s273 + $0x2c0] sm:$0xff]
        %v436 = vld [vmem:[%s273 + $0x2c8] sm:$0xff]
        %v437 = vld [vmem:[%s273 + $0x2d0] sm:$0xff]
        %v438 = vld [vmem:[%s273 + $0x2d8] sm:$0xff]
        %v439 = vld [vmem:[%s273 + $0x2e0] sm:$0xff]
        %v440 = vld [vmem:[%s273 + $0x2e8] sm:$0xff]
        %v441 = vld [vmem:[%s273 + $0x2f0] sm:$0xff]
        %v442 = vld [vmem:[%s273 + $0x2f8] sm:$0xff]
        %v443 = vld [vmem:[%s273 + $0x300] sm:$0xff]
        %v444 = vld [vmem:[%s273 + $0x308] sm:$0xff]
        %v445 = vld [vmem:[%s273 + $0x310] sm:$0xff]
        %v446 = vld [vmem:[%s273 + $0x318] sm:$0xff]
        %v447 = vld [vmem:[%s273 + $0x320] sm:$0xff]
        %v448 = vld [vmem:[%s273 + $0x328] sm:$0xff]
        %v449 = vld [vmem:[%s273 + $0x330] sm:$0xff]
        %v450 = vld [vmem:[%s273 + $0x338] sm:$0xff]
        %v451 = vld [vmem:[%s273 + $0x340] sm:$0xff]
        %v452 = vld [vmem:[%s273 + $0x348] sm:$0xff]
        %v453 = vld [vmem:[%s273 + $0x350] sm:$0xff]
        %v454 = vld [vmem:[%s273 + $0x358] sm:$0xff]
        %v455 = vld [vmem:[%s273 + $0x360] sm:$0xff]
        %v456 = vld [vmem:[%s273 + $0x368] sm:$0xff]
        %v457 = vld [vmem:[%s273 + $0x370] sm:$0xff]
        %v458 = vld [vmem:[%s273 + $0x378] sm:$0xff]
        %v459 = vld [vmem:[%s273 + $0x380] sm:$0xff]
        %v460 = vld [vmem:[%s273 + $0x388] sm:$0xff]
        %v461 = vld [vmem:[%s273 + $0x390] sm:$0xff]
        %v462 = vld [vmem:[%s273 + $0x398] sm:$0xff]
        %v463 = vld [vmem:[%s273 + $0x3a0] sm:$0xff]
        %v464 = vld [vmem:[%s273 + $0x3a8] sm:$0xff]
        %v465 = vld [vmem:[%s273 + $0x3b0] sm:$0xff]
        %v466 = vld [vmem:[%s273 + $0x3b8] sm:$0xff]
        %v467 = vld [vmem:[%s273 + $0x3c0] sm:$0xff]
        %v468 = vld [vmem:[%s273 + $0x3c8] sm:$0xff]
        %v469 = vld [vmem:[%s273 + $0x3d0] sm:$0xff]
        %v470 = vld [vmem:[%s273 + $0x3d8] sm:$0xff]
        %v471 = vld [vmem:[%s273 + $0x3e0] sm:$0xff]
        %v472 = vld [vmem:[%s273 + $0x3e8] sm:$0xff]
        %v473 = vld [vmem:[%s273 + $0x3f0] sm:$0xff]
        %v474 = vld [vmem:[%s273 + $0x3f8] sm:$0xff]
        %v475 = vld [vmem:[%s273 + $0x400] sm:$0xff]
        %v476 = vld [vmem:[%s273 + $0x408] sm:$0xff]
        %v477 = vld [vmem:[%s273 + $0x410] sm:$0xff]
        %v478 = vld [vmem:[%s273 + $0x418] sm:$0xff]
        %v479 = vld [vmem:[%s273 + $0x420] sm:$0xff]
        %v480 = vld [vmem:[%s273 + $0x428] sm:$0xff]
        %v481 = vld [vmem:[%s273 + $0x430] sm:$0xff]
        %v482 = vld [vmem:[%s273 + $0x438] sm:$0xff]
        %v483 = vld [vmem:[%s273 + $0x440] sm:$0xff]
        %v484 = vld [vmem:[%s273 + $0x448] sm:$0xff]
        %v485 = vld [vmem:[%s273 + $0x450] sm:$0xff]
        %v486 = vld [vmem:[%s273 + $0x458] sm:$0xff]
        %v487 = vld [vmem:[%s273 + $0x460] sm:$0xff]
        %v488 = vld [vmem:[%s273 + $0x468] sm:$0xff]
        %v489 = vld [vmem:[%s273 + $0x470] sm:$0xff]
        %v490 = vld [vmem:[%s273 + $0x478] sm:$0xff]
        %v491 = vld [vmem:[%s273 + $0x480] sm:$0xff]
        %v492 = vld [vmem:[%s273 + $0x488] sm:$0xff]
        %v493 = vld [vmem:[%s273 + $0x490] sm:$0xff]
        %v494 = vld [vmem:[%s273 + $0x498] sm:$0xff]
        %v495 = vld [vmem:[%s273 + $0x4a0] sm:$0xff]
        %v496 = vld [vmem:[%s273 + $0x4a8] sm:$0xff]
        %v497 = vld [vmem:[%s273 + $0x4b0] sm:$0xff]
        %v498 = vld [vmem:[%s273 + $0x4b8] sm:$0xff]
        %v499 = vld [vmem:[%s273 + $0x4c0] sm:$0xff]
        %v500 = vld [vmem:[%s273 + $0x4c8] sm:$0xff]
        %v501 = vld [vmem:[%s273 + $0x4d0] sm:$0xff]
        %v502 = vld [vmem:[%s273 + $0x4d8] sm:$0xff]
        %v503 = vld [vmem:[%s273 + $0x4e0] sm:$0xff]
        %v504 = vld [vmem:[%s273 + $0x4e8] sm:$0xff]
        %v505 = vld [vmem:[%s273 + $0x4f0] sm:$0xff]
        %v506 = vld [vmem:[%s273 + $0x4f8] sm:$0xff]
        %v513 = vunpack.c.l.b16 %v341
        %v514 = vunpack.c.h.b16 %v341
        %v515 = vunpack.c.l.b16 %v342
        %v516 = vunpack.c.h.b16 %v342
        %v517 = vunpack.c.l.b16 %v343
        %v518 = vunpack.c.l.b16 %v344
        %v519 = vunpack.c.h.b16 %v344
        %v520 = vunpack.c.l.b16 %v345
        %v521 = vunpack.c.h.b16 %v345
        %v522 = vunpack.c.l.b16 %v346
        %v523 = vpack.c.b16 %v518, %v513
        %v524 = vpack.c.b16 %v519, %v514
        %v525 = vpack.c.b16 %v520, %v515
        %v526 = vpack.c.b16 %v521, %v516
        %v527 = vpack.c.b16 %v522, %v517
        %v693 = vunpack.c.l.b16 %v347
        %v694 = vunpack.c.h.b16 %v347
        %v695 = vunpack.c.l.b16 %v348
        %v696 = vunpack.c.h.b16 %v348
        %v697 = vunpack.c.l.b16 %v349
        %v698 = vunpack.c.h.b16 %v349
        %v699 = vunpack.c.l.b16 %v350
        %v700 = vunpack.c.h.b16 %v350
        %v701 = vunpack.c.l.b16 %v351
        %v702 = vunpack.c.h.b16 %v351
        %v703 = vunpack.c.l.b16 %v352
        %v704 = vunpack.c.h.b16 %v352
        %v705 = vunpack.c.l.b16 %v353
        %v706 = vunpack.c.h.b16 %v353
        %v707 = vunpack.c.l.b16 %v354
        %v708 = vunpack.c.h.b16 %v354
        %v709 = vunpack.c.l.b16 %v355
        %v710 = vunpack.c.h.b16 %v355
        %v711 = vunpack.c.l.b16 %v356
        %v712 = vunpack.c.h.b16 %v356
        %v713 = vunpack.c.l.b16 %v357
        %v714 = vunpack.c.h.b16 %v357
        %v715 = vunpack.c.l.b16 %v358
        %v716 = vunpack.c.h.b16 %v358
        %v717 = vunpack.c.l.b16 %v359
        %v718 = vunpack.c.h.b16 %v359
        %v719 = vunpack.c.l.b16 %v360
        %v720 = vunpack.c.h.b16 %v360
        %v721 = vunpack.c.l.b16 %v361
        %v722 = vunpack.c.h.b16 %v361
        %v723 = vunpack.c.l.b16 %v362
        %v724 = vunpack.c.h.b16 %v362
        %v725 = vunpack.c.l.b16 %v363
        %v726 = vunpack.c.h.b16 %v363
        %v727 = vunpack.c.l.b16 %v364
        %v728 = vunpack.c.h.b16 %v364
        %v729 = vunpack.c.l.b16 %v365
        %v730 = vunpack.c.h.b16 %v365
        %v731 = vunpack.c.l.b16 %v366
        %v732 = vunpack.c.h.b16 %v366
        %v733 = vunpack.c.l.b16 %v367
        %v734 = vunpack.c.h.b16 %v367
        %v735 = vunpack.c.l.b16 %v368
        %v736 = vunpack.c.h.b16 %v368
        %v737 = vunpack.c.l.b16 %v369
        %v738 = vunpack.c.h.b16 %v369
        %v739 = vunpack.c.l.b16 %v370
        %v740 = vunpack.c.h.b16 %v370
        %v741 = vunpack.c.l.b16 %v371
        %v742 = vunpack.c.h.b16 %v371
        %v743 = vunpack.c.l.b16 %v372
        %v744 = vunpack.c.h.b16 %v372
        %v745 = vunpack.c.l.b16 %v373
        %v746 = vunpack.c.h.b16 %v373
        %v747 = vunpack.c.l.b16 %v374
        %v748 = vunpack.c.h.b16 %v374
        %v749 = vunpack.c.l.b16 %v375
        %v750 = vunpack.c.h.b16 %v375
        %v751 = vunpack.c.l.b16 %v376
        %v752 = vunpack.c.h.b16 %v376
        %v753 = vunpack.c.l.b16 %v377
        %v754 = vunpack.c.h.b16 %v377
        %v755 = vunpack.c.l.b16 %v378
        %v756 = vunpack.c.h.b16 %v378
        %v757 = vunpack.c.l.b16 %v379
        %v758 = vunpack.c.h.b16 %v379
        %v759 = vunpack.c.l.b16 %v380
        %v760 = vunpack.c.h.b16 %v380
        %v761 = vunpack.c.l.b16 %v381
        %v762 = vunpack.c.h.b16 %v381
        %v763 = vunpack.c.l.b16 %v382
        %v764 = vunpack.c.h.b16 %v382
        %v765 = vunpack.c.l.b16 %v383
        %v766 = vunpack.c.h.b16 %v383
        %v767 = vunpack.c.l.b16 %v384
        %v768 = vunpack.c.h.b16 %v384
        %v769 = vunpack.c.l.b16 %v385
        %v770 = vunpack.c.h.b16 %v385
        %v771 = vunpack.c.l.b16 %v386
        %v772 = vunpack.c.h.b16 %v386
        %v773 = vunpack.c.l.b16 %v387
        %v774 = vunpack.c.h.b16 %v387
        %v775 = vunpack.c.l.b16 %v388
        %v776 = vunpack.c.h.b16 %v388
        %v777 = vunpack.c.l.b16 %v389
        %v778 = vunpack.c.h.b16 %v389
        %v779 = vunpack.c.l.b16 %v390
        %v780 = vunpack.c.h.b16 %v390
        %v781 = vunpack.c.l.b16 %v391
        %v782 = vunpack.c.h.b16 %v391
        %v783 = vunpack.c.l.b16 %v392
        %v784 = vunpack.c.h.b16 %v392
        %v785 = vunpack.c.l.b16 %v393
        %v786 = vunpack.c.h.b16 %v393
        %v787 = vunpack.c.l.b16 %v394
        %v788 = vunpack.c.h.b16 %v394
        %v789 = vunpack.c.l.b16 %v395
        %v790 = vunpack.c.h.b16 %v395
        %v791 = vunpack.c.l.b16 %v396
        %v792 = vunpack.c.h.b16 %v396
        %v793 = vunpack.c.l.b16 %v397
        %v794 = vunpack.c.h.b16 %v397
        %v795 = vunpack.c.l.b16 %v398
        %v796 = vunpack.c.h.b16 %v398
        %v797 = vunpack.c.l.b16 %v399
        %v798 = vunpack.c.h.b16 %v399
        %v799 = vunpack.c.l.b16 %v400
        %v800 = vunpack.c.h.b16 %v400
        %v801 = vunpack.c.l.b16 %v401
        %v802 = vunpack.c.h.b16 %v401
        %v803 = vunpack.c.l.b16 %v402
        %v804 = vunpack.c.h.b16 %v402
        %v805 = vunpack.c.l.b16 %v403
        %v806 = vunpack.c.h.b16 %v403
        %v807 = vunpack.c.l.b16 %v404
        %v808 = vunpack.c.h.b16 %v404
        %v809 = vunpack.c.l.b16 %v405
        %v810 = vunpack.c.h.b16 %v405
        %v811 = vunpack.c.l.b16 %v406
        %v812 = vunpack.c.h.b16 %v406
        %v813 = vunpack.c.l.b16 %v407
        %v814 = vunpack.c.h.b16 %v407
        %v815 = vunpack.c.l.b16 %v408
        %v816 = vunpack.c.h.b16 %v408
        %v817 = vunpack.c.l.b16 %v409
        %v818 = vunpack.c.h.b16 %v409
        %v819 = vunpack.c.l.b16 %v410
        %v820 = vunpack.c.h.b16 %v410
        %v821 = vunpack.c.l.b16 %v411
        %v822 = vunpack.c.h.b16 %v411
        %v823 = vunpack.c.l.b16 %v412
        %v824 = vunpack.c.h.b16 %v412
        %v825 = vunpack.c.l.b16 %v413
        %v826 = vunpack.c.h.b16 %v413
        %v827 = vunpack.c.l.b16 %v414
        %v828 = vunpack.c.h.b16 %v414
        %v829 = vunpack.c.l.b16 %v415
        %v830 = vunpack.c.h.b16 %v415
        %v831 = vunpack.c.l.b16 %v416
        %v832 = vunpack.c.h.b16 %v416
        %v833 = vunpack.c.l.b16 %v417
        %v834 = vunpack.c.h.b16 %v417
        %v835 = vunpack.c.l.b16 %v418
        %v836 = vunpack.c.h.b16 %v418
        %v837 = vunpack.c.l.b16 %v419
        %v838 = vunpack.c.h.b16 %v419
        %v839 = vunpack.c.l.b16 %v420
        %v840 = vunpack.c.h.b16 %v420
        %v841 = vunpack.c.l.b16 %v421
        %v842 = vunpack.c.h.b16 %v421
        %v843 = vunpack.c.l.b16 %v422
        %v844 = vunpack.c.h.b16 %v422
        %v845 = vunpack.c.l.b16 %v423
        %v846 = vunpack.c.h.b16 %v423
        %v847 = vunpack.c.l.b16 %v424
        %v848 = vunpack.c.h.b16 %v424
        %v849 = vunpack.c.l.b16 %v425
        %v850 = vunpack.c.h.b16 %v425
        %v851 = vunpack.c.l.b16 %v426
        %v852 = vunpack.c.h.b16 %v426
        %v853 = vunpack.c.l.b16 %v427
        %v854 = vunpack.c.h.b16 %v427
        %v855 = vunpack.c.l.b16 %v428
        %v856 = vunpack.c.h.b16 %v428
        %v857 = vunpack.c.l.b16 %v429
        %v858 = vunpack.c.h.b16 %v429
        %v859 = vunpack.c.l.b16 %v430
        %v860 = vunpack.c.h.b16 %v430
        %v861 = vunpack.c.l.b16 %v431
        %v862 = vunpack.c.h.b16 %v431
        %v863 = vunpack.c.l.b16 %v432
        %v864 = vunpack.c.h.b16 %v432
        %v865 = vunpack.c.l.b16 %v433
        %v866 = vunpack.c.h.b16 %v433
        %v867 = vunpack.c.l.b16 %v434
        %v868 = vunpack.c.h.b16 %v434
        %v869 = vunpack.c.l.b16 %v435
        %v870 = vunpack.c.h.b16 %v435
        %v871 = vunpack.c.l.b16 %v436
        %v872 = vunpack.c.h.b16 %v436
        %v873 = vunpack.c.l.b16 %v437
        %v874 = vunpack.c.h.b16 %v437
        %v875 = vunpack.c.l.b16 %v438
        %v876 = vunpack.c.h.b16 %v438
        %v877 = vunpack.c.l.b16 %v439
        %v878 = vunpack.c.h.b16 %v439
        %v879 = vunpack.c.l.b16 %v440
        %v880 = vunpack.c.h.b16 %v440
        %v881 = vunpack.c.l.b16 %v441
        %v882 = vunpack.c.h.b16 %v441
        %v883 = vunpack.c.l.b16 %v442
        %v884 = vunpack.c.h.b16 %v442
        %v885 = vunpack.c.l.b16 %v443
        %v886 = vunpack.c.h.b16 %v443
        %v887 = vunpack.c.l.b16 %v444
        %v888 = vunpack.c.h.b16 %v444
        %v889 = vunpack.c.l.b16 %v445
        %v890 = vunpack.c.h.b16 %v445
        %v891 = vunpack.c.l.b16 %v446
        %v892 = vunpack.c.h.b16 %v446
        %v893 = vunpack.c.l.b16 %v447
        %v894 = vunpack.c.h.b16 %v447
        %v895 = vunpack.c.l.b16 %v448
        %v896 = vunpack.c.h.b16 %v448
        %v897 = vunpack.c.l.b16 %v449
        %v898 = vunpack.c.h.b16 %v449
        %v899 = vunpack.c.l.b16 %v450
        %v900 = vunpack.c.h.b16 %v450
        %v901 = vunpack.c.l.b16 %v451
        %v902 = vunpack.c.h.b16 %v451
        %v903 = vunpack.c.l.b16 %v452
        %v904 = vunpack.c.h.b16 %v452
        %v905 = vunpack.c.l.b16 %v453
        %v906 = vunpack.c.h.b16 %v453
        %v907 = vunpack.c.l.b16 %v454
        %v908 = vunpack.c.h.b16 %v454
        %v909 = vunpack.c.l.b16 %v455
        %v910 = vunpack.c.h.b16 %v455
        %v911 = vunpack.c.l.b16 %v456
        %v912 = vunpack.c.h.b16 %v456
        %v913 = vunpack.c.l.b16 %v457
        %v914 = vunpack.c.h.b16 %v457
        %v915 = vunpack.c.l.b16 %v458
        %v916 = vunpack.c.h.b16 %v458
        %v917 = vunpack.c.l.b16 %v459
        %v918 = vunpack.c.h.b16 %v459
        %v919 = vunpack.c.l.b16 %v460
        %v920 = vunpack.c.h.b16 %v460
        %v921 = vunpack.c.l.b16 %v461
        %v922 = vunpack.c.h.b16 %v461
        %v923 = vunpack.c.l.b16 %v462
        %v924 = vunpack.c.h.b16 %v462
        %v925 = vunpack.c.l.b16 %v463
        %v926 = vunpack.c.h.b16 %v463
        %v927 = vunpack.c.l.b16 %v464
        %v928 = vunpack.c.h.b16 %v464
        %v929 = vunpack.c.l.b16 %v465
        %v930 = vunpack.c.h.b16 %v465
        %v931 = vunpack.c.l.b16 %v466
        %v932 = vunpack.c.h.b16 %v466
        %v933 = vunpack.c.l.b16 %v467
        %v934 = vunpack.c.h.b16 %v467
        %v935 = vunpack.c.l.b16 %v468
        %v936 = vunpack.c.h.b16 %v468
        %v937 = vunpack.c.l.b16 %v469
        %v938 = vunpack.c.h.b16 %v469
        %v939 = vunpack.c.l.b16 %v470
        %v940 = vunpack.c.h.b16 %v470
        %v941 = vunpack.c.l.b16 %v471
        %v942 = vunpack.c.h.b16 %v471
        %v943 = vunpack.c.l.b16 %v472
        %v944 = vunpack.c.h.b16 %v472
        %v945 = vunpack.c.l.b16 %v473
        %v946 = vunpack.c.h.b16 %v473
        %v947 = vunpack.c.l.b16 %v474
        %v948 = vunpack.c.h.b16 %v474
        %v949 = vunpack.c.l.b16 %v475
        %v950 = vunpack.c.h.b16 %v475
        %v951 = vunpack.c.l.b16 %v476
        %v952 = vunpack.c.h.b16 %v476
        %v953 = vunpack.c.l.b16 %v477
        %v954 = vunpack.c.h.b16 %v477
        %v955 = vunpack.c.l.b16 %v478
        %v956 = vunpack.c.h.b16 %v478
        %v957 = vunpack.c.l.b16 %v479
        %v958 = vunpack.c.h.b16 %v479
        %v959 = vunpack.c.l.b16 %v480
        %v960 = vunpack.c.h.b16 %v480
        %v961 = vunpack.c.l.b16 %v481
        %v962 = vunpack.c.h.b16 %v481
        %v963 = vunpack.c.l.b16 %v482
        %v964 = vunpack.c.h.b16 %v482
        %v965 = vunpack.c.l.b16 %v483
        %v966 = vunpack.c.h.b16 %v483
        %v967 = vunpack.c.l.b16 %v484
        %v968 = vunpack.c.h.b16 %v484
        %v969 = vunpack.c.l.b16 %v485
        %v970 = vunpack.c.h.b16 %v485
        %v971 = vunpack.c.l.b16 %v486
        %v972 = vunpack.c.h.b16 %v486
        %v973 = vunpack.c.l.b16 %v487
        %v974 = vunpack.c.h.b16 %v487
        %v975 = vunpack.c.l.b16 %v488
        %v976 = vunpack.c.h.b16 %v488
        %v977 = vunpack.c.l.b16 %v489
        %v978 = vunpack.c.h.b16 %v489
        %v979 = vunpack.c.l.b16 %v490
        %v980 = vunpack.c.h.b16 %v490
        %v981 = vunpack.c.l.b16 %v491
        %v982 = vunpack.c.h.b16 %v491
        %v983 = vunpack.c.l.b16 %v492
        %v984 = vunpack.c.h.b16 %v492
        %v985 = vunpack.c.l.b16 %v493
        %v986 = vunpack.c.h.b16 %v493
        %v987 = vunpack.c.l.b16 %v494
        %v988 = vunpack.c.h.b16 %v494
        %v989 = vunpack.c.l.b16 %v495
        %v990 = vunpack.c.h.b16 %v495
        %v991 = vunpack.c.l.b16 %v496
        %v992 = vunpack.c.h.b16 %v496
        %v993 = vunpack.c.l.b16 %v497
        %v994 = vunpack.c.h.b16 %v497
        %v995 = vunpack.c.l.b16 %v498
        %v996 = vunpack.c.h.b16 %v498
        %v997 = vunpack.c.l.b16 %v499
        %v998 = vunpack.c.h.b16 %v499
        %v999 = vunpack.c.l.b16 %v500
        %v1000 = vunpack.c.h.b16 %v500
        %v1001 = vunpack.c.l.b16 %v501
        %v1002 = vunpack.c.h.b16 %v501
        %v1003 = vunpack.c.l.b16 %v502
        %v1004 = vunpack.c.h.b16 %v502
        %v1005 = vunpack.c.l.b16 %v503
        %v1006 = vunpack.c.h.b16 %v503
        %v1007 = vunpack.c.l.b16 %v504
        %v1008 = vunpack.c.h.b16 %v504
        %v1009 = vunpack.c.l.b16 %v505
        %v1010 = vunpack.c.h.b16 %v505
        %v1011 = vunpack.c.l.b16 %v506
        %v1012 = vunpack.c.h.b16 %v506
        %v1013 = vpack.c.b16 %v697, %v693
        %v1014 = vpack.c.b16 %v698, %v694
        %v1015 = vpack.c.b16 %v699, %v695
        %v1016 = vpack.c.b16 %v700, %v696
        %v1017 = vpack.c.b16 %v705, %v701
        %v1018 = vpack.c.b16 %v706, %v702
        %v1019 = vpack.c.b16 %v707, %v703
        %v1020 = vpack.c.b16 %v708, %v704
        %v1021 = vpack.c.b16 %v713, %v709
        %v1022 = vpack.c.b16 %v714, %v710
        %v1023 = vpack.c.b16 %v715, %v711
        %v1024 = vpack.c.b16 %v716, %v712
        %v1025 = vpack.c.b16 %v721, %v717
        %v1026 = vpack.c.b16 %v722, %v718
        %v1027 = vpack.c.b16 %v723, %v719
        %v1028 = vpack.c.b16 %v724, %v720
        %v1029 = vpack.c.b16 %v729, %v725
        %v1030 = vpack.c.b16 %v730, %v726
        %v1031 = vpack.c.b16 %v731, %v727
        %v1032 = vpack.c.b16 %v732, %v728
        %v1033 = vpack.c.b16 %v737, %v733
        %v1034 = vpack.c.b16 %v738, %v734
        %v1035 = vpack.c.b16 %v739, %v735
        %v1036 = vpack.c.b16 %v740, %v736
        %v1037 = vpack.c.b16 %v745, %v741
        %v1038 = vpack.c.b16 %v746, %v742
        %v1039 = vpack.c.b16 %v747, %v743
        %v1040 = vpack.c.b16 %v748, %v744
        %v1041 = vpack.c.b16 %v753, %v749
        %v1042 = vpack.c.b16 %v754, %v750
        %v1043 = vpack.c.b16 %v755, %v751
        %v1044 = vpack.c.b16 %v756, %v752
        %v1045 = vpack.c.b16 %v761, %v757
        %v1046 = vpack.c.b16 %v762, %v758
        %v1047 = vpack.c.b16 %v763, %v759
        %v1048 = vpack.c.b16 %v764, %v760
        %v1049 = vpack.c.b16 %v769, %v765
        %v1050 = vpack.c.b16 %v770, %v766
        %v1051 = vpack.c.b16 %v771, %v767
        %v1052 = vpack.c.b16 %v772, %v768
        %v1053 = vpack.c.b16 %v777, %v773
        %v1054 = vpack.c.b16 %v778, %v774
        %v1055 = vpack.c.b16 %v779, %v775
        %v1056 = vpack.c.b16 %v780, %v776
        %v1057 = vpack.c.b16 %v785, %v781
        %v1058 = vpack.c.b16 %v786, %v782
        %v1059 = vpack.c.b16 %v787, %v783
        %v1060 = vpack.c.b16 %v788, %v784
        %v1061 = vpack.c.b16 %v793, %v789
        %v1062 = vpack.c.b16 %v794, %v790
        %v1063 = vpack.c.b16 %v795, %v791
        %v1064 = vpack.c.b16 %v796, %v792
        %v1065 = vpack.c.b16 %v801, %v797
        %v1066 = vpack.c.b16 %v802, %v798
        %v1067 = vpack.c.b16 %v803, %v799
        %v1068 = vpack.c.b16 %v804, %v800
        %v1069 = vpack.c.b16 %v809, %v805
        %v1070 = vpack.c.b16 %v810, %v806
        %v1071 = vpack.c.b16 %v811, %v807
        %v1072 = vpack.c.b16 %v812, %v808
        %v1073 = vpack.c.b16 %v817, %v813
        %v1074 = vpack.c.b16 %v818, %v814
        %v1075 = vpack.c.b16 %v819, %v815
        %v1076 = vpack.c.b16 %v820, %v816
        %v1077 = vpack.c.b16 %v825, %v821
        %v1078 = vpack.c.b16 %v826, %v822
        %v1079 = vpack.c.b16 %v827, %v823
        %v1080 = vpack.c.b16 %v828, %v824
        %v1081 = vpack.c.b16 %v833, %v829
        %v1082 = vpack.c.b16 %v834, %v830
        %v1083 = vpack.c.b16 %v835, %v831
        %v1084 = vpack.c.b16 %v836, %v832
        %v1085 = vpack.c.b16 %v841, %v837
        %v1086 = vpack.c.b16 %v842, %v838
        %v1087 = vpack.c.b16 %v843, %v839
        %v1088 = vpack.c.b16 %v844, %v840
        %v1089 = vpack.c.b16 %v849, %v845
        %v1090 = vpack.c.b16 %v850, %v846
        %v1091 = vpack.c.b16 %v851, %v847
        %v1092 = vpack.c.b16 %v852, %v848
        %v1093 = vpack.c.b16 %v857, %v853
        %v1094 = vpack.c.b16 %v858, %v854
        %v1095 = vpack.c.b16 %v859, %v855
        %v1096 = vpack.c.b16 %v860, %v856
        %v1097 = vpack.c.b16 %v865, %v861
        %v1098 = vpack.c.b16 %v866, %v862
        %v1099 = vpack.c.b16 %v867, %v863
        %v1100 = vpack.c.b16 %v868, %v864
        %v1101 = vpack.c.b16 %v873, %v869
        %v1102 = vpack.c.b16 %v874, %v870
        %v1103 = vpack.c.b16 %v875, %v871
        %v1104 = vpack.c.b16 %v876, %v872
        %v1105 = vpack.c.b16 %v881, %v877
        %v1106 = vpack.c.b16 %v882, %v878
        %v1107 = vpack.c.b16 %v883, %v879
        %v1108 = vpack.c.b16 %v884, %v880
        %v1109 = vpack.c.b16 %v889, %v885
        %v1110 = vpack.c.b16 %v890, %v886
        %v1111 = vpack.c.b16 %v891, %v887
        %v1112 = vpack.c.b16 %v892, %v888
        %v1113 = vpack.c.b16 %v897, %v893
        %v1114 = vpack.c.b16 %v898, %v894
        %v1115 = vpack.c.b16 %v899, %v895
        %v1116 = vpack.c.b16 %v900, %v896
        %v1117 = vpack.c.b16 %v905, %v901
        %v1118 = vpack.c.b16 %v906, %v902
        %v1119 = vpack.c.b16 %v907, %v903
        %v1120 = vpack.c.b16 %v908, %v904
        %v1121 = vpack.c.b16 %v913, %v909
        %v1122 = vpack.c.b16 %v914, %v910
        %v1123 = vpack.c.b16 %v915, %v911
        %v1124 = vpack.c.b16 %v916, %v912
        %v1125 = vpack.c.b16 %v921, %v917
        %v1126 = vpack.c.b16 %v922, %v918
        %v1127 = vpack.c.b16 %v923, %v919
        %v1128 = vpack.c.b16 %v924, %v920
        %v1129 = vpack.c.b16 %v929, %v925
        %v1130 = vpack.c.b16 %v930, %v926
        %v1131 = vpack.c.b16 %v931, %v927
        %v1132 = vpack.c.b16 %v932, %v928
        %v1133 = vpack.c.b16 %v937, %v933
        %v1134 = vpack.c.b16 %v938, %v934
        %v1135 = vpack.c.b16 %v939, %v935
        %v1136 = vpack.c.b16 %v940, %v936
        %v1137 = vpack.c.b16 %v945, %v941
        %v1138 = vpack.c.b16 %v946, %v942
        %v1139 = vpack.c.b16 %v947, %v943
        %v1140 = vpack.c.b16 %v948, %v944
        %v1141 = vpack.c.b16 %v953, %v949
        %v1142 = vpack.c.b16 %v954, %v950
        %v1143 = vpack.c.b16 %v955, %v951
        %v1144 = vpack.c.b16 %v956, %v952
        %v1145 = vpack.c.b16 %v961, %v957
        %v1146 = vpack.c.b16 %v962, %v958
        %v1147 = vpack.c.b16 %v963, %v959
        %v1148 = vpack.c.b16 %v964, %v960
        %v1149 = vpack.c.b16 %v969, %v965
        %v1150 = vpack.c.b16 %v970, %v966
        %v1151 = vpack.c.b16 %v971, %v967
        %v1152 = vpack.c.b16 %v972, %v968
        %v1153 = vpack.c.b16 %v977, %v973
        %v1154 = vpack.c.b16 %v978, %v974
        %v1155 = vpack.c.b16 %v979, %v975
        %v1156 = vpack.c.b16 %v980, %v976
        %v1157 = vpack.c.b16 %v985, %v981
        %v1158 = vpack.c.b16 %v986, %v982
        %v1159 = vpack.c.b16 %v987, %v983
        %v1160 = vpack.c.b16 %v988, %v984
        %v1161 = vpack.c.b16 %v993, %v989
        %v1162 = vpack.c.b16 %v994, %v990
        %v1163 = vpack.c.b16 %v995, %v991
        %v1164 = vpack.c.b16 %v996, %v992
        %v1165 = vpack.c.b16 %v1001, %v997
        %v1166 = vpack.c.b16 %v1002, %v998
        %v1167 = vpack.c.b16 %v1003, %v999
        %v1168 = vpack.c.b16 %v1004, %v1000
        %v1169 = vpack.c.b16 %v1009, %v1005
        %v1170 = vpack.c.b16 %v1010, %v1006
        %v1171 = vpack.c.b16 %v1011, %v1007
        %v1172 = vpack.c.b16 %v1012, %v1008
        %1333 = vmatprep.subr.bf16.mxu0 %v1014
        %1334 = vmatpush1.bf16.msra.mxu0 %v1013
        %1335 = vmatprep.subr.bf16.mxu0 %v1018
        %1336 = vmatpush1.bf16.msra.mxu0 %v1017
        %1337 = vmatprep.subr.bf16.mxu0 %v1022
        %1338 = vmatpush1.bf16.msra.mxu0 %v1021
        %1339 = vmatprep.subr.bf16.mxu0 %v1026
        %1340 = vmatpush1.bf16.msra.mxu0 %v1025
        %1341 = vmatprep.subr.bf16.mxu0 %v1030
        %1342 = vmatpush1.bf16.msra.mxu0 %v1029
        %1343 = vmatprep.subr.bf16.mxu0 %v1034
        %1344 = vmatpush1.bf16.msra.mxu0 %v1033
        %1345 = vmatprep.subr.bf16.mxu0 %v1038
        %1346 = vmatpush1.bf16.msra.mxu0 %v1037
        %1347 = vmatprep.subr.bf16.mxu0 %v1042
        %1348 = vmatpush1.bf16.msra.mxu0 %v1041
        %1349 = vmatprep.subr.bf16.mxu0 %v1046
        %1350 = vmatpush1.bf16.msra.mxu0 %v1045
        %1351 = vmatprep.subr.bf16.mxu0 %v1050
        %1352 = vmatpush1.bf16.msra.mxu0 %v1049
        %1353 = vmatprep.subr.bf16.mxu0 %v1054
        %1354 = vmatpush1.bf16.msra.mxu0 %v1053
        %1355 = vmatprep.subr.bf16.mxu0 %v1058
        %1356 = vmatpush1.bf16.msra.mxu0 %v1057
        %1357 = vmatprep.subr.bf16.mxu0 %v1062
        %1358 = vmatpush1.bf16.msra.mxu0 %v1061
        %1359 = vmatprep.subr.bf16.mxu0 %v1066
        %1360 = vmatpush1.bf16.msra.mxu0 %v1065
        %1361 = vmatprep.subr.bf16.mxu0 %v1070
        %1362 = vmatpush1.bf16.msra.mxu0 %v1069
        %1363 = vmatprep.subr.bf16.mxu0 %v1074
        %1364 = vmatpush1.bf16.msra.mxu0 %v1073
        %1365 = vmatprep.mubr.bf16.mxu0 %v524
        %1366 = vmatmul.mubr.bf16.gmra.mrb[0].mxu0 %v523
        %v1367 = vpop.f32.mrb[0].mxu0
        %v1368 = vadd.f32 0.0, %v1367
        %v1369 = vpop.f32.mrb[0].mxu0
        %v1370 = vadd.f32 0.0, %v1369
        %v1371 = vpop.f32.mrb[0].mxu0
        %v1372 = vadd.f32 0.0, %v1371
        %v1373 = vpop.f32.mrb[0].mxu0
        %v1374 = vadd.f32 0.0, %v1373
        %1375 = vdwg.mxu0
        %1376 = vmatprep.subr.bf16.mxu0 %v1078
        %1377 = vmatpush1.bf16.msra.mxu0 %v1077
        %1378 = vmatprep.subr.bf16.mxu0 %v1082
        %1379 = vmatpush1.bf16.msra.mxu0 %v1081
        %1380 = vmatprep.subr.bf16.mxu0 %v1086
        %1381 = vmatpush1.bf16.msra.mxu0 %v1085
        %1382 = vmatprep.subr.bf16.mxu0 %v1090
        %1383 = vmatpush1.bf16.msra.mxu0 %v1089
        %1384 = vmatprep.subr.bf16.mxu0 %v1094
        %1385 = vmatpush1.bf16.msra.mxu0 %v1093
        %1386 = vmatprep.subr.bf16.mxu0 %v1098
        %1387 = vmatpush1.bf16.msra.mxu0 %v1097
        %1388 = vmatprep.subr.bf16.mxu0 %v1102
        %1389 = vmatpush1.bf16.msra.mxu0 %v1101
        %1390 = vmatprep.subr.bf16.mxu0 %v1106
        %1391 = vmatpush1.bf16.msra.mxu0 %v1105
        %1392 = vmatprep.subr.bf16.mxu0 %v1110
        %1393 = vmatpush1.bf16.msra.mxu0 %v1109
        %1394 = vmatprep.subr.bf16.mxu0 %v1114
        %1395 = vmatpush1.bf16.msra.mxu0 %v1113
        %1396 = vmatprep.subr.bf16.mxu0 %v1118
        %1397 = vmatpush1.bf16.msra.mxu0 %v1117
        %1398 = vmatprep.subr.bf16.mxu0 %v1122
        %1399 = vmatpush1.bf16.msra.mxu0 %v1121
        %1400 = vmatprep.subr.bf16.mxu0 %v1126
        %1401 = vmatpush1.bf16.msra.mxu0 %v1125
        %1402 = vmatprep.subr.bf16.mxu0 %v1130
        %1403 = vmatpush1.bf16.msra.mxu0 %v1129
        %1404 = vmatprep.subr.bf16.mxu0 %v1134
        %1405 = vmatpush1.bf16.msra.mxu0 %v1133
        %1406 = vmatprep.subr.bf16.mxu0 %v1138
        %1407 = vmatpush1.bf16.msra.mxu0 %v1137
        %1408 = vmatprep.mubr.bf16.mxu0 %v526
        %1409 = vmatmul.mubr.bf16.gmra.mrb[0].mxu0 %v525
        %v1410 = vpop.f32.mrb[0].mxu0
        %v1411 = vadd.f32 %v1368, %v1410
        %v1412 = vpop.f32.mrb[0].mxu0
        %v1413 = vadd.f32 %v1370, %v1412
        %v1414 = vpop.f32.mrb[0].mxu0
        %v1415 = vadd.f32 %v1372, %v1414
        %v1416 = vpop.f32.mrb[0].mxu0
        %v1417 = vadd.f32 %v1374, %v1416
        %1418 = vdwg.mxu0
        %1419 = vmatprep.subr.bf16.mxu0 %v1142
        %1420 = vmatpush1.bf16.msra.mxu0 %v1141
        %1421 = vmatprep.subr.bf16.mxu0 %v1146
        %1422 = vmatpush1.bf16.msra.mxu0 %v1145
        %1423 = vmatprep.subr.bf16.mxu0 %v1150
        %1424 = vmatpush1.bf16.msra.mxu0 %v1149
        %1425 = vmatprep.subr.bf16.mxu0 %v1154
        %1426 = vmatpush1.bf16.msra.mxu0 %v1153
        %1427 = vmatprep.subr.bf16.mxu0 %v1158
        %1428 = vmatpush1.bf16.msra.mxu0 %v1157
        %1429 = vmatprep.subr.bf16.mxu0 %v1162
        %1430 = vmatpush1.bf16.msra.mxu0 %v1161
        %1431 = vmatprep.subr.bf16.mxu0 %v1166
        %1432 = vmatpush1.bf16.msra.mxu0 %v1165
        %1433 = vmatprep.subr.bf16.mxu0 %v1170
        %1434 = vmatpush1.bf16.msra.mxu0 %v1169
        %1435 = vmatprep.subr.bf16.mxu0 0
        %1436 = vmatpush1.bf16.msra.mxu0 0
        %1437 = vmatprep.subr.bf16.mxu0 0
        %1438 = vmatpush1.bf16.msra.mxu0 0
        %1439 = vmatprep.subr.bf16.mxu0 0
        %1440 = vmatpush1.bf16.msra.mxu0 0
        %1441 = vmatprep.subr.bf16.mxu0 0
        %1442 = vmatpush1.bf16.msra.mxu0 0
        %1443 = vmatprep.subr.bf16.mxu0 0
        %1444 = vmatpush1.bf16.msra.mxu0 0
        %1445 = vmatprep.subr.bf16.mxu0 0
        %1446 = vmatpush1.bf16.msra.mxu0 0
        %1447 = vmatprep.subr.bf16.mxu0 0
        %1448 = vmatpush1.bf16.msra.mxu0 0
        %1449 = vmatprep.subr.bf16.mxu0 0
        %1450 = vmatpush1.bf16.msra.mxu0 0
        %1451 = vmatprep.mubr.bf16.mxu0 0
        %1452 = vmatmul.mubr.bf16.gmra.mrb[0].mxu0 %v527
        %v1453 = vpop.f32.mrb[0].mxu0
        %v1454 = vadd.f32 %v1411, %v1453
        %v1455 = vpop.f32.mrb[0].mxu0
        %v1456 = vadd.f32 %v1413, %v1455
        %v1457 = vpop.f32.mrb[0].mxu0
        %v1458 = vadd.f32 %v1415, %v1457
        %v1459 = vpop.f32.mrb[0].mxu0
        %v1460 = vadd.f32 %v1417, %v1459
        %1461 = vdwg.mxu0
        %1462 = vmatprep.subr.bf16.mxu0 %v1016
        %1463 = vmatpush1.bf16.msra.mxu0 %v1015
        %1464 = vmatprep.subr.bf16.mxu0 %v1020
        %1465 = vmatpush1.bf16.msra.mxu0 %v1019
        %1466 = vmatprep.subr.bf16.mxu0 %v1024
        %1467 = vmatpush1.bf16.msra.mxu0 %v1023
        %1468 = vmatprep.subr.bf16.mxu0 %v1028
        %1469 = vmatpush1.bf16.msra.mxu0 %v1027
        %1470 = vmatprep.subr.bf16.mxu0 %v1032
        %1471 = vmatpush1.bf16.msra.mxu0 %v1031
        %1472 = vmatprep.subr.bf16.mxu0 %v1036
        %1473 = vmatpush1.bf16.msra.mxu0 %v1035
        %1474 = vmatprep.subr.bf16.mxu0 %v1040
        %1475 = vmatpush1.bf16.msra.mxu0 %v1039
        %1476 = vmatprep.subr.bf16.mxu0 %v1044
        %1477 = vmatpush1.bf16.msra.mxu0 %v1043
        %1478 = vmatprep.subr.bf16.mxu0 %v1048
        %1479 = vmatpush1.bf16.msra.mxu0 %v1047
        %1480 = vmatprep.subr.bf16.mxu0 %v1052
        %1481 = vmatpush1.bf16.msra.mxu0 %v1051
        %1482 = vmatprep.subr.bf16.mxu0 %v1056
        %1483 = vmatpush1.bf16.msra.mxu0 %v1055
        %1484 = vmatprep.subr.bf16.mxu0 %v1060
        %1485 = vmatpush1.bf16.msra.mxu0 %v1059
        %1486 = vmatprep.subr.bf16.mxu0 %v1064
        %1487 = vmatpush1.bf16.msra.mxu0 %v1063
        %1488 = vmatprep.subr.bf16.mxu0 %v1068
        %1489 = vmatpush1.bf16.msra.mxu0 %v1067
        %1490 = vmatprep.subr.bf16.mxu0 %v1072
        %1491 = vmatpush1.bf16.msra.mxu0 %v1071
        %1492 = vmatprep.subr.bf16.mxu0 %v1076
        %1493 = vmatpush1.bf16.msra.mxu0 %v1075
        %1494 = vmatprep.mubr.bf16.mxu0 %v524
        %1495 = vmatmul.mubr.bf16.gmra.mrb[0].mxu0 %v523
        %v1496 = vpop.f32.mrb[0].mxu0
        %v1497 = vadd.f32 0.0, %v1496
        %v1498 = vpop.f32.mrb[0].mxu0
        %v1499 = vadd.f32 0.0, %v1498
        %v1500 = vpop.f32.mrb[0].mxu0
        %v1501 = vadd.f32 0.0, %v1500
        %v1502 = vpop.f32.mrb[0].mxu0
        %v1503 = vadd.f32 0.0, %v1502
        %1504 = vdwg.mxu0
        %1505 = vmatprep.subr.bf16.mxu0 %v1080
        %1506 = vmatpush1.bf16.msra.mxu0 %v1079
        %1507 = vmatprep.subr.bf16.mxu0 %v1084
        %1508 = vmatpush1.bf16.msra.mxu0 %v1083
        %1509 = vmatprep.subr.bf16.mxu0 %v1088
        %1510 = vmatpush1.bf16.msra.mxu0 %v1087
        %1511 = vmatprep.subr.bf16.mxu0 %v1092
        %1512 = vmatpush1.bf16.msra.mxu0 %v1091
        %1513 = vmatprep.subr.bf16.mxu0 %v1096
        %1514 = vmatpush1.bf16.msra.mxu0 %v1095
        %1515 = vmatprep.subr.bf16.mxu0 %v1100
        %1516 = vmatpush1.bf16.msra.mxu0 %v1099
        %1517 = vmatprep.subr.bf16.mxu0 %v1104
        %1518 = vmatpush1.bf16.msra.mxu0 %v1103
        %1519 = vmatprep.subr.bf16.mxu0 %v1108
        %1520 = vmatpush1.bf16.msra.mxu0 %v1107
        %1521 = vmatprep.subr.bf16.mxu0 %v1112
        %1522 = vmatpush1.bf16.msra.mxu0 %v1111
        %1523 = vmatprep.subr.bf16.mxu0 %v1116
        %1524 = vmatpush1.bf16.msra.mxu0 %v1115
        %1525 = vmatprep.subr.bf16.mxu0 %v1120
        %1526 = vmatpush1.bf16.msra.mxu0 %v1119
        %1527 = vmatprep.subr.bf16.mxu0 %v1124
        %1528 = vmatpush1.bf16.msra.mxu0 %v1123
        %1529 = vmatprep.subr.bf16.mxu0 %v1128
        %1530 = vmatpush1.bf16.msra.mxu0 %v1127
        %1531 = vmatprep.subr.bf16.mxu0 %v1132
        %1532 = vmatpush1.bf16.msra.mxu0 %v1131
        %1533 = vmatprep.subr.bf16.mxu0 %v1136
        %1534 = vmatpush1.bf16.msra.mxu0 %v1135
        %1535 = vmatprep.subr.bf16.mxu0 %v1140
        %1536 = vmatpush1.bf16.msra.mxu0 %v1139
        %1537 = vmatprep.mubr.bf16.mxu0 %v526
        %1538 = vmatmul.mubr.bf16.gmra.mrb[0].mxu0 %v525
        %v1539 = vpop.f32.mrb[0].mxu0
        %v1540 = vadd.f32 %v1497, %v1539
        %v1541 = vpop.f32.mrb[0].mxu0
        %v1542 = vadd.f32 %v1499, %v1541
        %v1543 = vpop.f32.mrb[0].mxu0
        %v1544 = vadd.f32 %v1501, %v1543
        %v1545 = vpop.f32.mrb[0].mxu0
        %v1546 = vadd.f32 %v1503, %v1545
        %1547 = vdwg.mxu0
        %1548 = vmatprep.subr.bf16.mxu0 %v1144
        %1549 = vmatpush1.bf16.msra.mxu0 %v1143
        %1550 = vmatprep.subr.bf16.mxu0 %v1148
        %1551 = vmatpush1.bf16.msra.mxu0 %v1147
        %1552 = vmatprep.subr.bf16.mxu0 %v1152
        %1553 = vmatpush1.bf16.msra.mxu0 %v1151
        %1554 = vmatprep.subr.bf16.mxu0 %v1156
        %1555 = vmatpush1.bf16.msra.mxu0 %v1155
        %1556 = vmatprep.subr.bf16.mxu0 %v1160
        %1557 = vmatpush1.bf16.msra.mxu0 %v1159
        %1558 = vmatprep.subr.bf16.mxu0 %v1164
        %1559 = vmatpush1.bf16.msra.mxu0 %v1163
        %1560 = vmatprep.subr.bf16.mxu0 %v1168
        %1561 = vmatpush1.bf16.msra.mxu0 %v1167
        %1562 = vmatprep.subr.bf16.mxu0 %v1172
        %1563 = vmatpush1.bf16.msra.mxu0 %v1171
        %1564 = vmatprep.subr.bf16.mxu0 0
        %1565 = vmatpush1.bf16.msra.mxu0 0
        %1566 = vmatprep.subr.bf16.mxu0 0
        %1567 = vmatpush1.bf16.msra.mxu0 0
        %1568 = vmatprep.subr.bf16.mxu0 0
        %1569 = vmatpush1.bf16.msra.mxu0 0
        %1570 = vmatprep.subr.bf16.mxu0 0
        %1571 = vmatpush1.bf16.msra.mxu0 0
        %1572 = vmatprep.subr.bf16.mxu0 0
        %1573 = vmatpush1.bf16.msra.mxu0 0
        %1574 = vmatprep.subr.bf16.mxu0 0
        %1575 = vmatpush1.bf16.msra.mxu0 0
        %1576 = vmatprep.subr.bf16.mxu0 0
        %1577 = vmatpush1.bf16.msra.mxu0 0
        %1578 = vmatprep.subr.bf16.mxu0 0
        %1579 = vmatpush1.bf16.msra.mxu0 0
        %1580 = vmatprep.mubr.bf16.mxu0 0
        %1581 = vmatmul.mubr.bf16.gmra.mrb[0].mxu0 %v527
        %v1582 = vpop.f32.mrb[0].mxu0
        %v1583 = vadd.f32 %v1540, %v1582
        %v1584 = vpop.f32.mrb[0].mxu0
        %v1585 = vadd.f32 %v1542, %v1584
        %v1586 = vpop.f32.mrb[0].mxu0
        %v1587 = vadd.f32 %v1544, %v1586
        %v1588 = vpop.f32.mrb[0].mxu0
        %v1589 = vadd.f32 %v1546, %v1588
        %1590 = vdwg.mxu0
        %v1591 = vadd.f32 %v333, %v1454
        %v1592 = vadd.f32 %v334, %v1456
        %v1593 = vadd.f32 %v335, %v1583
        %v1594 = vadd.f32 %v336, %v1585
        %v1595 = vadd.f32 %v337, %v1458
        %v1596 = vadd.f32 %v338, %v1460
        %v1597 = vadd.f32 %v339, %v1587
        %v1598 = vadd.f32 %v340, %v1589
        %1599 = vst [vmem:[#allocation2] sm:$0xff] %v1591
        %1600 = vst [vmem:[#allocation2 + $0x8] sm:$0xff] %v1592
        %1601 = vst [vmem:[#allocation2 + $0x10] sm:$0xff] %v1593
        %1602 = vst [vmem:[#allocation2 + $0x18] sm:$0xff] %v1594
        %1603 = vst [vmem:[#allocation2 + $0x20] sm:$0xff] %v1595
        %1604 = vst [vmem:[#allocation2 + $0x28] sm:$0xff] %v1596
        %1605 = vst [vmem:[#allocation2 + $0x30] sm:$0xff] %v1597
        %1606 = vst [vmem:[#allocation2 + $0x38] sm:$0xff] %v1598
        %p1607 = scmp.eq.s32.totalorder %s27, 3
        // Predicated region
        $region71: #{fwd.9} parent=53 // pred_check
          %p1608 = pneg %p1607
        $region72: #{fwd.9} parent=53 // pred_check_branch
          %1610 = sbr.rel (%p1608) target = $region74
        $region73: #{fwd.9} parent=53 // pred_region
          %v1611 = vld [vmem:[#allocation2] sm:$0xff]
          %v1612 = vld [vmem:[#allocation2 + $0x8] sm:$0xff]
          %v1613 = vld [vmem:[#allocation2 + $0x10] sm:$0xff]
          %v1614 = vld [vmem:[#allocation2 + $0x18] sm:$0xff]
          %v1615 = vld [vmem:[#allocation2 + $0x20] sm:$0xff]
          %v1616 = vld [vmem:[#allocation2 + $0x28] sm:$0xff]
          %v1617 = vld [vmem:[#allocation2 + $0x30] sm:$0xff]
          %v1618 = vld [vmem:[#allocation2 + $0x38] sm:$0xff]
          %v1619 = vld [vmem:[%s282] sm:$0xf]
          %v1621 = vlaneseq
          %v1622 = vshrl.u32 %v1621, 7
          %v1623 = vsub.s32 0, %v1622
          %v1624 = vrot.slane %v1619, %v1623
          %v1625 = vlaneseq
          %v1626 = vshrl.u32 %v1625, 7
          %v1627 = vsub.s32 1, %v1626
          %v1628 = vrot.slane %v1619, %v1627
          %v1629 = vlaneseq
          %v1630 = vshrl.u32 %v1629, 7
          %v1631 = vsub.s32 2, %v1630
          %v1632 = vrot.slane %v1619, %v1631
          %v1633 = vlaneseq
          %v1634 = vshrl.u32 %v1633, 7
          %v1635 = vsub.s32 3, %v1634
          %v1636 = vrot.slane %v1619, %v1635
          %v1641 = vadd.f32 %v1611, %v1624
          %v1642 = vadd.f32 %v1612, %v1628
          %v1643 = vadd.f32 %v1613, %v1632
          %v1644 = vadd.f32 %v1614, %v1636
          %v1645 = vadd.f32 %v1615, %v1624
          %v1646 = vadd.f32 %v1616, %v1628
          %v1647 = vadd.f32 %v1617, %v1632
          %v1648 = vadd.f32 %v1618, %v1636
          %vm1649 = vcmp.ge.f32.partialorder %v1641, 0.0
          %vm1650 = vcmp.ge.f32.partialorder %v1642, 0.0
          %vm1651 = vcmp.ge.f32.partialorder %v1643, 0.0
          %vm1652 = vcmp.ge.f32.partialorder %v1644, 0.0
          %vm1653 = vcmp.ge.f32.partialorder %v1645, 0.0
          %vm1654 = vcmp.ge.f32.partialorder %v1646, 0.0
          %vm1655 = vcmp.ge.f32.partialorder %v1647, 0.0
          %vm1656 = vcmp.ge.f32.partialorder %v1648, 0.0
          %v1657 = vmul.f32 %v1641, 0.1
          %v1658 = vmul.f32 %v1642, 0.1
          %v1659 = vmul.f32 %v1643, 0.1
          %v1660 = vmul.f32 %v1644, 0.1
          %v1661 = vmul.f32 %v1645, 0.1
          %v1662 = vmul.f32 %v1646, 0.1
          %v1663 = vmul.f32 %v1647, 0.1
          %v1664 = vmul.f32 %v1648, 0.1
          %v1665 = vsel %vm1649, %v1641, %v1657
          %v1666 = vsel %vm1650, %v1642, %v1658
          %v1667 = vsel %vm1651, %v1643, %v1659
          %v1668 = vsel %vm1652, %v1644, %v1660
          %v1669 = vsel %vm1653, %v1645, %v1661
          %v1670 = vsel %vm1654, %v1646, %v1662
          %v1671 = vsel %vm1655, %v1647, %v1663
          %v1672 = vsel %vm1656, %v1648, %v1664
          %1673 = vst [vmem:[%s312] sm:$0xff] %v1665
          %1674 = vst [vmem:[%s312 + $0x8] sm:$0xff] %v1666
          %1675 = vst [vmem:[%s312 + $0x10] sm:$0xff] %v1667
          %1676 = vst [vmem:[%s312 + $0x18] sm:$0xff] %v1668
          %1677 = vst [vmem:[%s312 + $0x20] sm:$0xff] %v1669
          %1678 = vst [vmem:[%s312 + $0x28] sm:$0xff] %v1670
          %1679 = vst [vmem:[%s312 + $0x30] sm:$0xff] %v1671
          %1680 = vst [vmem:[%s312 + $0x38] sm:$0xff] %v1672
        $region74: #{fwd.9} parent=53 // pred_fallthru
          _
        %s1681 = sand.u32 %s131, 1
        %s1682 = sand.u32 %s131, 1
        %s1683 = smul.addr %s1682, 64
        %s1684 = scalar_lea.vmem [#allocation8], %s1683
        // Predicated region
        $region75: #{fwd.9} parent=53 // pred_check
          %p1685 = pneg %p141
        $region76: #{fwd.9} parent=53 // pred_check_branch
          %1687 = sbr.rel (%p1685) target = $region78
        $region77: #{fwd.9} parent=53 // pred_region
          %s1688 = smul.u32 2, %s25
          %s1689 = smul.u32 4, %s26
          %s1690 = smul.addr %s1688, 8
          %s1691 = sadd.s32 %s1689, %s1690
          %s1692 = smul.addr %s1691, 8
          %s1693 = scalar_lea.vmem %s3, %s1692
          // Predicated region
          $region79: #{fwd.9} parent=77 // pred_check
            _
          $region80: #{fwd.9} parent=77 // pred_check_branch
            %1695 = sbr.rel (0) target = $region82
          $region81: #{fwd.9} parent=77 // pred_region
            // Predicated region
            $region83: #{fwd.9} parent=81 // pred_check
              _
            $region84: #{fwd.9} parent=81 // pred_check_branch
              %1697 = sbr.rel (0) target = $region86
            $region85: #{fwd.9} parent=81 // pred_region
              loop: start=0, step=1, limit=1
              $region87: #{fwd.9} parent=85 // loop_pre_header
                _
              $region88: #{fwd.9} parent=85 // loop_header
                %s1699 = sphi 0, %s1703
                %p1700 = scmp.ge.s32.totalorder %s1699, 1
                %s1704 = sphi %s1684, %s1684
                %s1705 = sphi %s1693, %s1693
              $region89: #{fwd.9} parent=85 // loop_header_branch
                %1702 = sbr.rel (%p1700) target = $region93
              $region90: #{fwd.9} parent=85 // loop_body
                %v1706 = vld [vmem:[%s1704] sm:$0xff]
                %1707 = vst [vmem:[%s1705] sm:$0xff] %v1706
                %v1708 = vld [vmem:[%s1704 + $0x8] sm:$0xff]
                %1709 = vst [vmem:[%s1705 + $0x8] sm:$0xff] %v1708
                %v1710 = vld [vmem:[%s1704 + $0x10] sm:$0xff]
                %1711 = vst [vmem:[%s1705 + $0x10] sm:$0xff] %v1710
                %v1712 = vld [vmem:[%s1704 + $0x18] sm:$0xff]
                %1713 = vst [vmem:[%s1705 + $0x18] sm:$0xff] %v1712
                %v1714 = vld [vmem:[%s1704 + $0x20] sm:$0xff]
                %1715 = vst [vmem:[%s1705 + $0x40] sm:$0xff] %v1714
                %v1716 = vld [vmem:[%s1704 + $0x28] sm:$0xff]
                %1717 = vst [vmem:[%s1705 + $0x48] sm:$0xff] %v1716
                %v1718 = vld [vmem:[%s1704 + $0x30] sm:$0xff]
                %1719 = vst [vmem:[%s1705 + $0x50] sm:$0xff] %v1718
                %v1720 = vld [vmem:[%s1704 + $0x38] sm:$0xff]
                %1721 = vst [vmem:[%s1705 + $0x58] sm:$0xff] %v1720
              $region91: #{fwd.9} parent=85 // loop_footer
                %s1703 = sadd.s32 1, %s1699
              $region92: #{fwd.9} parent=85 // loop_footer_branch
                %1698 = sbr.rel target = $region88
              $region93: #{fwd.9} parent=85 // loop_exit
                _
            $region86: #{fwd.9} parent=81 // pred_fallthru
              _
            // Predicated region
            $region94: #{fwd.9} parent=81 // pred_check
              _
            $region95: #{fwd.9} parent=81 // pred_check_branch
              %1723 = sbr.rel target = $region97
            $region96: #{fwd.9} parent=81 // pred_region
              _
            $region97: #{fwd.9} parent=81 // pred_fallthru
              _
          $region82: #{fwd.9} parent=77 // pred_fallthru
            _
          %1724 = vnop
        $region78: #{fwd.9} parent=53 // pred_fallthru
          _
      $region54: #{fwd.9} parent=5 // pred_fallthru
        _
      %p1725 = scmp.le.s32.totalorder 2, %s15
      // Predicated region
      $region98: #{fwd.9} parent=5 // pred_check
        %p1726 = pneg %p1725
      $region99: #{fwd.9} parent=5 // pred_check_branch
        %1728 = sbr.rel (%p1726) target = $region101
      $region100: #{fwd.9} parent=5 // pred_region
        %s1729 = ssub.s32 %s15, 2
        // Predicated region
        $region102: #{fwd.9} parent=100 // pred_check
          %p1730 = pneg %p147
        $region103: #{fwd.9} parent=100 // pred_check_branch
          %1732 = sbr.rel (%p1730) target = $region105
        $region104: #{fwd.9} parent=100 // pred_region
          %s1733 = sand.u32 %s132, 1
          %s1734 = sand.u32 %s132, 1
          %s1735 = smul.addr %s1734, 64
          %s1736 = scalar_lea.vmem [#allocation8], %s1735
        $region105: #{fwd.9} parent=100 // pred_fallthru
          _
      $region101: #{fwd.9} parent=5 // pred_fallthru
        _
    $region6: #{fwd.9} parent=1 // loop_footer
      %s19 = sadd.s32 1, %s15
    $region7: #{fwd.9} parent=1 // loop_footer_branch
      %14 = sbr.rel target = $region3
    $region8: #{fwd.9} parent=1 // loop_exit
      _
    %1737 = vsyncpa [#allocation5], 1
    %s1738 = scalar_lea.sflag [#allocation5], 1
    %1739 = vsyncpa %s1738, 1
    %1740 = vsyncpa [#allocation7], 1
    %s1741 = scalar_lea.sflag [#allocation7], 1
    %1742 = vsyncpa %s1741, 1

// kernel: fwd.11
$region0: #{fwd.11}
  #allocation0 [shape = 'u32[]', space=smem, size = 0x4, offset = 0x4, fixed_abs, tag = 'smem constant byte address 0x4 - core index']
  #allocation1 [shape = 'u32[144,128]{1,0:T(1,128)}', space=vmem, size = 0x12000, scoped, tag = 'internal scratch']
  #allocation2 [shape = 'f32[16,128]{1,0:T(8,128)}', space=vmem, size = 0x2000, scoped, tag = 'scratch operand']
  %s0 = inlined_call_operand.vmem [shape: bf16[16,3072], index: 0, kind: input, shape index: {}]
  %s1 = inlined_call_operand.vmem [shape: bf16[3072,128], index: 1, kind: input, shape index: {}]
  %s2 = inlined_call_operand.vmem [shape: f32[1,128], index: 2, kind: input, shape index: {}]
  %s3 = inlined_call_operand.vmem [shape: f32[16,128], index: 3, kind: output, shape index: {}]
  %s4 = sld [smem:[#allocation0]]
  $region76: #{fwd.11} parent=0
    _
  %s6 = ssub.s32 1, %s4
  %s7 = scalar_select 0, %s6, %s4
  $region1: #{fwd.11} parent=0
    #allocation3 [shape = 'u8[65536]{0}', space=vmem, size = 0x10000, scoped, tag = 'input window, operand 0']
    loop: start=0, step=1, limit=5
    $region2: #{fwd.11} parent=1 // loop_pre_header
      _
    $region3: #{fwd.11} parent=1 // loop_header
      %s9 = sphi 0, %s13
      %p10 = scmp.ge.s32.totalorder %s9, 5
      %s16 = sphi 0, %s35
      %s17 = sphi 0, %s31
      %s18 = sphi 0, %s27
      %s19 = sphi 0, %s16
      %s20 = sphi 0, %s17
      %s21 = sphi 0, %s18
      %s22 = sphi 0, %s19
      %s23 = sphi 0, %s20
      %s24 = sphi 0, %s21
      %s40 = sphi 0, %s42
      %s43 = sphi 0, %s40
      %s44 = sphi 0, %s43
      %s60 = sphi 0, %s44
      %s68 = sphi 0, %s70
      %s71 = sphi 0, %s68
      %s72 = sphi 0, %s71
      %s88 = sphi 0, %s72
      %s94 = sphi 0, %s96
      %s97 = sphi 0, %s94
      %s98 = sphi 0, %s97
      %s114 = sphi 0, %s98
      %s122 = sphi 0, %s124
      %s125 = sphi 0, %s122
      %s126 = sphi 0, %s125
      %s142 = sphi 0, %s126
    $region4: #{fwd.11} parent=1 // loop_header_branch
      %12 = sbr.rel (%p10) target = $region8
    $region5: #{fwd.11} parent=1 // loop_body
      %s14 = ssub.s32 %s9, 1
      %s15 = ssub.s32 %s9, 2
      %s25 = sadd.s32 1, %s18
      %p26 = scmp.ge.s32.totalorder %s25, 3
      %s27 = scalar_select %p26, 0, %s25
      %s28 = sadd.s32 1, %s17
      %s29 = scalar_select %p26, %s28, %s17
      %p30 = scmp.ge.s32.totalorder %s29, 1
      %s31 = scalar_select %p30, 0, %s29
      %s32 = sadd.s32 1, %s16
      %s33 = scalar_select %p30, %s32, %s16
      %p34 = scmp.ge.s32.totalorder %s33, 1
      %s35 = scalar_select %p34, 0, %s33
      %s36 = ssub.s32 %s16, %s35
      %s37 = ssub.s32 %s18, %s27
      %s38 = sor.u32 %s36, %s37
      %p39 = scmp.eq.s32.totalorder %s38, 0
      %s41 = sadd.s32 %s40, 1
      %s42 = scalar_select %p39, %s40, %s41
      %p45 = pneg %p39
      %p46 = scmp.eq.s32.totalorder %s9, 2
      %p47 = por %p45, %p46
      %p48 = scmp.ne.s32.totalorder %s40, %s43
      %p49 = scmp.eq.s32.totalorder %s9, 0
      %p50 = por %p48, %p49
      %p51 = scmp.ne.s32.totalorder %s40, %s43
      %p52 = scmp.eq.s32.totalorder %s14, 2
      %p53 = por %p51, %p52
      %p54 = scmp.ne.s32.totalorder %s43, %s44
      %p55 = scmp.eq.s32.totalorder %s14, 0
      %p56 = por %p54, %p55
      %p57 = scmp.ne.s32.totalorder %s43, %s44
      %p58 = scmp.eq.s32.totalorder %s15, 2
      %p59 = por %p57, %p58
      %p61 = scmp.ne.s32.totalorder %s44, %s60
      %p62 = scmp.eq.s32.totalorder %s15, 0
      %p63 = por %p61, %p62
      %s64 = ssub.s32 %s18, %s27
      %s65 = ssub.s32 %s17, %s31
      %s66 = sor.u32 %s64, %s65
      %p67 = scmp.eq.s32.totalorder %s66, 0
      %s69 = sadd.s32 %s68, 1
      %s70 = scalar_select %p67, %s68, %s69
      %p73 = pneg %p67
      %p74 = scmp.eq.s32.totalorder %s9, 2
      %p75 = por %p73, %p74
      %p76 = scmp.ne.s32.totalorder %s68, %s71
      %p77 = scmp.eq.s32.totalorder %s9, 0
      %p78 = por %p76, %p77
      %p79 = scmp.ne.s32.totalorder %s68, %s71
      %p80 = scmp.eq.s32.totalorder %s14, 2
      %p81 = por %p79, %p80
      %p82 = scmp.ne.s32.totalorder %s71, %s72
      %p83 = scmp.eq.s32.totalorder %s14, 0
      %p84 = por %p82, %p83
      %p85 = scmp.ne.s32.totalorder %s71, %s72
      %p86 = scmp.eq.s32.totalorder %s15, 2
      %p87 = por %p85, %p86
      %p89 = scmp.ne.s32.totalorder %s72, %s88
      %p90 = scmp.eq.s32.totalorder %s15, 0
      %p91 = por %p89, %p90
      %s92 = ssub.s32 %s17, %s31
      %p93 = scmp.eq.s32.totalorder %s92, 0
      %s95 = sadd.s32 %s94, 1
      %s96 = scalar_select %p93, %s94, %s95
      %p99 = pneg %p93
      %p100 = scmp.eq.s32.totalorder %s9, 2
      %p101 = por %p99, %p100
      %p102 = scmp.ne.s32.totalorder %s94, %s97
      %p103 = scmp.eq.s32.totalorder %s9, 0
      %p104 = por %p102, %p103
      %p105 = scmp.ne.s32.totalorder %s94, %s97
      %p106 = scmp.eq.s32.totalorder %s14, 2
      %p107 = por %p105, %p106
      %p108 = scmp.ne.s32.totalorder %s97, %s98
      %p109 = scmp.eq.s32.totalorder %s14, 0
      %p110 = por %p108, %p109
      %p111 = scmp.ne.s32.totalorder %s97, %s98
      %p112 = scmp.eq.s32.totalorder %s15, 2
      %p113 = por %p111, %p112
      %p115 = scmp.ne.s32.totalorder %s98, %s114
      %p116 = scmp.eq.s32.totalorder %s15, 0
      %p117 = por %p115, %p116
      %s118 = ssub.s32 %s16, %s35
      %s119 = ssub.s32 %s17, %s31
      %s120 = sor.u32 %s118, %s119
      %p121 = scmp.eq.s32.totalorder %s120, 0
      %s123 = sadd.s32 %s122, 1
      %s124 = scalar_select %p121, %s122, %s123
      %p127 = pneg %p121
      %p128 = scmp.eq.s32.totalorder %s9, 2
      %p129 = por %p127, %p128
      %p130 = scmp.ne.s32.totalorder %s122, %s125
      %p131 = scmp.eq.s32.totalorder %s9, 0
      %p132 = por %p130, %p131
      %p133 = scmp.ne.s32.totalorder %s122, %s125
      %p134 = scmp.eq.s32.totalorder %s14, 2
      %p135 = por %p133, %p134
      %p136 = scmp.ne.s32.totalorder %s125, %s126
      %p137 = scmp.eq.s32.totalorder %s14, 0
      %p138 = por %p136, %p137
      %p139 = scmp.ne.s32.totalorder %s125, %s126
      %p140 = scmp.eq.s32.totalorder %s15, 2
      %p141 = por %p139, %p140
      %p143 = scmp.ne.s32.totalorder %s126, %s142
      %p144 = scmp.eq.s32.totalorder %s15, 0
      %p145 = por %p143, %p144
      %p146 = scmp.le.s32.totalorder 1, %s9
      %p147 = scmp.lt.s32.totalorder %s9, 4
      %p148 = pnand %p146, %p147
      %p149 = pneg %p148
      // Predicated region
      $region9: #{fwd.11} parent=5 // pred_check
        _
      $region10: #{fwd.11} parent=5 // pred_check_branch
        %151 = sbr.rel (%p148) target = $region12
      $region11: #{fwd.11} parent=5 // pred_region
        %s152 = ssub.s32 %s9, 1
        // Predicated region
        $region13: #{fwd.11} parent=11 // pred_check
          %p153 = pneg %p110
        $region14: #{fwd.11} parent=11 // pred_check_branch
          %155 = sbr.rel (%p153) target = $region16
        $region15: #{fwd.11} parent=11 // pred_region
          %p156 = scmp.lt.s32.totalorder %s20, 0
          %s157 = scalar_select %p156, %s20, 0
          %s158 = scalar_lea.vmem %s2, %s157
        $region16: #{fwd.11} parent=11 // pred_fallthru
          _
      $region12: #{fwd.11} parent=5 // pred_fallthru
        _
      %p159 = scmp.lt.s32.totalorder %s9, 3
      // Predicated region
      $region17: #{fwd.11} parent=5 // pred_check
        %p160 = pneg %p159
      $region18: #{fwd.11} parent=5 // pred_check_branch
        %162 = sbr.rel (%p160) target = $region20
      $region19: #{fwd.11} parent=5 // pred_region
        // Predicated region
        $region21: #{fwd.11} parent=19 // pred_check
          %p163 = pneg %p50
        $region22: #{fwd.11} parent=19 // pred_check_branch
          %165 = sbr.rel (%p163) target = $region24
        $region23: #{fwd.11} parent=19 // pred_region
          %s166 = sand.u32 %s40, 1
          %s167 = sand.u32 %s40, 1
          %s168 = smul.addr %s167, 64
          %s169 = scalar_lea.vmem [#allocation3], %s168
          %s170 = smul.u32 2, %s16
          %s171 = smul.u32 8, %s18
          %s172 = smul.addr %s170, 24
          %s173 = sadd.s32 %s171, %s172
          %s174 = smul.addr %s173, 4
          %s175 = scalar_lea.vmem %s0, %s174
          // Predicated region
          $region25: #{fwd.11} parent=23 // pred_check
            _
          $region26: #{fwd.11} parent=23 // pred_check_branch
            %177 = sbr.rel (0) target = $region28
          $region27: #{fwd.11} parent=23 // pred_region
            // Predicated region
            $region29: #{fwd.11} parent=27 // pred_check
              _
            $region30: #{fwd.11} parent=27 // pred_check_branch
              %179 = sbr.rel (0) target = $region32
            $region31: #{fwd.11} parent=27 // pred_region
              loop: start=0, step=1, limit=1
              $region33: #{fwd.11} parent=31 // loop_pre_header
                _
              $region34: #{fwd.11} parent=31 // loop_header
                %s181 = sphi 0, %s185
                %p182 = scmp.ge.s32.totalorder %s181, 1
                %s186 = sphi %s175, %s175
                %s187 = sphi %s169, %s169
              $region35: #{fwd.11} parent=31 // loop_header_branch
                %184 = sbr.rel (%p182) target = $region39
              $region36: #{fwd.11} parent=31 // loop_body
                %v188 = vld [vmem:[%s186] sm:$0xff]
                %189 = vst [vmem:[%s187] sm:$0xff] %v188
                %v190 = vld [vmem:[%s186 + $0x8] sm:$0xff]
                %191 = vst [vmem:[%s187 + $0x8] sm:$0xff] %v190
                %v192 = vld [vmem:[%s186 + $0x10] sm:$0xff]
                %193 = vst [vmem:[%s187 + $0x10] sm:$0xff] %v192
                %v194 = vld [vmem:[%s186 + $0x18] sm:$0xff]
                %195 = vst [vmem:[%s187 + $0x18] sm:$0xff] %v194
                %v196 = vld [vmem:[%s186 + $0x60] sm:$0xff]
                %197 = vst [vmem:[%s187 + $0x20] sm:$0xff] %v196
                %v198 = vld [vmem:[%s186 + $0x68] sm:$0xff]
                %199 = vst [vmem:[%s187 + $0x28] sm:$0xff] %v198
                %v200 = vld [vmem:[%s186 + $0x70] sm:$0xff]
                %201 = vst [vmem:[%s187 + $0x30] sm:$0xff] %v200
                %v202 = vld [vmem:[%s186 + $0x78] sm:$0xff]
                %203 = vst [vmem:[%s187 + $0x38] sm:$0xff] %v202
              $region37: #{fwd.11} parent=31 // loop_footer
                %s185 = sadd.s32 1, %s181
              $region38: #{fwd.11} parent=31 // loop_footer_branch
                %180 = sbr.rel target = $region34
              $region39: #{fwd.11} parent=31 // loop_exit
                _
            $region32: #{fwd.11} parent=27 // pred_fallthru
              _
            // Predicated region
            $region40: #{fwd.11} parent=27 // pred_check
              _
            $region41: #{fwd.11} parent=27 // pred_check_branch
              %205 = sbr.rel target = $region43
            $region42: #{fwd.11} parent=27 // pred_region
              _
            $region43: #{fwd.11} parent=27 // pred_fallthru
              _
          $region28: #{fwd.11} parent=23 // pred_fallthru
            _
          %206 = vnop
        $region24: #{fwd.11} parent=19 // pred_fallthru
          _
        // Predicated region
        $region44: #{fwd.11} parent=19 // pred_check
          %p207 = pneg %p78
        $region45: #{fwd.11} parent=19 // pred_check_branch
          %209 = sbr.rel (%p207) target = $region47
        $region46: #{fwd.11} parent=19 // pred_region
          %s210 = smul.u32 128, %s18
          %p211 = scmp.lt.s32.totalorder %s210, 383
          %s212 = scalar_select %p211, %s210, 383
          %p213 = scmp.lt.s32.totalorder %s17, 0
          %s214 = scalar_select %p213, %s17, 0
          %s215 = sadd.s32 %s214, %s212
          %s216 = smul.addr %s215, 4
          %s217 = scalar_lea.vmem %s1, %s216
          %s218 = smul.u32 128, %s18
        $region47: #{fwd.11} parent=19 // pred_fallthru
          _
      $region20: #{fwd.11} parent=5 // pred_fallthru
        _
      %p219 = scmp.le.s32.totalorder 1, %s9
      %p220 = scmp.lt.s32.totalorder %s9, 4
      %p221 = pnand %p219, %p220
      %p222 = pneg %p221
      // Predicated region
      $region48: #{fwd.11} parent=5 // pred_check
        _
      $region49: #{fwd.11} parent=5 // pred_check_branch
        %224 = sbr.rel (%p221) target = $region51
      $region50: #{fwd.11} parent=5 // pred_region
        %s225 = ssub.s32 %s9, 1
        %s226 = sand.u32 %s43, 1
        %s227 = sand.u32 %s43, 1
        %s228 = smul.addr %s227, 64
        %s229 = scalar_lea.vmem [#allocation3], %s228
        // Predicated region
        $region52: #{fwd.11} parent=50 // pred_check
          %p230 = pneg %p56
        $region53: #{fwd.11} parent=50 // pred_check_branch
          %232 = sbr.rel (%p230) target = $region55
        $region54: #{fwd.11} parent=50 // pred_region
          _
        $region55: #{fwd.11} parent=50 // pred_fallthru
          _
        %s233 = sand.u32 %s43, 1
        %s234 = sand.u32 %s43, 1
        %s235 = smul.addr %s234, 64
        %s236 = scalar_lea.vmem [#allocation3], %s235
        %p237 = pneg %p56
        %p238 = pneg %p53
        %s239 = smul.u32 128, %s21
        %p240 = scmp.lt.s32.totalorder %s239, 383
        %s241 = scalar_select %p240, %s239, 383
        %p242 = scmp.lt.s32.totalorder %s20, 0
        %s243 = scalar_select %p242, %s20, 0
        %s244 = sadd.s32 %s243, %s241
        %s245 = smul.addr %s244, 4
        %s246 = scalar_lea.vmem %s1, %s245
        %p247 = pneg %p84
        %p248 = pneg %p81
        %p249 = scmp.lt.s32.totalorder %s20, 0
        %s250 = scalar_select %p249, %s20, 0
        %s251 = scalar_lea.vmem %s2, %s250
        %p252 = pneg %p110
        %p253 = pneg %p107
        %p254 = pneg %p138
        %p255 = pneg %p135
        %s256 = smul.u32 2, %s19
        %p257 = scmp.lt.s32.totalorder %s256, 1
        %s258 = scalar_select %p257, %s256, 1
        %p259 = scmp.lt.s32.totalorder %s20, 0
        %s260 = scalar_select %p259, %s20, 0
        %s261 = sadd.s32 %s260, %s258
        %s262 = smul.addr %s261, 8
        %s263 = scalar_lea.vmem %s3, %s262
        %s264 = smul.u32 2, %s19
        %s265 = smul.u32 8, %s21
        %s266 = smul.u32 128, %s21
        %p267 = scmp.lt.s32.totalorder %s266, 383
        %s268 = scalar_select %p267, %s266, 383
        %p269 = scmp.lt.s32.totalorder %s20, 0
        %s270 = scalar_select %p269, %s20, 0
        %s271 = sadd.s32 %s270, %s268
        %s272 = smul.addr %s271, 4
        %s273 = scalar_lea.vmem %s1, %s272
        %s274 = smul.u32 128, %s21
        %p275 = scmp.lt.s32.totalorder %s20, 0
        %s276 = scalar_select %p275, %s20, 0
        %s277 = scalar_lea.vmem %s2, %s276
        %s278 = smul.u32 2, %s19
        %p279 = scmp.lt.s32.totalorder %s278, 1
        %s280 = scalar_select %p279, %s278, 1
        %p281 = scmp.lt.s32.totalorder %s20, 0
        %s282 = scalar_select %p281, %s20, 0
        %s283 = sadd.s32 %s282, %s280
        %s284 = smul.addr %s283, 8
        %s285 = scalar_lea.vmem %s3, %s284
        %s286 = smul.u32 2, %s19
        %p288 = scmp.eq.s32.totalorder %s21, 0
        // Predicated region
        $region56: #{fwd.11} parent=50 // pred_check
          %p289 = pneg %p288
        $region57: #{fwd.11} parent=50 // pred_check_branch
          %291 = sbr.rel (%p289) target = $region59
        $region58: #{fwd.11} parent=50 // pred_region
          %292 = vst [vmem:[#allocation2] sm:$0xff] 0.0
          %293 = vst [vmem:[#allocation2 + $0x8] sm:$0xff] 0.0
        $region59: #{fwd.11} parent=50 // pred_fallthru
          _
        %v294 = vld [vmem:[#allocation2] sm:$0xff]
        %v295 = vld [vmem:[#allocation2 + $0x8] sm:$0xff]
        %v296 = vld [vmem:[%s229] sm:$0xff]
        %v297 = vld [vmem:[%s229 + $0x8] sm:$0xff]
        %v298 = vld [vmem:[%s229 + $0x10] sm:$0xff]
        %v299 = vld [vmem:[%s229 + $0x18] sm:$0xff]
        %v300 = vld [vmem:[%s229 + $0x20] sm:$0xff]
        %v301 = vld [vmem:[%s229 + $0x28] sm:$0xff]
        %v302 = vld [vmem:[%s229 + $0x30] sm:$0xff]
        %v303 = vld [vmem:[%s229 + $0x38] sm:$0xff]
        %v304 = vld [vmem:[%s273] sm:$0xf]
        %v305 = vld [vmem:[%s273 + $0x4] sm:$0xf]
        %v306 = vld [vmem:[%s273 + $0x8] sm:$0xf]
        %v307 = vld [vmem:[%s273 + $0xc] sm:$0xf]
        %v308 = vld [vmem:[%s273 + $0x10] sm:$0xf]
        %v309 = vld [vmem:[%s273 + $0x14] sm:$0xf]
        %v310 = vld [vmem:[%s273 + $0x18] sm:$0xf]
        %v311 = vld [vmem:[%s273 + $0x1c] sm:$0xf]
        %v312 = vld [vmem:[%s273 + $0x20] sm:$0xf]
        %v313 = vld [vmem:[%s273 + $0x24] sm:$0xf]
        %v314 = vld [vmem:[%s273 + $0x28] sm:$0xf]
        %v315 = vld [vmem:[%s273 + $0x2c] sm:$0xf]
        %v316 = vld [vmem:[%s273 + $0x30] sm:$0xf]
        %v317 = vld [vmem:[%s273 + $0x34] sm:$0xf]
        %v318 = vld [vmem:[%s273 + $0x38] sm:$0xf]
        %v319 = vld [vmem:[%s273 + $0x3c] sm:$0xf]
        %v320 = vld [vmem:[%s273 + $0x40] sm:$0xf]
        %v321 = vld [vmem:[%s273 + $0x44] sm:$0xf]
        %v322 = vld [vmem:[%s273 + $0x48] sm:$0xf]
        %v323 = vld [vmem:[%s273 + $0x4c] sm:$0xf]
        %v324 = vld [vmem:[%s273 + $0x50] sm:$0xf]
        %v325 = vld [vmem:[%s273 + $0x54] sm:$0xf]
        %v326 = vld [vmem:[%s273 + $0x58] sm:$0xf]
        %v327 = vld [vmem:[%s273 + $0x5c] sm:$0xf]
        %v328 = vld [vmem:[%s273 + $0x60] sm:$0xf]
        %v329 = vld [vmem:[%s273 + $0x64] sm:$0xf]
        %v330 = vld [vmem:[%s273 + $0x68] sm:$0xf]
        %v331 = vld [vmem:[%s273 + $0x6c] sm:$0xf]
        %v332 = vld [vmem:[%s273 + $0x70] sm:$0xf]
        %v333 = vld [vmem:[%s273 + $0x74] sm:$0xf]
        %v334 = vld [vmem:[%s273 + $0x78] sm:$0xf]
        %v335 = vld [vmem:[%s273 + $0x7c] sm:$0xf]
        %v336 = vld [vmem:[%s273 + $0x80] sm:$0xf]
        %v337 = vld [vmem:[%s273 + $0x84] sm:$0xf]
        %v338 = vld [vmem:[%s273 + $0x88] sm:$0xf]
        %v339 = vld [vmem:[%s273 + $0x8c] sm:$0xf]
        %v340 = vld [vmem:[%s273 + $0x90] sm:$0xf]
        %v341 = vld [vmem:[%s273 + $0x94] sm:$0xf]
        %v342 = vld [vmem:[%s273 + $0x98] sm:$0xf]
        %v343 = vld [vmem:[%s273 + $0x9c] sm:$0xf]
        %v344 = vld [vmem:[%s273 + $0xa0] sm:$0xf]
        %v345 = vld [vmem:[%s273 + $0xa4] sm:$0xf]
        %v346 = vld [vmem:[%s273 + $0xa8] sm:$0xf]
        %v347 = vld [vmem:[%s273 + $0xac] sm:$0xf]
        %v348 = vld [vmem:[%s273 + $0xb0] sm:$0xf]
        %v349 = vld [vmem:[%s273 + $0xb4] sm:$0xf]
        %v350 = vld [vmem:[%s273 + $0xb8] sm:$0xf]
        %v351 = vld [vmem:[%s273 + $0xbc] sm:$0xf]
        %v352 = vld [vmem:[%s273 + $0xc0] sm:$0xf]
        %v353 = vld [vmem:[%s273 + $0xc4] sm:$0xf]
        %v354 = vld [vmem:[%s273 + $0xc8] sm:$0xf]
        %v355 = vld [vmem:[%s273 + $0xcc] sm:$0xf]
        %v356 = vld [vmem:[%s273 + $0xd0] sm:$0xf]
        %v357 = vld [vmem:[%s273 + $0xd4] sm:$0xf]
        %v358 = vld [vmem:[%s273 + $0xd8] sm:$0xf]
        %v359 = vld [vmem:[%s273 + $0xdc] sm:$0xf]
        %v360 = vld [vmem:[%s273 + $0xe0] sm:$0xf]
        %v361 = vld [vmem:[%s273 + $0xe4] sm:$0xf]
        %v362 = vld [vmem:[%s273 + $0xe8] sm:$0xf]
        %v363 = vld [vmem:[%s273 + $0xec] sm:$0xf]
        %v364 = vld [vmem:[%s273 + $0xf0] sm:$0xf]
        %v365 = vld [vmem:[%s273 + $0xf4] sm:$0xf]
        %v366 = vld [vmem:[%s273 + $0xf8] sm:$0xf]
        %v367 = vld [vmem:[%s273 + $0xfc] sm:$0xf]
        %v368 = vld [vmem:[%s273 + $0x100] sm:$0xf]
        %v369 = vld [vmem:[%s273 + $0x104] sm:$0xf]
        %v370 = vld [vmem:[%s273 + $0x108] sm:$0xf]
        %v371 = vld [vmem:[%s273 + $0x10c] sm:$0xf]
        %v372 = vld [vmem:[%s273 + $0x110] sm:$0xf]
        %v373 = vld [vmem:[%s273 + $0x114] sm:$0xf]
        %v374 = vld [vmem:[%s273 + $0x118] sm:$0xf]
        %v375 = vld [vmem:[%s273 + $0x11c] sm:$0xf]
        %v376 = vld [vmem:[%s273 + $0x120] sm:$0xf]
        %v377 = vld [vmem:[%s273 + $0x124] sm:$0xf]
        %v378 = vld [vmem:[%s273 + $0x128] sm:$0xf]
        %v379 = vld [vmem:[%s273 + $0x12c] sm:$0xf]
        %v380 = vld [vmem:[%s273 + $0x130] sm:$0xf]
        %v381 = vld [vmem:[%s273 + $0x134] sm:$0xf]
        %v382 = vld [vmem:[%s273 + $0x138] sm:$0xf]
        %v383 = vld [vmem:[%s273 + $0x13c] sm:$0xf]
        %v384 = vld [vmem:[%s273 + $0x140] sm:$0xf]
        %v385 = vld [vmem:[%s273 + $0x144] sm:$0xf]
        %v386 = vld [vmem:[%s273 + $0x148] sm:$0xf]
        %v387 = vld [vmem:[%s273 + $0x14c] sm:$0xf]
        %v388 = vld [vmem:[%s273 + $0x150] sm:$0xf]
        %v389 = vld [vmem:[%s273 + $0x154] sm:$0xf]
        %v390 = vld [vmem:[%s273 + $0x158] sm:$0xf]
        %v391 = vld [vmem:[%s273 + $0x15c] sm:$0xf]
        %v392 = vld [vmem:[%s273 + $0x160] sm:$0xf]
        %v393 = vld [vmem:[%s273 + $0x164] sm:$0xf]
        %v394 = vld [vmem:[%s273 + $0x168] sm:$0xf]
        %v395 = vld [vmem:[%s273 + $0x16c] sm:$0xf]
        %v396 = vld [vmem:[%s273 + $0x170] sm:$0xf]
        %v397 = vld [vmem:[%s273 + $0x174] sm:$0xf]
        %v398 = vld [vmem:[%s273 + $0x178] sm:$0xf]
        %v399 = vld [vmem:[%s273 + $0x17c] sm:$0xf]
        %v400 = vld [vmem:[%s273 + $0x180] sm:$0xf]
        %v401 = vld [vmem:[%s273 + $0x184] sm:$0xf]
        %v402 = vld [vmem:[%s273 + $0x188] sm:$0xf]
        %v403 = vld [vmem:[%s273 + $0x18c] sm:$0xf]
        %v404 = vld [vmem:[%s273 + $0x190] sm:$0xf]
        %v405 = vld [vmem:[%s273 + $0x194] sm:$0xf]
        %v406 = vld [vmem:[%s273 + $0x198] sm:$0xf]
        %v407 = vld [vmem:[%s273 + $0x19c] sm:$0xf]
        %v408 = vld [vmem:[%s273 + $0x1a0] sm:$0xf]
        %v409 = vld [vmem:[%s273 + $0x1a4] sm:$0xf]
        %v410 = vld [vmem:[%s273 + $0x1a8] sm:$0xf]
        %v411 = vld [vmem:[%s273 + $0x1ac] sm:$0xf]
        %v412 = vld [vmem:[%s273 + $0x1b0] sm:$0xf]
        %v413 = vld [vmem:[%s273 + $0x1b4] sm:$0xf]
        %v414 = vld [vmem:[%s273 + $0x1b8] sm:$0xf]
        %v415 = vld [vmem:[%s273 + $0x1bc] sm:$0xf]
        %v416 = vld [vmem:[%s273 + $0x1c0] sm:$0xf]
        %v417 = vld [vmem:[%s273 + $0x1c4] sm:$0xf]
        %v418 = vld [vmem:[%s273 + $0x1c8] sm:$0xf]
        %v419 = vld [vmem:[%s273 + $0x1cc] sm:$0xf]
        %v420 = vld [vmem:[%s273 + $0x1d0] sm:$0xf]
        %v421 = vld [vmem:[%s273 + $0x1d4] sm:$0xf]
        %v422 = vld [vmem:[%s273 + $0x1d8] sm:$0xf]
        %v423 = vld [vmem:[%s273 + $0x1dc] sm:$0xf]
        %v424 = vld [vmem:[%s273 + $0x1e0] sm:$0xf]
        %v425 = vld [vmem:[%s273 + $0x1e4] sm:$0xf]
        %v426 = vld [vmem:[%s273 + $0x1e8] sm:$0xf]
        %v427 = vld [vmem:[%s273 + $0x1ec] sm:$0xf]
        %v428 = vld [vmem:[%s273 + $0x1f0] sm:$0xf]
        %v429 = vld [vmem:[%s273 + $0x1f4] sm:$0xf]
        %v430 = vld [vmem:[%s273 + $0x1f8] sm:$0xf]
        %v431 = vld [vmem:[%s273 + $0x1fc] sm:$0xf]
        %v440 = vunpack.c.l.b16 %v296
        %v441 = vunpack.c.h.b16 %v296
        %v442 = vunpack.c.l.b16 %v297
        %v443 = vunpack.c.h.b16 %v297
        %v444 = vunpack.c.l.b16 %v298
        %v445 = vunpack.c.h.b16 %v298
        %v446 = vunpack.c.l.b16 %v299
        %v447 = vunpack.c.h.b16 %v299
        %v448 = vunpack.c.l.b16 %v300
        %v449 = vunpack.c.h.b16 %v300
        %v450 = vunpack.c.l.b16 %v301
        %v451 = vunpack.c.h.b16 %v301
        %v452 = vunpack.c.l.b16 %v302
        %v453 = vunpack.c.h.b16 %v302
        %v454 = vunpack.c.l.b16 %v303
        %v455 = vunpack.c.h.b16 %v303
        %v456 = vpack.c.b16 %v448, %v440
        %v457 = vpack.c.b16 %v449, %v441
        %v458 = vpack.c.b16 %v450, %v442
        %v459 = vpack.c.b16 %v451, %v443
        %v460 = vpack.c.b16 %v452, %v444
        %v461 = vpack.c.b16 %v453, %v445
        %v462 = vpack.c.b16 %v454, %v446
        %v463 = vpack.c.b16 %v455, %v447
        %v600 = vunpack.c.l.b16 %v304
        %v601 = vunpack.c.l.b16 %v305
        %v602 = vunpack.c.l.b16 %v306
        %v603 = vunpack.c.l.b16 %v307
        %v604 = vunpack.c.l.b16 %v308
        %v605 = vunpack.c.l.b16 %v309
        %v606 = vunpack.c.l.b16 %v310
        %v607 = vunpack.c.l.b16 %v311
        %v608 = vunpack.c.l.b16 %v312
        %v609 = vunpack.c.l.b16 %v313
        %v610 = vunpack.c.l.b16 %v314
        %v611 = vunpack.c.l.b16 %v315
        %v612 = vunpack.c.l.b16 %v316
        %v613 = vunpack.c.l.b16 %v317
        %v614 = vunpack.c.l.b16 %v318
        %v615 = vunpack.c.l.b16 %v319
        %v616 = vunpack.c.l.b16 %v320
        %v617 = vunpack.c.l.b16 %v321
        %v618 = vunpack.c.l.b16 %v322
        %v619 = vunpack.c.l.b16 %v323
        %v620 = vunpack.c.l.b16 %v324
        %v621 = vunpack.c.l.b16 %v325
        %v622 = vunpack.c.l.b16 %v326
        %v623 = vunpack.c.l.b16 %v327
        %v624 = vunpack.c.l.b16 %v328
        %v625 = vunpack.c.l.b16 %v329
        %v626 = vunpack.c.l.b16 %v330
        %v627 = vunpack.c.l.b16 %v331
        %v628 = vunpack.c.l.b16 %v332
        %v629 = vunpack.c.l.b16 %v333
        %v630 = vunpack.c.l.b16 %v334
        %v631 = vunpack.c.l.b16 %v335
        %v632 = vunpack.c.l.b16 %v336
        %v633 = vunpack.c.l.b16 %v337
        %v634 = vunpack.c.l.b16 %v338
        %v635 = vunpack.c.l.b16 %v339
        %v636 = vunpack.c.l.b16 %v340
        %v637 = vunpack.c.l.b16 %v341
        %v638 = vunpack.c.l.b16 %v342
        %v639 = vunpack.c.l.b16 %v343
        %v640 = vunpack.c.l.b16 %v344
        %v641 = vunpack.c.l.b16 %v345
        %v642 = vunpack.c.l.b16 %v346
        %v643 = vunpack.c.l.b16 %v347
        %v644 = vunpack.c.l.b16 %v348
        %v645 = vunpack.c.l.b16 %v349
        %v646 = vunpack.c.l.b16 %v350
        %v647 = vunpack.c.l.b16 %v351
        %v648 = vunpack.c.l.b16 %v352
        %v649 = vunpack.c.l.b16 %v353
        %v650 = vunpack.c.l.b16 %v354
        %v651 = vunpack.c.l.b16 %v355
        %v652 = vunpack.c.l.b16 %v356
        %v653 = vunpack.c.l.b16 %v357
        %v654 = vunpack.c.l.b16 %v358
        %v655 = vunpack.c.l.b16 %v359
        %v656 = vunpack.c.l.b16 %v360
        %v657 = vunpack.c.l.b16 %v361
        %v658 = vunpack.c.l.b16 %v362
        %v659 = vunpack.c.l.b16 %v363
        %v660 = vunpack.c.l.b16 %v364
        %v661 = vunpack.c.l.b16 %v365
        %v662 = vunpack.c.l.b16 %v366
        %v663 = vunpack.c.l.b16 %v367
        %v664 = vunpack.c.l.b16 %v368
        %v665 = vunpack.c.l.b16 %v369
        %v666 = vunpack.c.l.b16 %v370
        %v667 = vunpack.c.l.b16 %v371
        %v668 = vunpack.c.l.b16 %v372
        %v669 = vunpack.c.l.b16 %v373
        %v670 = vunpack.c.l.b16 %v374
        %v671 = vunpack.c.l.b16 %v375
        %v672 = vunpack.c.l.b16 %v376
        %v673 = vunpack.c.l.b16 %v377
        %v674 = vunpack.c.l.b16 %v378
        %v675 = vunpack.c.l.b16 %v379
        %v676 = vunpack.c.l.b16 %v380
        %v677 = vunpack.c.l.b16 %v381
        %v678 = vunpack.c.l.b16 %v382
        %v679 = vunpack.c.l.b16 %v383
        %v680 = vunpack.c.l.b16 %v384
        %v681 = vunpack.c.l.b16 %v385
        %v682 = vunpack.c.l.b16 %v386
        %v683 = vunpack.c.l.b16 %v387
        %v684 = vunpack.c.l.b16 %v388
        %v685 = vunpack.c.l.b16 %v389
        %v686 = vunpack.c.l.b16 %v390
        %v687 = vunpack.c.l.b16 %v391
        %v688 = vunpack.c.l.b16 %v392
        %v689 = vunpack.c.l.b16 %v393
        %v690 = vunpack.c.l.b16 %v394
        %v691 = vunpack.c.l.b16 %v395
        %v692 = vunpack.c.l.b16 %v396
        %v693 = vunpack.c.l.b16 %v397
        %v694 = vunpack.c.l.b16 %v398
        %v695 = vunpack.c.l.b16 %v399
        %v696 = vunpack.c.l.b16 %v400
        %v697 = vunpack.c.l.b16 %v401
        %v698 = vunpack.c.l.b16 %v402
        %v699 = vunpack.c.l.b16 %v403
        %v700 = vunpack.c.l.b16 %v404
        %v701 = vunpack.c.l.b16 %v405
        %v702 = vunpack.c.l.b16 %v406
        %v703 = vunpack.c.l.b16 %v407
        %v704 = vunpack.c.l.b16 %v408
        %v705 = vunpack.c.l.b16 %v409
        %v706 = vunpack.c.l.b16 %v410
        %v707 = vunpack.c.l.b16 %v411
        %v708 = vunpack.c.l.b16 %v412
        %v709 = vunpack.c.l.b16 %v413
        %v710 = vunpack.c.l.b16 %v414
        %v711 = vunpack.c.l.b16 %v415
        %v712 = vunpack.c.l.b16 %v416
        %v713 = vunpack.c.l.b16 %v417
        %v714 = vunpack.c.l.b16 %v418
        %v715 = vunpack.c.l.b16 %v419
        %v716 = vunpack.c.l.b16 %v420
        %v717 = vunpack.c.l.b16 %v421
        %v718 = vunpack.c.l.b16 %v422
        %v719 = vunpack.c.l.b16 %v423
        %v720 = vunpack.c.l.b16 %v424
        %v721 = vunpack.c.l.b16 %v425
        %v722 = vunpack.c.l.b16 %v426
        %v723 = vunpack.c.l.b16 %v427
        %v724 = vunpack.c.l.b16 %v428
        %v725 = vunpack.c.l.b16 %v429
        %v726 = vunpack.c.l.b16 %v430
        %v727 = vunpack.c.l.b16 %v431
        %v728 = vpack.c.b16 %v601, %v600
        %v729 = vpack.c.b16 %v603, %v602
        %v730 = vpack.c.b16 %v605, %v604
        %v731 = vpack.c.b16 %v607, %v606
        %v732 = vpack.c.b16 %v609, %v608
        %v733 = vpack.c.b16 %v611, %v610
        %v734 = vpack.c.b16 %v613, %v612
        %v735 = vpack.c.b16 %v615, %v614
        %v736 = vpack.c.b16 %v617, %v616
        %v737 = vpack.c.b16 %v619, %v618
        %v738 = vpack.c.b16 %v621, %v620
        %v739 = vpack.c.b16 %v623, %v622
        %v740 = vpack.c.b16 %v625, %v624
        %v741 = vpack.c.b16 %v627, %v626
        %v742 = vpack.c.b16 %v629, %v628
        %v743 = vpack.c.b16 %v631, %v630
        %v744 = vpack.c.b16 %v633, %v632
        %v745 = vpack.c.b16 %v635, %v634
        %v746 = vpack.c.b16 %v637, %v636
        %v747 = vpack.c.b16 %v639, %v638
        %v748 = vpack.c.b16 %v641, %v640
        %v749 = vpack.c.b16 %v643, %v642
        %v750 = vpack.c.b16 %v645, %v644
        %v751 = vpack.c.b16 %v647, %v646
        %v752 = vpack.c.b16 %v649, %v648
        %v753 = vpack.c.b16 %v651, %v650
        %v754 = vpack.c.b16 %v653, %v652
        %v755 = vpack.c.b16 %v655, %v654
        %v756 = vpack.c.b16 %v657, %v656
        %v757 = vpack.c.b16 %v659, %v658
        %v758 = vpack.c.b16 %v661, %v660
        %v759 = vpack.c.b16 %v663, %v662
        %v760 = vpack.c.b16 %v665, %v664
        %v761 = vpack.c.b16 %v667, %v666
        %v762 = vpack.c.b16 %v669, %v668
        %v763 = vpack.c.b16 %v671, %v670
        %v764 = vpack.c.b16 %v673, %v672
        %v765 = vpack.c.b16 %v675, %v674
        %v766 = vpack.c.b16 %v677, %v676
        %v767 = vpack.c.b16 %v679, %v678
        %v768 = vpack.c.b16 %v681, %v680
        %v769 = vpack.c.b16 %v683, %v682
        %v770 = vpack.c.b16 %v685, %v684
        %v771 = vpack.c.b16 %v687, %v686
        %v772 = vpack.c.b16 %v689, %v688
        %v773 = vpack.c.b16 %v691, %v690
        %v774 = vpack.c.b16 %v693, %v692
        %v775 = vpack.c.b16 %v695, %v694
        %v776 = vpack.c.b16 %v697, %v696
        %v777 = vpack.c.b16 %v699, %v698
        %v778 = vpack.c.b16 %v701, %v700
        %v779 = vpack.c.b16 %v703, %v702
        %v780 = vpack.c.b16 %v705, %v704
        %v781 = vpack.c.b16 %v707, %v706
        %v782 = vpack.c.b16 %v709, %v708
        %v783 = vpack.c.b16 %v711, %v710
        %v784 = vpack.c.b16 %v713, %v712
        %v785 = vpack.c.b16 %v715, %v714
        %v786 = vpack.c.b16 %v717, %v716
        %v787 = vpack.c.b16 %v719, %v718
        %v788 = vpack.c.b16 %v721, %v720
        %v789 = vpack.c.b16 %v723, %v722
        %v790 = vpack.c.b16 %v725, %v724
        %v791 = vpack.c.b16 %v727, %v726
        %856 = vmatprep.subr.bf16.mxu0 0
        %857 = vmatpush1.bf16.msra.mxu0 %v728
        %858 = vmatprep.subr.bf16.mxu0 0
        %859 = vmatpush1.bf16.msra.mxu0 %v729
        %860 = vmatprep.subr.bf16.mxu0 0
        %861 = vmatpush1.bf16.msra.mxu0 %v730
        %862 = vmatprep.subr.bf16.mxu0 0
        %863 = vmatpush1.bf16.msra.mxu0 %v731
        %864 = vmatprep.subr.bf16.mxu0 0
        %865 = vmatpush1.bf16.msra.mxu0 %v732
        %866 = vmatprep.subr.bf16.mxu0 0
        %867 = vmatpush1.bf16.msra.mxu0 %v733
        %868 = vmatprep.subr.bf16.mxu0 0
        %869 = vmatpush1.bf16.msra.mxu0 %v734
        %870 = vmatprep.subr.bf16.mxu0 0
        %871 = vmatpush1.bf16.msra.mxu0 %v735
        %872 = vmatprep.subr.bf16.mxu0 0
        %873 = vmatpush1.bf16.msra.mxu0 %v736
        %874 = vmatprep.subr.bf16.mxu0 0
        %875 = vmatpush1.bf16.msra.mxu0 %v737
        %876 = vmatprep.subr.bf16.mxu0 0
        %877 = vmatpush1.bf16.msra.mxu0 %v738
        %878 = vmatprep.subr.bf16.mxu0 0
        %879 = vmatpush1.bf16.msra.mxu0 %v739
        %880 = vmatprep.subr.bf16.mxu0 0
        %881 = vmatpush1.bf16.msra.mxu0 %v740
        %882 = vmatprep.subr.bf16.mxu0 0
        %883 = vmatpush1.bf16.msra.mxu0 %v741
        %884 = vmatprep.subr.bf16.mxu0 0
        %885 = vmatpush1.bf16.msra.mxu0 %v742
        %886 = vmatprep.subr.bf16.mxu0 0
        %887 = vmatpush1.bf16.msra.mxu0 %v743
        %888 = vmatprep.mubr.bf16.mxu0 %v457
        %889 = vmatmul.mubr.bf16.gmra.mrb[0].mxu0 %v456
        %v890 = vpop.f32.mrb[0].mxu0
        %v891 = vadd.f32 0.0, %v890
        %v892 = vpop.f32.mrb[0].mxu0
        %v893 = vpop.f32.mrb[0].mxu0
        %v894 = vadd.f32 0.0, %v893
        %v895 = vpop.f32.mrb[0].mxu0
        %896 = vdwg.mxu0
        %897 = vmatprep.subr.bf16.mxu0 0
        %898 = vmatpush1.bf16.msra.mxu0 %v744
        %899 = vmatprep.subr.bf16.mxu0 0
        %900 = vmatpush1.bf16.msra.mxu0 %v745
        %901 = vmatprep.subr.bf16.mxu0 0
        %902 = vmatpush1.bf16.msra.mxu0 %v746
        %903 = vmatprep.subr.bf16.mxu0 0
        %904 = vmatpush1.bf16.msra.mxu0 %v747
        %905 = vmatprep.subr.bf16.mxu0 0
        %906 = vmatpush1.bf16.msra.mxu0 %v748
        %907 = vmatprep.subr.bf16.mxu0 0
        %908 = vmatpush1.bf16.msra.mxu0 %v749
        %909 = vmatprep.subr.bf16.mxu0 0
        %910 = vmatpush1.bf16.msra.mxu0 %v750
        %911 = vmatprep.subr.bf16.mxu0 0
        %912 = vmatpush1.bf16.msra.mxu0 %v751
        %913 = vmatprep.subr.bf16.mxu0 0
        %914 = vmatpush1.bf16.msra.mxu0 %v752
        %915 = vmatprep.subr.bf16.mxu0 0
        %916 = vmatpush1.bf16.msra.mxu0 %v753
        %917 = vmatprep.subr.bf16.mxu0 0
        %918 = vmatpush1.bf16.msra.mxu0 %v754
        %919 = vmatprep.subr.bf16.mxu0 0
        %920 = vmatpush1.bf16.msra.mxu0 %v755
        %921 = vmatprep.subr.bf16.mxu0 0
        %922 = vmatpush1.bf16.msra.mxu0 %v756
        %923 = vmatprep.subr.bf16.mxu0 0
        %924 = vmatpush1.bf16.msra.mxu0 %v757
        %925 = vmatprep.subr.bf16.mxu0 0
        %926 = vmatpush1.bf16.msra.mxu0 %v758
        %927 = vmatprep.subr.bf16.mxu0 0
        %928 = vmatpush1.bf16.msra.mxu0 %v759
        %929 = vmatprep.mubr.bf16.mxu0 %v459
        %930 = vmatmul.mubr.bf16.gmra.mrb[0].mxu0 %v458
        %v931 = vpop.f32.mrb[0].mxu0
        %v932 = vadd.f32 %v891, %v931
        %v933 = vpop.f32.mrb[0].mxu0
        %v934 = vpop.f32.mrb[0].mxu0
        %v935 = vadd.f32 %v894, %v934
        %v936 = vpop.f32.mrb[0].mxu0
        %937 = vdwg.mxu0
        %938 = vmatprep.subr.bf16.mxu0 0
        %939 = vmatpush1.bf16.msra.mxu0 %v760
        %940 = vmatprep.subr.bf16.mxu0 0
        %941 = vmatpush1.bf16.msra.mxu0 %v761
        %942 = vmatprep.subr.bf16.mxu0 0
        %943 = vmatpush1.bf16.msra.mxu0 %v762
        %944 = vmatprep.subr.bf16.mxu0 0
        %945 = vmatpush1.bf16.msra.mxu0 %v763
        %946 = vmatprep.subr.bf16.mxu0 0
        %947 = vmatpush1.bf16.msra.mxu0 %v764
        %948 = vmatprep.subr.bf16.mxu0 0
        %949 = vmatpush1.bf16.msra.mxu0 %v765
        %950 = vmatprep.subr.bf16.mxu0 0
        %951 = vmatpush1.bf16.msra.mxu0 %v766
        %952 = vmatprep.subr.bf16.mxu0 0
        %953 = vmatpush1.bf16.msra.mxu0 %v767
        %954 = vmatprep.subr.bf16.mxu0 0
        %955 = vmatpush1.bf16.msra.mxu0 %v768
        %956 = vmatprep.subr.bf16.mxu0 0
        %957 = vmatpush1.bf16.msra.mxu0 %v769
        %958 = vmatprep.subr.bf16.mxu0 0
        %959 = vmatpush1.bf16.msra.mxu0 %v770
        %960 = vmatprep.subr.bf16.mxu0 0
        %961 = vmatpush1.bf16.msra.mxu0 %v771
        %962 = vmatprep.subr.bf16.mxu0 0
        %963 = vmatpush1.bf16.msra.mxu0 %v772
        %964 = vmatprep.subr.bf16.mxu0 0
        %965 = vmatpush1.bf16.msra.mxu0 %v773
        %966 = vmatprep.subr.bf16.mxu0 0
        %967 = vmatpush1.bf16.msra.mxu0 %v774
        %968 = vmatprep.subr.bf16.mxu0 0
        %969 = vmatpush1.bf16.msra.mxu0 %v775
        %970 = vmatprep.mubr.bf16.mxu0 %v461
        %971 = vmatmul.mubr.bf16.gmra.mrb[0].mxu0 %v460
        %v972 = vpop.f32.mrb[0].mxu0
        %v973 = vadd.f32 %v932, %v972
        %v974 = vpop.f32.mrb[0].mxu0
        %v975 = vpop.f32.mrb[0].mxu0
        %v976 = vadd.f32 %v935, %v975
        %v977 = vpop.f32.mrb[0].mxu0
        %978 = vdwg.mxu0
        %979 = vmatprep.subr.bf16.mxu0 0
        %980 = vmatpush1.bf16.msra.mxu0 %v776
        %981 = vmatprep.subr.bf16.mxu0 0
        %982 = vmatpush1.bf16.msra.mxu0 %v777
        %983 = vmatprep.subr.bf16.mxu0 0
        %984 = vmatpush1.bf16.msra.mxu0 %v778
        %985 = vmatprep.subr.bf16.mxu0 0
        %986 = vmatpush1.bf16.msra.mxu0 %v779
        %987 = vmatprep.subr.bf16.mxu0 0
        %988 = vmatpush1.bf16.msra.mxu0 %v780
        %989 = vmatprep.subr.bf16.mxu0 0
        %990 = vmatpush1.bf16.msra.mxu0 %v781
        %991 = vmatprep.subr.bf16.mxu0 0
        %992 = vmatpush1.bf16.msra.mxu0 %v782
        %993 = vmatprep.subr.bf16.mxu0 0
        %994 = vmatpush1.bf16.msra.mxu0 %v783
        %995 = vmatprep.subr.bf16.mxu0 0
        %996 = vmatpush1.bf16.msra.mxu0 %v784
        %997 = vmatprep.subr.bf16.mxu0 0
        %998 = vmatpush1.bf16.msra.mxu0 %v785
        %999 = vmatprep.subr.bf16.mxu0 0
        %1000 = vmatpush1.bf16.msra.mxu0 %v786
        %1001 = vmatprep.subr.bf16.mxu0 0
        %1002 = vmatpush1.bf16.msra.mxu0 %v787
        %1003 = vmatprep.subr.bf16.mxu0 0
        %1004 = vmatpush1.bf16.msra.mxu0 %v788
        %1005 = vmatprep.subr.bf16.mxu0 0
        %1006 = vmatpush1.bf16.msra.mxu0 %v789
        %1007 = vmatprep.subr.bf16.mxu0 0
        %1008 = vmatpush1.bf16.msra.mxu0 %v790
        %1009 = vmatprep.subr.bf16.mxu0 0
        %1010 = vmatpush1.bf16.msra.mxu0 %v791
        %1011 = vmatprep.mubr.bf16.mxu0 %v463
        %1012 = vmatmul.mubr.bf16.gmra.mrb[0].mxu0 %v462
        %v1013 = vpop.f32.mrb[0].mxu0
        %v1014 = vadd.f32 %v973, %v1013
        %v1015 = vpop.f32.mrb[0].mxu0
        %v1016 = vpop.f32.mrb[0].mxu0
        %v1017 = vadd.f32 %v976, %v1016
        %v1018 = vpop.f32.mrb[0].mxu0
        %1019 = vdwg.mxu0
        %v1020 = vadd.f32 %v294, %v1014
        %v1021 = vadd.f32 %v295, %v1017
        %1022 = vst [vmem:[#allocation2] sm:$0xff] %v1020
        %1023 = vst [vmem:[#allocation2 + $0x8] sm:$0xff] %v1021
        %p1024 = scmp.eq.s32.totalorder %s21, 2
        // Predicated region
        $region60: #{fwd.11} parent=50 // pred_check
          %p1025 = pneg %p1024
        $region61: #{fwd.11} parent=50 // pred_check_branch
          %1027 = sbr.rel (%p1025) target = $region63
        $region62: #{fwd.11} parent=50 // pred_region
          %v1028 = vld [vmem:[#allocation2] sm:$0xff]
          %v1029 = vld [vmem:[#allocation2 + $0x8] sm:$0xff]
          %v1030 = vld [vmem:[%s277] sm:$0x1]
          %v1032 = vlaneseq
          %v1033 = vshrl.u32 %v1032, 7
          %v1034 = vsub.s32 0, %v1033
          %v1035 = vrot.slane %v1030, %v1034
          %v1037 = vadd.f32 %v1028, %v1035
          %v1038 = vadd.f32 %v1029, %v1035
          %1039 = vst [vmem:[%s285] sm:$0xff] %v1037
          %1040 = vst [vmem:[%s285 + $0x8] sm:$0xff] %v1038
        $region63: #{fwd.11} parent=50 // pred_fallthru
          _
        %s1041 = smul.u32 2, %s19
        %p1042 = scmp.lt.s32.totalorder %s1041, 1
        %s1043 = scalar_select %p1042, %s1041, 1
        %p1044 = scmp.lt.s32.totalorder %s20, 0
        %s1045 = scalar_select %p1044, %s20, 0
        %s1046 = sadd.s32 %s1045, %s1043
        %s1047 = smul.addr %s1046, 8
        %s1048 = scalar_lea.vmem %s3, %s1047
        // Predicated region
        $region64: #{fwd.11} parent=50 // pred_check
          %p1049 = pneg %p135
        $region65: #{fwd.11} parent=50 // pred_check_branch
          %1051 = sbr.rel (%p1049) target = $region67
        $region66: #{fwd.11} parent=50 // pred_region
          %s1052 = smul.u32 2, %s19
        $region67: #{fwd.11} parent=50 // pred_fallthru
          _
        // Predicated region
        $region68: #{fwd.11} parent=50 // pred_check
          %p1053 = pneg %p135
        $region69: #{fwd.11} parent=50 // pred_check_branch
          %1055 = sbr.rel (%p1053) target = $region71
        $region70: #{fwd.11} parent=50 // pred_region
          %s1056 = smul.u32 2, %s19
          %p1057 = scmp.lt.s32.totalorder %s1056, 1
          %s1058 = scalar_select %p1057, %s1056, 1
          %p1059 = scmp.lt.s32.totalorder %s20, 0
          %s1060 = scalar_select %p1059, %s20, 0
          %s1061 = sadd.s32 %s1060, %s1058
          %s1062 = smul.addr %s1061, 8
          %s1063 = scalar_lea.vmem %s3, %s1062
        $region71: #{fwd.11} parent=50 // pred_fallthru
          _
      $region51: #{fwd.11} parent=5 // pred_fallthru
        _
      %p1064 = scmp.le.s32.totalorder 2, %s9
      // Predicated region
      $region72: #{fwd.11} parent=5 // pred_check
        %p1065 = pneg %p1064
      $region73: #{fwd.11} parent=5 // pred_check_branch
        %1067 = sbr.rel (%p1065) target = $region75
      $region74: #{fwd.11} parent=5 // pred_region
        %s1068 = ssub.s32 %s9, 2
      $region75: #{fwd.11} parent=5 // pred_fallthru
        _
    $region6: #{fwd.11} parent=1 // loop_footer
      %s13 = sadd.s32 1, %s9
    $region7: #{fwd.11} parent=1 // loop_footer_branch
      %8 = sbr.rel target = $region3
    $region8: #{fwd.11} parent=1 // loop_exit
      _

// kernel: fwd.10
$region0: #{fwd.10}
  #allocation0 [shape = 'u32[]', space=smem, size = 0x4, offset = 0x4, fixed_abs, tag = 'smem constant byte address 0x4 - core index']
  #allocation1 [shape = 'u32[144,128]{1,0:T(1,128)}', space=vmem, size = 0x12000, scoped, tag = 'internal scratch']
  #allocation2 [shape = 'f32[16,512]{1,0:T(8,128)}', space=vmem, size = 0x8000, scoped, tag = 'scratch operand']
  %s0 = inlined_call_operand.vmem [shape: bf16[16,5120], index: 0, kind: input, shape index: {}]
  %s1 = inlined_call_operand.vmem [shape: bf16[5120,1024], index: 1, kind: input, shape index: {}]
  %s2 = inlined_call_operand.vmem [shape: f32[1,1024], index: 2, kind: input, shape index: {}]
  %s3 = inlined_call_operand.vmem [shape: f32[16,1024], index: 3, kind: output, shape index: {}]
  %s4 = sld [smem:[#allocation0]]
  $region118: #{fwd.10} parent=0
    _
  %s6 = ssub.s32 1, %s4
  %s7 = scalar_select 0, %s6, %s4
  $region1: #{fwd.10} parent=0
    #allocation3 [shape = 'u8[65536]{0}', space=vmem, size = 0x10000, scoped, tag = 'input window, operand 0']
    #allocation4 [shape = 'u8[2097152]{0}', space=vmem, size = 0x200000, scoped, tag = 'input window, operand 1']
    #allocation5 [shape = 'u8[65536]{0}', space=vmem, size = 0x10000, scoped, tag = 'output window, operand 0']
    loop: start=0, step=1, limit=12
    $region2: #{fwd.10} parent=1 // loop_pre_header
      _
    $region3: #{fwd.10} parent=1 // loop_header
      %s9 = sphi 0, %s13
      %p10 = scmp.ge.s32.totalorder %s9, 12
      %s16 = sphi 0, %s35
      %s17 = sphi 0, %s31
      %s18 = sphi 0, %s27
      %s19 = sphi 0, %s16
      %s20 = sphi 0, %s17
      %s21 = sphi 0, %s18
      %s22 = sphi 0, %s19
      %s23 = sphi 0, %s20
      %s24 = sphi 0, %s21
      %s40 = sphi 0, %s42
      %s43 = sphi 0, %s40
      %s44 = sphi 0, %s43
      %s60 = sphi 0, %s44
      %s68 = sphi 0, %s70
      %s71 = sphi 0, %s68
      %s72 = sphi 0, %s71
      %s88 = sphi 0, %s72
      %s94 = sphi 0, %s96
      %s97 = sphi 0, %s94
      %s98 = sphi 0, %s97
      %s114 = sphi 0, %s98
      %s122 = sphi 0, %s124
      %s125 = sphi 0, %s122
      %s126 = sphi 0, %s125
      %s142 = sphi 0, %s126
    $region4: #{fwd.10} parent=1 // loop_header_branch
      %12 = sbr.rel (%p10) target = $region8
    $region5: #{fwd.10} parent=1 // loop_body
      %s14 = ssub.s32 %s9, 1
      %s15 = ssub.s32 %s9, 2
      %s25 = sadd.s32 1, %s18
      %p26 = scmp.ge.s32.totalorder %s25, 5
      %s27 = scalar_select %p26, 0, %s25
      %s28 = sadd.s32 1, %s17
      %s29 = scalar_select %p26, %s28, %s17
      %p30 = scmp.ge.s32.totalorder %s29, 2
      %s31 = scalar_select %p30, 0, %s29
      %s32 = sadd.s32 1, %s16
      %s33 = scalar_select %p30, %s32, %s16
      %p34 = scmp.ge.s32.totalorder %s33, 1
      %s35 = scalar_select %p34, 0, %s33
      %s36 = ssub.s32 %s16, %s35
      %s37 = ssub.s32 %s18, %s27
      %s38 = sor.u32 %s36, %s37
      %p39 = scmp.eq.s32.totalorder %s38, 0
      %s41 = sadd.s32 %s40, 1
      %s42 = scalar_select %p39, %s40, %s41
      %p45 = pneg %p39
      %p46 = scmp.eq.s32.totalorder %s9, 9
      %p47 = por %p45, %p46
      %p48 = scmp.ne.s32.totalorder %s40, %s43
      %p49 = scmp.eq.s32.totalorder %s9, 0
      %p50 = por %p48, %p49
      %p51 = scmp.ne.s32.totalorder %s40, %s43
      %p52 = scmp.eq.s32.totalorder %s14, 9
      %p53 = por %p51, %p52
      %p54 = scmp.ne.s32.totalorder %s43, %s44
      %p55 = scmp.eq.s32.totalorder %s14, 0
      %p56 = por %p54, %p55
      %p57 = scmp.ne.s32.totalorder %s43, %s44
      %p58 = scmp.eq.s32.totalorder %s15, 9
      %p59 = por %p57, %p58
      %p61 = scmp.ne.s32.totalorder %s44, %s60
      %p62 = scmp.eq.s32.totalorder %s15, 0
      %p63 = por %p61, %p62
      %s64 = ssub.s32 %s18, %s27
      %s65 = ssub.s32 %s17, %s31
      %s66 = sor.u32 %s64, %s65
      %p67 = scmp.eq.s32.totalorder %s66, 0
      %s69 = sadd.s32 %s68, 1
      %s70 = scalar_select %p67, %s68, %s69
      %p73 = pneg %p67
      %p74 = scmp.eq.s32.totalorder %s9, 9
      %p75 = por %p73, %p74
      %p76 = scmp.ne.s32.totalorder %s68, %s71
      %p77 = scmp.eq.s32.totalorder %s9, 0
      %p78 = por %p76, %p77
      %p79 = scmp.ne.s32.totalorder %s68, %s71
      %p80 = scmp.eq.s32.totalorder %s14, 9
      %p81 = por %p79, %p80
      %p82 = scmp.ne.s32.totalorder %s71, %s72
      %p83 = scmp.eq.s32.totalorder %s14, 0
      %p84 = por %p82, %p83
      %p85 = scmp.ne.s32.totalorder %s71, %s72
      %p86 = scmp.eq.s32.totalorder %s15, 9
      %p87 = por %p85, %p86
      %p89 = scmp.ne.s32.totalorder %s72, %s88
      %p90 = scmp.eq.s32.totalorder %s15, 0
      %p91 = por %p89, %p90
      %s92 = ssub.s32 %s17, %s31
      %p93 = scmp.eq.s32.totalorder %s92, 0
      %s95 = sadd.s32 %s94, 1
      %s96 = scalar_select %p93, %s94, %s95
      %p99 = pneg %p93
      %p100 = scmp.eq.s32.totalorder %s9, 9
      %p101 = por %p99, %p100
      %p102 = scmp.ne.s32.totalorder %s94, %s97
      %p103 = scmp.eq.s32.totalorder %s9, 0
      %p104 = por %p102, %p103
      %p105 = scmp.ne.s32.totalorder %s94, %s97
      %p106 = scmp.eq.s32.totalorder %s14, 9
      %p107 = por %p105, %p106
      %p108 = scmp.ne.s32.totalorder %s97, %s98
      %p109 = scmp.eq.s32.totalorder %s14, 0
      %p110 = por %p108, %p109
      %p111 = scmp.ne.s32.totalorder %s97, %s98
      %p112 = scmp.eq.s32.totalorder %s15, 9
      %p113 = por %p111, %p112
      %p115 = scmp.ne.s32.totalorder %s98, %s114
      %p116 = scmp.eq.s32.totalorder %s15, 0
      %p117 = por %p115, %p116
      %s118 = ssub.s32 %s16, %s35
      %s119 = ssub.s32 %s17, %s31
      %s120 = sor.u32 %s118, %s119
      %p121 = scmp.eq.s32.totalorder %s120, 0
      %s123 = sadd.s32 %s122, 1
      %s124 = scalar_select %p121, %s122, %s123
      %p127 = pneg %p121
      %p128 = scmp.eq.s32.totalorder %s9, 9
      %p129 = por %p127, %p128
      %p130 = scmp.ne.s32.totalorder %s122, %s125
      %p131 = scmp.eq.s32.totalorder %s9, 0
      %p132 = por %p130, %p131
      %p133 = scmp.ne.s32.totalorder %s122, %s125
      %p134 = scmp.eq.s32.totalorder %s14, 9
      %p135 = por %p133, %p134
      %p136 = scmp.ne.s32.totalorder %s125, %s126
      %p137 = scmp.eq.s32.totalorder %s14, 0
      %p138 = por %p136, %p137
      %p139 = scmp.ne.s32.totalorder %s125, %s126
      %p140 = scmp.eq.s32.totalorder %s15, 9
      %p141 = por %p139, %p140
      %p143 = scmp.ne.s32.totalorder %s126, %s142
      %p144 = scmp.eq.s32.totalorder %s15, 0
      %p145 = por %p143, %p144
      %p146 = scmp.le.s32.totalorder 1, %s9
      %p147 = scmp.lt.s32.totalorder %s9, 11
      %p148 = pnand %p146, %p147
      %p149 = pneg %p148
      // Predicated region
      $region9: #{fwd.10} parent=5 // pred_check
        _
      $region10: #{fwd.10} parent=5 // pred_check_branch
        %151 = sbr.rel (%p148) target = $region12
      $region11: #{fwd.10} parent=5 // pred_region
        %s152 = ssub.s32 %s9, 1
      $region12: #{fwd.10} parent=5 // pred_fallthru
        _
      %p153 = scmp.lt.s32.totalorder %s9, 10
      // Predicated region
      $region13: #{fwd.10} parent=5 // pred_check
        %p154 = pneg %p153
      $region14: #{fwd.10} parent=5 // pred_check_branch
        %156 = sbr.rel (%p154) target = $region16
      $region15: #{fwd.10} parent=5 // pred_region
        // Predicated region
        $region17: #{fwd.10} parent=15 // pred_check
          %p157 = pneg %p50
        $region18: #{fwd.10} parent=15 // pred_check_branch
          %159 = sbr.rel (%p157) target = $region20
        $region19: #{fwd.10} parent=15 // pred_region
          %s160 = sand.u32 %s40, 1
          %s161 = sand.u32 %s40, 1
          %s162 = smul.addr %s161, 64
          %s163 = scalar_lea.vmem [#allocation3], %s162
          %s164 = smul.u32 2, %s16
          %s165 = smul.u32 8, %s18
          %s166 = smul.addr %s164, 40
          %s167 = sadd.s32 %s165, %s166
          %s168 = smul.addr %s167, 4
          %s169 = scalar_lea.vmem %s0, %s168
          // Predicated region
          $region21: #{fwd.10} parent=19 // pred_check
            _
          $region22: #{fwd.10} parent=19 // pred_check_branch
            %171 = sbr.rel (0) target = $region24
          $region23: #{fwd.10} parent=19 // pred_region
            // Predicated region
            $region25: #{fwd.10} parent=23 // pred_check
              _
            $region26: #{fwd.10} parent=23 // pred_check_branch
              %173 = sbr.rel (0) target = $region28
            $region27: #{fwd.10} parent=23 // pred_region
              loop: start=0, step=1, limit=1
              $region29: #{fwd.10} parent=27 // loop_pre_header
                _
              $region30: #{fwd.10} parent=27 // loop_header
                %s175 = sphi 0, %s179
                %p176 = scmp.ge.s32.totalorder %s175, 1
                %s180 = sphi %s169, %s169
                %s181 = sphi %s163, %s163
              $region31: #{fwd.10} parent=27 // loop_header_branch
                %178 = sbr.rel (%p176) target = $region35
              $region32: #{fwd.10} parent=27 // loop_body
                %v182 = vld [vmem:[%s180] sm:$0xff]
                %183 = vst [vmem:[%s181] sm:$0xff] %v182
                %v184 = vld [vmem:[%s180 + $0x8] sm:$0xff]
                %185 = vst [vmem:[%s181 + $0x8] sm:$0xff] %v184
                %v186 = vld [vmem:[%s180 + $0x10] sm:$0xff]
                %187 = vst [vmem:[%s181 + $0x10] sm:$0xff] %v186
                %v188 = vld [vmem:[%s180 + $0x18] sm:$0xff]
                %189 = vst [vmem:[%s181 + $0x18] sm:$0xff] %v188
                %v190 = vld [vmem:[%s180 + $0xa0] sm:$0xff]
                %191 = vst [vmem:[%s181 + $0x20] sm:$0xff] %v190
                %v192 = vld [vmem:[%s180 + $0xa8] sm:$0xff]
                %193 = vst [vmem:[%s181 + $0x28] sm:$0xff] %v192
                %v194 = vld [vmem:[%s180 + $0xb0] sm:$0xff]
                %195 = vst [vmem:[%s181 + $0x30] sm:$0xff] %v194
                %v196 = vld [vmem:[%s180 + $0xb8] sm:$0xff]
                %197 = vst [vmem:[%s181 + $0x38] sm:$0xff] %v196
              $region33: #{fwd.10} parent=27 // loop_footer
                %s179 = sadd.s32 1, %s175
              $region34: #{fwd.10} parent=27 // loop_footer_branch
                %174 = sbr.rel target = $region30
              $region35: #{fwd.10} parent=27 // loop_exit
                _
            $region28: #{fwd.10} parent=23 // pred_fallthru
              _
            // Predicated region
            $region36: #{fwd.10} parent=23 // pred_check
              _
            $region37: #{fwd.10} parent=23 // pred_check_branch
              %199 = sbr.rel target = $region39
            $region38: #{fwd.10} parent=23 // pred_region
              _
            $region39: #{fwd.10} parent=23 // pred_fallthru
              _
          $region24: #{fwd.10} parent=19 // pred_fallthru
            _
          %200 = vnop
        $region20: #{fwd.10} parent=15 // pred_fallthru
          _
        // Predicated region
        $region40: #{fwd.10} parent=15 // pred_check
          %p201 = pneg %p78
        $region41: #{fwd.10} parent=15 // pred_check_branch
          %203 = sbr.rel (%p201) target = $region43
        $region42: #{fwd.10} parent=15 // pred_region
          %s204 = sand.u32 %s68, 1
          %s205 = sand.u32 %s68, 1
          %s206 = smul.addr %s205, 2048
          %s207 = scalar_lea.vmem [#allocation4], %s206
          %s208 = smul.u32 128, %s18
          %s209 = smul.u32 4, %s17
          %s210 = smul.addr %s208, 8
          %s211 = sadd.s32 %s209, %s210
          %s212 = smul.addr %s211, 4
          %s213 = scalar_lea.vmem %s1, %s212
          // Predicated region
          $region44: #{fwd.10} parent=42 // pred_check
            _
          $region45: #{fwd.10} parent=42 // pred_check_branch
            %215 = sbr.rel (0) target = $region47
          $region46: #{fwd.10} parent=42 // pred_region
            // Predicated region
            $region48: #{fwd.10} parent=46 // pred_check
              _
            $region49: #{fwd.10} parent=46 // pred_check_branch
              %217 = sbr.rel (0) target = $region51
            $region50: #{fwd.10} parent=46 // pred_region
              loop: start=0, step=1, limit=1
              $region52: #{fwd.10} parent=50 // loop_pre_header
                _
              $region53: #{fwd.10} parent=50 // loop_header
                %s219 = sphi 0, %s223
                %p220 = scmp.ge.s32.totalorder %s219, 1
                %s224 = sphi %s213, %s213
                %s225 = sphi %s207, %s207
              $region54: #{fwd.10} parent=50 // loop_header_branch
                %222 = sbr.rel (%p220) target = $region58
              $region55: #{fwd.10} parent=50 // loop_body
                %v226 = vld [vmem:[%s224] sm:$0xff]
                %227 = vst [vmem:[%s225] sm:$0xff] %v226
                %v228 = vld [vmem:[%s224 + $0x8] sm:$0xff]
                %229 = vst [vmem:[%s225 + $0x8] sm:$0xff] %v228
                %v230 = vld [vmem:[%s224 + $0x20] sm:$0xff]
                %231 = vst [vmem:[%s225 + $0x10] sm:$0xff] %v230
                %v232 = vld [vmem:[%s224 + $0x28] sm:$0xff]
                %233 = vst [vmem:[%s225 + $0x18] sm:$0xff] %v232
                %v234 = vld [vmem:[%s224 + $0x40] sm:$0xff]
                %235 = vst [vmem:[%s225 + $0x20] sm:$0xff] %v234
                %v236 = vld [vmem:[%s224 + $0x48] sm:$0xff]
                %237 = vst [vmem:[%s225 + $0x28] sm:$0xff] %v236
                %v238 = vld [vmem:[%s224 + $0x60] sm:$0xff]
                %239 = vst [vmem:[%s225 + $0x30] sm:$0xff] %v238
                %v240 = vld [vmem:[%s224 + $0x68] sm:$0xff]
                %241 = vst [vmem:[%s225 + $0x38] sm:$0xff] %v240
                %v242 = vld [vmem:[%s224 + $0x80] sm:$0xff]
                %243 = vst [vmem:[%s225 + $0x40] sm:$0xff] %v242
                %v244 = vld [vmem:[%s224 + $0x88] sm:$0xff]
                %245 = vst [vmem:[%s225 + $0x48] sm:$0xff] %v244
                %v246 = vld [vmem:[%s224 + $0xa0] sm:$0xff]
                %247 = vst [vmem:[%s225 + $0x50] sm:$0xff] %v246
                %v248 = vld [vmem:[%s224 + $0xa8] sm:$0xff]
                %249 = vst [vmem:[%s225 + $0x58] sm:$0xff] %v248
                %v250 = vld [vmem:[%s224 + $0xc0] sm:$0xff]
                %251 = vst [vmem:[%s225 + $0x60] sm:$0xff] %v250
                %v252 = vld [vmem:[%s224 + $0xc8] sm:$0xff]
                %253 = vst [vmem:[%s225 + $0x68] sm:$0xff] %v252
                %v254 = vld [vmem:[%s224 + $0xe0] sm:$0xff]
                %255 = vst [vmem:[%s225 + $0x70] sm:$0xff] %v254
                %v256 = vld [vmem:[%s224 + $0xe8] sm:$0xff]
                %257 = vst [vmem:[%s225 + $0x78] sm:$0xff] %v256
                %v258 = vld [vmem:[%s224 + $0x100] sm:$0xff]
                %259 = vst [vmem:[%s225 + $0x80] sm:$0xff] %v258
                %v260 = vld [vmem:[%s224 + $0x108] sm:$0xff]
                %261 = vst [vmem:[%s225 + $0x88] sm:$0xff] %v260
                %v262 = vld [vmem:[%s224 + $0x120] sm:$0xff]
                %263 = vst [vmem:[%s225 + $0x90] sm:$0xff] %v262
                %v264 = vld [vmem:[%s224 + $0x128] sm:$0xff]
                %265 = vst [vmem:[%s225 + $0x98] sm:$0xff] %v264
                %v266 = vld [vmem:[%s224 + $0x140] sm:$0xff]
                %267 = vst [vmem:[%s225 + $0xa0] sm:$0xff] %v266
                %v268 = vld [vmem:[%s224 + $0x148] sm:$0xff]
                %269 = vst [vmem:[%s225 + $0xa8] sm:$0xff] %v268
                %v270 = vld [vmem:[%s224 + $0x160] sm:$0xff]
                %271 = vst [vmem:[%s225 + $0xb0] sm:$0xff] %v270
                %v272 = vld [vmem:[%s224 + $0x168] sm:$0xff]
                %273 = vst [vmem:[%s225 + $0xb8] sm:$0xff] %v272
                %v274 = vld [vmem:[%s224 + $0x180] sm:$0xff]
                %275 = vst [vmem:[%s225 + $0xc0] sm:$0xff] %v274
                %v276 = vld [vmem:[%s224 + $0x188] sm:$0xff]
                %277 = vst [vmem:[%s225 + $0xc8] sm:$0xff] %v276
                %v278 = vld [vmem:[%s224 + $0x1a0] sm:$0xff]
                %279 = vst [vmem:[%s225 + $0xd0] sm:$0xff] %v278
                %v280 = vld [vmem:[%s224 + $0x1a8] sm:$0xff]
                %281 = vst [vmem:[%s225 + $0xd8] sm:$0xff] %v280
                %v282 = vld [vmem:[%s224 + $0x1c0] sm:$0xff]
                %283 = vst [vmem:[%s225 + $0xe0] sm:$0xff] %v282
                %v284 = vld [vmem:[%s224 + $0x1c8] sm:$0xff]
                %285 = vst [vmem:[%s225 + $0xe8] sm:$0xff] %v284
                %v286 = vld [vmem:[%s224 + $0x1e0] sm:$0xff]
                %287 = vst [vmem:[%s225 + $0xf0] sm:$0xff] %v286
                %v288 = vld [vmem:[%s224 + $0x1e8] sm:$0xff]
                %289 = vst [vmem:[%s225 + $0xf8] sm:$0xff] %v288
                %v290 = vld [vmem:[%s224 + $0x200] sm:$0xff]
                %291 = vst [vmem:[%s225 + $0x100] sm:$0xff] %v290
                %v292 = vld [vmem:[%s224 + $0x208] sm:$0xff]
                %293 = vst [vmem:[%s225 + $0x108] sm:$0xff] %v292
                %v294 = vld [vmem:[%s224 + $0x220] sm:$0xff]
                %295 = vst [vmem:[%s225 + $0x110] sm:$0xff] %v294
                %v296 = vld [vmem:[%s224 + $0x228] sm:$0xff]
                %297 = vst [vmem:[%s225 + $0x118] sm:$0xff] %v296
                %v298 = vld [vmem:[%s224 + $0x240] sm:$0xff]
                %299 = vst [vmem:[%s225 + $0x120] sm:$0xff] %v298
                %v300 = vld [vmem:[%s224 + $0x248] sm:$0xff]
                %301 = vst [vmem:[%s225 + $0x128] sm:$0xff] %v300
                %v302 = vld [vmem:[%s224 + $0x260] sm:$0xff]
                %303 = vst [vmem:[%s225 + $0x130] sm:$0xff] %v302
                %v304 = vld [vmem:[%s224 + $0x268] sm:$0xff]
                %305 = vst [vmem:[%s225 + $0x138] sm:$0xff] %v304
                %v306 = vld [vmem:[%s224 + $0x280] sm:$0xff]
                %307 = vst [vmem:[%s225 + $0x140] sm:$0xff] %v306
                %v308 = vld [vmem:[%s224 + $0x288] sm:$0xff]
                %309 = vst [vmem:[%s225 + $0x148] sm:$0xff] %v308
                %v310 = vld [vmem:[%s224 + $0x2a0] sm:$0xff]
                %311 = vst [vmem:[%s225 + $0x150] sm:$0xff] %v310
                %v312 = vld [vmem:[%s224 + $0x2a8] sm:$0xff]
                %313 = vst [vmem:[%s225 + $0x158] sm:$0xff] %v312
                %v314 = vld [vmem:[%s224 + $0x2c0] sm:$0xff]
                %315 = vst [vmem:[%s225 + $0x160] sm:$0xff] %v314
                %v316 = vld [vmem:[%s224 + $0x2c8] sm:$0xff]
                %317 = vst [vmem:[%s225 + $0x168] sm:$0xff] %v316
                %v318 = vld [vmem:[%s224 + $0x2e0] sm:$0xff]
                %319 = vst [vmem:[%s225 + $0x170] sm:$0xff] %v318
                %v320 = vld [vmem:[%s224 + $0x2e8] sm:$0xff]
                %321 = vst [vmem:[%s225 + $0x178] sm:$0xff] %v320
                %v322 = vld [vmem:[%s224 + $0x300] sm:$0xff]
                %323 = vst [vmem:[%s225 + $0x180] sm:$0xff] %v322
                %v324 = vld [vmem:[%s224 + $0x308] sm:$0xff]
                %325 = vst [vmem:[%s225 + $0x188] sm:$0xff] %v324
                %v326 = vld [vmem:[%s224 + $0x320] sm:$0xff]
                %327 = vst [vmem:[%s225 + $0x190] sm:$0xff] %v326
                %v328 = vld [vmem:[%s224 + $0x328] sm:$0xff]
                %329 = vst [vmem:[%s225 + $0x198] sm:$0xff] %v328
                %v330 = vld [vmem:[%s224 + $0x340] sm:$0xff]
                %331 = vst [vmem:[%s225 + $0x1a0] sm:$0xff] %v330
                %v332 = vld [vmem:[%s224 + $0x348] sm:$0xff]
                %333 = vst [vmem:[%s225 + $0x1a8] sm:$0xff] %v332
                %v334 = vld [vmem:[%s224 + $0x360] sm:$0xff]
                %335 = vst [vmem:[%s225 + $0x1b0] sm:$0xff] %v334
                %v336 = vld [vmem:[%s224 + $0x368] sm:$0xff]
                %337 = vst [vmem:[%s225 + $0x1b8] sm:$0xff] %v336
                %v338 = vld [vmem:[%s224 + $0x380] sm:$0xff]
                %339 = vst [vmem:[%s225 + $0x1c0] sm:$0xff] %v338
                %v340 = vld [vmem:[%s224 + $0x388] sm:$0xff]
                %341 = vst [vmem:[%s225 + $0x1c8] sm:$0xff] %v340
                %v342 = vld [vmem:[%s224 + $0x3a0] sm:$0xff]
                %343 = vst [vmem:[%s225 + $0x1d0] sm:$0xff] %v342
                %v344 = vld [vmem:[%s224 + $0x3a8] sm:$0xff]
                %345 = vst [vmem:[%s225 + $0x1d8] sm:$0xff] %v344
                %v346 = vld [vmem:[%s224 + $0x3c0] sm:$0xff]
                %347 = vst [vmem:[%s225 + $0x1e0] sm:$0xff] %v346
                %v348 = vld [vmem:[%s224 + $0x3c8] sm:$0xff]
                %349 = vst [vmem:[%s225 + $0x1e8] sm:$0xff] %v348
                %v350 = vld [vmem:[%s224 + $0x3e0] sm:$0xff]
                %351 = vst [vmem:[%s225 + $0x1f0] sm:$0xff] %v350
                %v352 = vld [vmem:[%s224 + $0x3e8] sm:$0xff]
                %353 = vst [vmem:[%s225 + $0x1f8] sm:$0xff] %v352
                %v354 = vld [vmem:[%s224 + $0x400] sm:$0xff]
                %355 = vst [vmem:[%s225 + $0x200] sm:$0xff] %v354
                %v356 = vld [vmem:[%s224 + $0x408] sm:$0xff]
                %357 = vst [vmem:[%s225 + $0x208] sm:$0xff] %v356
                %v358 = vld [vmem:[%s224 + $0x420] sm:$0xff]
                %359 = vst [vmem:[%s225 + $0x210] sm:$0xff] %v358
                %v360 = vld [vmem:[%s224 + $0x428] sm:$0xff]
                %361 = vst [vmem:[%s225 + $0x218] sm:$0xff] %v360
                %v362 = vld [vmem:[%s224 + $0x440] sm:$0xff]
                %363 = vst [vmem:[%s225 + $0x220] sm:$0xff] %v362
                %v364 = vld [vmem:[%s224 + $0x448] sm:$0xff]
                %365 = vst [vmem:[%s225 + $0x228] sm:$0xff] %v364
                %v366 = vld [vmem:[%s224 + $0x460] sm:$0xff]
                %367 = vst [vmem:[%s225 + $0x230] sm:$0xff] %v366
                %v368 = vld [vmem:[%s224 + $0x468] sm:$0xff]
                %369 = vst [vmem:[%s225 + $0x238] sm:$0xff] %v368
                %v370 = vld [vmem:[%s224 + $0x480] sm:$0xff]
                %371 = vst [vmem:[%s225 + $0x240] sm:$0xff] %v370
                %v372 = vld [vmem:[%s224 + $0x488] sm:$0xff]
                %373 = vst [vmem:[%s225 + $0x248] sm:$0xff] %v372
                %v374 = vld [vmem:[%s224 + $0x4a0] sm:$0xff]
                %375 = vst [vmem:[%s225 + $0x250] sm:$0xff] %v374
                %v376 = vld [vmem:[%s224 + $0x4a8] sm:$0xff]
                %377 = vst [vmem:[%s225 + $0x258] sm:$0xff] %v376
                %v378 = vld [vmem:[%s224 + $0x4c0] sm:$0xff]
                %379 = vst [vmem:[%s225 + $0x260] sm:$0xff] %v378
                %v380 = vld [vmem:[%s224 + $0x4c8] sm:$0xff]
                %381 = vst [vmem:[%s225 + $0x268] sm:$0xff] %v380
                %v382 = vld [vmem:[%s224 + $0x4e0] sm:$0xff]
                %383 = vst [vmem:[%s225 + $0x270] sm:$0xff] %v382
                %v384 = vld [vmem:[%s224 + $0x4e8] sm:$0xff]
                %385 = vst [vmem:[%s225 + $0x278] sm:$0xff] %v384
                %v386 = vld [vmem:[%s224 + $0x500] sm:$0xff]
                %387 = vst [vmem:[%s225 + $0x280] sm:$0xff] %v386
                %v388 = vld [vmem:[%s224 + $0x508] sm:$0xff]
                %389 = vst [vmem:[%s225 + $0x288] sm:$0xff] %v388
                %v390 = vld [vmem:[%s224 + $0x520] sm:$0xff]
                %391 = vst [vmem:[%s225 + $0x290] sm:$0xff] %v390
                %v392 = vld [vmem:[%s224 + $0x528] sm:$0xff]
                %393 = vst [vmem:[%s225 + $0x298] sm:$0xff] %v392
                %v394 = vld [vmem:[%s224 + $0x540] sm:$0xff]
                %395 = vst [vmem:[%s225 + $0x2a0] sm:$0xff] %v394
                %v396 = vld [vmem:[%s224 + $0x548] sm:$0xff]
                %397 = vst [vmem:[%s225 + $0x2a8] sm:$0xff] %v396
                %v398 = vld [vmem:[%s224 + $0x560] sm:$0xff]
                %399 = vst [vmem:[%s225 + $0x2b0] sm:$0xff] %v398
                %v400 = vld [vmem:[%s224 + $0x568] sm:$0xff]
                %401 = vst [vmem:[%s225 + $0x2b8] sm:$0xff] %v400
                %v402 = vld [vmem:[%s224 + $0x580] sm:$0xff]
                %403 = vst [vmem:[%s225 + $0x2c0] sm:$0xff] %v402
                %v404 = vld [vmem:[%s224 + $0x588] sm:$0xff]
                %405 = vst [vmem:[%s225 + $0x2c8] sm:$0xff] %v404
                %v406 = vld [vmem:[%s224 + $0x5a0] sm:$0xff]
                %407 = vst [vmem:[%s225 + $0x2d0] sm:$0xff] %v406
                %v408 = vld [vmem:[%s224 + $0x5a8] sm:$0xff]
                %409 = vst [vmem:[%s225 + $0x2d8] sm:$0xff] %v408
                %v410 = vld [vmem:[%s224 + $0x5c0] sm:$0xff]
                %411 = vst [vmem:[%s225 + $0x2e0] sm:$0xff] %v410
                %v412 = vld [vmem:[%s224 + $0x5c8] sm:$0xff]
                %413 = vst [vmem:[%s225 + $0x2e8] sm:$0xff] %v412
                %v414 = vld [vmem:[%s224 + $0x5e0] sm:$0xff]
                %415 = vst [vmem:[%s225 + $0x2f0] sm:$0xff] %v414
                %v416 = vld [vmem:[%s224 + $0x5e8] sm:$0xff]
                %417 = vst [vmem:[%s225 + $0x2f8] sm:$0xff] %v416
                %v418 = vld [vmem:[%s224 + $0x600] sm:$0xff]
                %419 = vst [vmem:[%s225 + $0x300] sm:$0xff] %v418
                %v420 = vld [vmem:[%s224 + $0x608] sm:$0xff]
                %421 = vst [vmem:[%s225 + $0x308] sm:$0xff] %v420
                %v422 = vld [vmem:[%s224 + $0x620] sm:$0xff]
                %423 = vst [vmem:[%s225 + $0x310] sm:$0xff] %v422
                %v424 = vld [vmem:[%s224 + $0x628] sm:$0xff]
                %425 = vst [vmem:[%s225 + $0x318] sm:$0xff] %v424
                %v426 = vld [vmem:[%s224 + $0x640] sm:$0xff]
                %427 = vst [vmem:[%s225 + $0x320] sm:$0xff] %v426
                %v428 = vld [vmem:[%s224 + $0x648] sm:$0xff]
                %429 = vst [vmem:[%s225 + $0x328] sm:$0xff] %v428
                %v430 = vld [vmem:[%s224 + $0x660] sm:$0xff]
                %431 = vst [vmem:[%s225 + $0x330] sm:$0xff] %v430
                %v432 = vld [vmem:[%s224 + $0x668] sm:$0xff]
                %433 = vst [vmem:[%s225 + $0x338] sm:$0xff] %v432
                %v434 = vld [vmem:[%s224 + $0x680] sm:$0xff]
                %435 = vst [vmem:[%s225 + $0x340] sm:$0xff] %v434
                %v436 = vld [vmem:[%s224 + $0x688] sm:$0xff]
                %437 = vst [vmem:[%s225 + $0x348] sm:$0xff] %v436
                %v438 = vld [vmem:[%s224 + $0x6a0] sm:$0xff]
                %439 = vst [vmem:[%s225 + $0x350] sm:$0xff] %v438
                %v440 = vld [vmem:[%s224 + $0x6a8] sm:$0xff]
                %441 = vst [vmem:[%s225 + $0x358] sm:$0xff] %v440
                %v442 = vld [vmem:[%s224 + $0x6c0] sm:$0xff]
                %443 = vst [vmem:[%s225 + $0x360] sm:$0xff] %v442
                %v444 = vld [vmem:[%s224 + $0x6c8] sm:$0xff]
                %445 = vst [vmem:[%s225 + $0x368] sm:$0xff] %v444
                %v446 = vld [vmem:[%s224 + $0x6e0] sm:$0xff]
                %447 = vst [vmem:[%s225 + $0x370] sm:$0xff] %v446
                %v448 = vld [vmem:[%s224 + $0x6e8] sm:$0xff]
                %449 = vst [vmem:[%s225 + $0x378] sm:$0xff] %v448
                %v450 = vld [vmem:[%s224 + $0x700] sm:$0xff]
                %451 = vst [vmem:[%s225 + $0x380] sm:$0xff] %v450
                %v452 = vld [vmem:[%s224 + $0x708] sm:$0xff]
                %453 = vst [vmem:[%s225 + $0x388] sm:$0xff] %v452
                %v454 = vld [vmem:[%s224 + $0x720] sm:$0xff]
                %455 = vst [vmem:[%s225 + $0x390] sm:$0xff] %v454
                %v456 = vld [vmem:[%s224 + $0x728] sm:$0xff]
                %457 = vst [vmem:[%s225 + $0x398] sm:$0xff] %v456
                %v458 = vld [vmem:[%s224 + $0x740] sm:$0xff]
                %459 = vst [vmem:[%s225 + $0x3a0] sm:$0xff] %v458
                %v460 = vld [vmem:[%s224 + $0x748] sm:$0xff]
                %461 = vst [vmem:[%s225 + $0x3a8] sm:$0xff] %v460
                %v462 = vld [vmem:[%s224 + $0x760] sm:$0xff]
                %463 = vst [vmem:[%s225 + $0x3b0] sm:$0xff] %v462
                %v464 = vld [vmem:[%s224 + $0x768] sm:$0xff]
                %465 = vst [vmem:[%s225 + $0x3b8] sm:$0xff] %v464
                %v466 = vld [vmem:[%s224 + $0x780] sm:$0xff]
                %467 = vst [vmem:[%s225 + $0x3c0] sm:$0xff] %v466
                %v468 = vld [vmem:[%s224 + $0x788] sm:$0xff]
                %469 = vst [vmem:[%s225 + $0x3c8] sm:$0xff] %v468
                %v470 = vld [vmem:[%s224 + $0x7a0] sm:$0xff]
                %471 = vst [vmem:[%s225 + $0x3d0] sm:$0xff] %v470
                %v472 = vld [vmem:[%s224 + $0x7a8] sm:$0xff]
                %473 = vst [vmem:[%s225 + $0x3d8] sm:$0xff] %v472
                %v474 = vld [vmem:[%s224 + $0x7c0] sm:$0xff]
                %475 = vst [vmem:[%s225 + $0x3e0] sm:$0xff] %v474
                %v476 = vld [vmem:[%s224 + $0x7c8] sm:$0xff]
                %477 = vst [vmem:[%s225 + $0x3e8] sm:$0xff] %v476
                %v478 = vld [vmem:[%s224 + $0x7e0] sm:$0xff]
                %479 = vst [vmem:[%s225 + $0x3f0] sm:$0xff] %v478
                %v480 = vld [vmem:[%s224 + $0x7e8] sm:$0xff]
                %481 = vst [vmem:[%s225 + $0x3f8] sm:$0xff] %v480
                %v482 = vld [vmem:[%s224 + $0x800] sm:$0xff]
                %483 = vst [vmem:[%s225 + $0x400] sm:$0xff] %v482
                %v484 = vld [vmem:[%s224 + $0x808] sm:$0xff]
                %485 = vst [vmem:[%s225 + $0x408] sm:$0xff] %v484
                %v486 = vld [vmem:[%s224 + $0x820] sm:$0xff]
                %487 = vst [vmem:[%s225 + $0x410] sm:$0xff] %v486
                %v488 = vld [vmem:[%s224 + $0x828] sm:$0xff]
                %489 = vst [vmem:[%s225 + $0x418] sm:$0xff] %v488
                %v490 = vld [vmem:[%s224 + $0x840] sm:$0xff]
                %491 = vst [vmem:[%s225 + $0x420] sm:$0xff] %v490
                %v492 = vld [vmem:[%s224 + $0x848] sm:$0xff]
                %493 = vst [vmem:[%s225 + $0x428] sm:$0xff] %v492
                %v494 = vld [vmem:[%s224 + $0x860] sm:$0xff]
                %495 = vst [vmem:[%s225 + $0x430] sm:$0xff] %v494
                %v496 = vld [vmem:[%s224 + $0x868] sm:$0xff]
                %497 = vst [vmem:[%s225 + $0x438] sm:$0xff] %v496
                %v498 = vld [vmem:[%s224 + $0x880] sm:$0xff]
                %499 = vst [vmem:[%s225 + $0x440] sm:$0xff] %v498
                %v500 = vld [vmem:[%s224 + $0x888] sm:$0xff]
                %501 = vst [vmem:[%s225 + $0x448] sm:$0xff] %v500
                %v502 = vld [vmem:[%s224 + $0x8a0] sm:$0xff]
                %503 = vst [vmem:[%s225 + $0x450] sm:$0xff] %v502
                %v504 = vld [vmem:[%s224 + $0x8a8] sm:$0xff]
                %505 = vst [vmem:[%s225 + $0x458] sm:$0xff] %v504
                %v506 = vld [vmem:[%s224 + $0x8c0] sm:$0xff]
                %507 = vst [vmem:[%s225 + $0x460] sm:$0xff] %v506
                %v508 = vld [vmem:[%s224 + $0x8c8] sm:$0xff]
                %509 = vst [vmem:[%s225 + $0x468] sm:$0xff] %v508
                %v510 = vld [vmem:[%s224 + $0x8e0] sm:$0xff]
                %511 = vst [vmem:[%s225 + $0x470] sm:$0xff] %v510
                %v512 = vld [vmem:[%s224 + $0x8e8] sm:$0xff]
                %513 = vst [vmem:[%s225 + $0x478] sm:$0xff] %v512
                %v514 = vld [vmem:[%s224 + $0x900] sm:$0xff]
                %515 = vst [vmem:[%s225 + $0x480] sm:$0xff] %v514
                %v516 = vld [vmem:[%s224 + $0x908] sm:$0xff]
                %517 = vst [vmem:[%s225 + $0x488] sm:$0xff] %v516
                %v518 = vld [vmem:[%s224 + $0x920] sm:$0xff]
                %519 = vst [vmem:[%s225 + $0x490] sm:$0xff] %v518
                %v520 = vld [vmem:[%s224 + $0x928] sm:$0xff]
                %521 = vst [vmem:[%s225 + $0x498] sm:$0xff] %v520
                %v522 = vld [vmem:[%s224 + $0x940] sm:$0xff]
                %523 = vst [vmem:[%s225 + $0x4a0] sm:$0xff] %v522
                %v524 = vld [vmem:[%s224 + $0x948] sm:$0xff]
                %525 = vst [vmem:[%s225 + $0x4a8] sm:$0xff] %v524
                %v526 = vld [vmem:[%s224 + $0x960] sm:$0xff]
                %527 = vst [vmem:[%s225 + $0x4b0] sm:$0xff] %v526
                %v528 = vld [vmem:[%s224 + $0x968] sm:$0xff]
                %529 = vst [vmem:[%s225 + $0x4b8] sm:$0xff] %v528
                %v530 = vld [vmem:[%s224 + $0x980] sm:$0xff]
                %531 = vst [vmem:[%s225 + $0x4c0] sm:$0xff] %v530
                %v532 = vld [vmem:[%s224 + $0x988] sm:$0xff]
                %533 = vst [vmem:[%s225 + $0x4c8] sm:$0xff] %v532
                %v534 = vld [vmem:[%s224 + $0x9a0] sm:$0xff]
                %535 = vst [vmem:[%s225 + $0x4d0] sm:$0xff] %v534
                %v536 = vld [vmem:[%s224 + $0x9a8] sm:$0xff]
                %537 = vst [vmem:[%s225 + $0x4d8] sm:$0xff] %v536
                %v538 = vld [vmem:[%s224 + $0x9c0] sm:$0xff]
                %539 = vst [vmem:[%s225 + $0x4e0] sm:$0xff] %v538
                %v540 = vld [vmem:[%s224 + $0x9c8] sm:$0xff]
                %541 = vst [vmem:[%s225 + $0x4e8] sm:$0xff] %v540
                %v542 = vld [vmem:[%s224 + $0x9e0] sm:$0xff]
                %543 = vst [vmem:[%s225 + $0x4f0] sm:$0xff] %v542
                %v544 = vld [vmem:[%s224 + $0x9e8] sm:$0xff]
                %545 = vst [vmem:[%s225 + $0x4f8] sm:$0xff] %v544
                %v546 = vld [vmem:[%s224 + $0xa00] sm:$0xff]
                %547 = vst [vmem:[%s225 + $0x500] sm:$0xff] %v546
                %v548 = vld [vmem:[%s224 + $0xa08] sm:$0xff]
                %549 = vst [vmem:[%s225 + $0x508] sm:$0xff] %v548
                %v550 = vld [vmem:[%s224 + $0xa20] sm:$0xff]
                %551 = vst [vmem:[%s225 + $0x510] sm:$0xff] %v550
                %v552 = vld [vmem:[%s224 + $0xa28] sm:$0xff]
                %553 = vst [vmem:[%s225 + $0x518] sm:$0xff] %v552
                %v554 = vld [vmem:[%s224 + $0xa40] sm:$0xff]
                %555 = vst [vmem:[%s225 + $0x520] sm:$0xff] %v554
                %v556 = vld [vmem:[%s224 + $0xa48] sm:$0xff]
                %557 = vst [vmem:[%s225 + $0x528] sm:$0xff] %v556
                %v558 = vld [vmem:[%s224 + $0xa60] sm:$0xff]
                %559 = vst [vmem:[%s225 + $0x530] sm:$0xff] %v558
                %v560 = vld [vmem:[%s224 + $0xa68] sm:$0xff]
                %561 = vst [vmem:[%s225 + $0x538] sm:$0xff] %v560
                %v562 = vld [vmem:[%s224 + $0xa80] sm:$0xff]
                %563 = vst [vmem:[%s225 + $0x540] sm:$0xff] %v562
                %v564 = vld [vmem:[%s224 + $0xa88] sm:$0xff]
                %565 = vst [vmem:[%s225 + $0x548] sm:$0xff] %v564
                %v566 = vld [vmem:[%s224 + $0xaa0] sm:$0xff]
                %567 = vst [vmem:[%s225 + $0x550] sm:$0xff] %v566
                %v568 = vld [vmem:[%s224 + $0xaa8] sm:$0xff]
                %569 = vst [vmem:[%s225 + $0x558] sm:$0xff] %v568
                %v570 = vld [vmem:[%s224 + $0xac0] sm:$0xff]
                %571 = vst [vmem:[%s225 + $0x560] sm:$0xff] %v570
                %v572 = vld [vmem:[%s224 + $0xac8] sm:$0xff]
                %573 = vst [vmem:[%s225 + $0x568] sm:$0xff] %v572
                %v574 = vld [vmem:[%s224 + $0xae0] sm:$0xff]
                %575 = vst [vmem:[%s225 + $0x570] sm:$0xff] %v574
                %v576 = vld [vmem:[%s224 + $0xae8] sm:$0xff]
                %577 = vst [vmem:[%s225 + $0x578] sm:$0xff] %v576
                %v578 = vld [vmem:[%s224 + $0xb00] sm:$0xff]
                %579 = vst [vmem:[%s225 + $0x580] sm:$0xff] %v578
                %v580 = vld [vmem:[%s224 + $0xb08] sm:$0xff]
                %581 = vst [vmem:[%s225 + $0x588] sm:$0xff] %v580
                %v582 = vld [vmem:[%s224 + $0xb20] sm:$0xff]
                %583 = vst [vmem:[%s225 + $0x590] sm:$0xff] %v582
                %v584 = vld [vmem:[%s224 + $0xb28] sm:$0xff]
                %585 = vst [vmem:[%s225 + $0x598] sm:$0xff] %v584
                %v586 = vld [vmem:[%s224 + $0xb40] sm:$0xff]
                %587 = vst [vmem:[%s225 + $0x5a0] sm:$0xff] %v586
                %v588 = vld [vmem:[%s224 + $0xb48] sm:$0xff]
                %589 = vst [vmem:[%s225 + $0x5a8] sm:$0xff] %v588
                %v590 = vld [vmem:[%s224 + $0xb60] sm:$0xff]
                %591 = vst [vmem:[%s225 + $0x5b0] sm:$0xff] %v590
                %v592 = vld [vmem:[%s224 + $0xb68] sm:$0xff]
                %593 = vst [vmem:[%s225 + $0x5b8] sm:$0xff] %v592
                %v594 = vld [vmem:[%s224 + $0xb80] sm:$0xff]
                %595 = vst [vmem:[%s225 + $0x5c0] sm:$0xff] %v594
                %v596 = vld [vmem:[%s224 + $0xb88] sm:$0xff]
                %597 = vst [vmem:[%s225 + $0x5c8] sm:$0xff] %v596
                %v598 = vld [vmem:[%s224 + $0xba0] sm:$0xff]
                %599 = vst [vmem:[%s225 + $0x5d0] sm:$0xff] %v598
                %v600 = vld [vmem:[%s224 + $0xba8] sm:$0xff]
                %601 = vst [vmem:[%s225 + $0x5d8] sm:$0xff] %v600
                %v602 = vld [vmem:[%s224 + $0xbc0] sm:$0xff]
                %603 = vst [vmem:[%s225 + $0x5e0] sm:$0xff] %v602
                %v604 = vld [vmem:[%s224 + $0xbc8] sm:$0xff]
                %605 = vst [vmem:[%s225 + $0x5e8] sm:$0xff] %v604
                %v606 = vld [vmem:[%s224 + $0xbe0] sm:$0xff]
                %607 = vst [vmem:[%s225 + $0x5f0] sm:$0xff] %v606
                %v608 = vld [vmem:[%s224 + $0xbe8] sm:$0xff]
                %609 = vst [vmem:[%s225 + $0x5f8] sm:$0xff] %v608
                %v610 = vld [vmem:[%s224 + $0xc00] sm:$0xff]
                %611 = vst [vmem:[%s225 + $0x600] sm:$0xff] %v610
                %v612 = vld [vmem:[%s224 + $0xc08] sm:$0xff]
                %613 = vst [vmem:[%s225 + $0x608] sm:$0xff] %v612
                %v614 = vld [vmem:[%s224 + $0xc20] sm:$0xff]
                %615 = vst [vmem:[%s225 + $0x610] sm:$0xff] %v614
                %v616 = vld [vmem:[%s224 + $0xc28] sm:$0xff]
                %617 = vst [vmem:[%s225 + $0x618] sm:$0xff] %v616
                %v618 = vld [vmem:[%s224 + $0xc40] sm:$0xff]
                %619 = vst [vmem:[%s225 + $0x620] sm:$0xff] %v618
                %v620 = vld [vmem:[%s224 + $0xc48] sm:$0xff]
                %621 = vst [vmem:[%s225 + $0x628] sm:$0xff] %v620
                %v622 = vld [vmem:[%s224 + $0xc60] sm:$0xff]
                %623 = vst [vmem:[%s225 + $0x630] sm:$0xff] %v622
                %v624 = vld [vmem:[%s224 + $0xc68] sm:$0xff]
                %625 = vst [vmem:[%s225 + $0x638] sm:$0xff] %v624
                %v626 = vld [vmem:[%s224 + $0xc80] sm:$0xff]
                %627 = vst [vmem:[%s225 + $0x640] sm:$0xff] %v626
                %v628 = vld [vmem:[%s224 + $0xc88] sm:$0xff]
                %629 = vst [vmem:[%s225 + $0x648] sm:$0xff] %v628
                %v630 = vld [vmem:[%s224 + $0xca0] sm:$0xff]
                %631 = vst [vmem:[%s225 + $0x650] sm:$0xff] %v630
                %v632 = vld [vmem:[%s224 + $0xca8] sm:$0xff]
                %633 = vst [vmem:[%s225 + $0x658] sm:$0xff] %v632
                %v634 = vld [vmem:[%s224 + $0xcc0] sm:$0xff]
                %635 = vst [vmem:[%s225 + $0x660] sm:$0xff] %v634
                %v636 = vld [vmem:[%s224 + $0xcc8] sm:$0xff]
                %637 = vst [vmem:[%s225 + $0x668] sm:$0xff] %v636
                %v638 = vld [vmem:[%s224 + $0xce0] sm:$0xff]
                %639 = vst [vmem:[%s225 + $0x670] sm:$0xff] %v638
                %v640 = vld [vmem:[%s224 + $0xce8] sm:$0xff]
                %641 = vst [vmem:[%s225 + $0x678] sm:$0xff] %v640
                %v642 = vld [vmem:[%s224 + $0xd00] sm:$0xff]
                %643 = vst [vmem:[%s225 + $0x680] sm:$0xff] %v642
                %v644 = vld [vmem:[%s224 + $0xd08] sm:$0xff]
                %645 = vst [vmem:[%s225 + $0x688] sm:$0xff] %v644
                %v646 = vld [vmem:[%s224 + $0xd20] sm:$0xff]
                %647 = vst [vmem:[%s225 + $0x690] sm:$0xff] %v646
                %v648 = vld [vmem:[%s224 + $0xd28] sm:$0xff]
                %649 = vst [vmem:[%s225 + $0x698] sm:$0xff] %v648
                %v650 = vld [vmem:[%s224 + $0xd40] sm:$0xff]
                %651 = vst [vmem:[%s225 + $0x6a0] sm:$0xff] %v650
                %v652 = vld [vmem:[%s224 + $0xd48] sm:$0xff]
                %653 = vst [vmem:[%s225 + $0x6a8] sm:$0xff] %v652
                %v654 = vld [vmem:[%s224 + $0xd60] sm:$0xff]
                %655 = vst [vmem:[%s225 + $0x6b0] sm:$0xff] %v654
                %v656 = vld [vmem:[%s224 + $0xd68] sm:$0xff]
                %657 = vst [vmem:[%s225 + $0x6b8] sm:$0xff] %v656
                %v658 = vld [vmem:[%s224 + $0xd80] sm:$0xff]
                %659 = vst [vmem:[%s225 + $0x6c0] sm:$0xff] %v658
                %v660 = vld [vmem:[%s224 + $0xd88] sm:$0xff]
                %661 = vst [vmem:[%s225 + $0x6c8] sm:$0xff] %v660
                %v662 = vld [vmem:[%s224 + $0xda0] sm:$0xff]
                %663 = vst [vmem:[%s225 + $0x6d0] sm:$0xff] %v662
                %v664 = vld [vmem:[%s224 + $0xda8] sm:$0xff]
                %665 = vst [vmem:[%s225 + $0x6d8] sm:$0xff] %v664
                %v666 = vld [vmem:[%s224 + $0xdc0] sm:$0xff]
                %667 = vst [vmem:[%s225 + $0x6e0] sm:$0xff] %v666
                %v668 = vld [vmem:[%s224 + $0xdc8] sm:$0xff]
                %669 = vst [vmem:[%s225 + $0x6e8] sm:$0xff] %v668
                %v670 = vld [vmem:[%s224 + $0xde0] sm:$0xff]
                %671 = vst [vmem:[%s225 + $0x6f0] sm:$0xff] %v670
                %v672 = vld [vmem:[%s224 + $0xde8] sm:$0xff]
                %673 = vst [vmem:[%s225 + $0x6f8] sm:$0xff] %v672
                %v674 = vld [vmem:[%s224 + $0xe00] sm:$0xff]
                %675 = vst [vmem:[%s225 + $0x700] sm:$0xff] %v674
                %v676 = vld [vmem:[%s224 + $0xe08] sm:$0xff]
                %677 = vst [vmem:[%s225 + $0x708] sm:$0xff] %v676
                %v678 = vld [vmem:[%s224 + $0xe20] sm:$0xff]
                %679 = vst [vmem:[%s225 + $0x710] sm:$0xff] %v678
                %v680 = vld [vmem:[%s224 + $0xe28] sm:$0xff]
                %681 = vst [vmem:[%s225 + $0x718] sm:$0xff] %v680
                %v682 = vld [vmem:[%s224 + $0xe40] sm:$0xff]
                %683 = vst [vmem:[%s225 + $0x720] sm:$0xff] %v682
                %v684 = vld [vmem:[%s224 + $0xe48] sm:$0xff]
                %685 = vst [vmem:[%s225 + $0x728] sm:$0xff] %v684
                %v686 = vld [vmem:[%s224 + $0xe60] sm:$0xff]
                %687 = vst [vmem:[%s225 + $0x730] sm:$0xff] %v686
                %v688 = vld [vmem:[%s224 + $0xe68] sm:$0xff]
                %689 = vst [vmem:[%s225 + $0x738] sm:$0xff] %v688
                %v690 = vld [vmem:[%s224 + $0xe80] sm:$0xff]
                %691 = vst [vmem:[%s225 + $0x740] sm:$0xff] %v690
                %v692 = vld [vmem:[%s224 + $0xe88] sm:$0xff]
                %693 = vst [vmem:[%s225 + $0x748] sm:$0xff] %v692
                %v694 = vld [vmem:[%s224 + $0xea0] sm:$0xff]
                %695 = vst [vmem:[%s225 + $0x750] sm:$0xff] %v694
                %v696 = vld [vmem:[%s224 + $0xea8] sm:$0xff]
                %697 = vst [vmem:[%s225 + $0x758] sm:$0xff] %v696
                %v698 = vld [vmem:[%s224 + $0xec0] sm:$0xff]
                %699 = vst [vmem:[%s225 + $0x760] sm:$0xff] %v698
                %v700 = vld [vmem:[%s224 + $0xec8] sm:$0xff]
                %701 = vst [vmem:[%s225 + $0x768] sm:$0xff] %v700
                %v702 = vld [vmem:[%s224 + $0xee0] sm:$0xff]
                %703 = vst [vmem:[%s225 + $0x770] sm:$0xff] %v702
                %v704 = vld [vmem:[%s224 + $0xee8] sm:$0xff]
                %705 = vst [vmem:[%s225 + $0x778] sm:$0xff] %v704
                %v706 = vld [vmem:[%s224 + $0xf00] sm:$0xff]
                %707 = vst [vmem:[%s225 + $0x780] sm:$0xff] %v706
                %v708 = vld [vmem:[%s224 + $0xf08] sm:$0xff]
                %709 = vst [vmem:[%s225 + $0x788] sm:$0xff] %v708
                %v710 = vld [vmem:[%s224 + $0xf20] sm:$0xff]
                %711 = vst [vmem:[%s225 + $0x790] sm:$0xff] %v710
                %v712 = vld [vmem:[%s224 + $0xf28] sm:$0xff]
                %713 = vst [vmem:[%s225 + $0x798] sm:$0xff] %v712
                %v714 = vld [vmem:[%s224 + $0xf40] sm:$0xff]
                %715 = vst [vmem:[%s225 + $0x7a0] sm:$0xff] %v714
                %v716 = vld [vmem:[%s224 + $0xf48] sm:$0xff]
                %717 = vst [vmem:[%s225 + $0x7a8] sm:$0xff] %v716
                %v718 = vld [vmem:[%s224 + $0xf60] sm:$0xff]
                %719 = vst [vmem:[%s225 + $0x7b0] sm:$0xff] %v718
                %v720 = vld [vmem:[%s224 + $0xf68] sm:$0xff]
                %721 = vst [vmem:[%s225 + $0x7b8] sm:$0xff] %v720
                %v722 = vld [vmem:[%s224 + $0xf80] sm:$0xff]
                %723 = vst [vmem:[%s225 + $0x7c0] sm:$0xff] %v722
                %v724 = vld [vmem:[%s224 + $0xf88] sm:$0xff]
                %725 = vst [vmem:[%s225 + $0x7c8] sm:$0xff] %v724
                %v726 = vld [vmem:[%s224 + $0xfa0] sm:$0xff]
                %727 = vst [vmem:[%s225 + $0x7d0] sm:$0xff] %v726
                %v728 = vld [vmem:[%s224 + $0xfa8] sm:$0xff]
                %729 = vst [vmem:[%s225 + $0x7d8] sm:$0xff] %v728
                %v730 = vld [vmem:[%s224 + $0xfc0] sm:$0xff]
                %731 = vst [vmem:[%s225 + $0x7e0] sm:$0xff] %v730
                %v732 = vld [vmem:[%s224 + $0xfc8] sm:$0xff]
                %733 = vst [vmem:[%s225 + $0x7e8] sm:$0xff] %v732
                %v734 = vld [vmem:[%s224 + $0xfe0] sm:$0xff]
                %735 = vst [vmem:[%s225 + $0x7f0] sm:$0xff] %v734
                %v736 = vld [vmem:[%s224 + $0xfe8] sm:$0xff]
                %737 = vst [vmem:[%s225 + $0x7f8] sm:$0xff] %v736
              $region56: #{fwd.10} parent=50 // loop_footer
                %s223 = sadd.s32 1, %s219
              $region57: #{fwd.10} parent=50 // loop_footer_branch
                %218 = sbr.rel target = $region53
              $region58: #{fwd.10} parent=50 // loop_exit
                _
            $region51: #{fwd.10} parent=46 // pred_fallthru
              _
            // Predicated region
            $region59: #{fwd.10} parent=46 // pred_check
              _
            $region60: #{fwd.10} parent=46 // pred_check_branch
              %739 = sbr.rel target = $region62
            $region61: #{fwd.10} parent=46 // pred_region
              _
            $region62: #{fwd.10} parent=46 // pred_fallthru
              _
          $region47: #{fwd.10} parent=42 // pred_fallthru
            _
          %740 = vnop
        $region43: #{fwd.10} parent=15 // pred_fallthru
          _
        // Predicated region
        $region63: #{fwd.10} parent=15 // pred_check
          %p741 = pneg %p104
        $region64: #{fwd.10} parent=15 // pred_check_branch
          %743 = sbr.rel (%p741) target = $region66
        $region65: #{fwd.10} parent=15 // pred_region
          %s744 = smul.u32 4, %s17
          %p745 = scmp.lt.s32.totalorder %s744, 7
          %s746 = scalar_select %p745, %s744, 7
          %s747 = scalar_lea.vmem %s2, %s746
          %s748 = smul.u32 4, %s17
        $region66: #{fwd.10} parent=15 // pred_fallthru
          _
      $region16: #{fwd.10} parent=5 // pred_fallthru
        _
      %p749 = scmp.le.s32.totalorder 1, %s9
      %p750 = scmp.lt.s32.totalorder %s9, 11
      %p751 = pnand %p749, %p750
      %p752 = pneg %p751
      // Predicated region
      $region67: #{fwd.10} parent=5 // pred_check
        _
      $region68: #{fwd.10} parent=5 // pred_check_branch
        %754 = sbr.rel (%p751) target = $region70
      $region69: #{fwd.10} parent=5 // pred_region
        %s755 = ssub.s32 %s9, 1
        %s756 = sand.u32 %s43, 1
        %s757 = sand.u32 %s43, 1
        %s758 = smul.addr %s757, 64
        %s759 = scalar_lea.vmem [#allocation3], %s758
        // Predicated region
        $region71: #{fwd.10} parent=69 // pred_check
          %p760 = pneg %p56
        $region72: #{fwd.10} parent=69 // pred_check_branch
          %762 = sbr.rel (%p760) target = $region74
        $region73: #{fwd.10} parent=69 // pred_region
          _
        $region74: #{fwd.10} parent=69 // pred_fallthru
          _
        %s763 = sand.u32 %s71, 1
        %s764 = sand.u32 %s71, 1
        %s765 = smul.addr %s764, 2048
        %s766 = scalar_lea.vmem [#allocation4], %s765
        // Predicated region
        $region75: #{fwd.10} parent=69 // pred_check
          %p767 = pneg %p84
        $region76: #{fwd.10} parent=69 // pred_check_branch
          %769 = sbr.rel (%p767) target = $region78
        $region77: #{fwd.10} parent=69 // pred_region
          _
        $region78: #{fwd.10} parent=69 // pred_fallthru
          _
        %s770 = sand.u32 %s43, 1
        %s771 = sand.u32 %s43, 1
        %s772 = smul.addr %s771, 64
        %s773 = scalar_lea.vmem [#allocation3], %s772
        %p774 = pneg %p56
        %p775 = pneg %p53
        %s776 = sand.u32 %s71, 1
        %s777 = sand.u32 %s71, 1
        %s778 = smul.addr %s777, 2048
        %s779 = scalar_lea.vmem [#allocation4], %s778
        %p780 = pneg %p84
        %p781 = pneg %p81
        %s782 = smul.u32 4, %s20
        %p783 = scmp.lt.s32.totalorder %s782, 7
        %s784 = scalar_select %p783, %s782, 7
        %s785 = scalar_lea.vmem %s2, %s784
        %p786 = pneg %p110
        %p787 = pneg %p107
        %p788 = pneg %p138
        %p789 = pneg %p135
        %s790 = sand.u32 %s125, 1
        %s791 = sand.u32 %s125, 1
        %s792 = smul.addr %s791, 64
        %s793 = scalar_lea.vmem [#allocation5], %s792
        %s794 = smul.u32 2, %s19
        %s795 = smul.u32 8, %s21
        %s796 = smul.u32 128, %s21
        %s797 = smul.u32 4, %s20
        %s798 = smul.u32 4, %s20
        %p799 = scmp.lt.s32.totalorder %s798, 7
        %s800 = scalar_select %p799, %s798, 7
        %s801 = scalar_lea.vmem %s2, %s800
        %s802 = smul.u32 4, %s20
        %s803 = smul.u32 2, %s19
        %s804 = smul.u32 4, %s20
        %p805 = scmp.eq.s32.totalorder %s21, 0
        // Predicated region
        $region79: #{fwd.10} parent=69 // pred_check
          %p806 = pneg %p805
        $region80: #{fwd.10} parent=69 // pred_check_branch
          %808 = sbr.rel (%p806) target = $region82
        $region81: #{fwd.10} parent=69 // pred_region
          %809 = vst [vmem:[#allocation2] sm:$0xff] 0.0
          %810 = vst [vmem:[#allocation2 + $0x8] sm:$0xff] 0.0
          %811 = vst [vmem:[#allocation2 + $0x10] sm:$0xff] 0.0
          %812 = vst [vmem:[#allocation2 + $0x18] sm:$0xff] 0.0
          %813 = vst [vmem:[#allocation2 + $0x20] sm:$0xff] 0.0
          %814 = vst [vmem:[#allocation2 + $0x28] sm:$0xff] 0.0
          %815 = vst [vmem:[#allocation2 + $0x30] sm:$0xff] 0.0
          %816 = vst [vmem:[#allocation2 + $0x38] sm:$0xff] 0.0
        $region82: #{fwd.10} parent=69 // pred_fallthru
          _
        %v817 = vld [vmem:[#allocation2] sm:$0xff]
        %v818 = vld [vmem:[#allocation2 + $0x8] sm:$0xff]
        %v819 = vld [vmem:[#allocation2 + $0x10] sm:$0xff]
        %v820 = vld [vmem:[#allocation2 + $0x18] sm:$0xff]
        %v821 = vld [vmem:[#allocation2 + $0x20] sm:$0xff]
        %v822 = vld [vmem:[#allocation2 + $0x28] sm:$0xff]
        %v823 = vld [vmem:[#allocation2 + $0x30] sm:$0xff]
        %v824 = vld [vmem:[#allocation2 + $0x38] sm:$0xff]
        %v825 = vld [vmem:[%s759] sm:$0xff]
        %v826 = vld [vmem:[%s759 + $0x8] sm:$0xff]
        %v827 = vld [vmem:[%s759 + $0x10] sm:$0xff]
        %v828 = vld [vmem:[%s759 + $0x18] sm:$0xff]
        %v829 = vld [vmem:[%s759 + $0x20] sm:$0xff]
        %v830 = vld [vmem:[%s759 + $0x28] sm:$0xff]
        %v831 = vld [vmem:[%s759 + $0x30] sm:$0xff]
        %v832 = vld [vmem:[%s759 + $0x38] sm:$0xff]
        %v833 = vld [vmem:[%s766] sm:$0xff]
        %v834 = vld [vmem:[%s766 + $0x8] sm:$0xff]
        %v835 = vld [vmem:[%s766 + $0x10] sm:$0xff]
        %v836 = vld [vmem:[%s766 + $0x18] sm:$0xff]
        %v837 = vld [vmem:[%s766 + $0x20] sm:$0xff]
        %v838 = vld [vmem:[%s766 + $0x28] sm:$0xff]
        %v839 = vld [vmem:[%s766 + $0x30] sm:$0xff]
        %v840 = vld [vmem:[%s766 + $0x38] sm:$0xff]
        %v841 = vld [vmem:[%s766 + $0x40] sm:$0xff]
        %v842 = vld [vmem:[%s766 + $0x48] sm:$0xff]
        %v843 = vld [vmem:[%s766 + $0x50] sm:$0xff]
        %v844 = vld [vmem:[%s766 + $0x58] sm:$0xff]
        %v845 = vld [vmem:[%s766 + $0x60] sm:$0xff]
        %v846 = vld [vmem:[%s766 + $0x68] sm:$0xff]
        %v847 = vld [vmem:[%s766 + $0x70] sm:$0xff]
        %v848 = vld [vmem:[%s766 + $0x78] sm:$0xff]
        %v849 = vld [vmem:[%s766 + $0x80] sm:$0xff]
        %v850 = vld [vmem:[%s766 + $0x88] sm:$0xff]
        %v851 = vld [vmem:[%s766 + $0x90] sm:$0xff]
        %v852 = vld [vmem:[%s766 + $0x98] sm:$0xff]
        %v853 = vld [vmem:[%s766 + $0xa0] sm:$0xff]
        %v854 = vld [vmem:[%s766 + $0xa8] sm:$0xff]
        %v855 = vld [vmem:[%s766 + $0xb0] sm:$0xff]
        %v856 = vld [vmem:[%s766 + $0xb8] sm:$0xff]
        %v857 = vld [vmem:[%s766 + $0xc0] sm:$0xff]
        %v858 = vld [vmem:[%s766 + $0xc8] sm:$0xff]
        %v859 = vld [vmem:[%s766 + $0xd0] sm:$0xff]
        %v860 = vld [vmem:[%s766 + $0xd8] sm:$0xff]
        %v861 = vld [vmem:[%s766 + $0xe0] sm:$0xff]
        %v862 = vld [vmem:[%s766 + $0xe8] sm:$0xff]
        %v863 = vld [vmem:[%s766 + $0xf0] sm:$0xff]
        %v864 = vld [vmem:[%s766 + $0xf8] sm:$0xff]
        %v865 = vld [vmem:[%s766 + $0x100] sm:$0xff]
        %v866 = vld [vmem:[%s766 + $0x108] sm:$0xff]
        %v867 = vld [vmem:[%s766 + $0x110] sm:$0xff]
        %v868 = vld [vmem:[%s766 + $0x118] sm:$0xff]
        %v869 = vld [vmem:[%s766 + $0x120] sm:$0xff]
        %v870 = vld [vmem:[%s766 + $0x128] sm:$0xff]
        %v871 = vld [vmem:[%s766 + $0x130] sm:$0xff]
        %v872 = vld [vmem:[%s766 + $0x138] sm:$0xff]
        %v873 = vld [vmem:[%s766 + $0x140] sm:$0xff]
        %v874 = vld [vmem:[%s766 + $0x148] sm:$0xff]
        %v875 = vld [vmem:[%s766 + $0x150] sm:$0xff]
        %v876 = vld [vmem:[%s766 + $0x158] sm:$0xff]
        %v877 = vld [vmem:[%s766 + $0x160] sm:$0xff]
        %v878 = vld [vmem:[%s766 + $0x168] sm:$0xff]
        %v879 = vld [vmem:[%s766 + $0x170] sm:$0xff]
        %v880 = vld [vmem:[%s766 + $0x178] sm:$0xff]
        %v881 = vld [vmem:[%s766 + $0x180] sm:$0xff]
        %v882 = vld [vmem:[%s766 + $0x188] sm:$0xff]
        %v883 = vld [vmem:[%s766 + $0x190] sm:$0xff]
        %v884 = vld [vmem:[%s766 + $0x198] sm:$0xff]
        %v885 = vld [vmem:[%s766 + $0x1a0] sm:$0xff]
        %v886 = vld [vmem:[%s766 + $0x1a8] sm:$0xff]
        %v887 = vld [vmem:[%s766 + $0x1b0] sm:$0xff]
        %v888 = vld [vmem:[%s766 + $0x1b8] sm:$0xff]
        %v889 = vld [vmem:[%s766 + $0x1c0] sm:$0xff]
        %v890 = vld [vmem:[%s766 + $0x1c8] sm:$0xff]
        %v891 = vld [vmem:[%s766 + $0x1d0] sm:$0xff]
        %v892 = vld [vmem:[%s766 + $0x1d8] sm:$0xff]
        %v893 = vld [vmem:[%s766 + $0x1e0] sm:$0xff]
        %v894 = vld [vmem:[%s766 + $0x1e8] sm:$0xff]
        %v895 = vld [vmem:[%s766 + $0x1f0] sm:$0xff]
        %v896 = vld [vmem:[%s766 + $0x1f8] sm:$0xff]
        %v897 = vld [vmem:[%s766 + $0x200] sm:$0xff]
        %v898 = vld [vmem:[%s766 + $0x208] sm:$0xff]
        %v899 = vld [vmem:[%s766 + $0x210] sm:$0xff]
        %v900 = vld [vmem:[%s766 + $0x218] sm:$0xff]
        %v901 = vld [vmem:[%s766 + $0x220] sm:$0xff]
        %v902 = vld [vmem:[%s766 + $0x228] sm:$0xff]
        %v903 = vld [vmem:[%s766 + $0x230] sm:$0xff]
        %v904 = vld [vmem:[%s766 + $0x238] sm:$0xff]
        %v905 = vld [vmem:[%s766 + $0x240] sm:$0xff]
        %v906 = vld [vmem:[%s766 + $0x248] sm:$0xff]
        %v907 = vld [vmem:[%s766 + $0x250] sm:$0xff]
        %v908 = vld [vmem:[%s766 + $0x258] sm:$0xff]
        %v909 = vld [vmem:[%s766 + $0x260] sm:$0xff]
        %v910 = vld [vmem:[%s766 + $0x268] sm:$0xff]
        %v911 = vld [vmem:[%s766 + $0x270] sm:$0xff]
        %v912 = vld [vmem:[%s766 + $0x278] sm:$0xff]
        %v913 = vld [vmem:[%s766 + $0x280] sm:$0xff]
        %v914 = vld [vmem:[%s766 + $0x288] sm:$0xff]
        %v915 = vld [vmem:[%s766 + $0x290] sm:$0xff]
        %v916 = vld [vmem:[%s766 + $0x298] sm:$0xff]
        %v917 = vld [vmem:[%s766 + $0x2a0] sm:$0xff]
        %v918 = vld [vmem:[%s766 + $0x2a8] sm:$0xff]
        %v919 = vld [vmem:[%s766 + $0x2b0] sm:$0xff]
        %v920 = vld [vmem:[%s766 + $0x2b8] sm:$0xff]
        %v921 = vld [vmem:[%s766 + $0x2c0] sm:$0xff]
        %v922 = vld [vmem:[%s766 + $0x2c8] sm:$0xff]
        %v923 = vld [vmem:[%s766 + $0x2d0] sm:$0xff]
        %v924 = vld [vmem:[%s766 + $0x2d8] sm:$0xff]
        %v925 = vld [vmem:[%s766 + $0x2e0] sm:$0xff]
        %v926 = vld [vmem:[%s766 + $0x2e8] sm:$0xff]
        %v927 = vld [vmem:[%s766 + $0x2f0] sm:$0xff]
        %v928 = vld [vmem:[%s766 + $0x2f8] sm:$0xff]
        %v929 = vld [vmem:[%s766 + $0x300] sm:$0xff]
        %v930 = vld [vmem:[%s766 + $0x308] sm:$0xff]
        %v931 = vld [vmem:[%s766 + $0x310] sm:$0xff]
        %v932 = vld [vmem:[%s766 + $0x318] sm:$0xff]
        %v933 = vld [vmem:[%s766 + $0x320] sm:$0xff]
        %v934 = vld [vmem:[%s766 + $0x328] sm:$0xff]
        %v935 = vld [vmem:[%s766 + $0x330] sm:$0xff]
        %v936 = vld [vmem:[%s766 + $0x338] sm:$0xff]
        %v937 = vld [vmem:[%s766 + $0x340] sm:$0xff]
        %v938 = vld [vmem:[%s766 + $0x348] sm:$0xff]
        %v939 = vld [vmem:[%s766 + $0x350] sm:$0xff]
        %v940 = vld [vmem:[%s766 + $0x358] sm:$0xff]
        %v941 = vld [vmem:[%s766 + $0x360] sm:$0xff]
        %v942 = vld [vmem:[%s766 + $0x368] sm:$0xff]
        %v943 = vld [vmem:[%s766 + $0x370] sm:$0xff]
        %v944 = vld [vmem:[%s766 + $0x378] sm:$0xff]
        %v945 = vld [vmem:[%s766 + $0x380] sm:$0xff]
        %v946 = vld [vmem:[%s766 + $0x388] sm:$0xff]
        %v947 = vld [vmem:[%s766 + $0x390] sm:$0xff]
        %v948 = vld [vmem:[%s766 + $0x398] sm:$0xff]
        %v949 = vld [vmem:[%s766 + $0x3a0] sm:$0xff]
        %v950 = vld [vmem:[%s766 + $0x3a8] sm:$0xff]
        %v951 = vld [vmem:[%s766 + $0x3b0] sm:$0xff]
        %v952 = vld [vmem:[%s766 + $0x3b8] sm:$0xff]
        %v953 = vld [vmem:[%s766 + $0x3c0] sm:$0xff]
        %v954 = vld [vmem:[%s766 + $0x3c8] sm:$0xff]
        %v955 = vld [vmem:[%s766 + $0x3d0] sm:$0xff]
        %v956 = vld [vmem:[%s766 + $0x3d8] sm:$0xff]
        %v957 = vld [vmem:[%s766 + $0x3e0] sm:$0xff]
        %v958 = vld [vmem:[%s766 + $0x3e8] sm:$0xff]
        %v959 = vld [vmem:[%s766 + $0x3f0] sm:$0xff]
        %v960 = vld [vmem:[%s766 + $0x3f8] sm:$0xff]
        %v961 = vld [vmem:[%s766 + $0x400] sm:$0xff]
        %v962 = vld [vmem:[%s766 + $0x408] sm:$0xff]
        %v963 = vld [vmem:[%s766 + $0x410] sm:$0xff]
        %v964 = vld [vmem:[%s766 + $0x418] sm:$0xff]
        %v965 = vld [vmem:[%s766 + $0x420] sm:$0xff]
        %v966 = vld [vmem:[%s766 + $0x428] sm:$0xff]
        %v967 = vld [vmem:[%s766 + $0x430] sm:$0xff]
        %v968 = vld [vmem:[%s766 + $0x438] sm:$0xff]
        %v969 = vld [vmem:[%s766 + $0x440] sm:$0xff]
        %v970 = vld [vmem:[%s766 + $0x448] sm:$0xff]
        %v971 = vld [vmem:[%s766 + $0x450] sm:$0xff]
        %v972 = vld [vmem:[%s766 + $0x458] sm:$0xff]
        %v973 = vld [vmem:[%s766 + $0x460] sm:$0xff]
        %v974 = vld [vmem:[%s766 + $0x468] sm:$0xff]
        %v975 = vld [vmem:[%s766 + $0x470] sm:$0xff]
        %v976 = vld [vmem:[%s766 + $0x478] sm:$0xff]
        %v977 = vld [vmem:[%s766 + $0x480] sm:$0xff]
        %v978 = vld [vmem:[%s766 + $0x488] sm:$0xff]
        %v979 = vld [vmem:[%s766 + $0x490] sm:$0xff]
        %v980 = vld [vmem:[%s766 + $0x498] sm:$0xff]
        %v981 = vld [vmem:[%s766 + $0x4a0] sm:$0xff]
        %v982 = vld [vmem:[%s766 + $0x4a8] sm:$0xff]
        %v983 = vld [vmem:[%s766 + $0x4b0] sm:$0xff]
        %v984 = vld [vmem:[%s766 + $0x4b8] sm:$0xff]
        %v985 = vld [vmem:[%s766 + $0x4c0] sm:$0xff]
        %v986 = vld [vmem:[%s766 + $0x4c8] sm:$0xff]
        %v987 = vld [vmem:[%s766 + $0x4d0] sm:$0xff]
        %v988 = vld [vmem:[%s766 + $0x4d8] sm:$0xff]
        %v989 = vld [vmem:[%s766 + $0x4e0] sm:$0xff]
        %v990 = vld [vmem:[%s766 + $0x4e8] sm:$0xff]
        %v991 = vld [vmem:[%s766 + $0x4f0] sm:$0xff]
        %v992 = vld [vmem:[%s766 + $0x4f8] sm:$0xff]
        %v993 = vld [vmem:[%s766 + $0x500] sm:$0xff]
        %v994 = vld [vmem:[%s766 + $0x508] sm:$0xff]
        %v995 = vld [vmem:[%s766 + $0x510] sm:$0xff]
        %v996 = vld [vmem:[%s766 + $0x518] sm:$0xff]
        %v997 = vld [vmem:[%s766 + $0x520] sm:$0xff]
        %v998 = vld [vmem:[%s766 + $0x528] sm:$0xff]
        %v999 = vld [vmem:[%s766 + $0x530] sm:$0xff]
        %v1000 = vld [vmem:[%s766 + $0x538] sm:$0xff]
        %v1001 = vld [vmem:[%s766 + $0x540] sm:$0xff]
        %v1002 = vld [vmem:[%s766 + $0x548] sm:$0xff]
        %v1003 = vld [vmem:[%s766 + $0x550] sm:$0xff]
        %v1004 = vld [vmem:[%s766 + $0x558] sm:$0xff]
        %v1005 = vld [vmem:[%s766 + $0x560] sm:$0xff]
        %v1006 = vld [vmem:[%s766 + $0x568] sm:$0xff]
        %v1007 = vld [vmem:[%s766 + $0x570] sm:$0xff]
        %v1008 = vld [vmem:[%s766 + $0x578] sm:$0xff]
        %v1009 = vld [vmem:[%s766 + $0x580] sm:$0xff]
        %v1010 = vld [vmem:[%s766 + $0x588] sm:$0xff]
        %v1011 = vld [vmem:[%s766 + $0x590] sm:$0xff]
        %v1012 = vld [vmem:[%s766 + $0x598] sm:$0xff]
        %v1013 = vld [vmem:[%s766 + $0x5a0] sm:$0xff]
        %v1014 = vld [vmem:[%s766 + $0x5a8] sm:$0xff]
        %v1015 = vld [vmem:[%s766 + $0x5b0] sm:$0xff]
        %v1016 = vld [vmem:[%s766 + $0x5b8] sm:$0xff]
        %v1017 = vld [vmem:[%s766 + $0x5c0] sm:$0xff]
        %v1018 = vld [vmem:[%s766 + $0x5c8] sm:$0xff]
        %v1019 = vld [vmem:[%s766 + $0x5d0] sm:$0xff]
        %v1020 = vld [vmem:[%s766 + $0x5d8] sm:$0xff]
        %v1021 = vld [vmem:[%s766 + $0x5e0] sm:$0xff]
        %v1022 = vld [vmem:[%s766 + $0x5e8] sm:$0xff]
        %v1023 = vld [vmem:[%s766 + $0x5f0] sm:$0xff]
        %v1024 = vld [vmem:[%s766 + $0x5f8] sm:$0xff]
        %v1025 = vld [vmem:[%s766 + $0x600] sm:$0xff]
        %v1026 = vld [vmem:[%s766 + $0x608] sm:$0xff]
        %v1027 = vld [vmem:[%s766 + $0x610] sm:$0xff]
        %v1028 = vld [vmem:[%s766 + $0x618] sm:$0xff]
        %v1029 = vld [vmem:[%s766 + $0x620] sm:$0xff]
        %v1030 = vld [vmem:[%s766 + $0x628] sm:$0xff]
        %v1031 = vld [vmem:[%s766 + $0x630] sm:$0xff]
        %v1032 = vld [vmem:[%s766 + $0x638] sm:$0xff]
        %v1033 = vld [vmem:[%s766 + $0x640] sm:$0xff]
        %v1034 = vld [vmem:[%s766 + $0x648] sm:$0xff]
        %v1035 = vld [vmem:[%s766 + $0x650] sm:$0xff]
        %v1036 = vld [vmem:[%s766 + $0x658] sm:$0xff]
        %v1037 = vld [vmem:[%s766 + $0x660] sm:$0xff]
        %v1038 = vld [vmem:[%s766 + $0x668] sm:$0xff]
        %v1039 = vld [vmem:[%s766 + $0x670] sm:$0xff]
        %v1040 = vld [vmem:[%s766 + $0x678] sm:$0xff]
        %v1041 = vld [vmem:[%s766 + $0x680] sm:$0xff]
        %v1042 = vld [vmem:[%s766 + $0x688] sm:$0xff]
        %v1043 = vld [vmem:[%s766 + $0x690] sm:$0xff]
        %v1044 = vld [vmem:[%s766 + $0x698] sm:$0xff]
        %v1045 = vld [vmem:[%s766 + $0x6a0] sm:$0xff]
        %v1046 = vld [vmem:[%s766 + $0x6a8] sm:$0xff]
        %v1047 = vld [vmem:[%s766 + $0x6b0] sm:$0xff]
        %v1048 = vld [vmem:[%s766 + $0x6b8] sm:$0xff]
        %v1049 = vld [vmem:[%s766 + $0x6c0] sm:$0xff]
        %v1050 = vld [vmem:[%s766 + $0x6c8] sm:$0xff]
        %v1051 = vld [vmem:[%s766 + $0x6d0] sm:$0xff]
        %v1052 = vld [vmem:[%s766 + $0x6d8] sm:$0xff]
        %v1053 = vld [vmem:[%s766 + $0x6e0] sm:$0xff]
        %v1054 = vld [vmem:[%s766 + $0x6e8] sm:$0xff]
        %v1055 = vld [vmem:[%s766 + $0x6f0] sm:$0xff]
        %v1056 = vld [vmem:[%s766 + $0x6f8] sm:$0xff]
        %v1057 = vld [vmem:[%s766 + $0x700] sm:$0xff]
        %v1058 = vld [vmem:[%s766 + $0x708] sm:$0xff]
        %v1059 = vld [vmem:[%s766 + $0x710] sm:$0xff]
        %v1060 = vld [vmem:[%s766 + $0x718] sm:$0xff]
        %v1061 = vld [vmem:[%s766 + $0x720] sm:$0xff]
        %v1062 = vld [vmem:[%s766 + $0x728] sm:$0xff]
        %v1063 = vld [vmem:[%s766 + $0x730] sm:$0xff]
        %v1064 = vld [vmem:[%s766 + $0x738] sm:$0xff]
        %v1065 = vld [vmem:[%s766 + $0x740] sm:$0xff]
        %v1066 = vld [vmem:[%s766 + $0x748] sm:$0xff]
        %v1067 = vld [vmem:[%s766 + $0x750] sm:$0xff]
        %v1068 = vld [vmem:[%s766 + $0x758] sm:$0xff]
        %v1069 = vld [vmem:[%s766 + $0x760] sm:$0xff]
        %v1070 = vld [vmem:[%s766 + $0x768] sm:$0xff]
        %v1071 = vld [vmem:[%s766 + $0x770] sm:$0xff]
        %v1072 = vld [vmem:[%s766 + $0x778] sm:$0xff]
        %v1073 = vld [vmem:[%s766 + $0x780] sm:$0xff]
        %v1074 = vld [vmem:[%s766 + $0x788] sm:$0xff]
        %v1075 = vld [vmem:[%s766 + $0x790] sm:$0xff]
        %v1076 = vld [vmem:[%s766 + $0x798] sm:$0xff]
        %v1077 = vld [vmem:[%s766 + $0x7a0] sm:$0xff]
        %v1078 = vld [vmem:[%s766 + $0x7a8] sm:$0xff]
        %v1079 = vld [vmem:[%s766 + $0x7b0] sm:$0xff]
        %v1080 = vld [vmem:[%s766 + $0x7b8] sm:$0xff]
        %v1081 = vld [vmem:[%s766 + $0x7c0] sm:$0xff]
        %v1082 = vld [vmem:[%s766 + $0x7c8] sm:$0xff]
        %v1083 = vld [vmem:[%s766 + $0x7d0] sm:$0xff]
        %v1084 = vld [vmem:[%s766 + $0x7d8] sm:$0xff]
        %v1085 = vld [vmem:[%s766 + $0x7e0] sm:$0xff]
        %v1086 = vld [vmem:[%s766 + $0x7e8] sm:$0xff]
        %v1087 = vld [vmem:[%s766 + $0x7f0] sm:$0xff]
        %v1088 = vld [vmem:[%s766 + $0x7f8] sm:$0xff]
        %v1097 = vunpack.c.l.b16 %v825
        %v1098 = vunpack.c.h.b16 %v825
        %v1099 = vunpack.c.l.b16 %v826
        %v1100 = vunpack.c.h.b16 %v826
        %v1101 = vunpack.c.l.b16 %v827
        %v1102 = vunpack.c.h.b16 %v827
        %v1103 = vunpack.c.l.b16 %v828
        %v1104 = vunpack.c.h.b16 %v828
        %v1105 = vunpack.c.l.b16 %v829
        %v1106 = vunpack.c.h.b16 %v829
        %v1107 = vunpack.c.l.b16 %v830
        %v1108 = vunpack.c.h.b16 %v830
        %v1109 = vunpack.c.l.b16 %v831
        %v1110 = vunpack.c.h.b16 %v831
        %v1111 = vunpack.c.l.b16 %v832
        %v1112 = vunpack.c.h.b16 %v832
        %v1113 = vpack.c.b16 %v1105, %v1097
        %v1114 = vpack.c.b16 %v1106, %v1098
        %v1115 = vpack.c.b16 %v1107, %v1099
        %v1116 = vpack.c.b16 %v1108, %v1100
        %v1117 = vpack.c.b16 %v1109, %v1101
        %v1118 = vpack.c.b16 %v1110, %v1102
        %v1119 = vpack.c.b16 %v1111, %v1103
        %v1120 = vpack.c.b16 %v1112, %v1104
        %v1385 = vunpack.c.l.b16 %v833
        %v1386 = vunpack.c.h.b16 %v833
        %v1387 = vunpack.c.l.b16 %v834
        %v1388 = vunpack.c.h.b16 %v834
        %v1389 = vunpack.c.l.b16 %v835
        %v1390 = vunpack.c.h.b16 %v835
        %v1391 = vunpack.c.l.b16 %v836
        %v1392 = vunpack.c.h.b16 %v836
        %v1393 = vunpack.c.l.b16 %v837
        %v1394 = vunpack.c.h.b16 %v837
        %v1395 = vunpack.c.l.b16 %v838
        %v1396 = vunpack.c.h.b16 %v838
        %v1397 = vunpack.c.l.b16 %v839
        %v1398 = vunpack.c.h.b16 %v839
        %v1399 = vunpack.c.l.b16 %v840
        %v1400 = vunpack.c.h.b16 %v840
        %v1401 = vunpack.c.l.b16 %v841
        %v1402 = vunpack.c.h.b16 %v841
        %v1403 = vunpack.c.l.b16 %v842
        %v1404 = vunpack.c.h.b16 %v842
        %v1405 = vunpack.c.l.b16 %v843
        %v1406 = vunpack.c.h.b16 %v843
        %v1407 = vunpack.c.l.b16 %v844
        %v1408 = vunpack.c.h.b16 %v844
        %v1409 = vunpack.c.l.b16 %v845
        %v1410 = vunpack.c.h.b16 %v845
        %v1411 = vunpack.c.l.b16 %v846
        %v1412 = vunpack.c.h.b16 %v846
        %v1413 = vunpack.c.l.b16 %v847
        %v1414 = vunpack.c.h.b16 %v847
        %v1415 = vunpack.c.l.b16 %v848
        %v1416 = vunpack.c.h.b16 %v848
        %v1417 = vunpack.c.l.b16 %v849
        %v1418 = vunpack.c.h.b16 %v849
        %v1419 = vunpack.c.l.b16 %v850
        %v1420 = vunpack.c.h.b16 %v850
        %v1421 = vunpack.c.l.b16 %v851
        %v1422 = vunpack.c.h.b16 %v851
        %v1423 = vunpack.c.l.b16 %v852
        %v1424 = vunpack.c.h.b16 %v852
        %v1425 = vunpack.c.l.b16 %v853
        %v1426 = vunpack.c.h.b16 %v853
        %v1427 = vunpack.c.l.b16 %v854
        %v1428 = vunpack.c.h.b16 %v854
        %v1429 = vunpack.c.l.b16 %v855
        %v1430 = vunpack.c.h.b16 %v855
        %v1431 = vunpack.c.l.b16 %v856
        %v1432 = vunpack.c.h.b16 %v856
        %v1433 = vunpack.c.l.b16 %v857
        %v1434 = vunpack.c.h.b16 %v857
        %v1435 = vunpack.c.l.b16 %v858
        %v1436 = vunpack.c.h.b16 %v858
        %v1437 = vunpack.c.l.b16 %v859
        %v1438 = vunpack.c.h.b16 %v859
        %v1439 = vunpack.c.l.b16 %v860
        %v1440 = vunpack.c.h.b16 %v860
        %v1441 = vunpack.c.l.b16 %v861
        %v1442 = vunpack.c.h.b16 %v861
        %v1443 = vunpack.c.l.b16 %v862
        %v1444 = vunpack.c.h.b16 %v862
        %v1445 = vunpack.c.l.b16 %v863
        %v1446 = vunpack.c.h.b16 %v863
        %v1447 = vunpack.c.l.b16 %v864
        %v1448 = vunpack.c.h.b16 %v864
        %v1449 = vunpack.c.l.b16 %v865
        %v1450 = vunpack.c.h.b16 %v865
        %v1451 = vunpack.c.l.b16 %v866
        %v1452 = vunpack.c.h.b16 %v866
        %v1453 = vunpack.c.l.b16 %v867
        %v1454 = vunpack.c.h.b16 %v867
        %v1455 = vunpack.c.l.b16 %v868
        %v1456 = vunpack.c.h.b16 %v868
        %v1457 = vunpack.c.l.b16 %v869
        %v1458 = vunpack.c.h.b16 %v869
        %v1459 = vunpack.c.l.b16 %v870
        %v1460 = vunpack.c.h.b16 %v870
        %v1461 = vunpack.c.l.b16 %v871
        %v1462 = vunpack.c.h.b16 %v871
        %v1463 = vunpack.c.l.b16 %v872
        %v1464 = vunpack.c.h.b16 %v872
        %v1465 = vunpack.c.l.b16 %v873
        %v1466 = vunpack.c.h.b16 %v873
        %v1467 = vunpack.c.l.b16 %v874
        %v1468 = vunpack.c.h.b16 %v874
        %v1469 = vunpack.c.l.b16 %v875
        %v1470 = vunpack.c.h.b16 %v875
        %v1471 = vunpack.c.l.b16 %v876
        %v1472 = vunpack.c.h.b16 %v876
        %v1473 = vunpack.c.l.b16 %v877
        %v1474 = vunpack.c.h.b16 %v877
        %v1475 = vunpack.c.l.b16 %v878
        %v1476 = vunpack.c.h.b16 %v878
        %v1477 = vunpack.c.l.b16 %v879
        %v1478 = vunpack.c.h.b16 %v879
        %v1479 = vunpack.c.l.b16 %v880
        %v1480 = vunpack.c.h.b16 %v880
        %v1481 = vunpack.c.l.b16 %v881
        %v1482 = vunpack.c.h.b16 %v881
        %v1483 = vunpack.c.l.b16 %v882
        %v1484 = vunpack.c.h.b16 %v882
        %v1485 = vunpack.c.l.b16 %v883
        %v1486 = vunpack.c.h.b16 %v883
        %v1487 = vunpack.c.l.b16 %v884
        %v1488 = vunpack.c.h.b16 %v884
        %v1489 = vunpack.c.l.b16 %v885
        %v1490 = vunpack.c.h.b16 %v885
        %v1491 = vunpack.c.l.b16 %v886
        %v1492 = vunpack.c.h.b16 %v886
        %v1493 = vunpack.c.l.b16 %v887
        %v1494 = vunpack.c.h.b16 %v887
        %v1495 = vunpack.c.l.b16 %v888
        %v1496 = vunpack.c.h.b16 %v888
        %v1497 = vunpack.c.l.b16 %v889
        %v1498 = vunpack.c.h.b16 %v889
        %v1499 = vunpack.c.l.b16 %v890
        %v1500 = vunpack.c.h.b16 %v890
        %v1501 = vunpack.c.l.b16 %v891
        %v1502 = vunpack.c.h.b16 %v891
        %v1503 = vunpack.c.l.b16 %v892
        %v1504 = vunpack.c.h.b16 %v892
        %v1505 = vunpack.c.l.b16 %v893
        %v1506 = vunpack.c.h.b16 %v893
        %v1507 = vunpack.c.l.b16 %v894
        %v1508 = vunpack.c.h.b16 %v894
        %v1509 = vunpack.c.l.b16 %v895
        %v1510 = vunpack.c.h.b16 %v895
        %v1511 = vunpack.c.l.b16 %v896
        %v1512 = vunpack.c.h.b16 %v896
        %v1513 = vunpack.c.l.b16 %v897
        %v1514 = vunpack.c.h.b16 %v897
        %v1515 = vunpack.c.l.b16 %v898
        %v1516 = vunpack.c.h.b16 %v898
        %v1517 = vunpack.c.l.b16 %v899
        %v1518 = vunpack.c.h.b16 %v899
        %v1519 = vunpack.c.l.b16 %v900
        %v1520 = vunpack.c.h.b16 %v900
        %v1521 = vunpack.c.l.b16 %v901
        %v1522 = vunpack.c.h.b16 %v901
        %v1523 = vunpack.c.l.b16 %v902
        %v1524 = vunpack.c.h.b16 %v902
        %v1525 = vunpack.c.l.b16 %v903
        %v1526 = vunpack.c.h.b16 %v903
        %v1527 = vunpack.c.l.b16 %v904
        %v1528 = vunpack.c.h.b16 %v904
        %v1529 = vunpack.c.l.b16 %v905
        %v1530 = vunpack.c.h.b16 %v905
        %v1531 = vunpack.c.l.b16 %v906
        %v1532 = vunpack.c.h.b16 %v906
        %v1533 = vunpack.c.l.b16 %v907
        %v1534 = vunpack.c.h.b16 %v907
        %v1535 = vunpack.c.l.b16 %v908
        %v1536 = vunpack.c.h.b16 %v908
        %v1537 = vunpack.c.l.b16 %v909
        %v1538 = vunpack.c.h.b16 %v909
        %v1539 = vunpack.c.l.b16 %v910
        %v1540 = vunpack.c.h.b16 %v910
        %v1541 = vunpack.c.l.b16 %v911
        %v1542 = vunpack.c.h.b16 %v911
        %v1543 = vunpack.c.l.b16 %v912
        %v1544 = vunpack.c.h.b16 %v912
        %v1545 = vunpack.c.l.b16 %v913
        %v1546 = vunpack.c.h.b16 %v913
        %v1547 = vunpack.c.l.b16 %v914
        %v1548 = vunpack.c.h.b16 %v914
        %v1549 = vunpack.c.l.b16 %v915
        %v1550 = vunpack.c.h.b16 %v915
        %v1551 = vunpack.c.l.b16 %v916
        %v1552 = vunpack.c.h.b16 %v916
        %v1553 = vunpack.c.l.b16 %v917
        %v1554 = vunpack.c.h.b16 %v917
        %v1555 = vunpack.c.l.b16 %v918
        %v1556 = vunpack.c.h.b16 %v918
        %v1557 = vunpack.c.l.b16 %v919
        %v1558 = vunpack.c.h.b16 %v919
        %v1559 = vunpack.c.l.b16 %v920
        %v1560 = vunpack.c.h.b16 %v920
        %v1561 = vunpack.c.l.b16 %v921
        %v1562 = vunpack.c.h.b16 %v921
        %v1563 = vunpack.c.l.b16 %v922
        %v1564 = vunpack.c.h.b16 %v922
        %v1565 = vunpack.c.l.b16 %v923
        %v1566 = vunpack.c.h.b16 %v923
        %v1567 = vunpack.c.l.b16 %v924
        %v1568 = vunpack.c.h.b16 %v924
        %v1569 = vunpack.c.l.b16 %v925
        %v1570 = vunpack.c.h.b16 %v925
        %v1571 = vunpack.c.l.b16 %v926
        %v1572 = vunpack.c.h.b16 %v926
        %v1573 = vunpack.c.l.b16 %v927
        %v1574 = vunpack.c.h.b16 %v927
        %v1575 = vunpack.c.l.b16 %v928
        %v1576 = vunpack.c.h.b16 %v928
        %v1577 = vunpack.c.l.b16 %v929
        %v1578 = vunpack.c.h.b16 %v929
        %v1579 = vunpack.c.l.b16 %v930
        %v1580 = vunpack.c.h.b16 %v930
        %v1581 = vunpack.c.l.b16 %v931
        %v1582 = vunpack.c.h.b16 %v931
        %v1583 = vunpack.c.l.b16 %v932
        %v1584 = vunpack.c.h.b16 %v932
        %v1585 = vunpack.c.l.b16 %v933
        %v1586 = vunpack.c.h.b16 %v933
        %v1587 = vunpack.c.l.b16 %v934
        %v1588 = vunpack.c.h.b16 %v934
        %v1589 = vunpack.c.l.b16 %v935
        %v1590 = vunpack.c.h.b16 %v935
        %v1591 = vunpack.c.l.b16 %v936
        %v1592 = vunpack.c.h.b16 %v936
        %v1593 = vunpack.c.l.b16 %v937
        %v1594 = vunpack.c.h.b16 %v937
        %v1595 = vunpack.c.l.b16 %v938
        %v1596 = vunpack.c.h.b16 %v938
        %v1597 = vunpack.c.l.b16 %v939
        %v1598 = vunpack.c.h.b16 %v939
        %v1599 = vunpack.c.l.b16 %v940
        %v1600 = vunpack.c.h.b16 %v940
        %v1601 = vunpack.c.l.b16 %v941
        %v1602 = vunpack.c.h.b16 %v941
        %v1603 = vunpack.c.l.b16 %v942
        %v1604 = vunpack.c.h.b16 %v942
        %v1605 = vunpack.c.l.b16 %v943
        %v1606 = vunpack.c.h.b16 %v943
        %v1607 = vunpack.c.l.b16 %v944
        %v1608 = vunpack.c.h.b16 %v944
        %v1609 = vunpack.c.l.b16 %v945
        %v1610 = vunpack.c.h.b16 %v945
        %v1611 = vunpack.c.l.b16 %v946
        %v1612 = vunpack.c.h.b16 %v946
        %v1613 = vunpack.c.l.b16 %v947
        %v1614 = vunpack.c.h.b16 %v947
        %v1615 = vunpack.c.l.b16 %v948
        %v1616 = vunpack.c.h.b16 %v948
        %v1617 = vunpack.c.l.b16 %v949
        %v1618 = vunpack.c.h.b16 %v949
        %v1619 = vunpack.c.l.b16 %v950
        %v1620 = vunpack.c.h.b16 %v950
        %v1621 = vunpack.c.l.b16 %v951
        %v1622 = vunpack.c.h.b16 %v951
        %v1623 = vunpack.c.l.b16 %v952
        %v1624 = vunpack.c.h.b16 %v952
        %v1625 = vunpack.c.l.b16 %v953
        %v1626 = vunpack.c.h.b16 %v953
        %v1627 = vunpack.c.l.b16 %v954
        %v1628 = vunpack.c.h.b16 %v954
        %v1629 = vunpack.c.l.b16 %v955
        %v1630 = vunpack.c.h.b16 %v955
        %v1631 = vunpack.c.l.b16 %v956
        %v1632 = vunpack.c.h.b16 %v956
        %v1633 = vunpack.c.l.b16 %v957
        %v1634 = vunpack.c.h.b16 %v957
        %v1635 = vunpack.c.l.b16 %v958
        %v1636 = vunpack.c.h.b16 %v958
        %v1637 = vunpack.c.l.b16 %v959
        %v1638 = vunpack.c.h.b16 %v959
        %v1639 = vunpack.c.l.b16 %v960
        %v1640 = vunpack.c.h.b16 %v960
        %v1641 = vunpack.c.l.b16 %v961
        %v1642 = vunpack.c.h.b16 %v961
        %v1643 = vunpack.c.l.b16 %v962
        %v1644 = vunpack.c.h.b16 %v962
        %v1645 = vunpack.c.l.b16 %v963
        %v1646 = vunpack.c.h.b16 %v963
        %v1647 = vunpack.c.l.b16 %v964
        %v1648 = vunpack.c.h.b16 %v964
        %v1649 = vunpack.c.l.b16 %v965
        %v1650 = vunpack.c.h.b16 %v965
        %v1651 = vunpack.c.l.b16 %v966
        %v1652 = vunpack.c.h.b16 %v966
        %v1653 = vunpack.c.l.b16 %v967
        %v1654 = vunpack.c.h.b16 %v967
        %v1655 = vunpack.c.l.b16 %v968
        %v1656 = vunpack.c.h.b16 %v968
        %v1657 = vunpack.c.l.b16 %v969
        %v1658 = vunpack.c.h.b16 %v969
        %v1659 = vunpack.c.l.b16 %v970
        %v1660 = vunpack.c.h.b16 %v970
        %v1661 = vunpack.c.l.b16 %v971
        %v1662 = vunpack.c.h.b16 %v971
        %v1663 = vunpack.c.l.b16 %v972
        %v1664 = vunpack.c.h.b16 %v972
        %v1665 = vunpack.c.l.b16 %v973
        %v1666 = vunpack.c.h.b16 %v973
        %v1667 = vunpack.c.l.b16 %v974
        %v1668 = vunpack.c.h.b16 %v974
        %v1669 = vunpack.c.l.b16 %v975
        %v1670 = vunpack.c.h.b16 %v975
        %v1671 = vunpack.c.l.b16 %v976
        %v1672 = vunpack.c.h.b16 %v976
        %v1673 = vunpack.c.l.b16 %v977
        %v1674 = vunpack.c.h.b16 %v977
        %v1675 = vunpack.c.l.b16 %v978
        %v1676 = vunpack.c.h.b16 %v978
        %v1677 = vunpack.c.l.b16 %v979
        %v1678 = vunpack.c.h.b16 %v979
        %v1679 = vunpack.c.l.b16 %v980
        %v1680 = vunpack.c.h.b16 %v980
        %v1681 = vunpack.c.l.b16 %v981
        %v1682 = vunpack.c.h.b16 %v981
        %v1683 = vunpack.c.l.b16 %v982
        %v1684 = vunpack.c.h.b16 %v982
        %v1685 = vunpack.c.l.b16 %v983
        %v1686 = vunpack.c.h.b16 %v983
        %v1687 = vunpack.c.l.b16 %v984
        %v1688 = vunpack.c.h.b16 %v984
        %v1689 = vunpack.c.l.b16 %v985
        %v1690 = vunpack.c.h.b16 %v985
        %v1691 = vunpack.c.l.b16 %v986
        %v1692 = vunpack.c.h.b16 %v986
        %v1693 = vunpack.c.l.b16 %v987
        %v1694 = vunpack.c.h.b16 %v987
        %v1695 = vunpack.c.l.b16 %v988
        %v1696 = vunpack.c.h.b16 %v988
        %v1697 = vunpack.c.l.b16 %v989
        %v1698 = vunpack.c.h.b16 %v989
        %v1699 = vunpack.c.l.b16 %v990
        %v1700 = vunpack.c.h.b16 %v990
        %v1701 = vunpack.c.l.b16 %v991
        %v1702 = vunpack.c.h.b16 %v991
        %v1703 = vunpack.c.l.b16 %v992
        %v1704 = vunpack.c.h.b16 %v992
        %v1705 = vunpack.c.l.b16 %v993
        %v1706 = vunpack.c.h.b16 %v993
        %v1707 = vunpack.c.l.b16 %v994
        %v1708 = vunpack.c.h.b16 %v994
        %v1709 = vunpack.c.l.b16 %v995
        %v1710 = vunpack.c.h.b16 %v995
        %v1711 = vunpack.c.l.b16 %v996
        %v1712 = vunpack.c.h.b16 %v996
        %v1713 = vunpack.c.l.b16 %v997
        %v1714 = vunpack.c.h.b16 %v997
        %v1715 = vunpack.c.l.b16 %v998
        %v1716 = vunpack.c.h.b16 %v998
        %v1717 = vunpack.c.l.b16 %v999
        %v1718 = vunpack.c.h.b16 %v999
        %v1719 = vunpack.c.l.b16 %v1000
        %v1720 = vunpack.c.h.b16 %v1000
        %v1721 = vunpack.c.l.b16 %v1001
        %v1722 = vunpack.c.h.b16 %v1001
        %v1723 = vunpack.c.l.b16 %v1002
        %v1724 = vunpack.c.h.b16 %v1002
        %v1725 = vunpack.c.l.b16 %v1003
        %v1726 = vunpack.c.h.b16 %v1003
        %v1727 = vunpack.c.l.b16 %v1004
        %v1728 = vunpack.c.h.b16 %v1004
        %v1729 = vunpack.c.l.b16 %v1005
        %v1730 = vunpack.c.h.b16 %v1005
        %v1731 = vunpack.c.l.b16 %v1006
        %v1732 = vunpack.c.h.b16 %v1006
        %v1733 = vunpack.c.l.b16 %v1007
        %v1734 = vunpack.c.h.b16 %v1007
        %v1735 = vunpack.c.l.b16 %v1008
        %v1736 = vunpack.c.h.b16 %v1008
        %v1737 = vunpack.c.l.b16 %v1009
        %v1738 = vunpack.c.h.b16 %v1009
        %v1739 = vunpack.c.l.b16 %v1010
        %v1740 = vunpack.c.h.b16 %v1010
        %v1741 = vunpack.c.l.b16 %v1011
        %v1742 = vunpack.c.h.b16 %v1011
        %v1743 = vunpack.c.l.b16 %v1012
        %v1744 = vunpack.c.h.b16 %v1012
        %v1745 = vunpack.c.l.b16 %v1013
        %v1746 = vunpack.c.h.b16 %v1013
        %v1747 = vunpack.c.l.b16 %v1014
        %v1748 = vunpack.c.h.b16 %v1014
        %v1749 = vunpack.c.l.b16 %v1015
        %v1750 = vunpack.c.h.b16 %v1015
        %v1751 = vunpack.c.l.b16 %v1016
        %v1752 = vunpack.c.h.b16 %v1016
        %v1753 = vunpack.c.l.b16 %v1017
        %v1754 = vunpack.c.h.b16 %v1017
        %v1755 = vunpack.c.l.b16 %v1018
        %v1756 = vunpack.c.h.b16 %v1018
        %v1757 = vunpack.c.l.b16 %v1019
        %v1758 = vunpack.c.h.b16 %v1019
        %v1759 = vunpack.c.l.b16 %v1020
        %v1760 = vunpack.c.h.b16 %v1020
        %v1761 = vunpack.c.l.b16 %v1021
        %v1762 = vunpack.c.h.b16 %v1021
        %v1763 = vunpack.c.l.b16 %v1022
        %v1764 = vunpack.c.h.b16 %v1022
        %v1765 = vunpack.c.l.b16 %v1023
        %v1766 = vunpack.c.h.b16 %v1023
        %v1767 = vunpack.c.l.b16 %v1024
        %v1768 = vunpack.c.h.b16 %v1024
        %v1769 = vunpack.c.l.b16 %v1025
        %v1770 = vunpack.c.h.b16 %v1025
        %v1771 = vunpack.c.l.b16 %v1026
        %v1772 = vunpack.c.h.b16 %v1026
        %v1773 = vunpack.c.l.b16 %v1027
        %v1774 = vunpack.c.h.b16 %v1027
        %v1775 = vunpack.c.l.b16 %v1028
        %v1776 = vunpack.c.h.b16 %v1028
        %v1777 = vunpack.c.l.b16 %v1029
        %v1778 = vunpack.c.h.b16 %v1029
        %v1779 = vunpack.c.l.b16 %v1030
        %v1780 = vunpack.c.h.b16 %v1030
        %v1781 = vunpack.c.l.b16 %v1031
        %v1782 = vunpack.c.h.b16 %v1031
        %v1783 = vunpack.c.l.b16 %v1032
        %v1784 = vunpack.c.h.b16 %v1032
        %v1785 = vunpack.c.l.b16 %v1033
        %v1786 = vunpack.c.h.b16 %v1033
        %v1787 = vunpack.c.l.b16 %v1034
        %v1788 = vunpack.c.h.b16 %v1034
        %v1789 = vunpack.c.l.b16 %v1035
        %v1790 = vunpack.c.h.b16 %v1035
        %v1791 = vunpack.c.l.b16 %v1036
        %v1792 = vunpack.c.h.b16 %v1036
        %v1793 = vunpack.c.l.b16 %v1037
        %v1794 = vunpack.c.h.b16 %v1037
        %v1795 = vunpack.c.l.b16 %v1038
        %v1796 = vunpack.c.h.b16 %v1038
        %v1797 = vunpack.c.l.b16 %v1039
        %v1798 = vunpack.c.h.b16 %v1039
        %v1799 = vunpack.c.l.b16 %v1040
        %v1800 = vunpack.c.h.b16 %v1040
        %v1801 = vunpack.c.l.b16 %v1041
        %v1802 = vunpack.c.h.b16 %v1041
        %v1803 = vunpack.c.l.b16 %v1042
        %v1804 = vunpack.c.h.b16 %v1042
        %v1805 = vunpack.c.l.b16 %v1043
        %v1806 = vunpack.c.h.b16 %v1043
        %v1807 = vunpack.c.l.b16 %v1044
        %v1808 = vunpack.c.h.b16 %v1044
        %v1809 = vunpack.c.l.b16 %v1045
        %v1810 = vunpack.c.h.b16 %v1045
        %v1811 = vunpack.c.l.b16 %v1046
        %v1812 = vunpack.c.h.b16 %v1046
        %v1813 = vunpack.c.l.b16 %v1047
        %v1814 = vunpack.c.h.b16 %v1047
        %v1815 = vunpack.c.l.b16 %v1048
        %v1816 = vunpack.c.h.b16 %v1048
        %v1817 = vunpack.c.l.b16 %v1049
        %v1818 = vunpack.c.h.b16 %v1049
        %v1819 = vunpack.c.l.b16 %v1050
        %v1820 = vunpack.c.h.b16 %v1050
        %v1821 = vunpack.c.l.b16 %v1051
        %v1822 = vunpack.c.h.b16 %v1051
        %v1823 = vunpack.c.l.b16 %v1052
        %v1824 = vunpack.c.h.b16 %v1052
        %v1825 = vunpack.c.l.b16 %v1053
        %v1826 = vunpack.c.h.b16 %v1053
        %v1827 = vunpack.c.l.b16 %v1054
        %v1828 = vunpack.c.h.b16 %v1054
        %v1829 = vunpack.c.l.b16 %v1055
        %v1830 = vunpack.c.h.b16 %v1055
        %v1831 = vunpack.c.l.b16 %v1056
        %v1832 = vunpack.c.h.b16 %v1056
        %v1833 = vunpack.c.l.b16 %v1057
        %v1834 = vunpack.c.h.b16 %v1057
        %v1835 = vunpack.c.l.b16 %v1058
        %v1836 = vunpack.c.h.b16 %v1058
        %v1837 = vunpack.c.l.b16 %v1059
        %v1838 = vunpack.c.h.b16 %v1059
        %v1839 = vunpack.c.l.b16 %v1060
        %v1840 = vunpack.c.h.b16 %v1060
        %v1841 = vunpack.c.l.b16 %v1061
        %v1842 = vunpack.c.h.b16 %v1061
        %v1843 = vunpack.c.l.b16 %v1062
        %v1844 = vunpack.c.h.b16 %v1062
        %v1845 = vunpack.c.l.b16 %v1063
        %v1846 = vunpack.c.h.b16 %v1063
        %v1847 = vunpack.c.l.b16 %v1064
        %v1848 = vunpack.c.h.b16 %v1064
        %v1849 = vunpack.c.l.b16 %v1065
        %v1850 = vunpack.c.h.b16 %v1065
        %v1851 = vunpack.c.l.b16 %v1066
        %v1852 = vunpack.c.h.b16 %v1066
        %v1853 = vunpack.c.l.b16 %v1067
        %v1854 = vunpack.c.h.b16 %v1067
        %v1855 = vunpack.c.l.b16 %v1068
        %v1856 = vunpack.c.h.b16 %v1068
        %v1857 = vunpack.c.l.b16 %v1069
        %v1858 = vunpack.c.h.b16 %v1069
        %v1859 = vunpack.c.l.b16 %v1070
        %v1860 = vunpack.c.h.b16 %v1070
        %v1861 = vunpack.c.l.b16 %v1071
        %v1862 = vunpack.c.h.b16 %v1071
        %v1863 = vunpack.c.l.b16 %v1072
        %v1864 = vunpack.c.h.b16 %v1072
        %v1865 = vunpack.c.l.b16 %v1073
        %v1866 = vunpack.c.h.b16 %v1073
        %v1867 = vunpack.c.l.b16 %v1074
        %v1868 = vunpack.c.h.b16 %v1074
        %v1869 = vunpack.c.l.b16 %v1075
        %v1870 = vunpack.c.h.b16 %v1075
        %v1871 = vunpack.c.l.b16 %v1076
        %v1872 = vunpack.c.h.b16 %v1076
        %v1873 = vunpack.c.l.b16 %v1077
        %v1874 = vunpack.c.h.b16 %v1077
        %v1875 = vunpack.c.l.b16 %v1078
        %v1876 = vunpack.c.h.b16 %v1078
        %v1877 = vunpack.c.l.b16 %v1079
        %v1878 = vunpack.c.h.b16 %v1079
        %v1879 = vunpack.c.l.b16 %v1080
        %v1880 = vunpack.c.h.b16 %v1080
        %v1881 = vunpack.c.l.b16 %v1081
        %v1882 = vunpack.c.h.b16 %v1081
        %v1883 = vunpack.c.l.b16 %v1082
        %v1884 = vunpack.c.h.b16 %v1082
        %v1885 = vunpack.c.l.b16 %v1083
        %v1886 = vunpack.c.h.b16 %v1083
        %v1887 = vunpack.c.l.b16 %v1084
        %v1888 = vunpack.c.h.b16 %v1084
        %v1889 = vunpack.c.l.b16 %v1085
        %v1890 = vunpack.c.h.b16 %v1085
        %v1891 = vunpack.c.l.b16 %v1086
        %v1892 = vunpack.c.h.b16 %v1086
        %v1893 = vunpack.c.l.b16 %v1087
        %v1894 = vunpack.c.h.b16 %v1087
        %v1895 = vunpack.c.l.b16 %v1088
        %v1896 = vunpack.c.h.b16 %v1088
        %v1897 = vpack.c.b16 %v1389, %v1385
        %v1898 = vpack.c.b16 %v1390, %v1386
        %v1899 = vpack.c.b16 %v1391, %v1387
        %v1900 = vpack.c.b16 %v1392, %v1388
        %v1901 = vpack.c.b16 %v1397, %v1393
        %v1902 = vpack.c.b16 %v1398, %v1394
        %v1903 = vpack.c.b16 %v1399, %v1395
        %v1904 = vpack.c.b16 %v1400, %v1396
        %v1905 = vpack.c.b16 %v1405, %v1401
        %v1906 = vpack.c.b16 %v1406, %v1402
        %v1907 = vpack.c.b16 %v1407, %v1403
        %v1908 = vpack.c.b16 %v1408, %v1404
        %v1909 = vpack.c.b16 %v1413, %v1409
        %v1910 = vpack.c.b16 %v1414, %v1410
        %v1911 = vpack.c.b16 %v1415, %v1411
        %v1912 = vpack.c.b16 %v1416, %v1412
        %v1913 = vpack.c.b16 %v1421, %v1417
        %v1914 = vpack.c.b16 %v1422, %v1418
        %v1915 = vpack.c.b16 %v1423, %v1419
        %v1916 = vpack.c.b16 %v1424, %v1420
        %v1917 = vpack.c.b16 %v1429, %v1425
        %v1918 = vpack.c.b16 %v1430, %v1426
        %v1919 = vpack.c.b16 %v1431, %v1427
        %v1920 = vpack.c.b16 %v1432, %v1428
        %v1921 = vpack.c.b16 %v1437, %v1433
        %v1922 = vpack.c.b16 %v1438, %v1434
        %v1923 = vpack.c.b16 %v1439, %v1435
        %v1924 = vpack.c.b16 %v1440, %v1436
        %v1925 = vpack.c.b16 %v1445, %v1441
        %v1926 = vpack.c.b16 %v1446, %v1442
        %v1927 = vpack.c.b16 %v1447, %v1443
        %v1928 = vpack.c.b16 %v1448, %v1444
        %v1929 = vpack.c.b16 %v1453, %v1449
        %v1930 = vpack.c.b16 %v1454, %v1450
        %v1931 = vpack.c.b16 %v1455, %v1451
        %v1932 = vpack.c.b16 %v1456, %v1452
        %v1933 = vpack.c.b16 %v1461, %v1457
        %v1934 = vpack.c.b16 %v1462, %v1458
        %v1935 = vpack.c.b16 %v1463, %v1459
        %v1936 = vpack.c.b16 %v1464, %v1460
        %v1937 = vpack.c.b16 %v1469, %v1465
        %v1938 = vpack.c.b16 %v1470, %v1466
        %v1939 = vpack.c.b16 %v1471, %v1467
        %v1940 = vpack.c.b16 %v1472, %v1468
        %v1941 = vpack.c.b16 %v1477, %v1473
        %v1942 = vpack.c.b16 %v1478, %v1474
        %v1943 = vpack.c.b16 %v1479, %v1475
        %v1944 = vpack.c.b16 %v1480, %v1476
        %v1945 = vpack.c.b16 %v1485, %v1481
        %v1946 = vpack.c.b16 %v1486, %v1482
        %v1947 = vpack.c.b16 %v1487, %v1483
        %v1948 = vpack.c.b16 %v1488, %v1484
        %v1949 = vpack.c.b16 %v1493, %v1489
        %v1950 = vpack.c.b16 %v1494, %v1490
        %v1951 = vpack.c.b16 %v1495, %v1491
        %v1952 = vpack.c.b16 %v1496, %v1492
        %v1953 = vpack.c.b16 %v1501, %v1497
        %v1954 = vpack.c.b16 %v1502, %v1498
        %v1955 = vpack.c.b16 %v1503, %v1499
        %v1956 = vpack.c.b16 %v1504, %v1500
        %v1957 = vpack.c.b16 %v1509, %v1505
        %v1958 = vpack.c.b16 %v1510, %v1506
        %v1959 = vpack.c.b16 %v1511, %v1507
        %v1960 = vpack.c.b16 %v1512, %v1508
        %v1961 = vpack.c.b16 %v1517, %v1513
        %v1962 = vpack.c.b16 %v1518, %v1514
        %v1963 = vpack.c.b16 %v1519, %v1515
        %v1964 = vpack.c.b16 %v1520, %v1516
        %v1965 = vpack.c.b16 %v1525, %v1521
        %v1966 = vpack.c.b16 %v1526, %v1522
        %v1967 = vpack.c.b16 %v1527, %v1523
        %v1968 = vpack.c.b16 %v1528, %v1524
        %v1969 = vpack.c.b16 %v1533, %v1529
        %v1970 = vpack.c.b16 %v1534, %v1530
        %v1971 = vpack.c.b16 %v1535, %v1531
        %v1972 = vpack.c.b16 %v1536, %v1532
        %v1973 = vpack.c.b16 %v1541, %v1537
        %v1974 = vpack.c.b16 %v1542, %v1538
        %v1975 = vpack.c.b16 %v1543, %v1539
        %v1976 = vpack.c.b16 %v1544, %v1540
        %v1977 = vpack.c.b16 %v1549, %v1545
        %v1978 = vpack.c.b16 %v1550, %v1546
        %v1979 = vpack.c.b16 %v1551, %v1547
        %v1980 = vpack.c.b16 %v1552, %v1548
        %v1981 = vpack.c.b16 %v1557, %v1553
        %v1982 = vpack.c.b16 %v1558, %v1554
        %v1983 = vpack.c.b16 %v1559, %v1555
        %v1984 = vpack.c.b16 %v1560, %v1556
        %v1985 = vpack.c.b16 %v1565, %v1561
        %v1986 = vpack.c.b16 %v1566, %v1562
        %v1987 = vpack.c.b16 %v1567, %v1563
        %v1988 = vpack.c.b16 %v1568, %v1564
        %v1989 = vpack.c.b16 %v1573, %v1569
        %v1990 = vpack.c.b16 %v1574, %v1570
        %v1991 = vpack.c.b16 %v1575, %v1571
        %v1992 = vpack.c.b16 %v1576, %v1572
        %v1993 = vpack.c.b16 %v1581, %v1577
        %v1994 = vpack.c.b16 %v1582, %v1578
        %v1995 = vpack.c.b16 %v1583, %v1579
        %v1996 = vpack.c.b16 %v1584, %v1580
        %v1997 = vpack.c.b16 %v1589, %v1585
        %v1998 = vpack.c.b16 %v1590, %v1586
        %v1999 = vpack.c.b16 %v1591, %v1587
        %v2000 = vpack.c.b16 %v1592, %v1588
        %v2001 = vpack.c.b16 %v1597, %v1593
        %v2002 = vpack.c.b16 %v1598, %v1594
        %v2003 = vpack.c.b16 %v1599, %v1595
        %v2004 = vpack.c.b16 %v1600, %v1596
        %v2005 = vpack.c.b16 %v1605, %v1601
        %v2006 = vpack.c.b16 %v1606, %v1602
        %v2007 = vpack.c.b16 %v1607, %v1603
        %v2008 = vpack.c.b16 %v1608, %v1604
        %v2009 = vpack.c.b16 %v1613, %v1609
        %v2010 = vpack.c.b16 %v1614, %v1610
        %v2011 = vpack.c.b16 %v1615, %v1611
        %v2012 = vpack.c.b16 %v1616, %v1612
        %v2013 = vpack.c.b16 %v1621, %v1617
        %v2014 = vpack.c.b16 %v1622, %v1618
        %v2015 = vpack.c.b16 %v1623, %v1619
        %v2016 = vpack.c.b16 %v1624, %v1620
        %v2017 = vpack.c.b16 %v1629, %v1625
        %v2018 = vpack.c.b16 %v1630, %v1626
        %v2019 = vpack.c.b16 %v1631, %v1627
        %v2020 = vpack.c.b16 %v1632, %v1628
        %v2021 = vpack.c.b16 %v1637, %v1633
        %v2022 = vpack.c.b16 %v1638, %v1634
        %v2023 = vpack.c.b16 %v1639, %v1635
        %v2024 = vpack.c.b16 %v1640, %v1636
        %v2025 = vpack.c.b16 %v1645, %v1641
        %v2026 = vpack.c.b16 %v1646, %v1642
        %v2027 = vpack.c.b16 %v1647, %v1643
        %v2028 = vpack.c.b16 %v1648, %v1644
        %v2029 = vpack.c.b16 %v1653, %v1649
        %v2030 = vpack.c.b16 %v1654, %v1650
        %v2031 = vpack.c.b16 %v1655, %v1651
        %v2032 = vpack.c.b16 %v1656, %v1652
        %v2033 = vpack.c.b16 %v1661, %v1657
        %v2034 = vpack.c.b16 %v1662, %v1658
        %v2035 = vpack.c.b16 %v1663, %v1659
        %v2036 = vpack.c.b16 %v1664, %v1660
        %v2037 = vpack.c.b16 %v1669, %v1665
        %v2038 = vpack.c.b16 %v1670, %v1666
        %v2039 = vpack.c.b16 %v1671, %v1667
        %v2040 = vpack.c.b16 %v1672, %v1668
        %v2041 = vpack.c.b16 %v1677, %v1673
        %v2042 = vpack.c.b16 %v1678, %v1674
        %v2043 = vpack.c.b16 %v1679, %v1675
        %v2044 = vpack.c.b16 %v1680, %v1676
        %v2045 = vpack.c.b16 %v1685, %v1681
        %v2046 = vpack.c.b16 %v1686, %v1682
        %v2047 = vpack.c.b16 %v1687, %v1683
        %v2048 = vpack.c.b16 %v1688, %v1684
        %v2049 = vpack.c.b16 %v1693, %v1689
        %v2050 = vpack.c.b16 %v1694, %v1690
        %v2051 = vpack.c.b16 %v1695, %v1691
        %v2052 = vpack.c.b16 %v1696, %v1692
        %v2053 = vpack.c.b16 %v1701, %v1697
        %v2054 = vpack.c.b16 %v1702, %v1698
        %v2055 = vpack.c.b16 %v1703, %v1699
        %v2056 = vpack.c.b16 %v1704, %v1700
        %v2057 = vpack.c.b16 %v1709, %v1705
        %v2058 = vpack.c.b16 %v1710, %v1706
        %v2059 = vpack.c.b16 %v1711, %v1707
        %v2060 = vpack.c.b16 %v1712, %v1708
        %v2061 = vpack.c.b16 %v1717, %v1713
        %v2062 = vpack.c.b16 %v1718, %v1714
        %v2063 = vpack.c.b16 %v1719, %v1715
        %v2064 = vpack.c.b16 %v1720, %v1716
        %v2065 = vpack.c.b16 %v1725, %v1721
        %v2066 = vpack.c.b16 %v1726, %v1722
        %v2067 = vpack.c.b16 %v1727, %v1723
        %v2068 = vpack.c.b16 %v1728, %v1724
        %v2069 = vpack.c.b16 %v1733, %v1729
        %v2070 = vpack.c.b16 %v1734, %v1730
        %v2071 = vpack.c.b16 %v1735, %v1731
        %v2072 = vpack.c.b16 %v1736, %v1732
        %v2073 = vpack.c.b16 %v1741, %v1737
        %v2074 = vpack.c.b16 %v1742, %v1738
        %v2075 = vpack.c.b16 %v1743, %v1739
        %v2076 = vpack.c.b16 %v1744, %v1740
        %v2077 = vpack.c.b16 %v1749, %v1745
        %v2078 = vpack.c.b16 %v1750, %v1746
        %v2079 = vpack.c.b16 %v1751, %v1747
        %v2080 = vpack.c.b16 %v1752, %v1748
        %v2081 = vpack.c.b16 %v1757, %v1753
        %v2082 = vpack.c.b16 %v1758, %v1754
        %v2083 = vpack.c.b16 %v1759, %v1755
        %v2084 = vpack.c.b16 %v1760, %v1756
        %v2085 = vpack.c.b16 %v1765, %v1761
        %v2086 = vpack.c.b16 %v1766, %v1762
        %v2087 = vpack.c.b16 %v1767, %v1763
        %v2088 = vpack.c.b16 %v1768, %v1764
        %v2089 = vpack.c.b16 %v1773, %v1769
        %v2090 = vpack.c.b16 %v1774, %v1770
        %v2091 = vpack.c.b16 %v1775, %v1771
        %v2092 = vpack.c.b16 %v1776, %v1772
        %v2093 = vpack.c.b16 %v1781, %v1777
        %v2094 = vpack.c.b16 %v1782, %v1778
        %v2095 = vpack.c.b16 %v1783, %v1779
        %v2096 = vpack.c.b16 %v1784, %v1780
        %v2097 = vpack.c.b16 %v1789, %v1785
        %v2098 = vpack.c.b16 %v1790, %v1786
        %v2099 = vpack.c.b16 %v1791, %v1787
        %v2100 = vpack.c.b16 %v1792, %v1788
        %v2101 = vpack.c.b16 %v1797, %v1793
        %v2102 = vpack.c.b16 %v1798, %v1794
        %v2103 = vpack.c.b16 %v1799, %v1795
        %v2104 = vpack.c.b16 %v1800, %v1796
        %v2105 = vpack.c.b16 %v1805, %v1801
        %v2106 = vpack.c.b16 %v1806, %v1802
        %v2107 = vpack.c.b16 %v1807, %v1803
        %v2108 = vpack.c.b16 %v1808, %v1804
        %v2109 = vpack.c.b16 %v1813, %v1809
        %v2110 = vpack.c.b16 %v1814, %v1810
        %v2111 = vpack.c.b16 %v1815, %v1811
        %v2112 = vpack.c.b16 %v1816, %v1812
        %v2113 = vpack.c.b16 %v1821, %v1817
        %v2114 = vpack.c.b16 %v1822, %v1818
        %v2115 = vpack.c.b16 %v1823, %v1819
        %v2116 = vpack.c.b16 %v1824, %v1820
        %v2117 = vpack.c.b16 %v1829, %v1825
        %v2118 = vpack.c.b16 %v1830, %v1826
        %v2119 = vpack.c.b16 %v1831, %v1827
        %v2120 = vpack.c.b16 %v1832, %v1828
        %v2121 = vpack.c.b16 %v1837, %v1833
        %v2122 = vpack.c.b16 %v1838, %v1834
        %v2123 = vpack.c.b16 %v1839, %v1835
        %v2124 = vpack.c.b16 %v1840, %v1836
        %v2125 = vpack.c.b16 %v1845, %v1841
        %v2126 = vpack.c.b16 %v1846, %v1842
        %v2127 = vpack.c.b16 %v1847, %v1843
        %v2128 = vpack.c.b16 %v1848, %v1844
        %v2129 = vpack.c.b16 %v1853, %v1849
        %v2130 = vpack.c.b16 %v1854, %v1850
        %v2131 = vpack.c.b16 %v1855, %v1851
        %v2132 = vpack.c.b16 %v1856, %v1852
        %v2133 = vpack.c.b16 %v1861, %v1857
        %v2134 = vpack.c.b16 %v1862, %v1858
        %v2135 = vpack.c.b16 %v1863, %v1859
        %v2136 = vpack.c.b16 %v1864, %v1860
        %v2137 = vpack.c.b16 %v1869, %v1865
        %v2138 = vpack.c.b16 %v1870, %v1866
        %v2139 = vpack.c.b16 %v1871, %v1867
        %v2140 = vpack.c.b16 %v1872, %v1868
        %v2141 = vpack.c.b16 %v1877, %v1873
        %v2142 = vpack.c.b16 %v1878, %v1874
        %v2143 = vpack.c.b16 %v1879, %v1875
        %v2144 = vpack.c.b16 %v1880, %v1876
        %v2145 = vpack.c.b16 %v1885, %v1881
        %v2146 = vpack.c.b16 %v1886, %v1882
        %v2147 = vpack.c.b16 %v1887, %v1883
        %v2148 = vpack.c.b16 %v1888, %v1884
        %v2149 = vpack.c.b16 %v1893, %v1889
        %v2150 = vpack.c.b16 %v1894, %v1890
        %v2151 = vpack.c.b16 %v1895, %v1891
        %v2152 = vpack.c.b16 %v1896, %v1892
        %2409 = vmatprep.subr.bf16.mxu0 %v1898
        %2410 = vmatpush1.bf16.msra.mxu0 %v1897
        %2411 = vmatprep.subr.bf16.mxu0 %v1902
        %2412 = vmatpush1.bf16.msra.mxu0 %v1901
        %2413 = vmatprep.subr.bf16.mxu0 %v1906
        %2414 = vmatpush1.bf16.msra.mxu0 %v1905
        %2415 = vmatprep.subr.bf16.mxu0 %v1910
        %2416 = vmatpush1.bf16.msra.mxu0 %v1909
        %2417 = vmatprep.subr.bf16.mxu0 %v1914
        %2418 = vmatpush1.bf16.msra.mxu0 %v1913
        %2419 = vmatprep.subr.bf16.mxu0 %v1918
        %2420 = vmatpush1.bf16.msra.mxu0 %v1917
        %2421 = vmatprep.subr.bf16.mxu0 %v1922
        %2422 = vmatpush1.bf16.msra.mxu0 %v1921
        %2423 = vmatprep.subr.bf16.mxu0 %v1926
        %2424 = vmatpush1.bf16.msra.mxu0 %v1925
        %2425 = vmatprep.subr.bf16.mxu0 %v1930
        %2426 = vmatpush1.bf16.msra.mxu0 %v1929
        %2427 = vmatprep.subr.bf16.mxu0 %v1934
        %2428 = vmatpush1.bf16.msra.mxu0 %v1933
        %2429 = vmatprep.subr.bf16.mxu0 %v1938
        %2430 = vmatpush1.bf16.msra.mxu0 %v1937
        %2431 = vmatprep.subr.bf16.mxu0 %v1942
        %2432 = vmatpush1.bf16.msra.mxu0 %v1941
        %2433 = vmatprep.subr.bf16.mxu0 %v1946
        %2434 = vmatpush1.bf16.msra.mxu0 %v1945
        %2435 = vmatprep.subr.bf16.mxu0 %v1950
        %2436 = vmatpush1.bf16.msra.mxu0 %v1949
        %2437 = vmatprep.subr.bf16.mxu0 %v1954
        %2438 = vmatpush1.bf16.msra.mxu0 %v1953
        %2439 = vmatprep.subr.bf16.mxu0 %v1958
        %2440 = vmatpush1.bf16.msra.mxu0 %v1957
        %2441 = vmatprep.mubr.bf16.mxu0 %v1114
        %2442 = vmatmul.mubr.bf16.gmra.mrb[0].mxu0 %v1113
        %v2443 = vpop.f32.mrb[0].mxu0
        %v2444 = vadd.f32 0.0, %v2443
        %v2445 = vpop.f32.mrb[0].mxu0
        %v2446 = vadd.f32 0.0, %v2445
        %v2447 = vpop.f32.mrb[0].mxu0
        %v2448 = vadd.f32 0.0, %v2447
        %v2449 = vpop.f32.mrb[0].mxu0
        %v2450 = vadd.f32 0.0, %v2449
        %2451 = vdwg.mxu0
        %2452 = vmatprep.subr.bf16.mxu0 %v1962
        %2453 = vmatpush1.bf16.msra.mxu0 %v1961
        %2454 = vmatprep.subr.bf16.mxu0 %v1966
        %2455 = vmatpush1.bf16.msra.mxu0 %v1965
        %2456 = vmatprep.subr.bf16.mxu0 %v1970
        %2457 = vmatpush1.bf16.msra.mxu0 %v1969
        %2458 = vmatprep.subr.bf16.mxu0 %v1974
        %2459 = vmatpush1.bf16.msra.mxu0 %v1973
        %2460 = vmatprep.subr.bf16.mxu0 %v1978
        %2461 = vmatpush1.bf16.msra.mxu0 %v1977
        %2462 = vmatprep.subr.bf16.mxu0 %v1982
        %2463 = vmatpush1.bf16.msra.mxu0 %v1981
        %2464 = vmatprep.subr.bf16.mxu0 %v1986
        %2465 = vmatpush1.bf16.msra.mxu0 %v1985
        %2466 = vmatprep.subr.bf16.mxu0 %v1990
        %2467 = vmatpush1.bf16.msra.mxu0 %v1989
        %2468 = vmatprep.subr.bf16.mxu0 %v1994
        %2469 = vmatpush1.bf16.msra.mxu0 %v1993
        %2470 = vmatprep.subr.bf16.mxu0 %v1998
        %2471 = vmatpush1.bf16.msra.mxu0 %v1997
        %2472 = vmatprep.subr.bf16.mxu0 %v2002
        %2473 = vmatpush1.bf16.msra.mxu0 %v2001
        %2474 = vmatprep.subr.bf16.mxu0 %v2006
        %2475 = vmatpush1.bf16.msra.mxu0 %v2005
        %2476 = vmatprep.subr.bf16.mxu0 %v2010
        %2477 = vmatpush1.bf16.msra.mxu0 %v2009
        %2478 = vmatprep.subr.bf16.mxu0 %v2014
        %2479 = vmatpush1.bf16.msra.mxu0 %v2013
        %2480 = vmatprep.subr.bf16.mxu0 %v2018
        %2481 = vmatpush1.bf16.msra.mxu0 %v2017
        %2482 = vmatprep.subr.bf16.mxu0 %v2022
        %2483 = vmatpush1.bf16.msra.mxu0 %v2021
        %2484 = vmatprep.mubr.bf16.mxu0 %v1116
        %2485 = vmatmul.mubr.bf16.gmra.mrb[0].mxu0 %v1115
        %v2486 = vpop.f32.mrb[0].mxu0
        %v2487 = vadd.f32 %v2444, %v2486
        %v2488 = vpop.f32.mrb[0].mxu0
        %v2489 = vadd.f32 %v2446, %v2488
        %v2490 = vpop.f32.mrb[0].mxu0
        %v2491 = vadd.f32 %v2448, %v2490
        %v2492 = vpop.f32.mrb[0].mxu0
        %v2493 = vadd.f32 %v2450, %v2492
        %2494 = vdwg.mxu0
        %2495 = vmatprep.subr.bf16.mxu0 %v2026
        %2496 = vmatpush1.bf16.msra.mxu0 %v2025
        %2497 = vmatprep.subr.bf16.mxu0 %v2030
        %2498 = vmatpush1.bf16.msra.mxu0 %v2029
        %2499 = vmatprep.subr.bf16.mxu0 %v2034
        %2500 = vmatpush1.bf16.msra.mxu0 %v2033
        %2501 = vmatprep.subr.bf16.mxu0 %v2038
        %2502 = vmatpush1.bf16.msra.mxu0 %v2037
        %2503 = vmatprep.subr.bf16.mxu0 %v2042
        %2504 = vmatpush1.bf16.msra.mxu0 %v2041
        %2505 = vmatprep.subr.bf16.mxu0 %v2046
        %2506 = vmatpush1.bf16.msra.mxu0 %v2045
        %2507 = vmatprep.subr.bf16.mxu0 %v2050
        %2508 = vmatpush1.bf16.msra.mxu0 %v2049
        %2509 = vmatprep.subr.bf16.mxu0 %v2054
        %2510 = vmatpush1.bf16.msra.mxu0 %v2053
        %2511 = vmatprep.subr.bf16.mxu0 %v2058
        %2512 = vmatpush1.bf16.msra.mxu0 %v2057
        %2513 = vmatprep.subr.bf16.mxu0 %v2062
        %2514 = vmatpush1.bf16.msra.mxu0 %v2061
        %2515 = vmatprep.subr.bf16.mxu0 %v2066
        %2516 = vmatpush1.bf16.msra.mxu0 %v2065
        %2517 = vmatprep.subr.bf16.mxu0 %v2070
        %2518 = vmatpush1.bf16.msra.mxu0 %v2069
        %2519 = vmatprep.subr.bf16.mxu0 %v2074
        %2520 = vmatpush1.bf16.msra.mxu0 %v2073
        %2521 = vmatprep.subr.bf16.mxu0 %v2078
        %2522 = vmatpush1.bf16.msra.mxu0 %v2077
        %2523 = vmatprep.subr.bf16.mxu0 %v2082
        %2524 = vmatpush1.bf16.msra.mxu0 %v2081
        %2525 = vmatprep.subr.bf16.mxu0 %v2086
        %2526 = vmatpush1.bf16.msra.mxu0 %v2085
        %2527 = vmatprep.mubr.bf16.mxu0 %v1118
        %2528 = vmatmul.mubr.bf16.gmra.mrb[0].mxu0 %v1117
        %v2529 = vpop.f32.mrb[0].mxu0
        %v2530 = vadd.f32 %v2487, %v2529
        %v2531 = vpop.f32.mrb[0].mxu0
        %v2532 = vadd.f32 %v2489, %v2531
        %v2533 = vpop.f32.mrb[0].mxu0
        %v2534 = vadd.f32 %v2491, %v2533
        %v2535 = vpop.f32.mrb[0].mxu0
        %v2536 = vadd.f32 %v2493, %v2535
        %2537 = vdwg.mxu0
        %2538 = vmatprep.subr.bf16.mxu0 %v2090
        %2539 = vmatpush1.bf16.msra.mxu0 %v2089
        %2540 = vmatprep.subr.bf16.mxu0 %v2094
        %2541 = vmatpush1.bf16.msra.mxu0 %v2093
        %2542 = vmatprep.subr.bf16.mxu0 %v2098
        %2543 = vmatpush1.bf16.msra.mxu0 %v2097
        %2544 = vmatprep.subr.bf16.mxu0 %v2102
        %2545 = vmatpush1.bf16.msra.mxu0 %v2101
        %2546 = vmatprep.subr.bf16.mxu0 %v2106
        %2547 = vmatpush1.bf16.msra.mxu0 %v2105
        %2548 = vmatprep.subr.bf16.mxu0 %v2110
        %2549 = vmatpush1.bf16.msra.mxu0 %v2109
        %2550 = vmatprep.subr.bf16.mxu0 %v2114
        %2551 = vmatpush1.bf16.msra.mxu0 %v2113
        %2552 = vmatprep.subr.bf16.mxu0 %v2118
        %2553 = vmatpush1.bf16.msra.mxu0 %v2117
        %2554 = vmatprep.subr.bf16.mxu0 %v2122
        %2555 = vmatpush1.bf16.msra.mxu0 %v2121
        %2556 = vmatprep.subr.bf16.mxu0 %v2126
        %2557 = vmatpush1.bf16.msra.mxu0 %v2125
        %2558 = vmatprep.subr.bf16.mxu0 %v2130
        %2559 = vmatpush1.bf16.msra.mxu0 %v2129
        %2560 = vmatprep.subr.bf16.mxu0 %v2134
        %2561 = vmatpush1.bf16.msra.mxu0 %v2133
        %2562 = vmatprep.subr.bf16.mxu0 %v2138
        %2563 = vmatpush1.bf16.msra.mxu0 %v2137
        %2564 = vmatprep.subr.bf16.mxu0 %v2142
        %2565 = vmatpush1.bf16.msra.mxu0 %v2141
        %2566 = vmatprep.subr.bf16.mxu0 %v2146
        %2567 = vmatpush1.bf16.msra.mxu0 %v2145
        %2568 = vmatprep.subr.bf16.mxu0 %v2150
        %2569 = vmatpush1.bf16.msra.mxu0 %v2149
        %2570 = vmatprep.mubr.bf16.mxu0 %v1120
        %2571 = vmatmul.mubr.bf16.gmra.mrb[0].mxu0 %v1119
        %v2572 = vpop.f32.mrb[0].mxu0
        %v2573 = vadd.f32 %v2530, %v2572
        %v2574 = vpop.f32.mrb[0].mxu0
        %v2575 = vadd.f32 %v2532, %v2574
        %v2576 = vpop.f32.mrb[0].mxu0
        %v2577 = vadd.f32 %v2534, %v2576
        %v2578 = vpop.f32.mrb[0].mxu0
        %v2579 = vadd.f32 %v2536, %v2578
        %2580 = vdwg.mxu0
        %2581 = vmatprep.subr.bf16.mxu0 %v1900
        %2582 = vmatpush1.bf16.msra.mxu0 %v1899
        %2583 = vmatprep.subr.bf16.mxu0 %v1904
        %2584 = vmatpush1.bf16.msra.mxu0 %v1903
        %2585 = vmatprep.subr.bf16.mxu0 %v1908
        %2586 = vmatpush1.bf16.msra.mxu0 %v1907
        %2587 = vmatprep.subr.bf16.mxu0 %v1912
        %2588 = vmatpush1.bf16.msra.mxu0 %v1911
        %2589 = vmatprep.subr.bf16.mxu0 %v1916
        %2590 = vmatpush1.bf16.msra.mxu0 %v1915
        %2591 = vmatprep.subr.bf16.mxu0 %v1920
        %2592 = vmatpush1.bf16.msra.mxu0 %v1919
        %2593 = vmatprep.subr.bf16.mxu0 %v1924
        %2594 = vmatpush1.bf16.msra.mxu0 %v1923
        %2595 = vmatprep.subr.bf16.mxu0 %v1928
        %2596 = vmatpush1.bf16.msra.mxu0 %v1927
        %2597 = vmatprep.subr.bf16.mxu0 %v1932
        %2598 = vmatpush1.bf16.msra.mxu0 %v1931
        %2599 = vmatprep.subr.bf16.mxu0 %v1936
        %2600 = vmatpush1.bf16.msra.mxu0 %v1935
        %2601 = vmatprep.subr.bf16.mxu0 %v1940
        %2602 = vmatpush1.bf16.msra.mxu0 %v1939
        %2603 = vmatprep.subr.bf16.mxu0 %v1944
        %2604 = vmatpush1.bf16.msra.mxu0 %v1943
        %2605 = vmatprep.subr.bf16.mxu0 %v1948
        %2606 = vmatpush1.bf16.msra.mxu0 %v1947
        %2607 = vmatprep.subr.bf16.mxu0 %v1952
        %2608 = vmatpush1.bf16.msra.mxu0 %v1951
        %2609 = vmatprep.subr.bf16.mxu0 %v1956
        %2610 = vmatpush1.bf16.msra.mxu0 %v1955
        %2611 = vmatprep.subr.bf16.mxu0 %v1960
        %2612 = vmatpush1.bf16.msra.mxu0 %v1959
        %2613 = vmatprep.mubr.bf16.mxu0 %v1114
        %2614 = vmatmul.mubr.bf16.gmra.mrb[0].mxu0 %v1113
        %v2615 = vpop.f32.mrb[0].mxu0
        %v2616 = vadd.f32 0.0, %v2615
        %v2617 = vpop.f32.mrb[0].mxu0
        %v2618 = vadd.f32 0.0, %v2617
        %v2619 = vpop.f32.mrb[0].mxu0
        %v2620 = vadd.f32 0.0, %v2619
        %v2621 = vpop.f32.mrb[0].mxu0
        %v2622 = vadd.f32 0.0, %v2621
        %2623 = vdwg.mxu0
        %2624 = vmatprep.subr.bf16.mxu0 %v1964
        %2625 = vmatpush1.bf16.msra.mxu0 %v1963
        %2626 = vmatprep.subr.bf16.mxu0 %v1968
        %2627 = vmatpush1.bf16.msra.mxu0 %v1967
        %2628 = vmatprep.subr.bf16.mxu0 %v1972
        %2629 = vmatpush1.bf16.msra.mxu0 %v1971
        %2630 = vmatprep.subr.bf16.mxu0 %v1976
        %2631 = vmatpush1.bf16.msra.mxu0 %v1975
        %2632 = vmatprep.subr.bf16.mxu0 %v1980
        %2633 = vmatpush1.bf16.msra.mxu0 %v1979
        %2634 = vmatprep.subr.bf16.mxu0 %v1984
        %2635 = vmatpush1.bf16.msra.mxu0 %v1983
        %2636 = vmatprep.subr.bf16.mxu0 %v1988
        %2637 = vmatpush1.bf16.msra.mxu0 %v1987
        %2638 = vmatprep.subr.bf16.mxu0 %v1992
        %2639 = vmatpush1.bf16.msra.mxu0 %v1991
        %2640 = vmatprep.subr.bf16.mxu0 %v1996
        %2641 = vmatpush1.bf16.msra.mxu0 %v1995
        %2642 = vmatprep.subr.bf16.mxu0 %v2000
        %2643 = vmatpush1.bf16.msra.mxu0 %v1999
        %2644 = vmatprep.subr.bf16.mxu0 %v2004
        %2645 = vmatpush1.bf16.msra.mxu0 %v2003
        %2646 = vmatprep.subr.bf16.mxu0 %v2008
        %2647 = vmatpush1.bf16.msra.mxu0 %v2007
        %2648 = vmatprep.subr.bf16.mxu0 %v2012
        %2649 = vmatpush1.bf16.msra.mxu0 %v2011
        %2650 = vmatprep.subr.bf16.mxu0 %v2016
        %2651 = vmatpush1.bf16.msra.mxu0 %v2015
        %2652 = vmatprep.subr.bf16.mxu0 %v2020
        %2653 = vmatpush1.bf16.msra.mxu0 %v2019
        %2654 = vmatprep.subr.bf16.mxu0 %v2024
        %2655 = vmatpush1.bf16.msra.mxu0 %v2023
        %2656 = vmatprep.mubr.bf16.mxu0 %v1116
        %2657 = vmatmul.mubr.bf16.gmra.mrb[0].mxu0 %v1115
        %v2658 = vpop.f32.mrb[0].mxu0
        %v2659 = vadd.f32 %v2616, %v2658
        %v2660 = vpop.f32.mrb[0].mxu0
        %v2661 = vadd.f32 %v2618, %v2660
        %v2662 = vpop.f32.mrb[0].mxu0
        %v2663 = vadd.f32 %v2620, %v2662
        %v2664 = vpop.f32.mrb[0].mxu0
        %v2665 = vadd.f32 %v2622, %v2664
        %2666 = vdwg.mxu0
        %2667 = vmatprep.subr.bf16.mxu0 %v2028
        %2668 = vmatpush1.bf16.msra.mxu0 %v2027
        %2669 = vmatprep.subr.bf16.mxu0 %v2032
        %2670 = vmatpush1.bf16.msra.mxu0 %v2031
        %2671 = vmatprep.subr.bf16.mxu0 %v2036
        %2672 = vmatpush1.bf16.msra.mxu0 %v2035
        %2673 = vmatprep.subr.bf16.mxu0 %v2040
        %2674 = vmatpush1.bf16.msra.mxu0 %v2039
        %2675 = vmatprep.subr.bf16.mxu0 %v2044
        %2676 = vmatpush1.bf16.msra.mxu0 %v2043
        %2677 = vmatprep.subr.bf16.mxu0 %v2048
        %2678 = vmatpush1.bf16.msra.mxu0 %v2047
        %2679 = vmatprep.subr.bf16.mxu0 %v2052
        %2680 = vmatpush1.bf16.msra.mxu0 %v2051
        %2681 = vmatprep.subr.bf16.mxu0 %v2056
        %2682 = vmatpush1.bf16.msra.mxu0 %v2055
        %2683 = vmatprep.subr.bf16.mxu0 %v2060
        %2684 = vmatpush1.bf16.msra.mxu0 %v2059
        %2685 = vmatprep.subr.bf16.mxu0 %v2064
        %2686 = vmatpush1.bf16.msra.mxu0 %v2063
        %2687 = vmatprep.subr.bf16.mxu0 %v2068
        %2688 = vmatpush1.bf16.msra.mxu0 %v2067
        %2689 = vmatprep.subr.bf16.mxu0 %v2072
        %2690 = vmatpush1.bf16.msra.mxu0 %v2071
        %2691 = vmatprep.subr.bf16.mxu0 %v2076
        %2692 = vmatpush1.bf16.msra.mxu0 %v2075
        %2693 = vmatprep.subr.bf16.mxu0 %v2080
        %2694 = vmatpush1.bf16.msra.mxu0 %v2079
        %2695 = vmatprep.subr.bf16.mxu0 %v2084
        %2696 = vmatpush1.bf16.msra.mxu0 %v2083
        %2697 = vmatprep.subr.bf16.mxu0 %v2088
        %2698 = vmatpush1.bf16.msra.mxu0 %v2087
        %2699 = vmatprep.mubr.bf16.mxu0 %v1118
        %2700 = vmatmul.mubr.bf16.gmra.mrb[0].mxu0 %v1117
        %v2701 = vpop.f32.mrb[0].mxu0
        %v2702 = vadd.f32 %v2659, %v2701
        %v2703 = vpop.f32.mrb[0].mxu0
        %v2704 = vadd.f32 %v2661, %v2703
        %v2705 = vpop.f32.mrb[0].mxu0
        %v2706 = vadd.f32 %v2663, %v2705
        %v2707 = vpop.f32.mrb[0].mxu0
        %v2708 = vadd.f32 %v2665, %v2707
        %2709 = vdwg.mxu0
        %2710 = vmatprep.subr.bf16.mxu0 %v2092
        %2711 = vmatpush1.bf16.msra.mxu0 %v2091
        %2712 = vmatprep.subr.bf16.mxu0 %v2096
        %2713 = vmatpush1.bf16.msra.mxu0 %v2095
        %2714 = vmatprep.subr.bf16.mxu0 %v2100
        %2715 = vmatpush1.bf16.msra.mxu0 %v2099
        %2716 = vmatprep.subr.bf16.mxu0 %v2104
        %2717 = vmatpush1.bf16.msra.mxu0 %v2103
        %2718 = vmatprep.subr.bf16.mxu0 %v2108
        %2719 = vmatpush1.bf16.msra.mxu0 %v2107
        %2720 = vmatprep.subr.bf16.mxu0 %v2112
        %2721 = vmatpush1.bf16.msra.mxu0 %v2111
        %2722 = vmatprep.subr.bf16.mxu0 %v2116
        %2723 = vmatpush1.bf16.msra.mxu0 %v2115
        %2724 = vmatprep.subr.bf16.mxu0 %v2120
        %2725 = vmatpush1.bf16.msra.mxu0 %v2119
        %2726 = vmatprep.subr.bf16.mxu0 %v2124
        %2727 = vmatpush1.bf16.msra.mxu0 %v2123
        %2728 = vmatprep.subr.bf16.mxu0 %v2128
        %2729 = vmatpush1.bf16.msra.mxu0 %v2127
        %2730 = vmatprep.subr.bf16.mxu0 %v2132
        %2731 = vmatpush1.bf16.msra.mxu0 %v2131
        %2732 = vmatprep.subr.bf16.mxu0 %v2136
        %2733 = vmatpush1.bf16.msra.mxu0 %v2135
        %2734 = vmatprep.subr.bf16.mxu0 %v2140
        %2735 = vmatpush1.bf16.msra.mxu0 %v2139
        %2736 = vmatprep.subr.bf16.mxu0 %v2144
        %2737 = vmatpush1.bf16.msra.mxu0 %v2143
        %2738 = vmatprep.subr.bf16.mxu0 %v2148
        %2739 = vmatpush1.bf16.msra.mxu0 %v2147
        %2740 = vmatprep.subr.bf16.mxu0 %v2152
        %2741 = vmatpush1.bf16.msra.mxu0 %v2151
        %2742 = vmatprep.mubr.bf16.mxu0 %v1120
        %2743 = vmatmul.mubr.bf16.gmra.mrb[0].mxu0 %v1119
        %v2744 = vpop.f32.mrb[0].mxu0
        %v2745 = vadd.f32 %v2702, %v2744
        %v2746 = vpop.f32.mrb[0].mxu0
        %v2747 = vadd.f32 %v2704, %v2746
        %v2748 = vpop.f32.mrb[0].mxu0
        %v2749 = vadd.f32 %v2706, %v2748
        %v2750 = vpop.f32.mrb[0].mxu0
        %v2751 = vadd.f32 %v2708, %v2750
        %2752 = vdwg.mxu0
        %v2753 = vadd.f32 %v817, %v2573
        %v2754 = vadd.f32 %v818, %v2575
        %v2755 = vadd.f32 %v819, %v2745
        %v2756 = vadd.f32 %v820, %v2747
        %v2757 = vadd.f32 %v821, %v2577
        %v2758 = vadd.f32 %v822, %v2579
        %v2759 = vadd.f32 %v823, %v2749
        %v2760 = vadd.f32 %v824, %v2751
        %2761 = vst [vmem:[#allocation2] sm:$0xff] %v2753
        %2762 = vst [vmem:[#allocation2 + $0x8] sm:$0xff] %v2754
        %2763 = vst [vmem:[#allocation2 + $0x10] sm:$0xff] %v2755
        %2764 = vst [vmem:[#allocation2 + $0x18] sm:$0xff] %v2756
        %2765 = vst [vmem:[#allocation2 + $0x20] sm:$0xff] %v2757
        %2766 = vst [vmem:[#allocation2 + $0x28] sm:$0xff] %v2758
        %2767 = vst [vmem:[#allocation2 + $0x30] sm:$0xff] %v2759
        %2768 = vst [vmem:[#allocation2 + $0x38] sm:$0xff] %v2760
        %p2769 = scmp.eq.s32.totalorder %s21, 4
        // Predicated region
        $region83: #{fwd.10} parent=69 // pred_check
          %p2770 = pneg %p2769
        $region84: #{fwd.10} parent=69 // pred_check_branch
          %2772 = sbr.rel (%p2770) target = $region86
        $region85: #{fwd.10} parent=69 // pred_region
          %v2773 = vld [vmem:[#allocation2] sm:$0xff]
          %v2774 = vld [vmem:[#allocation2 + $0x8] sm:$0xff]
          %v2775 = vld [vmem:[#allocation2 + $0x10] sm:$0xff]
          %v2776 = vld [vmem:[#allocation2 + $0x18] sm:$0xff]
          %v2777 = vld [vmem:[#allocation2 + $0x20] sm:$0xff]
          %v2778 = vld [vmem:[#allocation2 + $0x28] sm:$0xff]
          %v2779 = vld [vmem:[#allocation2 + $0x30] sm:$0xff]
          %v2780 = vld [vmem:[#allocation2 + $0x38] sm:$0xff]
          %v2781 = vld [vmem:[%s801] sm:$0xf]
          %v2783 = vlaneseq
          %v2784 = vshrl.u32 %v2783, 7
          %v2785 = vsub.s32 0, %v2784
          %v2786 = vrot.slane %v2781, %v2785
          %v2787 = vlaneseq
          %v2788 = vshrl.u32 %v2787, 7
          %v2789 = vsub.s32 1, %v2788
          %v2790 = vrot.slane %v2781, %v2789
          %v2791 = vlaneseq
          %v2792 = vshrl.u32 %v2791, 7
          %v2793 = vsub.s32 2, %v2792
          %v2794 = vrot.slane %v2781, %v2793
          %v2795 = vlaneseq
          %v2796 = vshrl.u32 %v2795, 7
          %v2797 = vsub.s32 3, %v2796
          %v2798 = vrot.slane %v2781, %v2797
          %v2803 = vadd.f32 %v2773, %v2786
          %v2804 = vadd.f32 %v2774, %v2790
          %v2805 = vadd.f32 %v2775, %v2794
          %v2806 = vadd.f32 %v2776, %v2798
          %v2807 = vadd.f32 %v2777, %v2786
          %v2808 = vadd.f32 %v2778, %v2790
          %v2809 = vadd.f32 %v2779, %v2794
          %v2810 = vadd.f32 %v2780, %v2798
          %vm2811 = vcmp.ge.f32.partialorder %v2803, 0.0
          %vm2812 = vcmp.ge.f32.partialorder %v2804, 0.0
          %vm2813 = vcmp.ge.f32.partialorder %v2805, 0.0
          %vm2814 = vcmp.ge.f32.partialorder %v2806, 0.0
          %vm2815 = vcmp.ge.f32.partialorder %v2807, 0.0
          %vm2816 = vcmp.ge.f32.partialorder %v2808, 0.0
          %vm2817 = vcmp.ge.f32.partialorder %v2809, 0.0
          %vm2818 = vcmp.ge.f32.partialorder %v2810, 0.0
          %v2819 = vmul.f32 %v2803, 0.1
          %v2820 = vmul.f32 %v2804, 0.1
          %v2821 = vmul.f32 %v2805, 0.1
          %v2822 = vmul.f32 %v2806, 0.1
          %v2823 = vmul.f32 %v2807, 0.1
          %v2824 = vmul.f32 %v2808, 0.1
          %v2825 = vmul.f32 %v2809, 0.1
          %v2826 = vmul.f32 %v2810, 0.1
          %v2827 = vsel %vm2811, %v2803, %v2819
          %v2828 = vsel %vm2812, %v2804, %v2820
          %v2829 = vsel %vm2813, %v2805, %v2821
          %v2830 = vsel %vm2814, %v2806, %v2822
          %v2831 = vsel %vm2815, %v2807, %v2823
          %v2832 = vsel %vm2816, %v2808, %v2824
          %v2833 = vsel %vm2817, %v2809, %v2825
          %v2834 = vsel %vm2818, %v2810, %v2826
          %2835 = vst [vmem:[%s793] sm:$0xff] %v2827
          %2836 = vst [vmem:[%s793 + $0x8] sm:$0xff] %v2828
          %2837 = vst [vmem:[%s793 + $0x10] sm:$0xff] %v2829
          %2838 = vst [vmem:[%s793 + $0x18] sm:$0xff] %v2830
          %2839 = vst [vmem:[%s793 + $0x20] sm:$0xff] %v2831
          %2840 = vst [vmem:[%s793 + $0x28] sm:$0xff] %v2832
          %2841 = vst [vmem:[%s793 + $0x30] sm:$0xff] %v2833
          %2842 = vst [vmem:[%s793 + $0x38] sm:$0xff] %v2834
        $region86: #{fwd.10} parent=69 // pred_fallthru
          _
        %s2843 = sand.u32 %s125, 1
        %s2844 = sand.u32 %s125, 1
        %s2845 = smul.addr %s2844, 64
        %s2846 = scalar_lea.vmem [#allocation5], %s2845
        // Predicated region
        $region87: #{fwd.10} parent=69 // pred_check
          %p2847 = pneg %p135
        $region88: #{fwd.10} parent=69 // pred_check_branch
          %2849 = sbr.rel (%p2847) target = $region90
        $region89: #{fwd.10} parent=69 // pred_region
          %s2850 = smul.u32 2, %s19
          %s2851 = smul.u32 4, %s20
          %s2852 = smul.addr %s2850, 8
          %s2853 = sadd.s32 %s2851, %s2852
          %s2854 = smul.addr %s2853, 8
          %s2855 = scalar_lea.vmem %s3, %s2854
          // Predicated region
          $region91: #{fwd.10} parent=89 // pred_check
            _
          $region92: #{fwd.10} parent=89 // pred_check_branch
            %2857 = sbr.rel (0) target = $region94
          $region93: #{fwd.10} parent=89 // pred_region
            // Predicated region
            $region95: #{fwd.10} parent=93 // pred_check
              _
            $region96: #{fwd.10} parent=93 // pred_check_branch
              %2859 = sbr.rel (0) target = $region98
            $region97: #{fwd.10} parent=93 // pred_region
              loop: start=0, step=1, limit=1
              $region99: #{fwd.10} parent=97 // loop_pre_header
                _
              $region100: #{fwd.10} parent=97 // loop_header
                %s2861 = sphi 0, %s2865
                %p2862 = scmp.ge.s32.totalorder %s2861, 1
                %s2866 = sphi %s2846, %s2846
                %s2867 = sphi %s2855, %s2855
              $region101: #{fwd.10} parent=97 // loop_header_branch
                %2864 = sbr.rel (%p2862) target = $region105
              $region102: #{fwd.10} parent=97 // loop_body
                %v2868 = vld [vmem:[%s2866] sm:$0xff]
                %2869 = vst [vmem:[%s2867] sm:$0xff] %v2868
                %v2870 = vld [vmem:[%s2866 + $0x8] sm:$0xff]
                %2871 = vst [vmem:[%s2867 + $0x8] sm:$0xff] %v2870
                %v2872 = vld [vmem:[%s2866 + $0x10] sm:$0xff]
                %2873 = vst [vmem:[%s2867 + $0x10] sm:$0xff] %v2872
                %v2874 = vld [vmem:[%s2866 + $0x18] sm:$0xff]
                %2875 = vst [vmem:[%s2867 + $0x18] sm:$0xff] %v2874
                %v2876 = vld [vmem:[%s2866 + $0x20] sm:$0xff]
                %2877 = vst [vmem:[%s2867 + $0x40] sm:$0xff] %v2876
                %v2878 = vld [vmem:[%s2866 + $0x28] sm:$0xff]
                %2879 = vst [vmem:[%s2867 + $0x48] sm:$0xff] %v2878
                %v2880 = vld [vmem:[%s2866 + $0x30] sm:$0xff]
                %2881 = vst [vmem:[%s2867 + $0x50] sm:$0xff] %v2880
                %v2882 = vld [vmem:[%s2866 + $0x38] sm:$0xff]
                %2883 = vst [vmem:[%s2867 + $0x58] sm:$0xff] %v2882
              $region103: #{fwd.10} parent=97 // loop_footer
                %s2865 = sadd.s32 1, %s2861
              $region104: #{fwd.10} parent=97 // loop_footer_branch
                %2860 = sbr.rel target = $region100
              $region105: #{fwd.10} parent=97 // loop_exit
                _
            $region98: #{fwd.10} parent=93 // pred_fallthru
              _
            // Predicated region
            $region106: #{fwd.10} parent=93 // pred_check
              _
            $region107: #{fwd.10} parent=93 // pred_check_branch
              %2885 = sbr.rel target = $region109
            $region108: #{fwd.10} parent=93 // pred_region
              _
            $region109: #{fwd.10} parent=93 // pred_fallthru
              _
          $region94: #{fwd.10} parent=89 // pred_fallthru
            _
          %2886 = vnop
        $region90: #{fwd.10} parent=69 // pred_fallthru
          _
      $region70: #{fwd.10} parent=5 // pred_fallthru
        _
      %p2887 = scmp.le.s32.totalorder 2, %s9
      // Predicated region
      $region110: #{fwd.10} parent=5 // pred_check
        %p2888 = pneg %p2887
      $region111: #{fwd.10} parent=5 // pred_check_branch
        %2890 = sbr.rel (%p2888) target = $region113
      $region112: #{fwd.10} parent=5 // pred_region
        %s2891 = ssub.s32 %s9, 2
        // Predicated region
        $region114: #{fwd.10} parent=112 // pred_check
          %p2892 = pneg %p141
        $region115: #{fwd.10} parent=112 // pred_check_branch
          %2894 = sbr.rel (%p2892) target = $region117
        $region116: #{fwd.10} parent=112 // pred_region
          %s2895 = sand.u32 %s126, 1
          %s2896 = sand.u32 %s126, 1
          %s2897 = smul.addr %s2896, 64
          %s2898 = scalar_lea.vmem [#allocation5], %s2897
        $region117: #{fwd.10} parent=112 // pred_fallthru
          _
      $region113: #{fwd.10} parent=5 // pred_fallthru
        _
    $region6: #{fwd.10} parent=1 // loop_footer
      %s13 = sadd.s32 1, %s9
    $region7: #{fwd.10} parent=1 // loop_footer_branch
      %8 = sbr.rel target = $region3
    $region8: #{fwd.10} parent=1 // loop_exit
      _

</llo_original>
